<compile_context>
chip_gen: v7x
topology: tpu7x:2x2x1
jax: 0.10.0
libtpu: 0.0.40
codegen_flags: <defaults>
</compile_context>

<pallas_src>
import functools

import jax
import jax.numpy as jnp
from jax.experimental import pallas as pl
from jax.experimental.pallas import tpu as pltpu

NUM_CATEGORIES = 30
D_IN, D0, D1, D2 = 2048, 1024, 512, 256
OUT_PAD = 128          # lane-dense padded output width (>= NUM_CATEGORIES)
BN_EPS = 1e-5


def _mlp_kernel(x_ref,
                w0_ref, t0_ref,
                w1_ref, t1_ref,
                w2_ref, t2_ref,
                w3_ref, b3_ref,
                o_ref):
    # Layer 0: Linear(2048->1024, bias=False) with BN0 folded into W -> +shift -> ReLU
    h = jnp.dot(x_ref[...], w0_ref[...], preferred_element_type=jnp.float32)
    h = jnp.maximum(h + t0_ref[...], 0.0).astype(jnp.bfloat16)      # dp0: identity (eval)

    # Layer 1: Linear(1024->512) with BN1 folded -> ReLU
    h = jnp.dot(h, w1_ref[...], preferred_element_type=jnp.float32)
    h = jnp.maximum(h + t1_ref[...], 0.0).astype(jnp.bfloat16)      # dp1: identity (eval)

    # Layer 2: Linear(512->256) with BN2 folded -> ReLU
    h = jnp.dot(h, w2_ref[...], preferred_element_type=jnp.float32)
    h = jnp.maximum(h + t2_ref[...], 0.0).astype(jnp.bfloat16)      # dp2: identity (eval)

    # Layer 3: Linear(256 -> OUT_PAD); columns beyond NUM_CATEGORIES are zero padding.
    o_ref[...] = (jnp.dot(h, w3_ref[...], preferred_element_type=jnp.float32)
                  + b3_ref[...]).astype(o_ref.dtype)


def _pick_tile_b(batch):
    """Large M tile for big batches (amortize per-step overhead, fill MXU rows);
    keep >=2 grid steps when possible so both v7x TensorCores get work."""
    if batch >= 1024:
        return 512
    if batch >= 512:
        return 256
    if batch >= 16:
        return max(8, ((batch // 2) // 8) * 8)
    return 8


@functools.partial(jax.jit, static_argnames=("tile_b",))
def _forward_padded(x_bf16, params, tile_b):
    B = x_bf16.shape[0]
    w0, t0, w1, t1, w2, t2, w3, b3 = params
    # Whole-array VMEM residents: constant block index => copied in once, no per-step DMA.
    resident = pl.BlockSpec(memory_space=pltpu.MemorySpace.VMEM)
    grid = (B // tile_b,)
    return pl.pallas_call(
        _mlp_kernel,
        out_shape=jax.ShapeDtypeStruct((B, OUT_PAD), jnp.float32),
        grid_spec=pltpu.PrefetchScalarGridSpec(
            num_scalar_prefetch=0,
            grid=grid,
            in_specs=[
                pl.BlockSpec((tile_b, D_IN), lambda i: (i, 0)),   # x batch tile
                resident, resident,                               # w0, t0
                resident, resident,                               # w1, t1
                resident, resident,                               # w2, t2
                resident, resident,                               # w3, b3
            ],
            out_specs=pl.BlockSpec((tile_b, OUT_PAD), lambda i: (i, 0)),
        ),
        compiler_params=pltpu.CompilerParams(
            dimension_semantics=("parallel",),
            vmem_limit_bytes=48 << 20,   # > v5e/v6e scoped default, < v7x 64 MiB physical
        ),
    )(x_bf16, w0, t0, w1, t1, w2, t2, w3, b3)


def classification_two_inputs_forward(x, params, *, tile_b=None):
    """x: (B, 2048) float -> (B, NUM_CATEGORIES) float32 (eval-mode forward)."""
    B = x.shape[0]
    if tile_b is None:
        tile_b = _pick_tile_b(B)
    B_pad = ((B + tile_b - 1) // tile_b) * tile_b
    x_bf16 = x.astype(jnp.bfloat16)
    if B_pad != B:
        x_bf16 = jnp.pad(x_bf16, ((0, B_pad - B), (0, 0)))
    out = _forward_padded(x_bf16, params, tile_b)
    return out[:B, :NUM_CATEGORIES]


# ------------------------ parameter preparation ------------------------

def prepare_params(raw):
    """Fold eval-mode BatchNorm into the Linear layers and lay out for the kernel.

    `raw` holds PyTorch-layout tensors: w* as (C_out, C_in), b* as (C_out,),
    bn*_{gamma,beta,mean,var} as (C_out,).  Returns bf16 (C_in, C_out) weights with the
    BN scale folded in (w3 zero-padded to OUT_PAD columns) and f32 (1, C) additive shifts.
    """
    def fold(w, b, gamma, beta, mean, var):
        scale = gamma / jnp.sqrt(var + BN_EPS)            # (C_out,)
        shift = beta - mean * scale
        w_t = w.T * scale[None, :]                        # (C_in, C_out), BN scale folded
        t = shift if b is None else b * scale + shift
        return w_t.astype(jnp.bfloat16), t.reshape(1, -1).astype(jnp.float32)

    w0, t0 = fold(raw["w0"], None, raw["bn0_gamma"], raw["bn0_beta"],
                  raw["bn0_mean"], raw["bn0_var"])
    w1, t1 = fold(raw["w1"], raw["b1"], raw["bn1_gamma"], raw["bn1_beta"],
                  raw["bn1_mean"], raw["bn1_var"])
    w2, t2 = fold(raw["w2"], raw["b2"], raw["bn2_gamma"], raw["bn2_beta"],
                  raw["bn2_mean"], raw["bn2_var"])

    w3 = jnp.zeros((D2, OUT_PAD), jnp.float32).at[:, :NUM_CATEGORIES].set(raw["w3"].T)
    b3 = jnp.zeros((1, OUT_PAD), jnp.float32).at[0, :NUM_CATEGORIES].set(raw["b3"])
    return (w0, t0, w1, t1, w2, t2, w3.astype(jnp.bfloat16), b3)


def init_raw_params(key):
    """Deterministic synthetic parameters matching the PyTorch module's shapes."""
    ks = jax.random.split(key, 10)

    def lin(kw, kb, c_out, c_in, bias=True):
        bound = 1.0 / jnp.sqrt(c_in)
        w = jax.random.uniform(kw, (c_out, c_in), jnp.float32, -bound, bound)
        b = (jax.random.uniform(kb, (c_out,), jnp.float32, -bound, bound)
             if bias else None)
        return w, b

    def bn(k, c):
        kg, kb, km, kv = jax.random.split(k, 4)
        return {
            "gamma": 1.0 + 0.1 * jax.random.normal(kg, (c,), jnp.float32),
            "beta": 0.1 * jax.random.normal(kb, (c,), jnp.float32),
            "mean": 0.1 * jax.random.normal(km, (c,), jnp.float32),
            "var": jnp.abs(1.0 + 0.1 * jax.random.normal(kv, (c,), jnp.float32)),
        }

    w0, _ = lin(ks[0], ks[0], D0, D_IN, bias=False)
    w1, b1 = lin(ks[1], ks[2], D1, D0)
    w2, b2 = lin(ks[3], ks[4], D2, D1)
    w3, b3 = lin(ks[5], ks[6], NUM_CATEGORIES, D2)
    bn0, bn1, bn2 = bn(ks[7], D0), bn(ks[8], D1), bn(ks[9], D2)

    raw = {"w0": w0, "w1": w1, "b1": b1, "w2": w2, "b2": b2, "w3": w3, "b3": b3}
    for name, d in (("bn0", bn0), ("bn1", bn1), ("bn2", bn2)):
        for k, v in d.items():
            raw[f"{name}_{k}"] = v
    return raw


def _reference_forward(x, params):
    """Pure-JAX reference using the same prepped (bf16) parameters."""
    w0, t0, w1, t1, w2, t2, w3, b3 = params
    h = x.astype(jnp.bfloat16)
    h = jnp.maximum(jnp.dot(h, w0, preferred_element_type=jnp.float32) + t0, 0.0)
    h = jnp.maximum(jnp.dot(h.astype(jnp.bfloat16), w1,
                            preferred_element_type=jnp.float32) + t1, 0.0)
    h = jnp.maximum(jnp.dot(h.astype(jnp.bfloat16), w2,
                            preferred_element_type=jnp.float32) + t2, 0.0)
    out = jnp.dot(h.astype(jnp.bfloat16), w3, preferred_element_type=jnp.float32) + b3
    return out[:, :NUM_CATEGORIES]


if __name__ == "__main__":
    key = jax.random.PRNGKey(0)
    k_x, k_p = jax.random.split(key)

    B = 16  # small batch; feature dims are fixed by the module (2048 -> ... -> 30)
    x = jax.random.normal(k_x, (B, D_IN), jnp.float32)
    params = prepare_params(init_raw_params(k_p))

    out = classification_two_inputs_forward(x, params)
    out = jax.block_until_ready(out)

    ref = _reference_forward(x, params)
    assert out.shape == (B, NUM_CATEGORIES)
    max_err = float(jnp.max(jnp.abs(out - ref)))
    assert max_err < 1e-2, max_err

    print("KERNEL_OK")
</pallas_src>

<mosaic_0001>
module attributes {stable_mosaic.version = 11 : i64} {
  func.func @_mlp_kernel(%arg0: i32, %arg1: memref<8x2048xbf16, #tpu.memory_space<vmem>>, %arg2: memref<2048x1024xbf16, #tpu.memory_space<vmem>>, %arg3: memref<1x1024xf32, #tpu.memory_space<vmem>>, %arg4: memref<1024x512xbf16, #tpu.memory_space<vmem>>, %arg5: memref<1x512xf32, #tpu.memory_space<vmem>>, %arg6: memref<512x256xbf16, #tpu.memory_space<vmem>>, %arg7: memref<1x256xf32, #tpu.memory_space<vmem>>, %arg8: memref<256x128xbf16, #tpu.memory_space<vmem>>, %arg9: memref<1x128xf32, #tpu.memory_space<vmem>>, %arg10: memref<8x128xf32, #tpu.memory_space<vmem>>) attributes {dimension_semantics = [#tpu.dimension_semantics<parallel>], iteration_bounds = array<i64: 2>, scalar_prefetch = 0 : i64, scratch_operands = 0 : i64, tpu.core_type = #tpu.core_type<tc>, window_params = [{transform_indices = @transform_0, window_bounds = array<i64: 8, 2048>}, {pipeline_mode = #tpu.pipeline_mode<synchronous>, transform_indices = @transform_1, window_bounds = array<i64: 2048, 1024>}, {pipeline_mode = #tpu.pipeline_mode<synchronous>, transform_indices = @transform_2, window_bounds = array<i64: 1, 1024>}, {pipeline_mode = #tpu.pipeline_mode<synchronous>, transform_indices = @transform_3, window_bounds = array<i64: 1024, 512>}, {pipeline_mode = #tpu.pipeline_mode<synchronous>, transform_indices = @transform_4, window_bounds = array<i64: 1, 512>}, {pipeline_mode = #tpu.pipeline_mode<synchronous>, transform_indices = @transform_5, window_bounds = array<i64: 512, 256>}, {pipeline_mode = #tpu.pipeline_mode<synchronous>, transform_indices = @transform_6, window_bounds = array<i64: 1, 256>}, {pipeline_mode = #tpu.pipeline_mode<synchronous>, transform_indices = @transform_7, window_bounds = array<i64: 256, 128>}, {pipeline_mode = #tpu.pipeline_mode<synchronous>, transform_indices = @transform_8, window_bounds = array<i64: 1, 128>}, {transform_indices = @transform_9, window_bounds = array<i64: 8, 128>}]} {
    %c0 = arith.constant 0 : index
    %c0_0 = arith.constant 0 : index
    %0 = vector.load %arg1[%c0, %c0_0] : memref<8x2048xbf16, #tpu.memory_space<vmem>>, vector<8x2048xbf16>
    %c0_1 = arith.constant 0 : index
    %c0_2 = arith.constant 0 : index
    %1 = vector.load %arg2[%c0_1, %c0_2] : memref<2048x1024xbf16, #tpu.memory_space<vmem>>, vector<2048x1024xbf16>
    %cst = arith.constant dense<0.000000e+00> : vector<8x1024xf32>
    %2 = tpu.matmul %0, %1, %cst {dimension_numbers = #tpu.dot_dimension_numbers<[1], [0], [0], [1], [0, 0, 1, 1], [], []>} : vector<8x2048xbf16>, vector<2048x1024xbf16>, vector<8x1024xf32> -> vector<8x1024xf32>
    %c0_3 = arith.constant 0 : index
    %c0_4 = arith.constant 0 : index
    %3 = vector.load %arg3[%c0_3, %c0_4] : memref<1x1024xf32, #tpu.memory_space<vmem>>, vector<1x1024xf32>
    %4 = vector.broadcast %3 : vector<1x1024xf32> to vector<8x1024xf32>
    %5 = arith.addf %2, %4 : vector<8x1024xf32>
    %cst_5 = arith.constant 0.000000e+00 : f32
    %6 = vector.broadcast %cst_5 : f32 to vector<8x1024xf32>
    %7 = arith.maximumf %5, %6 : vector<8x1024xf32>
    %8 = arith.truncf %7 : vector<8x1024xf32> to vector<8x1024xbf16>
    %c0_6 = arith.constant 0 : index
    %c0_7 = arith.constant 0 : index
    %9 = vector.load %arg4[%c0_6, %c0_7] : memref<1024x512xbf16, #tpu.memory_space<vmem>>, vector<1024x512xbf16>
    %cst_8 = arith.constant dense<0.000000e+00> : vector<8x512xf32>
    %10 = tpu.matmul %8, %9, %cst_8 {dimension_numbers = #tpu.dot_dimension_numbers<[1], [0], [0], [1], [0, 0, 1, 1], [], []>} : vector<8x1024xbf16>, vector<1024x512xbf16>, vector<8x512xf32> -> vector<8x512xf32>
    %c0_9 = arith.constant 0 : index
    %c0_10 = arith.constant 0 : index
    %11 = vector.load %arg5[%c0_9, %c0_10] : memref<1x512xf32, #tpu.memory_space<vmem>>, vector<1x512xf32>
    %12 = vector.broadcast %11 : vector<1x512xf32> to vector<8x512xf32>
    %13 = arith.addf %10, %12 : vector<8x512xf32>
    %cst_11 = arith.constant 0.000000e+00 : f32
    %14 = vector.broadcast %cst_11 : f32 to vector<8x512xf32>
    %15 = arith.maximumf %13, %14 : vector<8x512xf32>
    %16 = arith.truncf %15 : vector<8x512xf32> to vector<8x512xbf16>
    %c0_12 = arith.constant 0 : index
    %c0_13 = arith.constant 0 : index
    %17 = vector.load %arg6[%c0_12, %c0_13] : memref<512x256xbf16, #tpu.memory_space<vmem>>, vector<512x256xbf16>
    %cst_14 = arith.constant dense<0.000000e+00> : vector<8x256xf32>
    %18 = tpu.matmul %16, %17, %cst_14 {dimension_numbers = #tpu.dot_dimension_numbers<[1], [0], [0], [1], [0, 0, 1, 1], [], []>} : vector<8x512xbf16>, vector<512x256xbf16>, vector<8x256xf32> -> vector<8x256xf32>
    %c0_15 = arith.constant 0 : index
    %c0_16 = arith.constant 0 : index
    %19 = vector.load %arg7[%c0_15, %c0_16] : memref<1x256xf32, #tpu.memory_space<vmem>>, vector<1x256xf32>
    %20 = vector.broadcast %19 : vector<1x256xf32> to vector<8x256xf32>
    %21 = arith.addf %18, %20 : vector<8x256xf32>
    %cst_17 = arith.constant 0.000000e+00 : f32
    %22 = vector.broadcast %cst_17 : f32 to vector<8x256xf32>
    %23 = arith.maximumf %21, %22 : vector<8x256xf32>
    %24 = arith.truncf %23 : vector<8x256xf32> to vector<8x256xbf16>
    %c0_18 = arith.constant 0 : index
    %c0_19 = arith.constant 0 : index
    %25 = vector.load %arg8[%c0_18, %c0_19] : memref<256x128xbf16, #tpu.memory_space<vmem>>, vector<256x128xbf16>
    %cst_20 = arith.constant dense<0.000000e+00> : vector<8x128xf32>
    %26 = tpu.matmul %24, %25, %cst_20 {dimension_numbers = #tpu.dot_dimension_numbers<[1], [0], [0], [1], [0, 0, 1, 1], [], []>} : vector<8x256xbf16>, vector<256x128xbf16>, vector<8x128xf32> -> vector<8x128xf32>
    %c0_21 = arith.constant 0 : index
    %c0_22 = arith.constant 0 : index
    %27 = vector.load %arg9[%c0_21, %c0_22] : memref<1x128xf32, #tpu.memory_space<vmem>>, vector<1x128xf32>
    %28 = vector.broadcast %27 : vector<1x128xf32> to vector<8x128xf32>
    %29 = arith.addf %26, %28 : vector<8x128xf32>
    %c0_23 = arith.constant 0 : index
    %c0_24 = arith.constant 0 : index
    %30 = vector.load %arg10[%c0_23, %c0_24] : memref<8x128xf32, #tpu.memory_space<vmem>>, vector<8x128xf32>
    tpu.vector_store %arg10[%c0_23, %c0_24], %29 {strides = array<i32>} : memref<8x128xf32, #tpu.memory_space<vmem>>, vector<8x128xf32>,
    return
  }
  func.func @transform_0(%arg0: i32) -> (i32, i32) {
    %c0_i32 = arith.constant 0 : i32
    %c0_i32_0 = arith.constant 0 : i32
    return %arg0, %c0_i32 : i32, i32
  }
  func.func @transform_1(%arg0: i32) -> (i32, i32) {
    %c0_i32 = arith.constant 0 : i32
    %c0_i32_0 = arith.constant 0 : i32
    %c0_i32_1 = arith.constant 0 : i32
    return %c0_i32, %c0_i32_0 : i32, i32
  }
  func.func @transform_2(%arg0: i32) -> (i32, i32) {
    %c0_i32 = arith.constant 0 : i32
    %c0_i32_0 = arith.constant 0 : i32
    %c0_i32_1 = arith.constant 0 : i32
    return %c0_i32, %c0_i32_0 : i32, i32
  }
  func.func @transform_3(%arg0: i32) -> (i32, i32) {
    %c0_i32 = arith.constant 0 : i32
    %c0_i32_0 = arith.constant 0 : i32
    %c0_i32_1 = arith.constant 0 : i32
    return %c0_i32, %c0_i32_0 : i32, i32
  }
  func.func @transform_4(%arg0: i32) -> (i32, i32) {
    %c0_i32 = arith.constant 0 : i32
    %c0_i32_0 = arith.constant 0 : i32
    %c0_i32_1 = arith.constant 0 : i32
    return %c0_i32, %c0_i32_0 : i32, i32
  }
  func.func @transform_5(%arg0: i32) -> (i32, i32) {
    %c0_i32 = arith.constant 0 : i32
    %c0_i32_0 = arith.constant 0 : i32
    %c0_i32_1 = arith.constant 0 : i32
    return %c0_i32, %c0_i32_0 : i32, i32
  }
  func.func @transform_6(%arg0: i32) -> (i32, i32) {
    %c0_i32 = arith.constant 0 : i32
    %c0_i32_0 = arith.constant 0 : i32
    %c0_i32_1 = arith.constant 0 : i32
    return %c0_i32, %c0_i32_0 : i32, i32
  }
  func.func @transform_7(%arg0: i32) -> (i32, i32) {
    %c0_i32 = arith.constant 0 : i32
    %c0_i32_0 = arith.constant 0 : i32
    %c0_i32_1 = arith.constant 0 : i32
    return %c0_i32, %c0_i32_0 : i32, i32
  }
  func.func @transform_8(%arg0: i32) -> (i32, i32) {
    %c0_i32 = arith.constant 0 : i32
    %c0_i32_0 = arith.constant 0 : i32
    %c0_i32_1 = arith.constant 0 : i32
    return %c0_i32, %c0_i32_0 : i32, i32
  }
  func.func @transform_9(%arg0: i32) -> (i32, i32) {
    %c0_i32 = arith.constant 0 : i32
    %c0_i32_0 = arith.constant 0 : i32
    return %arg0, %c0_i32 : i32, i32
  }
}

</mosaic_0001>

<llo_original>
// kernel: _forward_padded.1
$region0: #{_forward_padded.1}
  #allocation0 [shape = 'u32[]', space=smem, size = 0x4, offset = 0x4, fixed_abs, tag = 'smem constant byte address 0x4 - core index']
  #allocation1 [shape = 'u32[144,128]{1,0:T(1,128)}', space=vmem, size = 0x12000, scoped, tag = 'internal scratch']
  %s0 = inlined_call_operand.hbm [shape: bf16[16,2048], index: 0, kind: input, shape index: {}]
  %s1 = inlined_call_operand.hbm [shape: bf16[2048,1024], index: 1, kind: input, shape index: {}]
  %s2 = inlined_call_operand.hbm [shape: f32[1,1024], index: 2, kind: input, shape index: {}]
  %s3 = inlined_call_operand.hbm [shape: bf16[1024,512], index: 3, kind: input, shape index: {}]
  %s4 = inlined_call_operand.hbm [shape: f32[1,512], index: 4, kind: input, shape index: {}]
  %s5 = inlined_call_operand.hbm [shape: bf16[512,256], index: 5, kind: input, shape index: {}]
  %s6 = inlined_call_operand.hbm [shape: f32[1,256], index: 6, kind: input, shape index: {}]
  %s7 = inlined_call_operand.hbm [shape: bf16[256,128], index: 7, kind: input, shape index: {}]
  %s8 = inlined_call_operand.hbm [shape: f32[1,128], index: 8, kind: input, shape index: {}]
  %s9 = inlined_call_operand.hbm [shape: f32[16,128], index: 9, kind: output, shape index: {}]
  %s10 = sld [smem:[#allocation0]]
  $region105: #{_forward_padded.1} parent=0
    _
  %s12 = ssub.s32 1, %s10
  %s13 = scalar_select 0, %s12, %s10
  $region1: #{_forward_padded.1} parent=0
    #allocation2 [shape = 'u8[65536]{0}', space=vmem, size = 0x10000, scoped, tag = 'input window, operand 0']
    #allocation3 [shape = 's32[2]{0}', space=sflag, size = 0x8, scoped, tag = 'scoped memory for _forward_padded.1']
    #allocation4 [shape = 's32[2]{0}', space=sflag, size = 0x8, scoped, tag = 'scoped memory for _forward_padded.1']
    #allocation5 [shape = 'u8[4194304]{0}', space=vmem, size = 0x400000, scoped, tag = 'input window, operand 1, single buffered']
    #allocation6 [shape = 's32[1]{0}', space=sflag, size = 0x4, scoped, tag = 'scoped memory for _forward_padded.1']
    #allocation7 [shape = 'u8[4096]{0}', space=vmem, size = 0x1000, scoped, tag = 'input window, operand 2, single buffered']
    #allocation8 [shape = 'u8[1048576]{0}', space=vmem, size = 0x100000, scoped, tag = 'input window, operand 3, single buffered']
    #allocation9 [shape = 's32[1]{0}', space=sflag, size = 0x4, scoped, tag = 'scoped memory for _forward_padded.1']
    #allocation10 [shape = 'u8[2048]{0}', space=vmem, size = 0x800, scoped, tag = 'input window, operand 4, single buffered']
    #allocation11 [shape = 'u8[262144]{0}', space=vmem, size = 0x40000, scoped, tag = 'input window, operand 5, single buffered']
    #allocation12 [shape = 's32[1]{0}', space=sflag, size = 0x4, scoped, tag = 'scoped memory for _forward_padded.1']
    #allocation13 [shape = 'u8[1024]{0}', space=vmem, size = 0x400, scoped, tag = 'input window, operand 6, single buffered']
    #allocation14 [shape = 'u8[65536]{0}', space=vmem, size = 0x10000, scoped, tag = 'input window, operand 7, single buffered']
    #allocation15 [shape = 's32[1]{0}', space=sflag, size = 0x4, scoped, tag = 'scoped memory for _forward_padded.1']
    #allocation16 [shape = 'u8[512]{0}', space=vmem, size = 0x400, scoped, tag = 'input window, operand 8, single buffered']
    #allocation17 [shape = 'u8[8192]{0}', space=vmem, size = 0x2000, scoped, tag = 'output window, operand 0']
    %14 = vsyncpa [#allocation3], 0
    %s15 = scalar_lea.sflag [#allocation3], 1
    %16 = vsyncpa %s15, 0
    %17 = vsyncpa [#allocation6], 0
    %18 = vsyncpa [#allocation9], 0
    %19 = vsyncpa [#allocation12], 0
    %20 = vsyncpa [#allocation15], 0
    %21 = vsyncpa [#allocation4], 0
    %s22 = scalar_lea.sflag [#allocation4], 1
    %23 = vsyncpa %s22, 0
    loop: start=0, step=1, limit=4
    $region2: #{_forward_padded.1} parent=1 // loop_pre_header
      _
    $region3: #{_forward_padded.1} parent=1 // loop_header
      %s25 = sphi 0, %s29
      %p26 = scmp.ge.s32.totalorder %s25, 4
      %s35 = sphi 0, %s37
      %s38 = sphi 0, %s35
      %s39 = sphi 0, %s38
      %s55 = sphi 0, %s39
      %s59 = sphi 0, %s59
      %s61 = sphi 0, %s59
      %s62 = sphi 0, %s61
      %s76 = sphi 0, %s62
      %s80 = sphi 0, %s80
      %s82 = sphi 0, %s80
      %s83 = sphi 0, %s82
      %s97 = sphi 0, %s83
      %s101 = sphi 0, %s101
      %s103 = sphi 0, %s101
      %s104 = sphi 0, %s103
      %s118 = sphi 0, %s104
      %s122 = sphi 0, %s122
      %s124 = sphi 0, %s122
      %s125 = sphi 0, %s124
      %s139 = sphi 0, %s125
      %s143 = sphi 0, %s143
      %s145 = sphi 0, %s143
      %s146 = sphi 0, %s145
      %s160 = sphi 0, %s146
      %s164 = sphi 0, %s164
      %s166 = sphi 0, %s164
      %s167 = sphi 0, %s166
      %s181 = sphi 0, %s167
      %s185 = sphi 0, %s185
      %s187 = sphi 0, %s185
      %s188 = sphi 0, %s187
      %s202 = sphi 0, %s188
      %s206 = sphi 0, %s206
      %s208 = sphi 0, %s206
      %s209 = sphi 0, %s208
      %s223 = sphi 0, %s209
      %s229 = sphi 0, %s231
      %s232 = sphi 0, %s229
      %s233 = sphi 0, %s232
      %s249 = sphi 0, %s233
    $region4: #{_forward_padded.1} parent=1 // loop_header_branch
      %28 = sbr.rel (%p26) target = $region8
    $region5: #{_forward_padded.1} parent=1 // loop_body
      %s30 = ssub.s32 %s25, 1
      %s31 = ssub.s32 %s25, 2
      %s32 = sadd.s32 %s25, 1
      %s33 = ssub.s32 %s25, %s32
      %p34 = scmp.eq.s32.totalorder %s33, 0
      %s36 = sadd.s32 %s35, 1
      %s37 = scalar_select %p34, %s35, %s36
      %p40 = pneg %p34
      %p41 = scmp.eq.s32.totalorder %s25, 1
      %p42 = por %p40, %p41
      %p43 = scmp.ne.s32.totalorder %s35, %s38
      %p44 = scmp.eq.s32.totalorder %s25, 0
      %p45 = por %p43, %p44
      %p46 = scmp.ne.s32.totalorder %s35, %s38
      %p47 = scmp.eq.s32.totalorder %s30, 1
      %p48 = por %p46, %p47
      %p49 = scmp.ne.s32.totalorder %s38, %s39
      %p50 = scmp.eq.s32.totalorder %s30, 0
      %p51 = por %p49, %p50
      %p52 = scmp.ne.s32.totalorder %s38, %s39
      %p53 = scmp.eq.s32.totalorder %s31, 1
      %p54 = por %p52, %p53
      %p56 = scmp.ne.s32.totalorder %s39, %s55
      %p57 = scmp.eq.s32.totalorder %s31, 0
      %p58 = por %p56, %p57
      %s60 = sadd.s32 %s59, 1
      %p63 = scmp.eq.s32.totalorder %s25, 1
      %p64 = scmp.ne.s32.totalorder %s59, %s61
      %p65 = scmp.eq.s32.totalorder %s25, 0
      %p66 = por %p64, %p65
      %p67 = scmp.ne.s32.totalorder %s59, %s61
      %p68 = scmp.eq.s32.totalorder %s30, 1
      %p69 = por %p67, %p68
      %p70 = scmp.ne.s32.totalorder %s61, %s62
      %p71 = scmp.eq.s32.totalorder %s30, 0
      %p72 = por %p70, %p71
      %p73 = scmp.ne.s32.totalorder %s61, %s62
      %p74 = scmp.eq.s32.totalorder %s31, 1
      %p75 = por %p73, %p74
      %p77 = scmp.ne.s32.totalorder %s62, %s76
      %p78 = scmp.eq.s32.totalorder %s31, 0
      %p79 = por %p77, %p78
      %s81 = sadd.s32 %s80, 1
      %p84 = scmp.eq.s32.totalorder %s25, 1
      %p85 = scmp.ne.s32.totalorder %s80, %s82
      %p86 = scmp.eq.s32.totalorder %s25, 0
      %p87 = por %p85, %p86
      %p88 = scmp.ne.s32.totalorder %s80, %s82
      %p89 = scmp.eq.s32.totalorder %s30, 1
      %p90 = por %p88, %p89
      %p91 = scmp.ne.s32.totalorder %s82, %s83
      %p92 = scmp.eq.s32.totalorder %s30, 0
      %p93 = por %p91, %p92
      %p94 = scmp.ne.s32.totalorder %s82, %s83
      %p95 = scmp.eq.s32.totalorder %s31, 1
      %p96 = por %p94, %p95
      %p98 = scmp.ne.s32.totalorder %s83, %s97
      %p99 = scmp.eq.s32.totalorder %s31, 0
      %p100 = por %p98, %p99
      %s102 = sadd.s32 %s101, 1
      %p105 = scmp.eq.s32.totalorder %s25, 1
      %p106 = scmp.ne.s32.totalorder %s101, %s103
      %p107 = scmp.eq.s32.totalorder %s25, 0
      %p108 = por %p106, %p107
      %p109 = scmp.ne.s32.totalorder %s101, %s103
      %p110 = scmp.eq.s32.totalorder %s30, 1
      %p111 = por %p109, %p110
      %p112 = scmp.ne.s32.totalorder %s103, %s104
      %p113 = scmp.eq.s32.totalorder %s30, 0
      %p114 = por %p112, %p113
      %p115 = scmp.ne.s32.totalorder %s103, %s104
      %p116 = scmp.eq.s32.totalorder %s31, 1
      %p117 = por %p115, %p116
      %p119 = scmp.ne.s32.totalorder %s104, %s118
      %p120 = scmp.eq.s32.totalorder %s31, 0
      %p121 = por %p119, %p120
      %s123 = sadd.s32 %s122, 1
      %p126 = scmp.eq.s32.totalorder %s25, 1
      %p127 = scmp.ne.s32.totalorder %s122, %s124
      %p128 = scmp.eq.s32.totalorder %s25, 0
      %p129 = por %p127, %p128
      %p130 = scmp.ne.s32.totalorder %s122, %s124
      %p131 = scmp.eq.s32.totalorder %s30, 1
      %p132 = por %p130, %p131
      %p133 = scmp.ne.s32.totalorder %s124, %s125
      %p134 = scmp.eq.s32.totalorder %s30, 0
      %p135 = por %p133, %p134
      %p136 = scmp.ne.s32.totalorder %s124, %s125
      %p137 = scmp.eq.s32.totalorder %s31, 1
      %p138 = por %p136, %p137
      %p140 = scmp.ne.s32.totalorder %s125, %s139
      %p141 = scmp.eq.s32.totalorder %s31, 0
      %p142 = por %p140, %p141
      %s144 = sadd.s32 %s143, 1
      %p147 = scmp.eq.s32.totalorder %s25, 1
      %p148 = scmp.ne.s32.totalorder %s143, %s145
      %p149 = scmp.eq.s32.totalorder %s25, 0
      %p150 = por %p148, %p149
      %p151 = scmp.ne.s32.totalorder %s143, %s145
      %p152 = scmp.eq.s32.totalorder %s30, 1
      %p153 = por %p151, %p152
      %p154 = scmp.ne.s32.totalorder %s145, %s146
      %p155 = scmp.eq.s32.totalorder %s30, 0
      %p156 = por %p154, %p155
      %p157 = scmp.ne.s32.totalorder %s145, %s146
      %p158 = scmp.eq.s32.totalorder %s31, 1
      %p159 = por %p157, %p158
      %p161 = scmp.ne.s32.totalorder %s146, %s160
      %p162 = scmp.eq.s32.totalorder %s31, 0
      %p163 = por %p161, %p162
      %s165 = sadd.s32 %s164, 1
      %p168 = scmp.eq.s32.totalorder %s25, 1
      %p169 = scmp.ne.s32.totalorder %s164, %s166
      %p170 = scmp.eq.s32.totalorder %s25, 0
      %p171 = por %p169, %p170
      %p172 = scmp.ne.s32.totalorder %s164, %s166
      %p173 = scmp.eq.s32.totalorder %s30, 1
      %p174 = por %p172, %p173
      %p175 = scmp.ne.s32.totalorder %s166, %s167
      %p176 = scmp.eq.s32.totalorder %s30, 0
      %p177 = por %p175, %p176
      %p178 = scmp.ne.s32.totalorder %s166, %s167
      %p179 = scmp.eq.s32.totalorder %s31, 1
      %p180 = por %p178, %p179
      %p182 = scmp.ne.s32.totalorder %s167, %s181
      %p183 = scmp.eq.s32.totalorder %s31, 0
      %p184 = por %p182, %p183
      %s186 = sadd.s32 %s185, 1
      %p189 = scmp.eq.s32.totalorder %s25, 1
      %p190 = scmp.ne.s32.totalorder %s185, %s187
      %p191 = scmp.eq.s32.totalorder %s25, 0
      %p192 = por %p190, %p191
      %p193 = scmp.ne.s32.totalorder %s185, %s187
      %p194 = scmp.eq.s32.totalorder %s30, 1
      %p195 = por %p193, %p194
      %p196 = scmp.ne.s32.totalorder %s187, %s188
      %p197 = scmp.eq.s32.totalorder %s30, 0
      %p198 = por %p196, %p197
      %p199 = scmp.ne.s32.totalorder %s187, %s188
      %p200 = scmp.eq.s32.totalorder %s31, 1
      %p201 = por %p199, %p200
      %p203 = scmp.ne.s32.totalorder %s188, %s202
      %p204 = scmp.eq.s32.totalorder %s31, 0
      %p205 = por %p203, %p204
      %s207 = sadd.s32 %s206, 1
      %p210 = scmp.eq.s32.totalorder %s25, 1
      %p211 = scmp.ne.s32.totalorder %s206, %s208
      %p212 = scmp.eq.s32.totalorder %s25, 0
      %p213 = por %p211, %p212
      %p214 = scmp.ne.s32.totalorder %s206, %s208
      %p215 = scmp.eq.s32.totalorder %s30, 1
      %p216 = por %p214, %p215
      %p217 = scmp.ne.s32.totalorder %s208, %s209
      %p218 = scmp.eq.s32.totalorder %s30, 0
      %p219 = por %p217, %p218
      %p220 = scmp.ne.s32.totalorder %s208, %s209
      %p221 = scmp.eq.s32.totalorder %s31, 1
      %p222 = por %p220, %p221
      %p224 = scmp.ne.s32.totalorder %s209, %s223
      %p225 = scmp.eq.s32.totalorder %s31, 0
      %p226 = por %p224, %p225
      %s227 = ssub.s32 %s25, %s32
      %p228 = scmp.eq.s32.totalorder %s227, 0
      %s230 = sadd.s32 %s229, 1
      %s231 = scalar_select %p228, %s229, %s230
      %p234 = pneg %p228
      %p235 = scmp.eq.s32.totalorder %s25, 1
      %p236 = por %p234, %p235
      %p237 = scmp.ne.s32.totalorder %s229, %s232
      %p238 = scmp.eq.s32.totalorder %s25, 0
      %p239 = por %p237, %p238
      %p240 = scmp.ne.s32.totalorder %s229, %s232
      %p241 = scmp.eq.s32.totalorder %s30, 1
      %p242 = por %p240, %p241
      %p243 = scmp.ne.s32.totalorder %s232, %s233
      %p244 = scmp.eq.s32.totalorder %s30, 0
      %p245 = por %p243, %p244
      %p246 = scmp.ne.s32.totalorder %s232, %s233
      %p247 = scmp.eq.s32.totalorder %s31, 1
      %p248 = por %p246, %p247
      %p250 = scmp.ne.s32.totalorder %s233, %s249
      %p251 = scmp.eq.s32.totalorder %s31, 0
      %p252 = por %p250, %p251
      %p253 = scmp.le.s32.totalorder 1, %s25
      %p254 = scmp.lt.s32.totalorder %s25, 3
      %p255 = pnand %p253, %p254
      %p256 = pneg %p255
      // Predicated region
      $region9: #{_forward_padded.1} parent=5 // pred_check
        _
      $region10: #{_forward_padded.1} parent=5 // pred_check_branch
        %258 = sbr.rel (%p255) target = $region12
      $region11: #{_forward_padded.1} parent=5 // pred_region
        %s259 = ssub.s32 %s25, 1
        // Predicated region
        $region13: #{_forward_padded.1} parent=11 // pred_check
          %p260 = pneg %p72
        $region14: #{_forward_padded.1} parent=11 // pred_check_branch
          %262 = sbr.rel (%p260) target = $region16
        $region15: #{_forward_padded.1} parent=11 // pred_region
          %s264 = ssub.s32 131072, 131072
          %265 = vsyncadd [#allocation6], %s264
          %s266 = sshll.u32 [#allocation5], 4
          %s267 = int_to_ptr.vmem [resolvable:$true] %s266
          %272 = dma.hbm_to_vmem [thread:$0]  %s1, 131072, %s267, [#allocation6], 512, 512, 32
        $region16: #{_forward_padded.1} parent=11 // pred_fallthru
          _
        // Predicated region
        $region17: #{_forward_padded.1} parent=11 // pred_check
          %p273 = pneg %p93
        $region18: #{_forward_padded.1} parent=11 // pred_check_branch
          %275 = sbr.rel (%p273) target = $region20
        $region19: #{_forward_padded.1} parent=11 // pred_region
          %s277 = ssub.s32 128, 128
          %278 = vsyncadd [#allocation6], %s277
          %s280 = sshll.u32 [#allocation7], 4
          %s281 = int_to_ptr.vmem [resolvable:$true] %s280
          %283 = dma.hbm_to_vmem [thread:$0]  %s2, 128, %s281, [#allocation6]
        $region20: #{_forward_padded.1} parent=11 // pred_fallthru
          _
        // Predicated region
        $region21: #{_forward_padded.1} parent=11 // pred_check
          %p284 = pneg %p114
        $region22: #{_forward_padded.1} parent=11 // pred_check_branch
          %286 = sbr.rel (%p284) target = $region24
        $region23: #{_forward_padded.1} parent=11 // pred_region
          %s288 = ssub.s32 32768, 32768
          %289 = vsyncadd [#allocation9], %s288
          %s290 = sshll.u32 [#allocation8], 4
          %s291 = int_to_ptr.vmem [resolvable:$true] %s290
          %296 = dma.hbm_to_vmem [thread:$0]  %s3, 32768, %s291, [#allocation9], 256, 256, 16
        $region24: #{_forward_padded.1} parent=11 // pred_fallthru
          _
        // Predicated region
        $region25: #{_forward_padded.1} parent=11 // pred_check
          %p297 = pneg %p135
        $region26: #{_forward_padded.1} parent=11 // pred_check_branch
          %299 = sbr.rel (%p297) target = $region28
        $region27: #{_forward_padded.1} parent=11 // pred_region
          %s301 = ssub.s32 64, 64
          %302 = vsyncadd [#allocation9], %s301
          %s304 = sshll.u32 [#allocation10], 4
          %s305 = int_to_ptr.vmem [resolvable:$true] %s304
          %307 = dma.hbm_to_vmem [thread:$0]  %s4, 64, %s305, [#allocation9]
        $region28: #{_forward_padded.1} parent=11 // pred_fallthru
          _
        // Predicated region
        $region29: #{_forward_padded.1} parent=11 // pred_check
          %p308 = pneg %p156
        $region30: #{_forward_padded.1} parent=11 // pred_check_branch
          %310 = sbr.rel (%p308) target = $region32
        $region31: #{_forward_padded.1} parent=11 // pred_region
          %s312 = ssub.s32 8192, 8192
          %313 = vsyncadd [#allocation12], %s312
          %s314 = sshll.u32 [#allocation11], 4
          %s315 = int_to_ptr.vmem [resolvable:$true] %s314
          %320 = dma.hbm_to_vmem [thread:$0]  %s5, 8192, %s315, [#allocation12], 128, 128, 8
        $region32: #{_forward_padded.1} parent=11 // pred_fallthru
          _
        // Predicated region
        $region33: #{_forward_padded.1} parent=11 // pred_check
          %p321 = pneg %p177
        $region34: #{_forward_padded.1} parent=11 // pred_check_branch
          %323 = sbr.rel (%p321) target = $region36
        $region35: #{_forward_padded.1} parent=11 // pred_region
          %s325 = ssub.s32 32, 32
          %326 = vsyncadd [#allocation12], %s325
          %s328 = sshll.u32 [#allocation13], 4
          %s329 = int_to_ptr.vmem [resolvable:$true] %s328
          %331 = dma.hbm_to_vmem [thread:$0]  %s6, 32, %s329, [#allocation12]
        $region36: #{_forward_padded.1} parent=11 // pred_fallthru
          _
        // Predicated region
        $region37: #{_forward_padded.1} parent=11 // pred_check
          %p332 = pneg %p198
        $region38: #{_forward_padded.1} parent=11 // pred_check_branch
          %334 = sbr.rel (%p332) target = $region40
        $region39: #{_forward_padded.1} parent=11 // pred_region
          %s336 = ssub.s32 2048, 2048
          %337 = vsyncadd [#allocation15], %s336
          %s338 = sshll.u32 [#allocation14], 4
          %s339 = int_to_ptr.vmem [resolvable:$true] %s338
          %344 = dma.hbm_to_vmem [thread:$0]  %s7, 2048, %s339, [#allocation15], 64, 64, 4
        $region40: #{_forward_padded.1} parent=11 // pred_fallthru
          _
        // Predicated region
        $region41: #{_forward_padded.1} parent=11 // pred_check
          %p345 = pneg %p219
        $region42: #{_forward_padded.1} parent=11 // pred_check_branch
          %347 = sbr.rel (%p345) target = $region44
        $region43: #{_forward_padded.1} parent=11 // pred_region
          %s349 = ssub.s32 16, 16
          %350 = vsyncadd [#allocation15], %s349
          %s352 = sshll.u32 [#allocation16], 4
          %s353 = int_to_ptr.vmem [resolvable:$true] %s352
          %355 = dma.hbm_to_vmem [thread:$0]  %s8, 16, %s353, [#allocation15]
        $region44: #{_forward_padded.1} parent=11 // pred_fallthru
          _
      $region12: #{_forward_padded.1} parent=5 // pred_fallthru
        _
      %p356 = scmp.lt.s32.totalorder %s25, 2
      // Predicated region
      $region45: #{_forward_padded.1} parent=5 // pred_check
        %p357 = pneg %p356
      $region46: #{_forward_padded.1} parent=5 // pred_check_branch
        %359 = sbr.rel (%p357) target = $region48
      $region47: #{_forward_padded.1} parent=5 // pred_region
        // Predicated region
        $region49: #{_forward_padded.1} parent=47 // pred_check
          %p360 = pneg %p45
        $region50: #{_forward_padded.1} parent=47 // pred_check_branch
          %362 = sbr.rel (%p360) target = $region52
        $region51: #{_forward_padded.1} parent=47 // pred_region
          %s363 = sand.u32 %s35, 1
          %s364 = scalar_lea.sflag [#allocation3], %s363
          %s365 = sand.u32 %s35, 1
          %s366 = smul.addr %s365, 64
          %s367 = scalar_lea.vmem [#allocation2], %s366
          %s369 = ssub.s32 1024, 1024
          %370 = vsyncadd %s364, %s369
          %s371 = smul.addr %s25, 16
          %s372 = smul.addr %s371, 64
          %s373 = scalar_lea.hbm %s0, %s372
          %s375 = sshll.u32 %s367, 4
          %s376 = int_to_ptr.vmem [resolvable:$true] %s375
          %378 = dma.hbm_to_vmem [thread:$0]  %s373, 1024, %s376, %s364
        $region52: #{_forward_padded.1} parent=47 // pred_fallthru
          _
      $region48: #{_forward_padded.1} parent=5 // pred_fallthru
        _
      %p379 = scmp.le.s32.totalorder 1, %s25
      %p380 = scmp.lt.s32.totalorder %s25, 3
      %p381 = pnand %p379, %p380
      %p382 = pneg %p381
      // Predicated region
      $region53: #{_forward_padded.1} parent=5 // pred_check
        _
      $region54: #{_forward_padded.1} parent=5 // pred_check_branch
        %384 = sbr.rel (%p381) target = $region56
      $region55: #{_forward_padded.1} parent=5 // pred_region
        %s385 = ssub.s32 %s25, 1
        %s386 = sand.u32 %s38, 1
        %s387 = scalar_lea.sflag [#allocation3], %s386
        %s388 = sand.u32 %s38, 1
        %s389 = smul.addr %s388, 64
        %s390 = scalar_lea.vmem [#allocation2], %s389
        // Predicated region
        $region57: #{_forward_padded.1} parent=55 // pred_check
          %p391 = pneg %p51
        $region58: #{_forward_padded.1} parent=55 // pred_check_branch
          %393 = sbr.rel (%p391) target = $region60
        $region59: #{_forward_padded.1} parent=55 // pred_region
          %394 = dma.done %s387, 1024
        $region60: #{_forward_padded.1} parent=55 // pred_fallthru
          _
        // Predicated region
        $region61: #{_forward_padded.1} parent=55 // pred_check
          %p395 = pneg %p72
        $region62: #{_forward_padded.1} parent=55 // pred_check_branch
          %397 = sbr.rel (%p395) target = $region64
        $region63: #{_forward_padded.1} parent=55 // pred_region
          %398 = dma.done [#allocation6], 131072
        $region64: #{_forward_padded.1} parent=55 // pred_fallthru
          _
        // Predicated region
        $region65: #{_forward_padded.1} parent=55 // pred_check
          %p399 = pneg %p93
        $region66: #{_forward_padded.1} parent=55 // pred_check_branch
          %401 = sbr.rel (%p399) target = $region68
        $region67: #{_forward_padded.1} parent=55 // pred_region
          %402 = dma.done [#allocation6], 128
        $region68: #{_forward_padded.1} parent=55 // pred_fallthru
          _
        // Predicated region
        $region69: #{_forward_padded.1} parent=55 // pred_check
          %p403 = pneg %p114
        $region70: #{_forward_padded.1} parent=55 // pred_check_branch
          %405 = sbr.rel (%p403) target = $region72
        $region71: #{_forward_padded.1} parent=55 // pred_region
          %406 = dma.done [#allocation9], 32768
        $region72: #{_forward_padded.1} parent=55 // pred_fallthru
          _
        // Predicated region
        $region73: #{_forward_padded.1} parent=55 // pred_check
          %p407 = pneg %p135
        $region74: #{_forward_padded.1} parent=55 // pred_check_branch
          %409 = sbr.rel (%p407) target = $region76
        $region75: #{_forward_padded.1} parent=55 // pred_region
          %410 = dma.done [#allocation9], 64
        $region76: #{_forward_padded.1} parent=55 // pred_fallthru
          _
        // Predicated region
        $region77: #{_forward_padded.1} parent=55 // pred_check
          %p411 = pneg %p156
        $region78: #{_forward_padded.1} parent=55 // pred_check_branch
          %413 = sbr.rel (%p411) target = $region80
        $region79: #{_forward_padded.1} parent=55 // pred_region
          %414 = dma.done [#allocation12], 8192
        $region80: #{_forward_padded.1} parent=55 // pred_fallthru
          _
        // Predicated region
        $region81: #{_forward_padded.1} parent=55 // pred_check
          %p415 = pneg %p177
        $region82: #{_forward_padded.1} parent=55 // pred_check_branch
          %417 = sbr.rel (%p415) target = $region84
        $region83: #{_forward_padded.1} parent=55 // pred_region
          %418 = dma.done [#allocation12], 32
        $region84: #{_forward_padded.1} parent=55 // pred_fallthru
          _
        // Predicated region
        $region85: #{_forward_padded.1} parent=55 // pred_check
          %p419 = pneg %p198
        $region86: #{_forward_padded.1} parent=55 // pred_check_branch
          %421 = sbr.rel (%p419) target = $region88
        $region87: #{_forward_padded.1} parent=55 // pred_region
          %422 = dma.done [#allocation15], 2048
        $region88: #{_forward_padded.1} parent=55 // pred_fallthru
          _
        // Predicated region
        $region89: #{_forward_padded.1} parent=55 // pred_check
          %p423 = pneg %p219
        $region90: #{_forward_padded.1} parent=55 // pred_check_branch
          %425 = sbr.rel (%p423) target = $region92
        $region91: #{_forward_padded.1} parent=55 // pred_region
          %426 = dma.done [#allocation15], 16
        $region92: #{_forward_padded.1} parent=55 // pred_fallthru
          _
        %s427 = sand.u32 %s38, 1
        %s428 = scalar_lea.sflag [#allocation3], %s427
        %s429 = sand.u32 %s38, 1
        %s430 = smul.addr %s429, 64
        %s431 = scalar_lea.vmem [#allocation2], %s430
        %p432 = pneg %p51
        %p433 = pneg %p48
        %p434 = pneg %p72
        %p435 = pneg %p69
        %p436 = pneg %p93
        %p437 = pneg %p90
        %p438 = pneg %p114
        %p439 = pneg %p111
        %p440 = pneg %p135
        %p441 = pneg %p132
        %p442 = pneg %p156
        %p443 = pneg %p153
        %p444 = pneg %p177
        %p445 = pneg %p174
        %p446 = pneg %p198
        %p447 = pneg %p195
        %p448 = pneg %p219
        %p449 = pneg %p216
        %p450 = pneg %p245
        %p451 = pneg %p242
        %s452 = sand.u32 %s232, 1
        %s453 = scalar_lea.sflag [#allocation4], %s452
        %s454 = sand.u32 %s232, 1
        %s455 = smul.addr %s454, 8
        %s456 = scalar_lea.vmem [#allocation17], %s455
        %v458 = vld [vmem:[%s390] sm:$0xff]
        %v459 = vld [vmem:[%s390 + $0x8] sm:$0xff]
        %v460 = vld [vmem:[%s390 + $0x10] sm:$0xff]
        %v461 = vld [vmem:[%s390 + $0x18] sm:$0xff]
        %v462 = vld [vmem:[%s390 + $0x20] sm:$0xff]
        %v463 = vld [vmem:[%s390 + $0x28] sm:$0xff]
        %v464 = vld [vmem:[%s390 + $0x30] sm:$0xff]
        %v465 = vld [vmem:[%s390 + $0x38] sm:$0xff]
        %v466 = vld [vmem:[#allocation5] sm:$0xff]
        %v467 = vld [vmem:[#allocation5 + $0x8] sm:$0xff]
        %v468 = vld [vmem:[#allocation5 + $0x10] sm:$0xff]
        %v469 = vld [vmem:[#allocation5 + $0x18] sm:$0xff]
        %v470 = vld [vmem:[#allocation5 + $0x20] sm:$0xff]
        %v471 = vld [vmem:[#allocation5 + $0x28] sm:$0xff]
        %v472 = vld [vmem:[#allocation5 + $0x30] sm:$0xff]
        %v473 = vld [vmem:[#allocation5 + $0x38] sm:$0xff]
        %v474 = vld [vmem:[#allocation5 + $0x40] sm:$0xff]
        %v475 = vld [vmem:[#allocation5 + $0x48] sm:$0xff]
        %v476 = vld [vmem:[#allocation5 + $0x50] sm:$0xff]
        %v477 = vld [vmem:[#allocation5 + $0x58] sm:$0xff]
        %v478 = vld [vmem:[#allocation5 + $0x60] sm:$0xff]
        %v479 = vld [vmem:[#allocation5 + $0x68] sm:$0xff]
        %v480 = vld [vmem:[#allocation5 + $0x70] sm:$0xff]
        %v481 = vld [vmem:[#allocation5 + $0x78] sm:$0xff]
        %v482 = vld [vmem:[#allocation5 + $0x80] sm:$0xff]
        %v483 = vld [vmem:[#allocation5 + $0x88] sm:$0xff]
        %v484 = vld [vmem:[#allocation5 + $0x90] sm:$0xff]
        %v485 = vld [vmem:[#allocation5 + $0x98] sm:$0xff]
        %v486 = vld [vmem:[#allocation5 + $0xa0] sm:$0xff]
        %v487 = vld [vmem:[#allocation5 + $0xa8] sm:$0xff]
        %v488 = vld [vmem:[#allocation5 + $0xb0] sm:$0xff]
        %v489 = vld [vmem:[#allocation5 + $0xb8] sm:$0xff]
        %v490 = vld [vmem:[#allocation5 + $0xc0] sm:$0xff]
        %v491 = vld [vmem:[#allocation5 + $0xc8] sm:$0xff]
        %v492 = vld [vmem:[#allocation5 + $0xd0] sm:$0xff]
        %v493 = vld [vmem:[#allocation5 + $0xd8] sm:$0xff]
        %v494 = vld [vmem:[#allocation5 + $0xe0] sm:$0xff]
        %v495 = vld [vmem:[#allocation5 + $0xe8] sm:$0xff]
        %v496 = vld [vmem:[#allocation5 + $0xf0] sm:$0xff]
        %v497 = vld [vmem:[#allocation5 + $0xf8] sm:$0xff]
        %v498 = vld [vmem:[#allocation5 + $0x100] sm:$0xff]
        %v499 = vld [vmem:[#allocation5 + $0x108] sm:$0xff]
        %v500 = vld [vmem:[#allocation5 + $0x110] sm:$0xff]
        %v501 = vld [vmem:[#allocation5 + $0x118] sm:$0xff]
        %v502 = vld [vmem:[#allocation5 + $0x120] sm:$0xff]
        %v503 = vld [vmem:[#allocation5 + $0x128] sm:$0xff]
        %v504 = vld [vmem:[#allocation5 + $0x130] sm:$0xff]
        %v505 = vld [vmem:[#allocation5 + $0x138] sm:$0xff]
        %v506 = vld [vmem:[#allocation5 + $0x140] sm:$0xff]
        %v507 = vld [vmem:[#allocation5 + $0x148] sm:$0xff]
        %v508 = vld [vmem:[#allocation5 + $0x150] sm:$0xff]
        %v509 = vld [vmem:[#allocation5 + $0x158] sm:$0xff]
        %v510 = vld [vmem:[#allocation5 + $0x160] sm:$0xff]
        %v511 = vld [vmem:[#allocation5 + $0x168] sm:$0xff]
        %v512 = vld [vmem:[#allocation5 + $0x170] sm:$0xff]
        %v513 = vld [vmem:[#allocation5 + $0x178] sm:$0xff]
        %v514 = vld [vmem:[#allocation5 + $0x180] sm:$0xff]
        %v515 = vld [vmem:[#allocation5 + $0x188] sm:$0xff]
        %v516 = vld [vmem:[#allocation5 + $0x190] sm:$0xff]
        %v517 = vld [vmem:[#allocation5 + $0x198] sm:$0xff]
        %v518 = vld [vmem:[#allocation5 + $0x1a0] sm:$0xff]
        %v519 = vld [vmem:[#allocation5 + $0x1a8] sm:$0xff]
        %v520 = vld [vmem:[#allocation5 + $0x1b0] sm:$0xff]
        %v521 = vld [vmem:[#allocation5 + $0x1b8] sm:$0xff]
        %v522 = vld [vmem:[#allocation5 + $0x1c0] sm:$0xff]
        %v523 = vld [vmem:[#allocation5 + $0x1c8] sm:$0xff]
        %v524 = vld [vmem:[#allocation5 + $0x1d0] sm:$0xff]
        %v525 = vld [vmem:[#allocation5 + $0x1d8] sm:$0xff]
        %v526 = vld [vmem:[#allocation5 + $0x1e0] sm:$0xff]
        %v527 = vld [vmem:[#allocation5 + $0x1e8] sm:$0xff]
        %v528 = vld [vmem:[#allocation5 + $0x1f0] sm:$0xff]
        %v529 = vld [vmem:[#allocation5 + $0x1f8] sm:$0xff]
        %v530 = vld [vmem:[#allocation5 + $0x200] sm:$0xff]
        %v531 = vld [vmem:[#allocation5 + $0x208] sm:$0xff]
        %v532 = vld [vmem:[#allocation5 + $0x210] sm:$0xff]
        %v533 = vld [vmem:[#allocation5 + $0x218] sm:$0xff]
        %v534 = vld [vmem:[#allocation5 + $0x220] sm:$0xff]
        %v535 = vld [vmem:[#allocation5 + $0x228] sm:$0xff]
        %v536 = vld [vmem:[#allocation5 + $0x230] sm:$0xff]
        %v537 = vld [vmem:[#allocation5 + $0x238] sm:$0xff]
        %v538 = vld [vmem:[#allocation5 + $0x240] sm:$0xff]
        %v539 = vld [vmem:[#allocation5 + $0x248] sm:$0xff]
        %v540 = vld [vmem:[#allocation5 + $0x250] sm:$0xff]
        %v541 = vld [vmem:[#allocation5 + $0x258] sm:$0xff]
        %v542 = vld [vmem:[#allocation5 + $0x260] sm:$0xff]
        %v543 = vld [vmem:[#allocation5 + $0x268] sm:$0xff]
        %v544 = vld [vmem:[#allocation5 + $0x270] sm:$0xff]
        %v545 = vld [vmem:[#allocation5 + $0x278] sm:$0xff]
        %v546 = vld [vmem:[#allocation5 + $0x280] sm:$0xff]
        %v547 = vld [vmem:[#allocation5 + $0x288] sm:$0xff]
        %v548 = vld [vmem:[#allocation5 + $0x290] sm:$0xff]
        %v549 = vld [vmem:[#allocation5 + $0x298] sm:$0xff]
        %v550 = vld [vmem:[#allocation5 + $0x2a0] sm:$0xff]
        %v551 = vld [vmem:[#allocation5 + $0x2a8] sm:$0xff]
        %v552 = vld [vmem:[#allocation5 + $0x2b0] sm:$0xff]
        %v553 = vld [vmem:[#allocation5 + $0x2b8] sm:$0xff]
        %v554 = vld [vmem:[#allocation5 + $0x2c0] sm:$0xff]
        %v555 = vld [vmem:[#allocation5 + $0x2c8] sm:$0xff]
        %v556 = vld [vmem:[#allocation5 + $0x2d0] sm:$0xff]
        %v557 = vld [vmem:[#allocation5 + $0x2d8] sm:$0xff]
        %v558 = vld [vmem:[#allocation5 + $0x2e0] sm:$0xff]
        %v559 = vld [vmem:[#allocation5 + $0x2e8] sm:$0xff]
        %v560 = vld [vmem:[#allocation5 + $0x2f0] sm:$0xff]
        %v561 = vld [vmem:[#allocation5 + $0x2f8] sm:$0xff]
        %v562 = vld [vmem:[#allocation5 + $0x300] sm:$0xff]
        %v563 = vld [vmem:[#allocation5 + $0x308] sm:$0xff]
        %v564 = vld [vmem:[#allocation5 + $0x310] sm:$0xff]
        %v565 = vld [vmem:[#allocation5 + $0x318] sm:$0xff]
        %v566 = vld [vmem:[#allocation5 + $0x320] sm:$0xff]
        %v567 = vld [vmem:[#allocation5 + $0x328] sm:$0xff]
        %v568 = vld [vmem:[#allocation5 + $0x330] sm:$0xff]
        %v569 = vld [vmem:[#allocation5 + $0x338] sm:$0xff]
        %v570 = vld [vmem:[#allocation5 + $0x340] sm:$0xff]
        %v571 = vld [vmem:[#allocation5 + $0x348] sm:$0xff]
        %v572 = vld [vmem:[#allocation5 + $0x350] sm:$0xff]
        %v573 = vld [vmem:[#allocation5 + $0x358] sm:$0xff]
        %v574 = vld [vmem:[#allocation5 + $0x360] sm:$0xff]
        %v575 = vld [vmem:[#allocation5 + $0x368] sm:$0xff]
        %v576 = vld [vmem:[#allocation5 + $0x370] sm:$0xff]
        %v577 = vld [vmem:[#allocation5 + $0x378] sm:$0xff]
        %v578 = vld [vmem:[#allocation5 + $0x380] sm:$0xff]
        %v579 = vld [vmem:[#allocation5 + $0x388] sm:$0xff]
        %v580 = vld [vmem:[#allocation5 + $0x390] sm:$0xff]
        %v581 = vld [vmem:[#allocation5 + $0x398] sm:$0xff]
        %v582 = vld [vmem:[#allocation5 + $0x3a0] sm:$0xff]
        %v583 = vld [vmem:[#allocation5 + $0x3a8] sm:$0xff]
        %v584 = vld [vmem:[#allocation5 + $0x3b0] sm:$0xff]
        %v585 = vld [vmem:[#allocation5 + $0x3b8] sm:$0xff]
        %v586 = vld [vmem:[#allocation5 + $0x3c0] sm:$0xff]
        %v587 = vld [vmem:[#allocation5 + $0x3c8] sm:$0xff]
        %v588 = vld [vmem:[#allocation5 + $0x3d0] sm:$0xff]
        %v589 = vld [vmem:[#allocation5 + $0x3d8] sm:$0xff]
        %v590 = vld [vmem:[#allocation5 + $0x3e0] sm:$0xff]
        %v591 = vld [vmem:[#allocation5 + $0x3e8] sm:$0xff]
        %v592 = vld [vmem:[#allocation5 + $0x3f0] sm:$0xff]
        %v593 = vld [vmem:[#allocation5 + $0x3f8] sm:$0xff]
        %v594 = vld [vmem:[#allocation5 + $0x400] sm:$0xff]
        %v595 = vld [vmem:[#allocation5 + $0x408] sm:$0xff]
        %v596 = vld [vmem:[#allocation5 + $0x410] sm:$0xff]
        %v597 = vld [vmem:[#allocation5 + $0x418] sm:$0xff]
        %v598 = vld [vmem:[#allocation5 + $0x420] sm:$0xff]
        %v599 = vld [vmem:[#allocation5 + $0x428] sm:$0xff]
        %v600 = vld [vmem:[#allocation5 + $0x430] sm:$0xff]
        %v601 = vld [vmem:[#allocation5 + $0x438] sm:$0xff]
        %v602 = vld [vmem:[#allocation5 + $0x440] sm:$0xff]
        %v603 = vld [vmem:[#allocation5 + $0x448] sm:$0xff]
        %v604 = vld [vmem:[#allocation5 + $0x450] sm:$0xff]
        %v605 = vld [vmem:[#allocation5 + $0x458] sm:$0xff]
        %v606 = vld [vmem:[#allocation5 + $0x460] sm:$0xff]
        %v607 = vld [vmem:[#allocation5 + $0x468] sm:$0xff]
        %v608 = vld [vmem:[#allocation5 + $0x470] sm:$0xff]
        %v609 = vld [vmem:[#allocation5 + $0x478] sm:$0xff]
        %v610 = vld [vmem:[#allocation5 + $0x480] sm:$0xff]
        %v611 = vld [vmem:[#allocation5 + $0x488] sm:$0xff]
        %v612 = vld [vmem:[#allocation5 + $0x490] sm:$0xff]
        %v613 = vld [vmem:[#allocation5 + $0x498] sm:$0xff]
        %v614 = vld [vmem:[#allocation5 + $0x4a0] sm:$0xff]
        %v615 = vld [vmem:[#allocation5 + $0x4a8] sm:$0xff]
        %v616 = vld [vmem:[#allocation5 + $0x4b0] sm:$0xff]
        %v617 = vld [vmem:[#allocation5 + $0x4b8] sm:$0xff]
        %v618 = vld [vmem:[#allocation5 + $0x4c0] sm:$0xff]
        %v619 = vld [vmem:[#allocation5 + $0x4c8] sm:$0xff]
        %v620 = vld [vmem:[#allocation5 + $0x4d0] sm:$0xff]
        %v621 = vld [vmem:[#allocation5 + $0x4d8] sm:$0xff]
        %v622 = vld [vmem:[#allocation5 + $0x4e0] sm:$0xff]
        %v623 = vld [vmem:[#allocation5 + $0x4e8] sm:$0xff]
        %v624 = vld [vmem:[#allocation5 + $0x4f0] sm:$0xff]
        %v625 = vld [vmem:[#allocation5 + $0x4f8] sm:$0xff]
        %v626 = vld [vmem:[#allocation5 + $0x500] sm:$0xff]
        %v627 = vld [vmem:[#allocation5 + $0x508] sm:$0xff]
        %v628 = vld [vmem:[#allocation5 + $0x510] sm:$0xff]
        %v629 = vld [vmem:[#allocation5 + $0x518] sm:$0xff]
        %v630 = vld [vmem:[#allocation5 + $0x520] sm:$0xff]
        %v631 = vld [vmem:[#allocation5 + $0x528] sm:$0xff]
        %v632 = vld [vmem:[#allocation5 + $0x530] sm:$0xff]
        %v633 = vld [vmem:[#allocation5 + $0x538] sm:$0xff]
        %v634 = vld [vmem:[#allocation5 + $0x540] sm:$0xff]
        %v635 = vld [vmem:[#allocation5 + $0x548] sm:$0xff]
        %v636 = vld [vmem:[#allocation5 + $0x550] sm:$0xff]
        %v637 = vld [vmem:[#allocation5 + $0x558] sm:$0xff]
        %v638 = vld [vmem:[#allocation5 + $0x560] sm:$0xff]
        %v639 = vld [vmem:[#allocation5 + $0x568] sm:$0xff]
        %v640 = vld [vmem:[#allocation5 + $0x570] sm:$0xff]
        %v641 = vld [vmem:[#allocation5 + $0x578] sm:$0xff]
        %v642 = vld [vmem:[#allocation5 + $0x580] sm:$0xff]
        %v643 = vld [vmem:[#allocation5 + $0x588] sm:$0xff]
        %v644 = vld [vmem:[#allocation5 + $0x590] sm:$0xff]
        %v645 = vld [vmem:[#allocation5 + $0x598] sm:$0xff]
        %v646 = vld [vmem:[#allocation5 + $0x5a0] sm:$0xff]
        %v647 = vld [vmem:[#allocation5 + $0x5a8] sm:$0xff]
        %v648 = vld [vmem:[#allocation5 + $0x5b0] sm:$0xff]
        %v649 = vld [vmem:[#allocation5 + $0x5b8] sm:$0xff]
        %v650 = vld [vmem:[#allocation5 + $0x5c0] sm:$0xff]
        %v651 = vld [vmem:[#allocation5 + $0x5c8] sm:$0xff]
        %v652 = vld [vmem:[#allocation5 + $0x5d0] sm:$0xff]
        %v653 = vld [vmem:[#allocation5 + $0x5d8] sm:$0xff]
        %v654 = vld [vmem:[#allocation5 + $0x5e0] sm:$0xff]
        %v655 = vld [vmem:[#allocation5 + $0x5e8] sm:$0xff]
        %v656 = vld [vmem:[#allocation5 + $0x5f0] sm:$0xff]
        %v657 = vld [vmem:[#allocation5 + $0x5f8] sm:$0xff]
        %v658 = vld [vmem:[#allocation5 + $0x600] sm:$0xff]
        %v659 = vld [vmem:[#allocation5 + $0x608] sm:$0xff]
        %v660 = vld [vmem:[#allocation5 + $0x610] sm:$0xff]
        %v661 = vld [vmem:[#allocation5 + $0x618] sm:$0xff]
        %v662 = vld [vmem:[#allocation5 + $0x620] sm:$0xff]
        %v663 = vld [vmem:[#allocation5 + $0x628] sm:$0xff]
        %v664 = vld [vmem:[#allocation5 + $0x630] sm:$0xff]
        %v665 = vld [vmem:[#allocation5 + $0x638] sm:$0xff]
        %v666 = vld [vmem:[#allocation5 + $0x640] sm:$0xff]
        %v667 = vld [vmem:[#allocation5 + $0x648] sm:$0xff]
        %v668 = vld [vmem:[#allocation5 + $0x650] sm:$0xff]
        %v669 = vld [vmem:[#allocation5 + $0x658] sm:$0xff]
        %v670 = vld [vmem:[#allocation5 + $0x660] sm:$0xff]
        %v671 = vld [vmem:[#allocation5 + $0x668] sm:$0xff]
        %v672 = vld [vmem:[#allocation5 + $0x670] sm:$0xff]
        %v673 = vld [vmem:[#allocation5 + $0x678] sm:$0xff]
        %v674 = vld [vmem:[#allocation5 + $0x680] sm:$0xff]
        %v675 = vld [vmem:[#allocation5 + $0x688] sm:$0xff]
        %v676 = vld [vmem:[#allocation5 + $0x690] sm:$0xff]
        %v677 = vld [vmem:[#allocation5 + $0x698] sm:$0xff]
        %v678 = vld [vmem:[#allocation5 + $0x6a0] sm:$0xff]
        %v679 = vld [vmem:[#allocation5 + $0x6a8] sm:$0xff]
        %v680 = vld [vmem:[#allocation5 + $0x6b0] sm:$0xff]
        %v681 = vld [vmem:[#allocation5 + $0x6b8] sm:$0xff]
        %v682 = vld [vmem:[#allocation5 + $0x6c0] sm:$0xff]
        %v683 = vld [vmem:[#allocation5 + $0x6c8] sm:$0xff]
        %v684 = vld [vmem:[#allocation5 + $0x6d0] sm:$0xff]
        %v685 = vld [vmem:[#allocation5 + $0x6d8] sm:$0xff]
        %v686 = vld [vmem:[#allocation5 + $0x6e0] sm:$0xff]
        %v687 = vld [vmem:[#allocation5 + $0x6e8] sm:$0xff]
        %v688 = vld [vmem:[#allocation5 + $0x6f0] sm:$0xff]
        %v689 = vld [vmem:[#allocation5 + $0x6f8] sm:$0xff]
        %v690 = vld [vmem:[#allocation5 + $0x700] sm:$0xff]
        %v691 = vld [vmem:[#allocation5 + $0x708] sm:$0xff]
        %v692 = vld [vmem:[#allocation5 + $0x710] sm:$0xff]
        %v693 = vld [vmem:[#allocation5 + $0x718] sm:$0xff]
        %v694 = vld [vmem:[#allocation5 + $0x720] sm:$0xff]
        %v695 = vld [vmem:[#allocation5 + $0x728] sm:$0xff]
        %v696 = vld [vmem:[#allocation5 + $0x730] sm:$0xff]
        %v697 = vld [vmem:[#allocation5 + $0x738] sm:$0xff]
        %v698 = vld [vmem:[#allocation5 + $0x740] sm:$0xff]
        %v699 = vld [vmem:[#allocation5 + $0x748] sm:$0xff]
        %v700 = vld [vmem:[#allocation5 + $0x750] sm:$0xff]
        %v701 = vld [vmem:[#allocation5 + $0x758] sm:$0xff]
        %v702 = vld [vmem:[#allocation5 + $0x760] sm:$0xff]
        %v703 = vld [vmem:[#allocation5 + $0x768] sm:$0xff]
        %v704 = vld [vmem:[#allocation5 + $0x770] sm:$0xff]
        %v705 = vld [vmem:[#allocation5 + $0x778] sm:$0xff]
        %v706 = vld [vmem:[#allocation5 + $0x780] sm:$0xff]
        %v707 = vld [vmem:[#allocation5 + $0x788] sm:$0xff]
        %v708 = vld [vmem:[#allocation5 + $0x790] sm:$0xff]
        %v709 = vld [vmem:[#allocation5 + $0x798] sm:$0xff]
        %v710 = vld [vmem:[#allocation5 + $0x7a0] sm:$0xff]
        %v711 = vld [vmem:[#allocation5 + $0x7a8] sm:$0xff]
        %v712 = vld [vmem:[#allocation5 + $0x7b0] sm:$0xff]
        %v713 = vld [vmem:[#allocation5 + $0x7b8] sm:$0xff]
        %v714 = vld [vmem:[#allocation5 + $0x7c0] sm:$0xff]
        %v715 = vld [vmem:[#allocation5 + $0x7c8] sm:$0xff]
        %v716 = vld [vmem:[#allocation5 + $0x7d0] sm:$0xff]
        %v717 = vld [vmem:[#allocation5 + $0x7d8] sm:$0xff]
        %v718 = vld [vmem:[#allocation5 + $0x7e0] sm:$0xff]
        %v719 = vld [vmem:[#allocation5 + $0x7e8] sm:$0xff]
        %v720 = vld [vmem:[#allocation5 + $0x7f0] sm:$0xff]
        %v721 = vld [vmem:[#allocation5 + $0x7f8] sm:$0xff]
        %v722 = vld [vmem:[#allocation5 + $0x800] sm:$0xff]
        %v723 = vld [vmem:[#allocation5 + $0x808] sm:$0xff]
        %v724 = vld [vmem:[#allocation5 + $0x810] sm:$0xff]
        %v725 = vld [vmem:[#allocation5 + $0x818] sm:$0xff]
        %v726 = vld [vmem:[#allocation5 + $0x820] sm:$0xff]
        %v727 = vld [vmem:[#allocation5 + $0x828] sm:$0xff]
        %v728 = vld [vmem:[#allocation5 + $0x830] sm:$0xff]
        %v729 = vld [vmem:[#allocation5 + $0x838] sm:$0xff]
        %v730 = vld [vmem:[#allocation5 + $0x840] sm:$0xff]
        %v731 = vld [vmem:[#allocation5 + $0x848] sm:$0xff]
        %v732 = vld [vmem:[#allocation5 + $0x850] sm:$0xff]
        %v733 = vld [vmem:[#allocation5 + $0x858] sm:$0xff]
        %v734 = vld [vmem:[#allocation5 + $0x860] sm:$0xff]
        %v735 = vld [vmem:[#allocation5 + $0x868] sm:$0xff]
        %v736 = vld [vmem:[#allocation5 + $0x870] sm:$0xff]
        %v737 = vld [vmem:[#allocation5 + $0x878] sm:$0xff]
        %v738 = vld [vmem:[#allocation5 + $0x880] sm:$0xff]
        %v739 = vld [vmem:[#allocation5 + $0x888] sm:$0xff]
        %v740 = vld [vmem:[#allocation5 + $0x890] sm:$0xff]
        %v741 = vld [vmem:[#allocation5 + $0x898] sm:$0xff]
        %v742 = vld [vmem:[#allocation5 + $0x8a0] sm:$0xff]
        %v743 = vld [vmem:[#allocation5 + $0x8a8] sm:$0xff]
        %v744 = vld [vmem:[#allocation5 + $0x8b0] sm:$0xff]
        %v745 = vld [vmem:[#allocation5 + $0x8b8] sm:$0xff]
        %v746 = vld [vmem:[#allocation5 + $0x8c0] sm:$0xff]
        %v747 = vld [vmem:[#allocation5 + $0x8c8] sm:$0xff]
        %v748 = vld [vmem:[#allocation5 + $0x8d0] sm:$0xff]
        %v749 = vld [vmem:[#allocation5 + $0x8d8] sm:$0xff]
        %v750 = vld [vmem:[#allocation5 + $0x8e0] sm:$0xff]
        %v751 = vld [vmem:[#allocation5 + $0x8e8] sm:$0xff]
        %v752 = vld [vmem:[#allocation5 + $0x8f0] sm:$0xff]
        %v753 = vld [vmem:[#allocation5 + $0x8f8] sm:$0xff]
        %v754 = vld [vmem:[#allocation5 + $0x900] sm:$0xff]
        %v755 = vld [vmem:[#allocation5 + $0x908] sm:$0xff]
        %v756 = vld [vmem:[#allocation5 + $0x910] sm:$0xff]
        %v757 = vld [vmem:[#allocation5 + $0x918] sm:$0xff]
        %v758 = vld [vmem:[#allocation5 + $0x920] sm:$0xff]
        %v759 = vld [vmem:[#allocation5 + $0x928] sm:$0xff]
        %v760 = vld [vmem:[#allocation5 + $0x930] sm:$0xff]
        %v761 = vld [vmem:[#allocation5 + $0x938] sm:$0xff]
        %v762 = vld [vmem:[#allocation5 + $0x940] sm:$0xff]
        %v763 = vld [vmem:[#allocation5 + $0x948] sm:$0xff]
        %v764 = vld [vmem:[#allocation5 + $0x950] sm:$0xff]
        %v765 = vld [vmem:[#allocation5 + $0x958] sm:$0xff]
        %v766 = vld [vmem:[#allocation5 + $0x960] sm:$0xff]
        %v767 = vld [vmem:[#allocation5 + $0x968] sm:$0xff]
        %v768 = vld [vmem:[#allocation5 + $0x970] sm:$0xff]
        %v769 = vld [vmem:[#allocation5 + $0x978] sm:$0xff]
        %v770 = vld [vmem:[#allocation5 + $0x980] sm:$0xff]
        %v771 = vld [vmem:[#allocation5 + $0x988] sm:$0xff]
        %v772 = vld [vmem:[#allocation5 + $0x990] sm:$0xff]
        %v773 = vld [vmem:[#allocation5 + $0x998] sm:$0xff]
        %v774 = vld [vmem:[#allocation5 + $0x9a0] sm:$0xff]
        %v775 = vld [vmem:[#allocation5 + $0x9a8] sm:$0xff]
        %v776 = vld [vmem:[#allocation5 + $0x9b0] sm:$0xff]
        %v777 = vld [vmem:[#allocation5 + $0x9b8] sm:$0xff]
        %v778 = vld [vmem:[#allocation5 + $0x9c0] sm:$0xff]
        %v779 = vld [vmem:[#allocation5 + $0x9c8] sm:$0xff]
        %v780 = vld [vmem:[#allocation5 + $0x9d0] sm:$0xff]
        %v781 = vld [vmem:[#allocation5 + $0x9d8] sm:$0xff]
        %v782 = vld [vmem:[#allocation5 + $0x9e0] sm:$0xff]
        %v783 = vld [vmem:[#allocation5 + $0x9e8] sm:$0xff]
        %v784 = vld [vmem:[#allocation5 + $0x9f0] sm:$0xff]
        %v785 = vld [vmem:[#allocation5 + $0x9f8] sm:$0xff]
        %v786 = vld [vmem:[#allocation5 + $0xa00] sm:$0xff]
        %v787 = vld [vmem:[#allocation5 + $0xa08] sm:$0xff]
        %v788 = vld [vmem:[#allocation5 + $0xa10] sm:$0xff]
        %v789 = vld [vmem:[#allocation5 + $0xa18] sm:$0xff]
        %v790 = vld [vmem:[#allocation5 + $0xa20] sm:$0xff]
        %v791 = vld [vmem:[#allocation5 + $0xa28] sm:$0xff]
        %v792 = vld [vmem:[#allocation5 + $0xa30] sm:$0xff]
        %v793 = vld [vmem:[#allocation5 + $0xa38] sm:$0xff]
        %v794 = vld [vmem:[#allocation5 + $0xa40] sm:$0xff]
        %v795 = vld [vmem:[#allocation5 + $0xa48] sm:$0xff]
        %v796 = vld [vmem:[#allocation5 + $0xa50] sm:$0xff]
        %v797 = vld [vmem:[#allocation5 + $0xa58] sm:$0xff]
        %v798 = vld [vmem:[#allocation5 + $0xa60] sm:$0xff]
        %v799 = vld [vmem:[#allocation5 + $0xa68] sm:$0xff]
        %v800 = vld [vmem:[#allocation5 + $0xa70] sm:$0xff]
        %v801 = vld [vmem:[#allocation5 + $0xa78] sm:$0xff]
        %v802 = vld [vmem:[#allocation5 + $0xa80] sm:$0xff]
        %v803 = vld [vmem:[#allocation5 + $0xa88] sm:$0xff]
        %v804 = vld [vmem:[#allocation5 + $0xa90] sm:$0xff]
        %v805 = vld [vmem:[#allocation5 + $0xa98] sm:$0xff]
        %v806 = vld [vmem:[#allocation5 + $0xaa0] sm:$0xff]
        %v807 = vld [vmem:[#allocation5 + $0xaa8] sm:$0xff]
        %v808 = vld [vmem:[#allocation5 + $0xab0] sm:$0xff]
        %v809 = vld [vmem:[#allocation5 + $0xab8] sm:$0xff]
        %v810 = vld [vmem:[#allocation5 + $0xac0] sm:$0xff]
        %v811 = vld [vmem:[#allocation5 + $0xac8] sm:$0xff]
        %v812 = vld [vmem:[#allocation5 + $0xad0] sm:$0xff]
        %v813 = vld [vmem:[#allocation5 + $0xad8] sm:$0xff]
        %v814 = vld [vmem:[#allocation5 + $0xae0] sm:$0xff]
        %v815 = vld [vmem:[#allocation5 + $0xae8] sm:$0xff]
        %v816 = vld [vmem:[#allocation5 + $0xaf0] sm:$0xff]
        %v817 = vld [vmem:[#allocation5 + $0xaf8] sm:$0xff]
        %v818 = vld [vmem:[#allocation5 + $0xb00] sm:$0xff]
        %v819 = vld [vmem:[#allocation5 + $0xb08] sm:$0xff]
        %v820 = vld [vmem:[#allocation5 + $0xb10] sm:$0xff]
        %v821 = vld [vmem:[#allocation5 + $0xb18] sm:$0xff]
        %v822 = vld [vmem:[#allocation5 + $0xb20] sm:$0xff]
        %v823 = vld [vmem:[#allocation5 + $0xb28] sm:$0xff]
        %v824 = vld [vmem:[#allocation5 + $0xb30] sm:$0xff]
        %v825 = vld [vmem:[#allocation5 + $0xb38] sm:$0xff]
        %v826 = vld [vmem:[#allocation5 + $0xb40] sm:$0xff]
        %v827 = vld [vmem:[#allocation5 + $0xb48] sm:$0xff]
        %v828 = vld [vmem:[#allocation5 + $0xb50] sm:$0xff]
        %v829 = vld [vmem:[#allocation5 + $0xb58] sm:$0xff]
        %v830 = vld [vmem:[#allocation5 + $0xb60] sm:$0xff]
        %v831 = vld [vmem:[#allocation5 + $0xb68] sm:$0xff]
        %v832 = vld [vmem:[#allocation5 + $0xb70] sm:$0xff]
        %v833 = vld [vmem:[#allocation5 + $0xb78] sm:$0xff]
        %v834 = vld [vmem:[#allocation5 + $0xb80] sm:$0xff]
        %v835 = vld [vmem:[#allocation5 + $0xb88] sm:$0xff]
        %v836 = vld [vmem:[#allocation5 + $0xb90] sm:$0xff]
        %v837 = vld [vmem:[#allocation5 + $0xb98] sm:$0xff]
        %v838 = vld [vmem:[#allocation5 + $0xba0] sm:$0xff]
        %v839 = vld [vmem:[#allocation5 + $0xba8] sm:$0xff]
        %v840 = vld [vmem:[#allocation5 + $0xbb0] sm:$0xff]
        %v841 = vld [vmem:[#allocation5 + $0xbb8] sm:$0xff]
        %v842 = vld [vmem:[#allocation5 + $0xbc0] sm:$0xff]
        %v843 = vld [vmem:[#allocation5 + $0xbc8] sm:$0xff]
        %v844 = vld [vmem:[#allocation5 + $0xbd0] sm:$0xff]
        %v845 = vld [vmem:[#allocation5 + $0xbd8] sm:$0xff]
        %v846 = vld [vmem:[#allocation5 + $0xbe0] sm:$0xff]
        %v847 = vld [vmem:[#allocation5 + $0xbe8] sm:$0xff]
        %v848 = vld [vmem:[#allocation5 + $0xbf0] sm:$0xff]
        %v849 = vld [vmem:[#allocation5 + $0xbf8] sm:$0xff]
        %v850 = vld [vmem:[#allocation5 + $0xc00] sm:$0xff]
        %v851 = vld [vmem:[#allocation5 + $0xc08] sm:$0xff]
        %v852 = vld [vmem:[#allocation5 + $0xc10] sm:$0xff]
        %v853 = vld [vmem:[#allocation5 + $0xc18] sm:$0xff]
        %v854 = vld [vmem:[#allocation5 + $0xc20] sm:$0xff]
        %v855 = vld [vmem:[#allocation5 + $0xc28] sm:$0xff]
        %v856 = vld [vmem:[#allocation5 + $0xc30] sm:$0xff]
        %v857 = vld [vmem:[#allocation5 + $0xc38] sm:$0xff]
        %v858 = vld [vmem:[#allocation5 + $0xc40] sm:$0xff]
        %v859 = vld [vmem:[#allocation5 + $0xc48] sm:$0xff]
        %v860 = vld [vmem:[#allocation5 + $0xc50] sm:$0xff]
        %v861 = vld [vmem:[#allocation5 + $0xc58] sm:$0xff]
        %v862 = vld [vmem:[#allocation5 + $0xc60] sm:$0xff]
        %v863 = vld [vmem:[#allocation5 + $0xc68] sm:$0xff]
        %v864 = vld [vmem:[#allocation5 + $0xc70] sm:$0xff]
        %v865 = vld [vmem:[#allocation5 + $0xc78] sm:$0xff]
        %v866 = vld [vmem:[#allocation5 + $0xc80] sm:$0xff]
        %v867 = vld [vmem:[#allocation5 + $0xc88] sm:$0xff]
        %v868 = vld [vmem:[#allocation5 + $0xc90] sm:$0xff]
        %v869 = vld [vmem:[#allocation5 + $0xc98] sm:$0xff]
        %v870 = vld [vmem:[#allocation5 + $0xca0] sm:$0xff]
        %v871 = vld [vmem:[#allocation5 + $0xca8] sm:$0xff]
        %v872 = vld [vmem:[#allocation5 + $0xcb0] sm:$0xff]
        %v873 = vld [vmem:[#allocation5 + $0xcb8] sm:$0xff]
        %v874 = vld [vmem:[#allocation5 + $0xcc0] sm:$0xff]
        %v875 = vld [vmem:[#allocation5 + $0xcc8] sm:$0xff]
        %v876 = vld [vmem:[#allocation5 + $0xcd0] sm:$0xff]
        %v877 = vld [vmem:[#allocation5 + $0xcd8] sm:$0xff]
        %v878 = vld [vmem:[#allocation5 + $0xce0] sm:$0xff]
        %v879 = vld [vmem:[#allocation5 + $0xce8] sm:$0xff]
        %v880 = vld [vmem:[#allocation5 + $0xcf0] sm:$0xff]
        %v881 = vld [vmem:[#allocation5 + $0xcf8] sm:$0xff]
        %v882 = vld [vmem:[#allocation5 + $0xd00] sm:$0xff]
        %v883 = vld [vmem:[#allocation5 + $0xd08] sm:$0xff]
        %v884 = vld [vmem:[#allocation5 + $0xd10] sm:$0xff]
        %v885 = vld [vmem:[#allocation5 + $0xd18] sm:$0xff]
        %v886 = vld [vmem:[#allocation5 + $0xd20] sm:$0xff]
        %v887 = vld [vmem:[#allocation5 + $0xd28] sm:$0xff]
        %v888 = vld [vmem:[#allocation5 + $0xd30] sm:$0xff]
        %v889 = vld [vmem:[#allocation5 + $0xd38] sm:$0xff]
        %v890 = vld [vmem:[#allocation5 + $0xd40] sm:$0xff]
        %v891 = vld [vmem:[#allocation5 + $0xd48] sm:$0xff]
        %v892 = vld [vmem:[#allocation5 + $0xd50] sm:$0xff]
        %v893 = vld [vmem:[#allocation5 + $0xd58] sm:$0xff]
        %v894 = vld [vmem:[#allocation5 + $0xd60] sm:$0xff]
        %v895 = vld [vmem:[#allocation5 + $0xd68] sm:$0xff]
        %v896 = vld [vmem:[#allocation5 + $0xd70] sm:$0xff]
        %v897 = vld [vmem:[#allocation5 + $0xd78] sm:$0xff]
        %v898 = vld [vmem:[#allocation5 + $0xd80] sm:$0xff]
        %v899 = vld [vmem:[#allocation5 + $0xd88] sm:$0xff]
        %v900 = vld [vmem:[#allocation5 + $0xd90] sm:$0xff]
        %v901 = vld [vmem:[#allocation5 + $0xd98] sm:$0xff]
        %v902 = vld [vmem:[#allocation5 + $0xda0] sm:$0xff]
        %v903 = vld [vmem:[#allocation5 + $0xda8] sm:$0xff]
        %v904 = vld [vmem:[#allocation5 + $0xdb0] sm:$0xff]
        %v905 = vld [vmem:[#allocation5 + $0xdb8] sm:$0xff]
        %v906 = vld [vmem:[#allocation5 + $0xdc0] sm:$0xff]
        %v907 = vld [vmem:[#allocation5 + $0xdc8] sm:$0xff]
        %v908 = vld [vmem:[#allocation5 + $0xdd0] sm:$0xff]
        %v909 = vld [vmem:[#allocation5 + $0xdd8] sm:$0xff]
        %v910 = vld [vmem:[#allocation5 + $0xde0] sm:$0xff]
        %v911 = vld [vmem:[#allocation5 + $0xde8] sm:$0xff]
        %v912 = vld [vmem:[#allocation5 + $0xdf0] sm:$0xff]
        %v913 = vld [vmem:[#allocation5 + $0xdf8] sm:$0xff]
        %v914 = vld [vmem:[#allocation5 + $0xe00] sm:$0xff]
        %v915 = vld [vmem:[#allocation5 + $0xe08] sm:$0xff]
        %v916 = vld [vmem:[#allocation5 + $0xe10] sm:$0xff]
        %v917 = vld [vmem:[#allocation5 + $0xe18] sm:$0xff]
        %v918 = vld [vmem:[#allocation5 + $0xe20] sm:$0xff]
        %v919 = vld [vmem:[#allocation5 + $0xe28] sm:$0xff]
        %v920 = vld [vmem:[#allocation5 + $0xe30] sm:$0xff]
        %v921 = vld [vmem:[#allocation5 + $0xe38] sm:$0xff]
        %v922 = vld [vmem:[#allocation5 + $0xe40] sm:$0xff]
        %v923 = vld [vmem:[#allocation5 + $0xe48] sm:$0xff]
        %v924 = vld [vmem:[#allocation5 + $0xe50] sm:$0xff]
        %v925 = vld [vmem:[#allocation5 + $0xe58] sm:$0xff]
        %v926 = vld [vmem:[#allocation5 + $0xe60] sm:$0xff]
        %v927 = vld [vmem:[#allocation5 + $0xe68] sm:$0xff]
        %v928 = vld [vmem:[#allocation5 + $0xe70] sm:$0xff]
        %v929 = vld [vmem:[#allocation5 + $0xe78] sm:$0xff]
        %v930 = vld [vmem:[#allocation5 + $0xe80] sm:$0xff]
        %v931 = vld [vmem:[#allocation5 + $0xe88] sm:$0xff]
        %v932 = vld [vmem:[#allocation5 + $0xe90] sm:$0xff]
        %v933 = vld [vmem:[#allocation5 + $0xe98] sm:$0xff]
        %v934 = vld [vmem:[#allocation5 + $0xea0] sm:$0xff]
        %v935 = vld [vmem:[#allocation5 + $0xea8] sm:$0xff]
        %v936 = vld [vmem:[#allocation5 + $0xeb0] sm:$0xff]
        %v937 = vld [vmem:[#allocation5 + $0xeb8] sm:$0xff]
        %v938 = vld [vmem:[#allocation5 + $0xec0] sm:$0xff]
        %v939 = vld [vmem:[#allocation5 + $0xec8] sm:$0xff]
        %v940 = vld [vmem:[#allocation5 + $0xed0] sm:$0xff]
        %v941 = vld [vmem:[#allocation5 + $0xed8] sm:$0xff]
        %v942 = vld [vmem:[#allocation5 + $0xee0] sm:$0xff]
        %v943 = vld [vmem:[#allocation5 + $0xee8] sm:$0xff]
        %v944 = vld [vmem:[#allocation5 + $0xef0] sm:$0xff]
        %v945 = vld [vmem:[#allocation5 + $0xef8] sm:$0xff]
        %v946 = vld [vmem:[#allocation5 + $0xf00] sm:$0xff]
        %v947 = vld [vmem:[#allocation5 + $0xf08] sm:$0xff]
        %v948 = vld [vmem:[#allocation5 + $0xf10] sm:$0xff]
        %v949 = vld [vmem:[#allocation5 + $0xf18] sm:$0xff]
        %v950 = vld [vmem:[#allocation5 + $0xf20] sm:$0xff]
        %v951 = vld [vmem:[#allocation5 + $0xf28] sm:$0xff]
        %v952 = vld [vmem:[#allocation5 + $0xf30] sm:$0xff]
        %v953 = vld [vmem:[#allocation5 + $0xf38] sm:$0xff]
        %v954 = vld [vmem:[#allocation5 + $0xf40] sm:$0xff]
        %v955 = vld [vmem:[#allocation5 + $0xf48] sm:$0xff]
        %v956 = vld [vmem:[#allocation5 + $0xf50] sm:$0xff]
        %v957 = vld [vmem:[#allocation5 + $0xf58] sm:$0xff]
        %v958 = vld [vmem:[#allocation5 + $0xf60] sm:$0xff]
        %v959 = vld [vmem:[#allocation5 + $0xf68] sm:$0xff]
        %v960 = vld [vmem:[#allocation5 + $0xf70] sm:$0xff]
        %v961 = vld [vmem:[#allocation5 + $0xf78] sm:$0xff]
        %v962 = vld [vmem:[#allocation5 + $0xf80] sm:$0xff]
        %v963 = vld [vmem:[#allocation5 + $0xf88] sm:$0xff]
        %v964 = vld [vmem:[#allocation5 + $0xf90] sm:$0xff]
        %v965 = vld [vmem:[#allocation5 + $0xf98] sm:$0xff]
        %v966 = vld [vmem:[#allocation5 + $0xfa0] sm:$0xff]
        %v967 = vld [vmem:[#allocation5 + $0xfa8] sm:$0xff]
        %v968 = vld [vmem:[#allocation5 + $0xfb0] sm:$0xff]
        %v969 = vld [vmem:[#allocation5 + $0xfb8] sm:$0xff]
        %v970 = vld [vmem:[#allocation5 + $0xfc0] sm:$0xff]
        %v971 = vld [vmem:[#allocation5 + $0xfc8] sm:$0xff]
        %v972 = vld [vmem:[#allocation5 + $0xfd0] sm:$0xff]
        %v973 = vld [vmem:[#allocation5 + $0xfd8] sm:$0xff]
        %v974 = vld [vmem:[#allocation5 + $0xfe0] sm:$0xff]
        %v975 = vld [vmem:[#allocation5 + $0xfe8] sm:$0xff]
        %v976 = vld [vmem:[#allocation5 + $0xff0] sm:$0xff]
        %v977 = vld [vmem:[#allocation5 + $0xff8] sm:$0xff]
        %v978 = vld [vmem:[#allocation5 + $0x1000] sm:$0xff]
        %v979 = vld [vmem:[#allocation5 + $0x1008] sm:$0xff]
        %v980 = vld [vmem:[#allocation5 + $0x1010] sm:$0xff]
        %v981 = vld [vmem:[#allocation5 + $0x1018] sm:$0xff]
        %v982 = vld [vmem:[#allocation5 + $0x1020] sm:$0xff]
        %v983 = vld [vmem:[#allocation5 + $0x1028] sm:$0xff]
        %v984 = vld [vmem:[#allocation5 + $0x1030] sm:$0xff]
        %v985 = vld [vmem:[#allocation5 + $0x1038] sm:$0xff]
        %v986 = vld [vmem:[#allocation5 + $0x1040] sm:$0xff]
        %v987 = vld [vmem:[#allocation5 + $0x1048] sm:$0xff]
        %v988 = vld [vmem:[#allocation5 + $0x1050] sm:$0xff]
        %v989 = vld [vmem:[#allocation5 + $0x1058] sm:$0xff]
        %v990 = vld [vmem:[#allocation5 + $0x1060] sm:$0xff]
        %v991 = vld [vmem:[#allocation5 + $0x1068] sm:$0xff]
        %v992 = vld [vmem:[#allocation5 + $0x1070] sm:$0xff]
        %v993 = vld [vmem:[#allocation5 + $0x1078] sm:$0xff]
        %v994 = vld [vmem:[#allocation5 + $0x1080] sm:$0xff]
        %v995 = vld [vmem:[#allocation5 + $0x1088] sm:$0xff]
        %v996 = vld [vmem:[#allocation5 + $0x1090] sm:$0xff]
        %v997 = vld [vmem:[#allocation5 + $0x1098] sm:$0xff]
        %v998 = vld [vmem:[#allocation5 + $0x10a0] sm:$0xff]
        %v999 = vld [vmem:[#allocation5 + $0x10a8] sm:$0xff]
        %v1000 = vld [vmem:[#allocation5 + $0x10b0] sm:$0xff]
        %v1001 = vld [vmem:[#allocation5 + $0x10b8] sm:$0xff]
        %v1002 = vld [vmem:[#allocation5 + $0x10c0] sm:$0xff]
        %v1003 = vld [vmem:[#allocation5 + $0x10c8] sm:$0xff]
        %v1004 = vld [vmem:[#allocation5 + $0x10d0] sm:$0xff]
        %v1005 = vld [vmem:[#allocation5 + $0x10d8] sm:$0xff]
        %v1006 = vld [vmem:[#allocation5 + $0x10e0] sm:$0xff]
        %v1007 = vld [vmem:[#allocation5 + $0x10e8] sm:$0xff]
        %v1008 = vld [vmem:[#allocation5 + $0x10f0] sm:$0xff]
        %v1009 = vld [vmem:[#allocation5 + $0x10f8] sm:$0xff]
        %v1010 = vld [vmem:[#allocation5 + $0x1100] sm:$0xff]
        %v1011 = vld [vmem:[#allocation5 + $0x1108] sm:$0xff]
        %v1012 = vld [vmem:[#allocation5 + $0x1110] sm:$0xff]
        %v1013 = vld [vmem:[#allocation5 + $0x1118] sm:$0xff]
        %v1014 = vld [vmem:[#allocation5 + $0x1120] sm:$0xff]
        %v1015 = vld [vmem:[#allocation5 + $0x1128] sm:$0xff]
        %v1016 = vld [vmem:[#allocation5 + $0x1130] sm:$0xff]
        %v1017 = vld [vmem:[#allocation5 + $0x1138] sm:$0xff]
        %v1018 = vld [vmem:[#allocation5 + $0x1140] sm:$0xff]
        %v1019 = vld [vmem:[#allocation5 + $0x1148] sm:$0xff]
        %v1020 = vld [vmem:[#allocation5 + $0x1150] sm:$0xff]
        %v1021 = vld [vmem:[#allocation5 + $0x1158] sm:$0xff]
        %v1022 = vld [vmem:[#allocation5 + $0x1160] sm:$0xff]
        %v1023 = vld [vmem:[#allocation5 + $0x1168] sm:$0xff]
        %v1024 = vld [vmem:[#allocation5 + $0x1170] sm:$0xff]
        %v1025 = vld [vmem:[#allocation5 + $0x1178] sm:$0xff]
        %v1026 = vld [vmem:[#allocation5 + $0x1180] sm:$0xff]
        %v1027 = vld [vmem:[#allocation5 + $0x1188] sm:$0xff]
        %v1028 = vld [vmem:[#allocation5 + $0x1190] sm:$0xff]
        %v1029 = vld [vmem:[#allocation5 + $0x1198] sm:$0xff]
        %v1030 = vld [vmem:[#allocation5 + $0x11a0] sm:$0xff]
        %v1031 = vld [vmem:[#allocation5 + $0x11a8] sm:$0xff]
        %v1032 = vld [vmem:[#allocation5 + $0x11b0] sm:$0xff]
        %v1033 = vld [vmem:[#allocation5 + $0x11b8] sm:$0xff]
        %v1034 = vld [vmem:[#allocation5 + $0x11c0] sm:$0xff]
        %v1035 = vld [vmem:[#allocation5 + $0x11c8] sm:$0xff]
        %v1036 = vld [vmem:[#allocation5 + $0x11d0] sm:$0xff]
        %v1037 = vld [vmem:[#allocation5 + $0x11d8] sm:$0xff]
        %v1038 = vld [vmem:[#allocation5 + $0x11e0] sm:$0xff]
        %v1039 = vld [vmem:[#allocation5 + $0x11e8] sm:$0xff]
        %v1040 = vld [vmem:[#allocation5 + $0x11f0] sm:$0xff]
        %v1041 = vld [vmem:[#allocation5 + $0x11f8] sm:$0xff]
        %v1042 = vld [vmem:[#allocation5 + $0x1200] sm:$0xff]
        %v1043 = vld [vmem:[#allocation5 + $0x1208] sm:$0xff]
        %v1044 = vld [vmem:[#allocation5 + $0x1210] sm:$0xff]
        %v1045 = vld [vmem:[#allocation5 + $0x1218] sm:$0xff]
        %v1046 = vld [vmem:[#allocation5 + $0x1220] sm:$0xff]
        %v1047 = vld [vmem:[#allocation5 + $0x1228] sm:$0xff]
        %v1048 = vld [vmem:[#allocation5 + $0x1230] sm:$0xff]
        %v1049 = vld [vmem:[#allocation5 + $0x1238] sm:$0xff]
        %v1050 = vld [vmem:[#allocation5 + $0x1240] sm:$0xff]
        %v1051 = vld [vmem:[#allocation5 + $0x1248] sm:$0xff]
        %v1052 = vld [vmem:[#allocation5 + $0x1250] sm:$0xff]
        %v1053 = vld [vmem:[#allocation5 + $0x1258] sm:$0xff]
        %v1054 = vld [vmem:[#allocation5 + $0x1260] sm:$0xff]
        %v1055 = vld [vmem:[#allocation5 + $0x1268] sm:$0xff]
        %v1056 = vld [vmem:[#allocation5 + $0x1270] sm:$0xff]
        %v1057 = vld [vmem:[#allocation5 + $0x1278] sm:$0xff]
        %v1058 = vld [vmem:[#allocation5 + $0x1280] sm:$0xff]
        %v1059 = vld [vmem:[#allocation5 + $0x1288] sm:$0xff]
        %v1060 = vld [vmem:[#allocation5 + $0x1290] sm:$0xff]
        %v1061 = vld [vmem:[#allocation5 + $0x1298] sm:$0xff]
        %v1062 = vld [vmem:[#allocation5 + $0x12a0] sm:$0xff]
        %v1063 = vld [vmem:[#allocation5 + $0x12a8] sm:$0xff]
        %v1064 = vld [vmem:[#allocation5 + $0x12b0] sm:$0xff]
        %v1065 = vld [vmem:[#allocation5 + $0x12b8] sm:$0xff]
        %v1066 = vld [vmem:[#allocation5 + $0x12c0] sm:$0xff]
        %v1067 = vld [vmem:[#allocation5 + $0x12c8] sm:$0xff]
        %v1068 = vld [vmem:[#allocation5 + $0x12d0] sm:$0xff]
        %v1069 = vld [vmem:[#allocation5 + $0x12d8] sm:$0xff]
        %v1070 = vld [vmem:[#allocation5 + $0x12e0] sm:$0xff]
        %v1071 = vld [vmem:[#allocation5 + $0x12e8] sm:$0xff]
        %v1072 = vld [vmem:[#allocation5 + $0x12f0] sm:$0xff]
        %v1073 = vld [vmem:[#allocation5 + $0x12f8] sm:$0xff]
        %v1074 = vld [vmem:[#allocation5 + $0x1300] sm:$0xff]
        %v1075 = vld [vmem:[#allocation5 + $0x1308] sm:$0xff]
        %v1076 = vld [vmem:[#allocation5 + $0x1310] sm:$0xff]
        %v1077 = vld [vmem:[#allocation5 + $0x1318] sm:$0xff]
        %v1078 = vld [vmem:[#allocation5 + $0x1320] sm:$0xff]
        %v1079 = vld [vmem:[#allocation5 + $0x1328] sm:$0xff]
        %v1080 = vld [vmem:[#allocation5 + $0x1330] sm:$0xff]
        %v1081 = vld [vmem:[#allocation5 + $0x1338] sm:$0xff]
        %v1082 = vld [vmem:[#allocation5 + $0x1340] sm:$0xff]
        %v1083 = vld [vmem:[#allocation5 + $0x1348] sm:$0xff]
        %v1084 = vld [vmem:[#allocation5 + $0x1350] sm:$0xff]
        %v1085 = vld [vmem:[#allocation5 + $0x1358] sm:$0xff]
        %v1086 = vld [vmem:[#allocation5 + $0x1360] sm:$0xff]
        %v1087 = vld [vmem:[#allocation5 + $0x1368] sm:$0xff]
        %v1088 = vld [vmem:[#allocation5 + $0x1370] sm:$0xff]
        %v1089 = vld [vmem:[#allocation5 + $0x1378] sm:$0xff]
        %v1090 = vld [vmem:[#allocation5 + $0x1380] sm:$0xff]
        %v1091 = vld [vmem:[#allocation5 + $0x1388] sm:$0xff]
        %v1092 = vld [vmem:[#allocation5 + $0x1390] sm:$0xff]
        %v1093 = vld [vmem:[#allocation5 + $0x1398] sm:$0xff]
        %v1094 = vld [vmem:[#allocation5 + $0x13a0] sm:$0xff]
        %v1095 = vld [vmem:[#allocation5 + $0x13a8] sm:$0xff]
        %v1096 = vld [vmem:[#allocation5 + $0x13b0] sm:$0xff]
        %v1097 = vld [vmem:[#allocation5 + $0x13b8] sm:$0xff]
        %v1098 = vld [vmem:[#allocation5 + $0x13c0] sm:$0xff]
        %v1099 = vld [vmem:[#allocation5 + $0x13c8] sm:$0xff]
        %v1100 = vld [vmem:[#allocation5 + $0x13d0] sm:$0xff]
        %v1101 = vld [vmem:[#allocation5 + $0x13d8] sm:$0xff]
        %v1102 = vld [vmem:[#allocation5 + $0x13e0] sm:$0xff]
        %v1103 = vld [vmem:[#allocation5 + $0x13e8] sm:$0xff]
        %v1104 = vld [vmem:[#allocation5 + $0x13f0] sm:$0xff]
        %v1105 = vld [vmem:[#allocation5 + $0x13f8] sm:$0xff]
        %v1106 = vld [vmem:[#allocation5 + $0x1400] sm:$0xff]
        %v1107 = vld [vmem:[#allocation5 + $0x1408] sm:$0xff]
        %v1108 = vld [vmem:[#allocation5 + $0x1410] sm:$0xff]
        %v1109 = vld [vmem:[#allocation5 + $0x1418] sm:$0xff]
        %v1110 = vld [vmem:[#allocation5 + $0x1420] sm:$0xff]
        %v1111 = vld [vmem:[#allocation5 + $0x1428] sm:$0xff]
        %v1112 = vld [vmem:[#allocation5 + $0x1430] sm:$0xff]
        %v1113 = vld [vmem:[#allocation5 + $0x1438] sm:$0xff]
        %v1114 = vld [vmem:[#allocation5 + $0x1440] sm:$0xff]
        %v1115 = vld [vmem:[#allocation5 + $0x1448] sm:$0xff]
        %v1116 = vld [vmem:[#allocation5 + $0x1450] sm:$0xff]
        %v1117 = vld [vmem:[#allocation5 + $0x1458] sm:$0xff]
        %v1118 = vld [vmem:[#allocation5 + $0x1460] sm:$0xff]
        %v1119 = vld [vmem:[#allocation5 + $0x1468] sm:$0xff]
        %v1120 = vld [vmem:[#allocation5 + $0x1470] sm:$0xff]
        %v1121 = vld [vmem:[#allocation5 + $0x1478] sm:$0xff]
        %v1122 = vld [vmem:[#allocation5 + $0x1480] sm:$0xff]
        %v1123 = vld [vmem:[#allocation5 + $0x1488] sm:$0xff]
        %v1124 = vld [vmem:[#allocation5 + $0x1490] sm:$0xff]
        %v1125 = vld [vmem:[#allocation5 + $0x1498] sm:$0xff]
        %v1126 = vld [vmem:[#allocation5 + $0x14a0] sm:$0xff]
        %v1127 = vld [vmem:[#allocation5 + $0x14a8] sm:$0xff]
        %v1128 = vld [vmem:[#allocation5 + $0x14b0] sm:$0xff]
        %v1129 = vld [vmem:[#allocation5 + $0x14b8] sm:$0xff]
        %v1130 = vld [vmem:[#allocation5 + $0x14c0] sm:$0xff]
        %v1131 = vld [vmem:[#allocation5 + $0x14c8] sm:$0xff]
        %v1132 = vld [vmem:[#allocation5 + $0x14d0] sm:$0xff]
        %v1133 = vld [vmem:[#allocation5 + $0x14d8] sm:$0xff]
        %v1134 = vld [vmem:[#allocation5 + $0x14e0] sm:$0xff]
        %v1135 = vld [vmem:[#allocation5 + $0x14e8] sm:$0xff]
        %v1136 = vld [vmem:[#allocation5 + $0x14f0] sm:$0xff]
        %v1137 = vld [vmem:[#allocation5 + $0x14f8] sm:$0xff]
        %v1138 = vld [vmem:[#allocation5 + $0x1500] sm:$0xff]
        %v1139 = vld [vmem:[#allocation5 + $0x1508] sm:$0xff]
        %v1140 = vld [vmem:[#allocation5 + $0x1510] sm:$0xff]
        %v1141 = vld [vmem:[#allocation5 + $0x1518] sm:$0xff]
        %v1142 = vld [vmem:[#allocation5 + $0x1520] sm:$0xff]
        %v1143 = vld [vmem:[#allocation5 + $0x1528] sm:$0xff]
        %v1144 = vld [vmem:[#allocation5 + $0x1530] sm:$0xff]
        %v1145 = vld [vmem:[#allocation5 + $0x1538] sm:$0xff]
        %v1146 = vld [vmem:[#allocation5 + $0x1540] sm:$0xff]
        %v1147 = vld [vmem:[#allocation5 + $0x1548] sm:$0xff]
        %v1148 = vld [vmem:[#allocation5 + $0x1550] sm:$0xff]
        %v1149 = vld [vmem:[#allocation5 + $0x1558] sm:$0xff]
        %v1150 = vld [vmem:[#allocation5 + $0x1560] sm:$0xff]
        %v1151 = vld [vmem:[#allocation5 + $0x1568] sm:$0xff]
        %v1152 = vld [vmem:[#allocation5 + $0x1570] sm:$0xff]
        %v1153 = vld [vmem:[#allocation5 + $0x1578] sm:$0xff]
        %v1154 = vld [vmem:[#allocation5 + $0x1580] sm:$0xff]
        %v1155 = vld [vmem:[#allocation5 + $0x1588] sm:$0xff]
        %v1156 = vld [vmem:[#allocation5 + $0x1590] sm:$0xff]
        %v1157 = vld [vmem:[#allocation5 + $0x1598] sm:$0xff]
        %v1158 = vld [vmem:[#allocation5 + $0x15a0] sm:$0xff]
        %v1159 = vld [vmem:[#allocation5 + $0x15a8] sm:$0xff]
        %v1160 = vld [vmem:[#allocation5 + $0x15b0] sm:$0xff]
        %v1161 = vld [vmem:[#allocation5 + $0x15b8] sm:$0xff]
        %v1162 = vld [vmem:[#allocation5 + $0x15c0] sm:$0xff]
        %v1163 = vld [vmem:[#allocation5 + $0x15c8] sm:$0xff]
        %v1164 = vld [vmem:[#allocation5 + $0x15d0] sm:$0xff]
        %v1165 = vld [vmem:[#allocation5 + $0x15d8] sm:$0xff]
        %v1166 = vld [vmem:[#allocation5 + $0x15e0] sm:$0xff]
        %v1167 = vld [vmem:[#allocation5 + $0x15e8] sm:$0xff]
        %v1168 = vld [vmem:[#allocation5 + $0x15f0] sm:$0xff]
        %v1169 = vld [vmem:[#allocation5 + $0x15f8] sm:$0xff]
        %v1170 = vld [vmem:[#allocation5 + $0x1600] sm:$0xff]
        %v1171 = vld [vmem:[#allocation5 + $0x1608] sm:$0xff]
        %v1172 = vld [vmem:[#allocation5 + $0x1610] sm:$0xff]
        %v1173 = vld [vmem:[#allocation5 + $0x1618] sm:$0xff]
        %v1174 = vld [vmem:[#allocation5 + $0x1620] sm:$0xff]
        %v1175 = vld [vmem:[#allocation5 + $0x1628] sm:$0xff]
        %v1176 = vld [vmem:[#allocation5 + $0x1630] sm:$0xff]
        %v1177 = vld [vmem:[#allocation5 + $0x1638] sm:$0xff]
        %v1178 = vld [vmem:[#allocation5 + $0x1640] sm:$0xff]
        %v1179 = vld [vmem:[#allocation5 + $0x1648] sm:$0xff]
        %v1180 = vld [vmem:[#allocation5 + $0x1650] sm:$0xff]
        %v1181 = vld [vmem:[#allocation5 + $0x1658] sm:$0xff]
        %v1182 = vld [vmem:[#allocation5 + $0x1660] sm:$0xff]
        %v1183 = vld [vmem:[#allocation5 + $0x1668] sm:$0xff]
        %v1184 = vld [vmem:[#allocation5 + $0x1670] sm:$0xff]
        %v1185 = vld [vmem:[#allocation5 + $0x1678] sm:$0xff]
        %v1186 = vld [vmem:[#allocation5 + $0x1680] sm:$0xff]
        %v1187 = vld [vmem:[#allocation5 + $0x1688] sm:$0xff]
        %v1188 = vld [vmem:[#allocation5 + $0x1690] sm:$0xff]
        %v1189 = vld [vmem:[#allocation5 + $0x1698] sm:$0xff]
        %v1190 = vld [vmem:[#allocation5 + $0x16a0] sm:$0xff]
        %v1191 = vld [vmem:[#allocation5 + $0x16a8] sm:$0xff]
        %v1192 = vld [vmem:[#allocation5 + $0x16b0] sm:$0xff]
        %v1193 = vld [vmem:[#allocation5 + $0x16b8] sm:$0xff]
        %v1194 = vld [vmem:[#allocation5 + $0x16c0] sm:$0xff]
        %v1195 = vld [vmem:[#allocation5 + $0x16c8] sm:$0xff]
        %v1196 = vld [vmem:[#allocation5 + $0x16d0] sm:$0xff]
        %v1197 = vld [vmem:[#allocation5 + $0x16d8] sm:$0xff]
        %v1198 = vld [vmem:[#allocation5 + $0x16e0] sm:$0xff]
        %v1199 = vld [vmem:[#allocation5 + $0x16e8] sm:$0xff]
        %v1200 = vld [vmem:[#allocation5 + $0x16f0] sm:$0xff]
        %v1201 = vld [vmem:[#allocation5 + $0x16f8] sm:$0xff]
        %v1202 = vld [vmem:[#allocation5 + $0x1700] sm:$0xff]
        %v1203 = vld [vmem:[#allocation5 + $0x1708] sm:$0xff]
        %v1204 = vld [vmem:[#allocation5 + $0x1710] sm:$0xff]
        %v1205 = vld [vmem:[#allocation5 + $0x1718] sm:$0xff]
        %v1206 = vld [vmem:[#allocation5 + $0x1720] sm:$0xff]
        %v1207 = vld [vmem:[#allocation5 + $0x1728] sm:$0xff]
        %v1208 = vld [vmem:[#allocation5 + $0x1730] sm:$0xff]
        %v1209 = vld [vmem:[#allocation5 + $0x1738] sm:$0xff]
        %v1210 = vld [vmem:[#allocation5 + $0x1740] sm:$0xff]
        %v1211 = vld [vmem:[#allocation5 + $0x1748] sm:$0xff]
        %v1212 = vld [vmem:[#allocation5 + $0x1750] sm:$0xff]
        %v1213 = vld [vmem:[#allocation5 + $0x1758] sm:$0xff]
        %v1214 = vld [vmem:[#allocation5 + $0x1760] sm:$0xff]
        %v1215 = vld [vmem:[#allocation5 + $0x1768] sm:$0xff]
        %v1216 = vld [vmem:[#allocation5 + $0x1770] sm:$0xff]
        %v1217 = vld [vmem:[#allocation5 + $0x1778] sm:$0xff]
        %v1218 = vld [vmem:[#allocation5 + $0x1780] sm:$0xff]
        %v1219 = vld [vmem:[#allocation5 + $0x1788] sm:$0xff]
        %v1220 = vld [vmem:[#allocation5 + $0x1790] sm:$0xff]
        %v1221 = vld [vmem:[#allocation5 + $0x1798] sm:$0xff]
        %v1222 = vld [vmem:[#allocation5 + $0x17a0] sm:$0xff]
        %v1223 = vld [vmem:[#allocation5 + $0x17a8] sm:$0xff]
        %v1224 = vld [vmem:[#allocation5 + $0x17b0] sm:$0xff]
        %v1225 = vld [vmem:[#allocation5 + $0x17b8] sm:$0xff]
        %v1226 = vld [vmem:[#allocation5 + $0x17c0] sm:$0xff]
        %v1227 = vld [vmem:[#allocation5 + $0x17c8] sm:$0xff]
        %v1228 = vld [vmem:[#allocation5 + $0x17d0] sm:$0xff]
        %v1229 = vld [vmem:[#allocation5 + $0x17d8] sm:$0xff]
        %v1230 = vld [vmem:[#allocation5 + $0x17e0] sm:$0xff]
        %v1231 = vld [vmem:[#allocation5 + $0x17e8] sm:$0xff]
        %v1232 = vld [vmem:[#allocation5 + $0x17f0] sm:$0xff]
        %v1233 = vld [vmem:[#allocation5 + $0x17f8] sm:$0xff]
        %v1234 = vld [vmem:[#allocation5 + $0x1800] sm:$0xff]
        %v1235 = vld [vmem:[#allocation5 + $0x1808] sm:$0xff]
        %v1236 = vld [vmem:[#allocation5 + $0x1810] sm:$0xff]
        %v1237 = vld [vmem:[#allocation5 + $0x1818] sm:$0xff]
        %v1238 = vld [vmem:[#allocation5 + $0x1820] sm:$0xff]
        %v1239 = vld [vmem:[#allocation5 + $0x1828] sm:$0xff]
        %v1240 = vld [vmem:[#allocation5 + $0x1830] sm:$0xff]
        %v1241 = vld [vmem:[#allocation5 + $0x1838] sm:$0xff]
        %v1242 = vld [vmem:[#allocation5 + $0x1840] sm:$0xff]
        %v1243 = vld [vmem:[#allocation5 + $0x1848] sm:$0xff]
        %v1244 = vld [vmem:[#allocation5 + $0x1850] sm:$0xff]
        %v1245 = vld [vmem:[#allocation5 + $0x1858] sm:$0xff]
        %v1246 = vld [vmem:[#allocation5 + $0x1860] sm:$0xff]
        %v1247 = vld [vmem:[#allocation5 + $0x1868] sm:$0xff]
        %v1248 = vld [vmem:[#allocation5 + $0x1870] sm:$0xff]
        %v1249 = vld [vmem:[#allocation5 + $0x1878] sm:$0xff]
        %v1250 = vld [vmem:[#allocation5 + $0x1880] sm:$0xff]
        %v1251 = vld [vmem:[#allocation5 + $0x1888] sm:$0xff]
        %v1252 = vld [vmem:[#allocation5 + $0x1890] sm:$0xff]
        %v1253 = vld [vmem:[#allocation5 + $0x1898] sm:$0xff]
        %v1254 = vld [vmem:[#allocation5 + $0x18a0] sm:$0xff]
        %v1255 = vld [vmem:[#allocation5 + $0x18a8] sm:$0xff]
        %v1256 = vld [vmem:[#allocation5 + $0x18b0] sm:$0xff]
        %v1257 = vld [vmem:[#allocation5 + $0x18b8] sm:$0xff]
        %v1258 = vld [vmem:[#allocation5 + $0x18c0] sm:$0xff]
        %v1259 = vld [vmem:[#allocation5 + $0x18c8] sm:$0xff]
        %v1260 = vld [vmem:[#allocation5 + $0x18d0] sm:$0xff]
        %v1261 = vld [vmem:[#allocation5 + $0x18d8] sm:$0xff]
        %v1262 = vld [vmem:[#allocation5 + $0x18e0] sm:$0xff]
        %v1263 = vld [vmem:[#allocation5 + $0x18e8] sm:$0xff]
        %v1264 = vld [vmem:[#allocation5 + $0x18f0] sm:$0xff]
        %v1265 = vld [vmem:[#allocation5 + $0x18f8] sm:$0xff]
        %v1266 = vld [vmem:[#allocation5 + $0x1900] sm:$0xff]
        %v1267 = vld [vmem:[#allocation5 + $0x1908] sm:$0xff]
        %v1268 = vld [vmem:[#allocation5 + $0x1910] sm:$0xff]
        %v1269 = vld [vmem:[#allocation5 + $0x1918] sm:$0xff]
        %v1270 = vld [vmem:[#allocation5 + $0x1920] sm:$0xff]
        %v1271 = vld [vmem:[#allocation5 + $0x1928] sm:$0xff]
        %v1272 = vld [vmem:[#allocation5 + $0x1930] sm:$0xff]
        %v1273 = vld [vmem:[#allocation5 + $0x1938] sm:$0xff]
        %v1274 = vld [vmem:[#allocation5 + $0x1940] sm:$0xff]
        %v1275 = vld [vmem:[#allocation5 + $0x1948] sm:$0xff]
        %v1276 = vld [vmem:[#allocation5 + $0x1950] sm:$0xff]
        %v1277 = vld [vmem:[#allocation5 + $0x1958] sm:$0xff]
        %v1278 = vld [vmem:[#allocation5 + $0x1960] sm:$0xff]
        %v1279 = vld [vmem:[#allocation5 + $0x1968] sm:$0xff]
        %v1280 = vld [vmem:[#allocation5 + $0x1970] sm:$0xff]
        %v1281 = vld [vmem:[#allocation5 + $0x1978] sm:$0xff]
        %v1282 = vld [vmem:[#allocation5 + $0x1980] sm:$0xff]
        %v1283 = vld [vmem:[#allocation5 + $0x1988] sm:$0xff]
        %v1284 = vld [vmem:[#allocation5 + $0x1990] sm:$0xff]
        %v1285 = vld [vmem:[#allocation5 + $0x1998] sm:$0xff]
        %v1286 = vld [vmem:[#allocation5 + $0x19a0] sm:$0xff]
        %v1287 = vld [vmem:[#allocation5 + $0x19a8] sm:$0xff]
        %v1288 = vld [vmem:[#allocation5 + $0x19b0] sm:$0xff]
        %v1289 = vld [vmem:[#allocation5 + $0x19b8] sm:$0xff]
        %v1290 = vld [vmem:[#allocation5 + $0x19c0] sm:$0xff]
        %v1291 = vld [vmem:[#allocation5 + $0x19c8] sm:$0xff]
        %v1292 = vld [vmem:[#allocation5 + $0x19d0] sm:$0xff]
        %v1293 = vld [vmem:[#allocation5 + $0x19d8] sm:$0xff]
        %v1294 = vld [vmem:[#allocation5 + $0x19e0] sm:$0xff]
        %v1295 = vld [vmem:[#allocation5 + $0x19e8] sm:$0xff]
        %v1296 = vld [vmem:[#allocation5 + $0x19f0] sm:$0xff]
        %v1297 = vld [vmem:[#allocation5 + $0x19f8] sm:$0xff]
        %v1298 = vld [vmem:[#allocation5 + $0x1a00] sm:$0xff]
        %v1299 = vld [vmem:[#allocation5 + $0x1a08] sm:$0xff]
        %v1300 = vld [vmem:[#allocation5 + $0x1a10] sm:$0xff]
        %v1301 = vld [vmem:[#allocation5 + $0x1a18] sm:$0xff]
        %v1302 = vld [vmem:[#allocation5 + $0x1a20] sm:$0xff]
        %v1303 = vld [vmem:[#allocation5 + $0x1a28] sm:$0xff]
        %v1304 = vld [vmem:[#allocation5 + $0x1a30] sm:$0xff]
        %v1305 = vld [vmem:[#allocation5 + $0x1a38] sm:$0xff]
        %v1306 = vld [vmem:[#allocation5 + $0x1a40] sm:$0xff]
        %v1307 = vld [vmem:[#allocation5 + $0x1a48] sm:$0xff]
        %v1308 = vld [vmem:[#allocation5 + $0x1a50] sm:$0xff]
        %v1309 = vld [vmem:[#allocation5 + $0x1a58] sm:$0xff]
        %v1310 = vld [vmem:[#allocation5 + $0x1a60] sm:$0xff]
        %v1311 = vld [vmem:[#allocation5 + $0x1a68] sm:$0xff]
        %v1312 = vld [vmem:[#allocation5 + $0x1a70] sm:$0xff]
        %v1313 = vld [vmem:[#allocation5 + $0x1a78] sm:$0xff]
        %v1314 = vld [vmem:[#allocation5 + $0x1a80] sm:$0xff]
        %v1315 = vld [vmem:[#allocation5 + $0x1a88] sm:$0xff]
        %v1316 = vld [vmem:[#allocation5 + $0x1a90] sm:$0xff]
        %v1317 = vld [vmem:[#allocation5 + $0x1a98] sm:$0xff]
        %v1318 = vld [vmem:[#allocation5 + $0x1aa0] sm:$0xff]
        %v1319 = vld [vmem:[#allocation5 + $0x1aa8] sm:$0xff]
        %v1320 = vld [vmem:[#allocation5 + $0x1ab0] sm:$0xff]
        %v1321 = vld [vmem:[#allocation5 + $0x1ab8] sm:$0xff]
        %v1322 = vld [vmem:[#allocation5 + $0x1ac0] sm:$0xff]
        %v1323 = vld [vmem:[#allocation5 + $0x1ac8] sm:$0xff]
        %v1324 = vld [vmem:[#allocation5 + $0x1ad0] sm:$0xff]
        %v1325 = vld [vmem:[#allocation5 + $0x1ad8] sm:$0xff]
        %v1326 = vld [vmem:[#allocation5 + $0x1ae0] sm:$0xff]
        %v1327 = vld [vmem:[#allocation5 + $0x1ae8] sm:$0xff]
        %v1328 = vld [vmem:[#allocation5 + $0x1af0] sm:$0xff]
        %v1329 = vld [vmem:[#allocation5 + $0x1af8] sm:$0xff]
        %v1330 = vld [vmem:[#allocation5 + $0x1b00] sm:$0xff]
        %v1331 = vld [vmem:[#allocation5 + $0x1b08] sm:$0xff]
        %v1332 = vld [vmem:[#allocation5 + $0x1b10] sm:$0xff]
        %v1333 = vld [vmem:[#allocation5 + $0x1b18] sm:$0xff]
        %v1334 = vld [vmem:[#allocation5 + $0x1b20] sm:$0xff]
        %v1335 = vld [vmem:[#allocation5 + $0x1b28] sm:$0xff]
        %v1336 = vld [vmem:[#allocation5 + $0x1b30] sm:$0xff]
        %v1337 = vld [vmem:[#allocation5 + $0x1b38] sm:$0xff]
        %v1338 = vld [vmem:[#allocation5 + $0x1b40] sm:$0xff]
        %v1339 = vld [vmem:[#allocation5 + $0x1b48] sm:$0xff]
        %v1340 = vld [vmem:[#allocation5 + $0x1b50] sm:$0xff]
        %v1341 = vld [vmem:[#allocation5 + $0x1b58] sm:$0xff]
        %v1342 = vld [vmem:[#allocation5 + $0x1b60] sm:$0xff]
        %v1343 = vld [vmem:[#allocation5 + $0x1b68] sm:$0xff]
        %v1344 = vld [vmem:[#allocation5 + $0x1b70] sm:$0xff]
        %v1345 = vld [vmem:[#allocation5 + $0x1b78] sm:$0xff]
        %v1346 = vld [vmem:[#allocation5 + $0x1b80] sm:$0xff]
        %v1347 = vld [vmem:[#allocation5 + $0x1b88] sm:$0xff]
        %v1348 = vld [vmem:[#allocation5 + $0x1b90] sm:$0xff]
        %v1349 = vld [vmem:[#allocation5 + $0x1b98] sm:$0xff]
        %v1350 = vld [vmem:[#allocation5 + $0x1ba0] sm:$0xff]
        %v1351 = vld [vmem:[#allocation5 + $0x1ba8] sm:$0xff]
        %v1352 = vld [vmem:[#allocation5 + $0x1bb0] sm:$0xff]
        %v1353 = vld [vmem:[#allocation5 + $0x1bb8] sm:$0xff]
        %v1354 = vld [vmem:[#allocation5 + $0x1bc0] sm:$0xff]
        %v1355 = vld [vmem:[#allocation5 + $0x1bc8] sm:$0xff]
        %v1356 = vld [vmem:[#allocation5 + $0x1bd0] sm:$0xff]
        %v1357 = vld [vmem:[#allocation5 + $0x1bd8] sm:$0xff]
        %v1358 = vld [vmem:[#allocation5 + $0x1be0] sm:$0xff]
        %v1359 = vld [vmem:[#allocation5 + $0x1be8] sm:$0xff]
        %v1360 = vld [vmem:[#allocation5 + $0x1bf0] sm:$0xff]
        %v1361 = vld [vmem:[#allocation5 + $0x1bf8] sm:$0xff]
        %v1362 = vld [vmem:[#allocation5 + $0x1c00] sm:$0xff]
        %v1363 = vld [vmem:[#allocation5 + $0x1c08] sm:$0xff]
        %v1364 = vld [vmem:[#allocation5 + $0x1c10] sm:$0xff]
        %v1365 = vld [vmem:[#allocation5 + $0x1c18] sm:$0xff]
        %v1366 = vld [vmem:[#allocation5 + $0x1c20] sm:$0xff]
        %v1367 = vld [vmem:[#allocation5 + $0x1c28] sm:$0xff]
        %v1368 = vld [vmem:[#allocation5 + $0x1c30] sm:$0xff]
        %v1369 = vld [vmem:[#allocation5 + $0x1c38] sm:$0xff]
        %v1370 = vld [vmem:[#allocation5 + $0x1c40] sm:$0xff]
        %v1371 = vld [vmem:[#allocation5 + $0x1c48] sm:$0xff]
        %v1372 = vld [vmem:[#allocation5 + $0x1c50] sm:$0xff]
        %v1373 = vld [vmem:[#allocation5 + $0x1c58] sm:$0xff]
        %v1374 = vld [vmem:[#allocation5 + $0x1c60] sm:$0xff]
        %v1375 = vld [vmem:[#allocation5 + $0x1c68] sm:$0xff]
        %v1376 = vld [vmem:[#allocation5 + $0x1c70] sm:$0xff]
        %v1377 = vld [vmem:[#allocation5 + $0x1c78] sm:$0xff]
        %v1378 = vld [vmem:[#allocation5 + $0x1c80] sm:$0xff]
        %v1379 = vld [vmem:[#allocation5 + $0x1c88] sm:$0xff]
        %v1380 = vld [vmem:[#allocation5 + $0x1c90] sm:$0xff]
        %v1381 = vld [vmem:[#allocation5 + $0x1c98] sm:$0xff]
        %v1382 = vld [vmem:[#allocation5 + $0x1ca0] sm:$0xff]
        %v1383 = vld [vmem:[#allocation5 + $0x1ca8] sm:$0xff]
        %v1384 = vld [vmem:[#allocation5 + $0x1cb0] sm:$0xff]
        %v1385 = vld [vmem:[#allocation5 + $0x1cb8] sm:$0xff]
        %v1386 = vld [vmem:[#allocation5 + $0x1cc0] sm:$0xff]
        %v1387 = vld [vmem:[#allocation5 + $0x1cc8] sm:$0xff]
        %v1388 = vld [vmem:[#allocation5 + $0x1cd0] sm:$0xff]
        %v1389 = vld [vmem:[#allocation5 + $0x1cd8] sm:$0xff]
        %v1390 = vld [vmem:[#allocation5 + $0x1ce0] sm:$0xff]
        %v1391 = vld [vmem:[#allocation5 + $0x1ce8] sm:$0xff]
        %v1392 = vld [vmem:[#allocation5 + $0x1cf0] sm:$0xff]
        %v1393 = vld [vmem:[#allocation5 + $0x1cf8] sm:$0xff]
        %v1394 = vld [vmem:[#allocation5 + $0x1d00] sm:$0xff]
        %v1395 = vld [vmem:[#allocation5 + $0x1d08] sm:$0xff]
        %v1396 = vld [vmem:[#allocation5 + $0x1d10] sm:$0xff]
        %v1397 = vld [vmem:[#allocation5 + $0x1d18] sm:$0xff]
        %v1398 = vld [vmem:[#allocation5 + $0x1d20] sm:$0xff]
        %v1399 = vld [vmem:[#allocation5 + $0x1d28] sm:$0xff]
        %v1400 = vld [vmem:[#allocation5 + $0x1d30] sm:$0xff]
        %v1401 = vld [vmem:[#allocation5 + $0x1d38] sm:$0xff]
        %v1402 = vld [vmem:[#allocation5 + $0x1d40] sm:$0xff]
        %v1403 = vld [vmem:[#allocation5 + $0x1d48] sm:$0xff]
        %v1404 = vld [vmem:[#allocation5 + $0x1d50] sm:$0xff]
        %v1405 = vld [vmem:[#allocation5 + $0x1d58] sm:$0xff]
        %v1406 = vld [vmem:[#allocation5 + $0x1d60] sm:$0xff]
        %v1407 = vld [vmem:[#allocation5 + $0x1d68] sm:$0xff]
        %v1408 = vld [vmem:[#allocation5 + $0x1d70] sm:$0xff]
        %v1409 = vld [vmem:[#allocation5 + $0x1d78] sm:$0xff]
        %v1410 = vld [vmem:[#allocation5 + $0x1d80] sm:$0xff]
        %v1411 = vld [vmem:[#allocation5 + $0x1d88] sm:$0xff]
        %v1412 = vld [vmem:[#allocation5 + $0x1d90] sm:$0xff]
        %v1413 = vld [vmem:[#allocation5 + $0x1d98] sm:$0xff]
        %v1414 = vld [vmem:[#allocation5 + $0x1da0] sm:$0xff]
        %v1415 = vld [vmem:[#allocation5 + $0x1da8] sm:$0xff]
        %v1416 = vld [vmem:[#allocation5 + $0x1db0] sm:$0xff]
        %v1417 = vld [vmem:[#allocation5 + $0x1db8] sm:$0xff]
        %v1418 = vld [vmem:[#allocation5 + $0x1dc0] sm:$0xff]
        %v1419 = vld [vmem:[#allocation5 + $0x1dc8] sm:$0xff]
        %v1420 = vld [vmem:[#allocation5 + $0x1dd0] sm:$0xff]
        %v1421 = vld [vmem:[#allocation5 + $0x1dd8] sm:$0xff]
        %v1422 = vld [vmem:[#allocation5 + $0x1de0] sm:$0xff]
        %v1423 = vld [vmem:[#allocation5 + $0x1de8] sm:$0xff]
        %v1424 = vld [vmem:[#allocation5 + $0x1df0] sm:$0xff]
        %v1425 = vld [vmem:[#allocation5 + $0x1df8] sm:$0xff]
        %v1426 = vld [vmem:[#allocation5 + $0x1e00] sm:$0xff]
        %v1427 = vld [vmem:[#allocation5 + $0x1e08] sm:$0xff]
        %v1428 = vld [vmem:[#allocation5 + $0x1e10] sm:$0xff]
        %v1429 = vld [vmem:[#allocation5 + $0x1e18] sm:$0xff]
        %v1430 = vld [vmem:[#allocation5 + $0x1e20] sm:$0xff]
        %v1431 = vld [vmem:[#allocation5 + $0x1e28] sm:$0xff]
        %v1432 = vld [vmem:[#allocation5 + $0x1e30] sm:$0xff]
        %v1433 = vld [vmem:[#allocation5 + $0x1e38] sm:$0xff]
        %v1434 = vld [vmem:[#allocation5 + $0x1e40] sm:$0xff]
        %v1435 = vld [vmem:[#allocation5 + $0x1e48] sm:$0xff]
        %v1436 = vld [vmem:[#allocation5 + $0x1e50] sm:$0xff]
        %v1437 = vld [vmem:[#allocation5 + $0x1e58] sm:$0xff]
        %v1438 = vld [vmem:[#allocation5 + $0x1e60] sm:$0xff]
        %v1439 = vld [vmem:[#allocation5 + $0x1e68] sm:$0xff]
        %v1440 = vld [vmem:[#allocation5 + $0x1e70] sm:$0xff]
        %v1441 = vld [vmem:[#allocation5 + $0x1e78] sm:$0xff]
        %v1442 = vld [vmem:[#allocation5 + $0x1e80] sm:$0xff]
        %v1443 = vld [vmem:[#allocation5 + $0x1e88] sm:$0xff]
        %v1444 = vld [vmem:[#allocation5 + $0x1e90] sm:$0xff]
        %v1445 = vld [vmem:[#allocation5 + $0x1e98] sm:$0xff]
        %v1446 = vld [vmem:[#allocation5 + $0x1ea0] sm:$0xff]
        %v1447 = vld [vmem:[#allocation5 + $0x1ea8] sm:$0xff]
        %v1448 = vld [vmem:[#allocation5 + $0x1eb0] sm:$0xff]
        %v1449 = vld [vmem:[#allocation5 + $0x1eb8] sm:$0xff]
        %v1450 = vld [vmem:[#allocation5 + $0x1ec0] sm:$0xff]
        %v1451 = vld [vmem:[#allocation5 + $0x1ec8] sm:$0xff]
        %v1452 = vld [vmem:[#allocation5 + $0x1ed0] sm:$0xff]
        %v1453 = vld [vmem:[#allocation5 + $0x1ed8] sm:$0xff]
        %v1454 = vld [vmem:[#allocation5 + $0x1ee0] sm:$0xff]
        %v1455 = vld [vmem:[#allocation5 + $0x1ee8] sm:$0xff]
        %v1456 = vld [vmem:[#allocation5 + $0x1ef0] sm:$0xff]
        %v1457 = vld [vmem:[#allocation5 + $0x1ef8] sm:$0xff]
        %v1458 = vld [vmem:[#allocation5 + $0x1f00] sm:$0xff]
        %v1459 = vld [vmem:[#allocation5 + $0x1f08] sm:$0xff]
        %v1460 = vld [vmem:[#allocation5 + $0x1f10] sm:$0xff]
        %v1461 = vld [vmem:[#allocation5 + $0x1f18] sm:$0xff]
        %v1462 = vld [vmem:[#allocation5 + $0x1f20] sm:$0xff]
        %v1463 = vld [vmem:[#allocation5 + $0x1f28] sm:$0xff]
        %v1464 = vld [vmem:[#allocation5 + $0x1f30] sm:$0xff]
        %v1465 = vld [vmem:[#allocation5 + $0x1f38] sm:$0xff]
        %v1466 = vld [vmem:[#allocation5 + $0x1f40] sm:$0xff]
        %v1467 = vld [vmem:[#allocation5 + $0x1f48] sm:$0xff]
        %v1468 = vld [vmem:[#allocation5 + $0x1f50] sm:$0xff]
        %v1469 = vld [vmem:[#allocation5 + $0x1f58] sm:$0xff]
        %v1470 = vld [vmem:[#allocation5 + $0x1f60] sm:$0xff]
        %v1471 = vld [vmem:[#allocation5 + $0x1f68] sm:$0xff]
        %v1472 = vld [vmem:[#allocation5 + $0x1f70] sm:$0xff]
        %v1473 = vld [vmem:[#allocation5 + $0x1f78] sm:$0xff]
        %v1474 = vld [vmem:[#allocation5 + $0x1f80] sm:$0xff]
        %v1475 = vld [vmem:[#allocation5 + $0x1f88] sm:$0xff]
        %v1476 = vld [vmem:[#allocation5 + $0x1f90] sm:$0xff]
        %v1477 = vld [vmem:[#allocation5 + $0x1f98] sm:$0xff]
        %v1478 = vld [vmem:[#allocation5 + $0x1fa0] sm:$0xff]
        %v1479 = vld [vmem:[#allocation5 + $0x1fa8] sm:$0xff]
        %v1480 = vld [vmem:[#allocation5 + $0x1fb0] sm:$0xff]
        %v1481 = vld [vmem:[#allocation5 + $0x1fb8] sm:$0xff]
        %v1482 = vld [vmem:[#allocation5 + $0x1fc0] sm:$0xff]
        %v1483 = vld [vmem:[#allocation5 + $0x1fc8] sm:$0xff]
        %v1484 = vld [vmem:[#allocation5 + $0x1fd0] sm:$0xff]
        %v1485 = vld [vmem:[#allocation5 + $0x1fd8] sm:$0xff]
        %v1486 = vld [vmem:[#allocation5 + $0x1fe0] sm:$0xff]
        %v1487 = vld [vmem:[#allocation5 + $0x1fe8] sm:$0xff]
        %v1488 = vld [vmem:[#allocation5 + $0x1ff0] sm:$0xff]
        %v1489 = vld [vmem:[#allocation5 + $0x1ff8] sm:$0xff]
        %v1490 = vld [vmem:[#allocation7] sm:$0xff]
        %v1492 = vlaneseq
        %v1493 = vshrl.u32 %v1492, 7
        %v1494 = vsub.s32 0, %v1493
        %v1495 = vrot.slane %v1490, %v1494
        %v1496 = vlaneseq
        %v1497 = vshrl.u32 %v1496, 7
        %v1498 = vsub.s32 1, %v1497
        %v1499 = vrot.slane %v1490, %v1498
        %v1500 = vlaneseq
        %v1501 = vshrl.u32 %v1500, 7
        %v1502 = vsub.s32 2, %v1501
        %v1503 = vrot.slane %v1490, %v1502
        %v1504 = vlaneseq
        %v1505 = vshrl.u32 %v1504, 7
        %v1506 = vsub.s32 3, %v1505
        %v1507 = vrot.slane %v1490, %v1506
        %v1508 = vlaneseq
        %v1509 = vshrl.u32 %v1508, 7
        %v1510 = vsub.s32 4, %v1509
        %v1511 = vrot.slane %v1490, %v1510
        %v1512 = vlaneseq
        %v1513 = vshrl.u32 %v1512, 7
        %v1514 = vsub.s32 5, %v1513
        %v1515 = vrot.slane %v1490, %v1514
        %v1516 = vlaneseq
        %v1517 = vshrl.u32 %v1516, 7
        %v1518 = vsub.s32 6, %v1517
        %v1519 = vrot.slane %v1490, %v1518
        %v1520 = vlaneseq
        %v1521 = vshrl.u32 %v1520, 7
        %v1522 = vsub.s32 7, %v1521
        %v1523 = vrot.slane %v1490, %v1522
        %v1540 = vunpack.c.l.b16 %v458
        %v1541 = vunpack.c.h.b16 %v458
        %v1542 = vunpack.c.l.b16 %v459
        %v1543 = vunpack.c.h.b16 %v459
        %v1544 = vunpack.c.l.b16 %v460
        %v1545 = vunpack.c.h.b16 %v460
        %v1546 = vunpack.c.l.b16 %v461
        %v1547 = vunpack.c.h.b16 %v461
        %v1548 = vunpack.c.l.b16 %v462
        %v1549 = vunpack.c.h.b16 %v462
        %v1550 = vunpack.c.l.b16 %v463
        %v1551 = vunpack.c.h.b16 %v463
        %v1552 = vunpack.c.l.b16 %v464
        %v1553 = vunpack.c.h.b16 %v464
        %v1554 = vunpack.c.l.b16 %v465
        %v1555 = vunpack.c.h.b16 %v465
        %v1556 = vpack.c.b16 %v1540, %v1540
        %v1557 = vpack.c.b16 %v1541, %v1541
        %v1558 = vpack.c.b16 %v1542, %v1542
        %v1559 = vpack.c.b16 %v1543, %v1543
        %v1560 = vpack.c.b16 %v1544, %v1544
        %v1561 = vpack.c.b16 %v1545, %v1545
        %v1562 = vpack.c.b16 %v1546, %v1546
        %v1563 = vpack.c.b16 %v1547, %v1547
        %v1564 = vpack.c.b16 %v1548, %v1548
        %v1565 = vpack.c.b16 %v1549, %v1549
        %v1566 = vpack.c.b16 %v1550, %v1550
        %v1567 = vpack.c.b16 %v1551, %v1551
        %v1568 = vpack.c.b16 %v1552, %v1552
        %v1569 = vpack.c.b16 %v1553, %v1553
        %v1570 = vpack.c.b16 %v1554, %v1554
        %v1571 = vpack.c.b16 %v1555, %v1555
        %v2612 = vunpack.c.l.b16 %v466
        %v2613 = vunpack.c.h.b16 %v466
        %v2614 = vunpack.c.l.b16 %v467
        %v2615 = vunpack.c.h.b16 %v467
        %v2616 = vunpack.c.l.b16 %v468
        %v2617 = vunpack.c.h.b16 %v468
        %v2618 = vunpack.c.l.b16 %v469
        %v2619 = vunpack.c.h.b16 %v469
        %v2620 = vunpack.c.l.b16 %v470
        %v2621 = vunpack.c.h.b16 %v470
        %v2622 = vunpack.c.l.b16 %v471
        %v2623 = vunpack.c.h.b16 %v471
        %v2624 = vunpack.c.l.b16 %v472
        %v2625 = vunpack.c.h.b16 %v472
        %v2626 = vunpack.c.l.b16 %v473
        %v2627 = vunpack.c.h.b16 %v473
        %v2628 = vunpack.c.l.b16 %v474
        %v2629 = vunpack.c.h.b16 %v474
        %v2630 = vunpack.c.l.b16 %v475
        %v2631 = vunpack.c.h.b16 %v475
        %v2632 = vunpack.c.l.b16 %v476
        %v2633 = vunpack.c.h.b16 %v476
        %v2634 = vunpack.c.l.b16 %v477
        %v2635 = vunpack.c.h.b16 %v477
        %v2636 = vunpack.c.l.b16 %v478
        %v2637 = vunpack.c.h.b16 %v478
        %v2638 = vunpack.c.l.b16 %v479
        %v2639 = vunpack.c.h.b16 %v479
        %v2640 = vunpack.c.l.b16 %v480
        %v2641 = vunpack.c.h.b16 %v480
        %v2642 = vunpack.c.l.b16 %v481
        %v2643 = vunpack.c.h.b16 %v481
        %v2644 = vunpack.c.l.b16 %v482
        %v2645 = vunpack.c.h.b16 %v482
        %v2646 = vunpack.c.l.b16 %v483
        %v2647 = vunpack.c.h.b16 %v483
        %v2648 = vunpack.c.l.b16 %v484
        %v2649 = vunpack.c.h.b16 %v484
        %v2650 = vunpack.c.l.b16 %v485
        %v2651 = vunpack.c.h.b16 %v485
        %v2652 = vunpack.c.l.b16 %v486
        %v2653 = vunpack.c.h.b16 %v486
        %v2654 = vunpack.c.l.b16 %v487
        %v2655 = vunpack.c.h.b16 %v487
        %v2656 = vunpack.c.l.b16 %v488
        %v2657 = vunpack.c.h.b16 %v488
        %v2658 = vunpack.c.l.b16 %v489
        %v2659 = vunpack.c.h.b16 %v489
        %v2660 = vunpack.c.l.b16 %v490
        %v2661 = vunpack.c.h.b16 %v490
        %v2662 = vunpack.c.l.b16 %v491
        %v2663 = vunpack.c.h.b16 %v491
        %v2664 = vunpack.c.l.b16 %v492
        %v2665 = vunpack.c.h.b16 %v492
        %v2666 = vunpack.c.l.b16 %v493
        %v2667 = vunpack.c.h.b16 %v493
        %v2668 = vunpack.c.l.b16 %v494
        %v2669 = vunpack.c.h.b16 %v494
        %v2670 = vunpack.c.l.b16 %v495
        %v2671 = vunpack.c.h.b16 %v495
        %v2672 = vunpack.c.l.b16 %v496
        %v2673 = vunpack.c.h.b16 %v496
        %v2674 = vunpack.c.l.b16 %v497
        %v2675 = vunpack.c.h.b16 %v497
        %v2676 = vunpack.c.l.b16 %v498
        %v2677 = vunpack.c.h.b16 %v498
        %v2678 = vunpack.c.l.b16 %v499
        %v2679 = vunpack.c.h.b16 %v499
        %v2680 = vunpack.c.l.b16 %v500
        %v2681 = vunpack.c.h.b16 %v500
        %v2682 = vunpack.c.l.b16 %v501
        %v2683 = vunpack.c.h.b16 %v501
        %v2684 = vunpack.c.l.b16 %v502
        %v2685 = vunpack.c.h.b16 %v502
        %v2686 = vunpack.c.l.b16 %v503
        %v2687 = vunpack.c.h.b16 %v503
        %v2688 = vunpack.c.l.b16 %v504
        %v2689 = vunpack.c.h.b16 %v504
        %v2690 = vunpack.c.l.b16 %v505
        %v2691 = vunpack.c.h.b16 %v505
        %v2692 = vunpack.c.l.b16 %v506
        %v2693 = vunpack.c.h.b16 %v506
        %v2694 = vunpack.c.l.b16 %v507
        %v2695 = vunpack.c.h.b16 %v507
        %v2696 = vunpack.c.l.b16 %v508
        %v2697 = vunpack.c.h.b16 %v508
        %v2698 = vunpack.c.l.b16 %v509
        %v2699 = vunpack.c.h.b16 %v509
        %v2700 = vunpack.c.l.b16 %v510
        %v2701 = vunpack.c.h.b16 %v510
        %v2702 = vunpack.c.l.b16 %v511
        %v2703 = vunpack.c.h.b16 %v511
        %v2704 = vunpack.c.l.b16 %v512
        %v2705 = vunpack.c.h.b16 %v512
        %v2706 = vunpack.c.l.b16 %v513
        %v2707 = vunpack.c.h.b16 %v513
        %v2708 = vunpack.c.l.b16 %v514
        %v2709 = vunpack.c.h.b16 %v514
        %v2710 = vunpack.c.l.b16 %v515
        %v2711 = vunpack.c.h.b16 %v515
        %v2712 = vunpack.c.l.b16 %v516
        %v2713 = vunpack.c.h.b16 %v516
        %v2714 = vunpack.c.l.b16 %v517
        %v2715 = vunpack.c.h.b16 %v517
        %v2716 = vunpack.c.l.b16 %v518
        %v2717 = vunpack.c.h.b16 %v518
        %v2718 = vunpack.c.l.b16 %v519
        %v2719 = vunpack.c.h.b16 %v519
        %v2720 = vunpack.c.l.b16 %v520
        %v2721 = vunpack.c.h.b16 %v520
        %v2722 = vunpack.c.l.b16 %v521
        %v2723 = vunpack.c.h.b16 %v521
        %v2724 = vunpack.c.l.b16 %v522
        %v2725 = vunpack.c.h.b16 %v522
        %v2726 = vunpack.c.l.b16 %v523
        %v2727 = vunpack.c.h.b16 %v523
        %v2728 = vunpack.c.l.b16 %v524
        %v2729 = vunpack.c.h.b16 %v524
        %v2730 = vunpack.c.l.b16 %v525
        %v2731 = vunpack.c.h.b16 %v525
        %v2732 = vunpack.c.l.b16 %v526
        %v2733 = vunpack.c.h.b16 %v526
        %v2734 = vunpack.c.l.b16 %v527
        %v2735 = vunpack.c.h.b16 %v527
        %v2736 = vunpack.c.l.b16 %v528
        %v2737 = vunpack.c.h.b16 %v528
        %v2738 = vunpack.c.l.b16 %v529
        %v2739 = vunpack.c.h.b16 %v529
        %v2740 = vunpack.c.l.b16 %v530
        %v2741 = vunpack.c.h.b16 %v530
        %v2742 = vunpack.c.l.b16 %v531
        %v2743 = vunpack.c.h.b16 %v531
        %v2744 = vunpack.c.l.b16 %v532
        %v2745 = vunpack.c.h.b16 %v532
        %v2746 = vunpack.c.l.b16 %v533
        %v2747 = vunpack.c.h.b16 %v533
        %v2748 = vunpack.c.l.b16 %v534
        %v2749 = vunpack.c.h.b16 %v534
        %v2750 = vunpack.c.l.b16 %v535
        %v2751 = vunpack.c.h.b16 %v535
        %v2752 = vunpack.c.l.b16 %v536
        %v2753 = vunpack.c.h.b16 %v536
        %v2754 = vunpack.c.l.b16 %v537
        %v2755 = vunpack.c.h.b16 %v537
        %v2756 = vunpack.c.l.b16 %v538
        %v2757 = vunpack.c.h.b16 %v538
        %v2758 = vunpack.c.l.b16 %v539
        %v2759 = vunpack.c.h.b16 %v539
        %v2760 = vunpack.c.l.b16 %v540
        %v2761 = vunpack.c.h.b16 %v540
        %v2762 = vunpack.c.l.b16 %v541
        %v2763 = vunpack.c.h.b16 %v541
        %v2764 = vunpack.c.l.b16 %v542
        %v2765 = vunpack.c.h.b16 %v542
        %v2766 = vunpack.c.l.b16 %v543
        %v2767 = vunpack.c.h.b16 %v543
        %v2768 = vunpack.c.l.b16 %v544
        %v2769 = vunpack.c.h.b16 %v544
        %v2770 = vunpack.c.l.b16 %v545
        %v2771 = vunpack.c.h.b16 %v545
        %v2772 = vunpack.c.l.b16 %v546
        %v2773 = vunpack.c.h.b16 %v546
        %v2774 = vunpack.c.l.b16 %v547
        %v2775 = vunpack.c.h.b16 %v547
        %v2776 = vunpack.c.l.b16 %v548
        %v2777 = vunpack.c.h.b16 %v548
        %v2778 = vunpack.c.l.b16 %v549
        %v2779 = vunpack.c.h.b16 %v549
        %v2780 = vunpack.c.l.b16 %v550
        %v2781 = vunpack.c.h.b16 %v550
        %v2782 = vunpack.c.l.b16 %v551
        %v2783 = vunpack.c.h.b16 %v551
        %v2784 = vunpack.c.l.b16 %v552
        %v2785 = vunpack.c.h.b16 %v552
        %v2786 = vunpack.c.l.b16 %v553
        %v2787 = vunpack.c.h.b16 %v553
        %v2788 = vunpack.c.l.b16 %v554
        %v2789 = vunpack.c.h.b16 %v554
        %v2790 = vunpack.c.l.b16 %v555
        %v2791 = vunpack.c.h.b16 %v555
        %v2792 = vunpack.c.l.b16 %v556
        %v2793 = vunpack.c.h.b16 %v556
        %v2794 = vunpack.c.l.b16 %v557
        %v2795 = vunpack.c.h.b16 %v557
        %v2796 = vunpack.c.l.b16 %v558
        %v2797 = vunpack.c.h.b16 %v558
        %v2798 = vunpack.c.l.b16 %v559
        %v2799 = vunpack.c.h.b16 %v559
        %v2800 = vunpack.c.l.b16 %v560
        %v2801 = vunpack.c.h.b16 %v560
        %v2802 = vunpack.c.l.b16 %v561
        %v2803 = vunpack.c.h.b16 %v561
        %v2804 = vunpack.c.l.b16 %v562
        %v2805 = vunpack.c.h.b16 %v562
        %v2806 = vunpack.c.l.b16 %v563
        %v2807 = vunpack.c.h.b16 %v563
        %v2808 = vunpack.c.l.b16 %v564
        %v2809 = vunpack.c.h.b16 %v564
        %v2810 = vunpack.c.l.b16 %v565
        %v2811 = vunpack.c.h.b16 %v565
        %v2812 = vunpack.c.l.b16 %v566
        %v2813 = vunpack.c.h.b16 %v566
        %v2814 = vunpack.c.l.b16 %v567
        %v2815 = vunpack.c.h.b16 %v567
        %v2816 = vunpack.c.l.b16 %v568
        %v2817 = vunpack.c.h.b16 %v568
        %v2818 = vunpack.c.l.b16 %v569
        %v2819 = vunpack.c.h.b16 %v569
        %v2820 = vunpack.c.l.b16 %v570
        %v2821 = vunpack.c.h.b16 %v570
        %v2822 = vunpack.c.l.b16 %v571
        %v2823 = vunpack.c.h.b16 %v571
        %v2824 = vunpack.c.l.b16 %v572
        %v2825 = vunpack.c.h.b16 %v572
        %v2826 = vunpack.c.l.b16 %v573
        %v2827 = vunpack.c.h.b16 %v573
        %v2828 = vunpack.c.l.b16 %v574
        %v2829 = vunpack.c.h.b16 %v574
        %v2830 = vunpack.c.l.b16 %v575
        %v2831 = vunpack.c.h.b16 %v575
        %v2832 = vunpack.c.l.b16 %v576
        %v2833 = vunpack.c.h.b16 %v576
        %v2834 = vunpack.c.l.b16 %v577
        %v2835 = vunpack.c.h.b16 %v577
        %v2836 = vunpack.c.l.b16 %v578
        %v2837 = vunpack.c.h.b16 %v578
        %v2838 = vunpack.c.l.b16 %v579
        %v2839 = vunpack.c.h.b16 %v579
        %v2840 = vunpack.c.l.b16 %v580
        %v2841 = vunpack.c.h.b16 %v580
        %v2842 = vunpack.c.l.b16 %v581
        %v2843 = vunpack.c.h.b16 %v581
        %v2844 = vunpack.c.l.b16 %v582
        %v2845 = vunpack.c.h.b16 %v582
        %v2846 = vunpack.c.l.b16 %v583
        %v2847 = vunpack.c.h.b16 %v583
        %v2848 = vunpack.c.l.b16 %v584
        %v2849 = vunpack.c.h.b16 %v584
        %v2850 = vunpack.c.l.b16 %v585
        %v2851 = vunpack.c.h.b16 %v585
        %v2852 = vunpack.c.l.b16 %v586
        %v2853 = vunpack.c.h.b16 %v586
        %v2854 = vunpack.c.l.b16 %v587
        %v2855 = vunpack.c.h.b16 %v587
        %v2856 = vunpack.c.l.b16 %v588
        %v2857 = vunpack.c.h.b16 %v588
        %v2858 = vunpack.c.l.b16 %v589
        %v2859 = vunpack.c.h.b16 %v589
        %v2860 = vunpack.c.l.b16 %v590
        %v2861 = vunpack.c.h.b16 %v590
        %v2862 = vunpack.c.l.b16 %v591
        %v2863 = vunpack.c.h.b16 %v591
        %v2864 = vunpack.c.l.b16 %v592
        %v2865 = vunpack.c.h.b16 %v592
        %v2866 = vunpack.c.l.b16 %v593
        %v2867 = vunpack.c.h.b16 %v593
        %v2868 = vunpack.c.l.b16 %v594
        %v2869 = vunpack.c.h.b16 %v594
        %v2870 = vunpack.c.l.b16 %v595
        %v2871 = vunpack.c.h.b16 %v595
        %v2872 = vunpack.c.l.b16 %v596
        %v2873 = vunpack.c.h.b16 %v596
        %v2874 = vunpack.c.l.b16 %v597
        %v2875 = vunpack.c.h.b16 %v597
        %v2876 = vunpack.c.l.b16 %v598
        %v2877 = vunpack.c.h.b16 %v598
        %v2878 = vunpack.c.l.b16 %v599
        %v2879 = vunpack.c.h.b16 %v599
        %v2880 = vunpack.c.l.b16 %v600
        %v2881 = vunpack.c.h.b16 %v600
        %v2882 = vunpack.c.l.b16 %v601
        %v2883 = vunpack.c.h.b16 %v601
        %v2884 = vunpack.c.l.b16 %v602
        %v2885 = vunpack.c.h.b16 %v602
        %v2886 = vunpack.c.l.b16 %v603
        %v2887 = vunpack.c.h.b16 %v603
        %v2888 = vunpack.c.l.b16 %v604
        %v2889 = vunpack.c.h.b16 %v604
        %v2890 = vunpack.c.l.b16 %v605
        %v2891 = vunpack.c.h.b16 %v605
        %v2892 = vunpack.c.l.b16 %v606
        %v2893 = vunpack.c.h.b16 %v606
        %v2894 = vunpack.c.l.b16 %v607
        %v2895 = vunpack.c.h.b16 %v607
        %v2896 = vunpack.c.l.b16 %v608
        %v2897 = vunpack.c.h.b16 %v608
        %v2898 = vunpack.c.l.b16 %v609
        %v2899 = vunpack.c.h.b16 %v609
        %v2900 = vunpack.c.l.b16 %v610
        %v2901 = vunpack.c.h.b16 %v610
        %v2902 = vunpack.c.l.b16 %v611
        %v2903 = vunpack.c.h.b16 %v611
        %v2904 = vunpack.c.l.b16 %v612
        %v2905 = vunpack.c.h.b16 %v612
        %v2906 = vunpack.c.l.b16 %v613
        %v2907 = vunpack.c.h.b16 %v613
        %v2908 = vunpack.c.l.b16 %v614
        %v2909 = vunpack.c.h.b16 %v614
        %v2910 = vunpack.c.l.b16 %v615
        %v2911 = vunpack.c.h.b16 %v615
        %v2912 = vunpack.c.l.b16 %v616
        %v2913 = vunpack.c.h.b16 %v616
        %v2914 = vunpack.c.l.b16 %v617
        %v2915 = vunpack.c.h.b16 %v617
        %v2916 = vunpack.c.l.b16 %v618
        %v2917 = vunpack.c.h.b16 %v618
        %v2918 = vunpack.c.l.b16 %v619
        %v2919 = vunpack.c.h.b16 %v619
        %v2920 = vunpack.c.l.b16 %v620
        %v2921 = vunpack.c.h.b16 %v620
        %v2922 = vunpack.c.l.b16 %v621
        %v2923 = vunpack.c.h.b16 %v621
        %v2924 = vunpack.c.l.b16 %v622
        %v2925 = vunpack.c.h.b16 %v622
        %v2926 = vunpack.c.l.b16 %v623
        %v2927 = vunpack.c.h.b16 %v623
        %v2928 = vunpack.c.l.b16 %v624
        %v2929 = vunpack.c.h.b16 %v624
        %v2930 = vunpack.c.l.b16 %v625
        %v2931 = vunpack.c.h.b16 %v625
        %v2932 = vunpack.c.l.b16 %v626
        %v2933 = vunpack.c.h.b16 %v626
        %v2934 = vunpack.c.l.b16 %v627
        %v2935 = vunpack.c.h.b16 %v627
        %v2936 = vunpack.c.l.b16 %v628
        %v2937 = vunpack.c.h.b16 %v628
        %v2938 = vunpack.c.l.b16 %v629
        %v2939 = vunpack.c.h.b16 %v629
        %v2940 = vunpack.c.l.b16 %v630
        %v2941 = vunpack.c.h.b16 %v630
        %v2942 = vunpack.c.l.b16 %v631
        %v2943 = vunpack.c.h.b16 %v631
        %v2944 = vunpack.c.l.b16 %v632
        %v2945 = vunpack.c.h.b16 %v632
        %v2946 = vunpack.c.l.b16 %v633
        %v2947 = vunpack.c.h.b16 %v633
        %v2948 = vunpack.c.l.b16 %v634
        %v2949 = vunpack.c.h.b16 %v634
        %v2950 = vunpack.c.l.b16 %v635
        %v2951 = vunpack.c.h.b16 %v635
        %v2952 = vunpack.c.l.b16 %v636
        %v2953 = vunpack.c.h.b16 %v636
        %v2954 = vunpack.c.l.b16 %v637
        %v2955 = vunpack.c.h.b16 %v637
        %v2956 = vunpack.c.l.b16 %v638
        %v2957 = vunpack.c.h.b16 %v638
        %v2958 = vunpack.c.l.b16 %v639
        %v2959 = vunpack.c.h.b16 %v639
        %v2960 = vunpack.c.l.b16 %v640
        %v2961 = vunpack.c.h.b16 %v640
        %v2962 = vunpack.c.l.b16 %v641
        %v2963 = vunpack.c.h.b16 %v641
        %v2964 = vunpack.c.l.b16 %v642
        %v2965 = vunpack.c.h.b16 %v642
        %v2966 = vunpack.c.l.b16 %v643
        %v2967 = vunpack.c.h.b16 %v643
        %v2968 = vunpack.c.l.b16 %v644
        %v2969 = vunpack.c.h.b16 %v644
        %v2970 = vunpack.c.l.b16 %v645
        %v2971 = vunpack.c.h.b16 %v645
        %v2972 = vunpack.c.l.b16 %v646
        %v2973 = vunpack.c.h.b16 %v646
        %v2974 = vunpack.c.l.b16 %v647
        %v2975 = vunpack.c.h.b16 %v647
        %v2976 = vunpack.c.l.b16 %v648
        %v2977 = vunpack.c.h.b16 %v648
        %v2978 = vunpack.c.l.b16 %v649
        %v2979 = vunpack.c.h.b16 %v649
        %v2980 = vunpack.c.l.b16 %v650
        %v2981 = vunpack.c.h.b16 %v650
        %v2982 = vunpack.c.l.b16 %v651
        %v2983 = vunpack.c.h.b16 %v651
        %v2984 = vunpack.c.l.b16 %v652
        %v2985 = vunpack.c.h.b16 %v652
        %v2986 = vunpack.c.l.b16 %v653
        %v2987 = vunpack.c.h.b16 %v653
        %v2988 = vunpack.c.l.b16 %v654
        %v2989 = vunpack.c.h.b16 %v654
        %v2990 = vunpack.c.l.b16 %v655
        %v2991 = vunpack.c.h.b16 %v655
        %v2992 = vunpack.c.l.b16 %v656
        %v2993 = vunpack.c.h.b16 %v656
        %v2994 = vunpack.c.l.b16 %v657
        %v2995 = vunpack.c.h.b16 %v657
        %v2996 = vunpack.c.l.b16 %v658
        %v2997 = vunpack.c.h.b16 %v658
        %v2998 = vunpack.c.l.b16 %v659
        %v2999 = vunpack.c.h.b16 %v659
        %v3000 = vunpack.c.l.b16 %v660
        %v3001 = vunpack.c.h.b16 %v660
        %v3002 = vunpack.c.l.b16 %v661
        %v3003 = vunpack.c.h.b16 %v661
        %v3004 = vunpack.c.l.b16 %v662
        %v3005 = vunpack.c.h.b16 %v662
        %v3006 = vunpack.c.l.b16 %v663
        %v3007 = vunpack.c.h.b16 %v663
        %v3008 = vunpack.c.l.b16 %v664
        %v3009 = vunpack.c.h.b16 %v664
        %v3010 = vunpack.c.l.b16 %v665
        %v3011 = vunpack.c.h.b16 %v665
        %v3012 = vunpack.c.l.b16 %v666
        %v3013 = vunpack.c.h.b16 %v666
        %v3014 = vunpack.c.l.b16 %v667
        %v3015 = vunpack.c.h.b16 %v667
        %v3016 = vunpack.c.l.b16 %v668
        %v3017 = vunpack.c.h.b16 %v668
        %v3018 = vunpack.c.l.b16 %v669
        %v3019 = vunpack.c.h.b16 %v669
        %v3020 = vunpack.c.l.b16 %v670
        %v3021 = vunpack.c.h.b16 %v670
        %v3022 = vunpack.c.l.b16 %v671
        %v3023 = vunpack.c.h.b16 %v671
        %v3024 = vunpack.c.l.b16 %v672
        %v3025 = vunpack.c.h.b16 %v672
        %v3026 = vunpack.c.l.b16 %v673
        %v3027 = vunpack.c.h.b16 %v673
        %v3028 = vunpack.c.l.b16 %v674
        %v3029 = vunpack.c.h.b16 %v674
        %v3030 = vunpack.c.l.b16 %v675
        %v3031 = vunpack.c.h.b16 %v675
        %v3032 = vunpack.c.l.b16 %v676
        %v3033 = vunpack.c.h.b16 %v676
        %v3034 = vunpack.c.l.b16 %v677
        %v3035 = vunpack.c.h.b16 %v677
        %v3036 = vunpack.c.l.b16 %v678
        %v3037 = vunpack.c.h.b16 %v678
        %v3038 = vunpack.c.l.b16 %v679
        %v3039 = vunpack.c.h.b16 %v679
        %v3040 = vunpack.c.l.b16 %v680
        %v3041 = vunpack.c.h.b16 %v680
        %v3042 = vunpack.c.l.b16 %v681
        %v3043 = vunpack.c.h.b16 %v681
        %v3044 = vunpack.c.l.b16 %v682
        %v3045 = vunpack.c.h.b16 %v682
        %v3046 = vunpack.c.l.b16 %v683
        %v3047 = vunpack.c.h.b16 %v683
        %v3048 = vunpack.c.l.b16 %v684
        %v3049 = vunpack.c.h.b16 %v684
        %v3050 = vunpack.c.l.b16 %v685
        %v3051 = vunpack.c.h.b16 %v685
        %v3052 = vunpack.c.l.b16 %v686
        %v3053 = vunpack.c.h.b16 %v686
        %v3054 = vunpack.c.l.b16 %v687
        %v3055 = vunpack.c.h.b16 %v687
        %v3056 = vunpack.c.l.b16 %v688
        %v3057 = vunpack.c.h.b16 %v688
        %v3058 = vunpack.c.l.b16 %v689
        %v3059 = vunpack.c.h.b16 %v689
        %v3060 = vunpack.c.l.b16 %v690
        %v3061 = vunpack.c.h.b16 %v690
        %v3062 = vunpack.c.l.b16 %v691
        %v3063 = vunpack.c.h.b16 %v691
        %v3064 = vunpack.c.l.b16 %v692
        %v3065 = vunpack.c.h.b16 %v692
        %v3066 = vunpack.c.l.b16 %v693
        %v3067 = vunpack.c.h.b16 %v693
        %v3068 = vunpack.c.l.b16 %v694
        %v3069 = vunpack.c.h.b16 %v694
        %v3070 = vunpack.c.l.b16 %v695
        %v3071 = vunpack.c.h.b16 %v695
        %v3072 = vunpack.c.l.b16 %v696
        %v3073 = vunpack.c.h.b16 %v696
        %v3074 = vunpack.c.l.b16 %v697
        %v3075 = vunpack.c.h.b16 %v697
        %v3076 = vunpack.c.l.b16 %v698
        %v3077 = vunpack.c.h.b16 %v698
        %v3078 = vunpack.c.l.b16 %v699
        %v3079 = vunpack.c.h.b16 %v699
        %v3080 = vunpack.c.l.b16 %v700
        %v3081 = vunpack.c.h.b16 %v700
        %v3082 = vunpack.c.l.b16 %v701
        %v3083 = vunpack.c.h.b16 %v701
        %v3084 = vunpack.c.l.b16 %v702
        %v3085 = vunpack.c.h.b16 %v702
        %v3086 = vunpack.c.l.b16 %v703
        %v3087 = vunpack.c.h.b16 %v703
        %v3088 = vunpack.c.l.b16 %v704
        %v3089 = vunpack.c.h.b16 %v704
        %v3090 = vunpack.c.l.b16 %v705
        %v3091 = vunpack.c.h.b16 %v705
        %v3092 = vunpack.c.l.b16 %v706
        %v3093 = vunpack.c.h.b16 %v706
        %v3094 = vunpack.c.l.b16 %v707
        %v3095 = vunpack.c.h.b16 %v707
        %v3096 = vunpack.c.l.b16 %v708
        %v3097 = vunpack.c.h.b16 %v708
        %v3098 = vunpack.c.l.b16 %v709
        %v3099 = vunpack.c.h.b16 %v709
        %v3100 = vunpack.c.l.b16 %v710
        %v3101 = vunpack.c.h.b16 %v710
        %v3102 = vunpack.c.l.b16 %v711
        %v3103 = vunpack.c.h.b16 %v711
        %v3104 = vunpack.c.l.b16 %v712
        %v3105 = vunpack.c.h.b16 %v712
        %v3106 = vunpack.c.l.b16 %v713
        %v3107 = vunpack.c.h.b16 %v713
        %v3108 = vunpack.c.l.b16 %v714
        %v3109 = vunpack.c.h.b16 %v714
        %v3110 = vunpack.c.l.b16 %v715
        %v3111 = vunpack.c.h.b16 %v715
        %v3112 = vunpack.c.l.b16 %v716
        %v3113 = vunpack.c.h.b16 %v716
        %v3114 = vunpack.c.l.b16 %v717
        %v3115 = vunpack.c.h.b16 %v717
        %v3116 = vunpack.c.l.b16 %v718
        %v3117 = vunpack.c.h.b16 %v718
        %v3118 = vunpack.c.l.b16 %v719
        %v3119 = vunpack.c.h.b16 %v719
        %v3120 = vunpack.c.l.b16 %v720
        %v3121 = vunpack.c.h.b16 %v720
        %v3122 = vunpack.c.l.b16 %v721
        %v3123 = vunpack.c.h.b16 %v721
        %v3124 = vunpack.c.l.b16 %v722
        %v3125 = vunpack.c.h.b16 %v722
        %v3126 = vunpack.c.l.b16 %v723
        %v3127 = vunpack.c.h.b16 %v723
        %v3128 = vunpack.c.l.b16 %v724
        %v3129 = vunpack.c.h.b16 %v724
        %v3130 = vunpack.c.l.b16 %v725
        %v3131 = vunpack.c.h.b16 %v725
        %v3132 = vunpack.c.l.b16 %v726
        %v3133 = vunpack.c.h.b16 %v726
        %v3134 = vunpack.c.l.b16 %v727
        %v3135 = vunpack.c.h.b16 %v727
        %v3136 = vunpack.c.l.b16 %v728
        %v3137 = vunpack.c.h.b16 %v728
        %v3138 = vunpack.c.l.b16 %v729
        %v3139 = vunpack.c.h.b16 %v729
        %v3140 = vunpack.c.l.b16 %v730
        %v3141 = vunpack.c.h.b16 %v730
        %v3142 = vunpack.c.l.b16 %v731
        %v3143 = vunpack.c.h.b16 %v731
        %v3144 = vunpack.c.l.b16 %v732
        %v3145 = vunpack.c.h.b16 %v732
        %v3146 = vunpack.c.l.b16 %v733
        %v3147 = vunpack.c.h.b16 %v733
        %v3148 = vunpack.c.l.b16 %v734
        %v3149 = vunpack.c.h.b16 %v734
        %v3150 = vunpack.c.l.b16 %v735
        %v3151 = vunpack.c.h.b16 %v735
        %v3152 = vunpack.c.l.b16 %v736
        %v3153 = vunpack.c.h.b16 %v736
        %v3154 = vunpack.c.l.b16 %v737
        %v3155 = vunpack.c.h.b16 %v737
        %v3156 = vunpack.c.l.b16 %v738
        %v3157 = vunpack.c.h.b16 %v738
        %v3158 = vunpack.c.l.b16 %v739
        %v3159 = vunpack.c.h.b16 %v739
        %v3160 = vunpack.c.l.b16 %v740
        %v3161 = vunpack.c.h.b16 %v740
        %v3162 = vunpack.c.l.b16 %v741
        %v3163 = vunpack.c.h.b16 %v741
        %v3164 = vunpack.c.l.b16 %v742
        %v3165 = vunpack.c.h.b16 %v742
        %v3166 = vunpack.c.l.b16 %v743
        %v3167 = vunpack.c.h.b16 %v743
        %v3168 = vunpack.c.l.b16 %v744
        %v3169 = vunpack.c.h.b16 %v744
        %v3170 = vunpack.c.l.b16 %v745
        %v3171 = vunpack.c.h.b16 %v745
        %v3172 = vunpack.c.l.b16 %v746
        %v3173 = vunpack.c.h.b16 %v746
        %v3174 = vunpack.c.l.b16 %v747
        %v3175 = vunpack.c.h.b16 %v747
        %v3176 = vunpack.c.l.b16 %v748
        %v3177 = vunpack.c.h.b16 %v748
        %v3178 = vunpack.c.l.b16 %v749
        %v3179 = vunpack.c.h.b16 %v749
        %v3180 = vunpack.c.l.b16 %v750
        %v3181 = vunpack.c.h.b16 %v750
        %v3182 = vunpack.c.l.b16 %v751
        %v3183 = vunpack.c.h.b16 %v751
        %v3184 = vunpack.c.l.b16 %v752
        %v3185 = vunpack.c.h.b16 %v752
        %v3186 = vunpack.c.l.b16 %v753
        %v3187 = vunpack.c.h.b16 %v753
        %v3188 = vunpack.c.l.b16 %v754
        %v3189 = vunpack.c.h.b16 %v754
        %v3190 = vunpack.c.l.b16 %v755
        %v3191 = vunpack.c.h.b16 %v755
        %v3192 = vunpack.c.l.b16 %v756
        %v3193 = vunpack.c.h.b16 %v756
        %v3194 = vunpack.c.l.b16 %v757
        %v3195 = vunpack.c.h.b16 %v757
        %v3196 = vunpack.c.l.b16 %v758
        %v3197 = vunpack.c.h.b16 %v758
        %v3198 = vunpack.c.l.b16 %v759
        %v3199 = vunpack.c.h.b16 %v759
        %v3200 = vunpack.c.l.b16 %v760
        %v3201 = vunpack.c.h.b16 %v760
        %v3202 = vunpack.c.l.b16 %v761
        %v3203 = vunpack.c.h.b16 %v761
        %v3204 = vunpack.c.l.b16 %v762
        %v3205 = vunpack.c.h.b16 %v762
        %v3206 = vunpack.c.l.b16 %v763
        %v3207 = vunpack.c.h.b16 %v763
        %v3208 = vunpack.c.l.b16 %v764
        %v3209 = vunpack.c.h.b16 %v764
        %v3210 = vunpack.c.l.b16 %v765
        %v3211 = vunpack.c.h.b16 %v765
        %v3212 = vunpack.c.l.b16 %v766
        %v3213 = vunpack.c.h.b16 %v766
        %v3214 = vunpack.c.l.b16 %v767
        %v3215 = vunpack.c.h.b16 %v767
        %v3216 = vunpack.c.l.b16 %v768
        %v3217 = vunpack.c.h.b16 %v768
        %v3218 = vunpack.c.l.b16 %v769
        %v3219 = vunpack.c.h.b16 %v769
        %v3220 = vunpack.c.l.b16 %v770
        %v3221 = vunpack.c.h.b16 %v770
        %v3222 = vunpack.c.l.b16 %v771
        %v3223 = vunpack.c.h.b16 %v771
        %v3224 = vunpack.c.l.b16 %v772
        %v3225 = vunpack.c.h.b16 %v772
        %v3226 = vunpack.c.l.b16 %v773
        %v3227 = vunpack.c.h.b16 %v773
        %v3228 = vunpack.c.l.b16 %v774
        %v3229 = vunpack.c.h.b16 %v774
        %v3230 = vunpack.c.l.b16 %v775
        %v3231 = vunpack.c.h.b16 %v775
        %v3232 = vunpack.c.l.b16 %v776
        %v3233 = vunpack.c.h.b16 %v776
        %v3234 = vunpack.c.l.b16 %v777
        %v3235 = vunpack.c.h.b16 %v777
        %v3236 = vunpack.c.l.b16 %v778
        %v3237 = vunpack.c.h.b16 %v778
        %v3238 = vunpack.c.l.b16 %v779
        %v3239 = vunpack.c.h.b16 %v779
        %v3240 = vunpack.c.l.b16 %v780
        %v3241 = vunpack.c.h.b16 %v780
        %v3242 = vunpack.c.l.b16 %v781
        %v3243 = vunpack.c.h.b16 %v781
        %v3244 = vunpack.c.l.b16 %v782
        %v3245 = vunpack.c.h.b16 %v782
        %v3246 = vunpack.c.l.b16 %v783
        %v3247 = vunpack.c.h.b16 %v783
        %v3248 = vunpack.c.l.b16 %v784
        %v3249 = vunpack.c.h.b16 %v784
        %v3250 = vunpack.c.l.b16 %v785
        %v3251 = vunpack.c.h.b16 %v785
        %v3252 = vunpack.c.l.b16 %v786
        %v3253 = vunpack.c.h.b16 %v786
        %v3254 = vunpack.c.l.b16 %v787
        %v3255 = vunpack.c.h.b16 %v787
        %v3256 = vunpack.c.l.b16 %v788
        %v3257 = vunpack.c.h.b16 %v788
        %v3258 = vunpack.c.l.b16 %v789
        %v3259 = vunpack.c.h.b16 %v789
        %v3260 = vunpack.c.l.b16 %v790
        %v3261 = vunpack.c.h.b16 %v790
        %v3262 = vunpack.c.l.b16 %v791
        %v3263 = vunpack.c.h.b16 %v791
        %v3264 = vunpack.c.l.b16 %v792
        %v3265 = vunpack.c.h.b16 %v792
        %v3266 = vunpack.c.l.b16 %v793
        %v3267 = vunpack.c.h.b16 %v793
        %v3268 = vunpack.c.l.b16 %v794
        %v3269 = vunpack.c.h.b16 %v794
        %v3270 = vunpack.c.l.b16 %v795
        %v3271 = vunpack.c.h.b16 %v795
        %v3272 = vunpack.c.l.b16 %v796
        %v3273 = vunpack.c.h.b16 %v796
        %v3274 = vunpack.c.l.b16 %v797
        %v3275 = vunpack.c.h.b16 %v797
        %v3276 = vunpack.c.l.b16 %v798
        %v3277 = vunpack.c.h.b16 %v798
        %v3278 = vunpack.c.l.b16 %v799
        %v3279 = vunpack.c.h.b16 %v799
        %v3280 = vunpack.c.l.b16 %v800
        %v3281 = vunpack.c.h.b16 %v800
        %v3282 = vunpack.c.l.b16 %v801
        %v3283 = vunpack.c.h.b16 %v801
        %v3284 = vunpack.c.l.b16 %v802
        %v3285 = vunpack.c.h.b16 %v802
        %v3286 = vunpack.c.l.b16 %v803
        %v3287 = vunpack.c.h.b16 %v803
        %v3288 = vunpack.c.l.b16 %v804
        %v3289 = vunpack.c.h.b16 %v804
        %v3290 = vunpack.c.l.b16 %v805
        %v3291 = vunpack.c.h.b16 %v805
        %v3292 = vunpack.c.l.b16 %v806
        %v3293 = vunpack.c.h.b16 %v806
        %v3294 = vunpack.c.l.b16 %v807
        %v3295 = vunpack.c.h.b16 %v807
        %v3296 = vunpack.c.l.b16 %v808
        %v3297 = vunpack.c.h.b16 %v808
        %v3298 = vunpack.c.l.b16 %v809
        %v3299 = vunpack.c.h.b16 %v809
        %v3300 = vunpack.c.l.b16 %v810
        %v3301 = vunpack.c.h.b16 %v810
        %v3302 = vunpack.c.l.b16 %v811
        %v3303 = vunpack.c.h.b16 %v811
        %v3304 = vunpack.c.l.b16 %v812
        %v3305 = vunpack.c.h.b16 %v812
        %v3306 = vunpack.c.l.b16 %v813
        %v3307 = vunpack.c.h.b16 %v813
        %v3308 = vunpack.c.l.b16 %v814
        %v3309 = vunpack.c.h.b16 %v814
        %v3310 = vunpack.c.l.b16 %v815
        %v3311 = vunpack.c.h.b16 %v815
        %v3312 = vunpack.c.l.b16 %v816
        %v3313 = vunpack.c.h.b16 %v816
        %v3314 = vunpack.c.l.b16 %v817
        %v3315 = vunpack.c.h.b16 %v817
        %v3316 = vunpack.c.l.b16 %v818
        %v3317 = vunpack.c.h.b16 %v818
        %v3318 = vunpack.c.l.b16 %v819
        %v3319 = vunpack.c.h.b16 %v819
        %v3320 = vunpack.c.l.b16 %v820
        %v3321 = vunpack.c.h.b16 %v820
        %v3322 = vunpack.c.l.b16 %v821
        %v3323 = vunpack.c.h.b16 %v821
        %v3324 = vunpack.c.l.b16 %v822
        %v3325 = vunpack.c.h.b16 %v822
        %v3326 = vunpack.c.l.b16 %v823
        %v3327 = vunpack.c.h.b16 %v823
        %v3328 = vunpack.c.l.b16 %v824
        %v3329 = vunpack.c.h.b16 %v824
        %v3330 = vunpack.c.l.b16 %v825
        %v3331 = vunpack.c.h.b16 %v825
        %v3332 = vunpack.c.l.b16 %v826
        %v3333 = vunpack.c.h.b16 %v826
        %v3334 = vunpack.c.l.b16 %v827
        %v3335 = vunpack.c.h.b16 %v827
        %v3336 = vunpack.c.l.b16 %v828
        %v3337 = vunpack.c.h.b16 %v828
        %v3338 = vunpack.c.l.b16 %v829
        %v3339 = vunpack.c.h.b16 %v829
        %v3340 = vunpack.c.l.b16 %v830
        %v3341 = vunpack.c.h.b16 %v830
        %v3342 = vunpack.c.l.b16 %v831
        %v3343 = vunpack.c.h.b16 %v831
        %v3344 = vunpack.c.l.b16 %v832
        %v3345 = vunpack.c.h.b16 %v832
        %v3346 = vunpack.c.l.b16 %v833
        %v3347 = vunpack.c.h.b16 %v833
        %v3348 = vunpack.c.l.b16 %v834
        %v3349 = vunpack.c.h.b16 %v834
        %v3350 = vunpack.c.l.b16 %v835
        %v3351 = vunpack.c.h.b16 %v835
        %v3352 = vunpack.c.l.b16 %v836
        %v3353 = vunpack.c.h.b16 %v836
        %v3354 = vunpack.c.l.b16 %v837
        %v3355 = vunpack.c.h.b16 %v837
        %v3356 = vunpack.c.l.b16 %v838
        %v3357 = vunpack.c.h.b16 %v838
        %v3358 = vunpack.c.l.b16 %v839
        %v3359 = vunpack.c.h.b16 %v839
        %v3360 = vunpack.c.l.b16 %v840
        %v3361 = vunpack.c.h.b16 %v840
        %v3362 = vunpack.c.l.b16 %v841
        %v3363 = vunpack.c.h.b16 %v841
        %v3364 = vunpack.c.l.b16 %v842
        %v3365 = vunpack.c.h.b16 %v842
        %v3366 = vunpack.c.l.b16 %v843
        %v3367 = vunpack.c.h.b16 %v843
        %v3368 = vunpack.c.l.b16 %v844
        %v3369 = vunpack.c.h.b16 %v844
        %v3370 = vunpack.c.l.b16 %v845
        %v3371 = vunpack.c.h.b16 %v845
        %v3372 = vunpack.c.l.b16 %v846
        %v3373 = vunpack.c.h.b16 %v846
        %v3374 = vunpack.c.l.b16 %v847
        %v3375 = vunpack.c.h.b16 %v847
        %v3376 = vunpack.c.l.b16 %v848
        %v3377 = vunpack.c.h.b16 %v848
        %v3378 = vunpack.c.l.b16 %v849
        %v3379 = vunpack.c.h.b16 %v849
        %v3380 = vunpack.c.l.b16 %v850
        %v3381 = vunpack.c.h.b16 %v850
        %v3382 = vunpack.c.l.b16 %v851
        %v3383 = vunpack.c.h.b16 %v851
        %v3384 = vunpack.c.l.b16 %v852
        %v3385 = vunpack.c.h.b16 %v852
        %v3386 = vunpack.c.l.b16 %v853
        %v3387 = vunpack.c.h.b16 %v853
        %v3388 = vunpack.c.l.b16 %v854
        %v3389 = vunpack.c.h.b16 %v854
        %v3390 = vunpack.c.l.b16 %v855
        %v3391 = vunpack.c.h.b16 %v855
        %v3392 = vunpack.c.l.b16 %v856
        %v3393 = vunpack.c.h.b16 %v856
        %v3394 = vunpack.c.l.b16 %v857
        %v3395 = vunpack.c.h.b16 %v857
        %v3396 = vunpack.c.l.b16 %v858
        %v3397 = vunpack.c.h.b16 %v858
        %v3398 = vunpack.c.l.b16 %v859
        %v3399 = vunpack.c.h.b16 %v859
        %v3400 = vunpack.c.l.b16 %v860
        %v3401 = vunpack.c.h.b16 %v860
        %v3402 = vunpack.c.l.b16 %v861
        %v3403 = vunpack.c.h.b16 %v861
        %v3404 = vunpack.c.l.b16 %v862
        %v3405 = vunpack.c.h.b16 %v862
        %v3406 = vunpack.c.l.b16 %v863
        %v3407 = vunpack.c.h.b16 %v863
        %v3408 = vunpack.c.l.b16 %v864
        %v3409 = vunpack.c.h.b16 %v864
        %v3410 = vunpack.c.l.b16 %v865
        %v3411 = vunpack.c.h.b16 %v865
        %v3412 = vunpack.c.l.b16 %v866
        %v3413 = vunpack.c.h.b16 %v866
        %v3414 = vunpack.c.l.b16 %v867
        %v3415 = vunpack.c.h.b16 %v867
        %v3416 = vunpack.c.l.b16 %v868
        %v3417 = vunpack.c.h.b16 %v868
        %v3418 = vunpack.c.l.b16 %v869
        %v3419 = vunpack.c.h.b16 %v869
        %v3420 = vunpack.c.l.b16 %v870
        %v3421 = vunpack.c.h.b16 %v870
        %v3422 = vunpack.c.l.b16 %v871
        %v3423 = vunpack.c.h.b16 %v871
        %v3424 = vunpack.c.l.b16 %v872
        %v3425 = vunpack.c.h.b16 %v872
        %v3426 = vunpack.c.l.b16 %v873
        %v3427 = vunpack.c.h.b16 %v873
        %v3428 = vunpack.c.l.b16 %v874
        %v3429 = vunpack.c.h.b16 %v874
        %v3430 = vunpack.c.l.b16 %v875
        %v3431 = vunpack.c.h.b16 %v875
        %v3432 = vunpack.c.l.b16 %v876
        %v3433 = vunpack.c.h.b16 %v876
        %v3434 = vunpack.c.l.b16 %v877
        %v3435 = vunpack.c.h.b16 %v877
        %v3436 = vunpack.c.l.b16 %v878
        %v3437 = vunpack.c.h.b16 %v878
        %v3438 = vunpack.c.l.b16 %v879
        %v3439 = vunpack.c.h.b16 %v879
        %v3440 = vunpack.c.l.b16 %v880
        %v3441 = vunpack.c.h.b16 %v880
        %v3442 = vunpack.c.l.b16 %v881
        %v3443 = vunpack.c.h.b16 %v881
        %v3444 = vunpack.c.l.b16 %v882
        %v3445 = vunpack.c.h.b16 %v882
        %v3446 = vunpack.c.l.b16 %v883
        %v3447 = vunpack.c.h.b16 %v883
        %v3448 = vunpack.c.l.b16 %v884
        %v3449 = vunpack.c.h.b16 %v884
        %v3450 = vunpack.c.l.b16 %v885
        %v3451 = vunpack.c.h.b16 %v885
        %v3452 = vunpack.c.l.b16 %v886
        %v3453 = vunpack.c.h.b16 %v886
        %v3454 = vunpack.c.l.b16 %v887
        %v3455 = vunpack.c.h.b16 %v887
        %v3456 = vunpack.c.l.b16 %v888
        %v3457 = vunpack.c.h.b16 %v888
        %v3458 = vunpack.c.l.b16 %v889
        %v3459 = vunpack.c.h.b16 %v889
        %v3460 = vunpack.c.l.b16 %v890
        %v3461 = vunpack.c.h.b16 %v890
        %v3462 = vunpack.c.l.b16 %v891
        %v3463 = vunpack.c.h.b16 %v891
        %v3464 = vunpack.c.l.b16 %v892
        %v3465 = vunpack.c.h.b16 %v892
        %v3466 = vunpack.c.l.b16 %v893
        %v3467 = vunpack.c.h.b16 %v893
        %v3468 = vunpack.c.l.b16 %v894
        %v3469 = vunpack.c.h.b16 %v894
        %v3470 = vunpack.c.l.b16 %v895
        %v3471 = vunpack.c.h.b16 %v895
        %v3472 = vunpack.c.l.b16 %v896
        %v3473 = vunpack.c.h.b16 %v896
        %v3474 = vunpack.c.l.b16 %v897
        %v3475 = vunpack.c.h.b16 %v897
        %v3476 = vunpack.c.l.b16 %v898
        %v3477 = vunpack.c.h.b16 %v898
        %v3478 = vunpack.c.l.b16 %v899
        %v3479 = vunpack.c.h.b16 %v899
        %v3480 = vunpack.c.l.b16 %v900
        %v3481 = vunpack.c.h.b16 %v900
        %v3482 = vunpack.c.l.b16 %v901
        %v3483 = vunpack.c.h.b16 %v901
        %v3484 = vunpack.c.l.b16 %v902
        %v3485 = vunpack.c.h.b16 %v902
        %v3486 = vunpack.c.l.b16 %v903
        %v3487 = vunpack.c.h.b16 %v903
        %v3488 = vunpack.c.l.b16 %v904
        %v3489 = vunpack.c.h.b16 %v904
        %v3490 = vunpack.c.l.b16 %v905
        %v3491 = vunpack.c.h.b16 %v905
        %v3492 = vunpack.c.l.b16 %v906
        %v3493 = vunpack.c.h.b16 %v906
        %v3494 = vunpack.c.l.b16 %v907
        %v3495 = vunpack.c.h.b16 %v907
        %v3496 = vunpack.c.l.b16 %v908
        %v3497 = vunpack.c.h.b16 %v908
        %v3498 = vunpack.c.l.b16 %v909
        %v3499 = vunpack.c.h.b16 %v909
        %v3500 = vunpack.c.l.b16 %v910
        %v3501 = vunpack.c.h.b16 %v910
        %v3502 = vunpack.c.l.b16 %v911
        %v3503 = vunpack.c.h.b16 %v911
        %v3504 = vunpack.c.l.b16 %v912
        %v3505 = vunpack.c.h.b16 %v912
        %v3506 = vunpack.c.l.b16 %v913
        %v3507 = vunpack.c.h.b16 %v913
        %v3508 = vunpack.c.l.b16 %v914
        %v3509 = vunpack.c.h.b16 %v914
        %v3510 = vunpack.c.l.b16 %v915
        %v3511 = vunpack.c.h.b16 %v915
        %v3512 = vunpack.c.l.b16 %v916
        %v3513 = vunpack.c.h.b16 %v916
        %v3514 = vunpack.c.l.b16 %v917
        %v3515 = vunpack.c.h.b16 %v917
        %v3516 = vunpack.c.l.b16 %v918
        %v3517 = vunpack.c.h.b16 %v918
        %v3518 = vunpack.c.l.b16 %v919
        %v3519 = vunpack.c.h.b16 %v919
        %v3520 = vunpack.c.l.b16 %v920
        %v3521 = vunpack.c.h.b16 %v920
        %v3522 = vunpack.c.l.b16 %v921
        %v3523 = vunpack.c.h.b16 %v921
        %v3524 = vunpack.c.l.b16 %v922
        %v3525 = vunpack.c.h.b16 %v922
        %v3526 = vunpack.c.l.b16 %v923
        %v3527 = vunpack.c.h.b16 %v923
        %v3528 = vunpack.c.l.b16 %v924
        %v3529 = vunpack.c.h.b16 %v924
        %v3530 = vunpack.c.l.b16 %v925
        %v3531 = vunpack.c.h.b16 %v925
        %v3532 = vunpack.c.l.b16 %v926
        %v3533 = vunpack.c.h.b16 %v926
        %v3534 = vunpack.c.l.b16 %v927
        %v3535 = vunpack.c.h.b16 %v927
        %v3536 = vunpack.c.l.b16 %v928
        %v3537 = vunpack.c.h.b16 %v928
        %v3538 = vunpack.c.l.b16 %v929
        %v3539 = vunpack.c.h.b16 %v929
        %v3540 = vunpack.c.l.b16 %v930
        %v3541 = vunpack.c.h.b16 %v930
        %v3542 = vunpack.c.l.b16 %v931
        %v3543 = vunpack.c.h.b16 %v931
        %v3544 = vunpack.c.l.b16 %v932
        %v3545 = vunpack.c.h.b16 %v932
        %v3546 = vunpack.c.l.b16 %v933
        %v3547 = vunpack.c.h.b16 %v933
        %v3548 = vunpack.c.l.b16 %v934
        %v3549 = vunpack.c.h.b16 %v934
        %v3550 = vunpack.c.l.b16 %v935
        %v3551 = vunpack.c.h.b16 %v935
        %v3552 = vunpack.c.l.b16 %v936
        %v3553 = vunpack.c.h.b16 %v936
        %v3554 = vunpack.c.l.b16 %v937
        %v3555 = vunpack.c.h.b16 %v937
        %v3556 = vunpack.c.l.b16 %v938
        %v3557 = vunpack.c.h.b16 %v938
        %v3558 = vunpack.c.l.b16 %v939
        %v3559 = vunpack.c.h.b16 %v939
        %v3560 = vunpack.c.l.b16 %v940
        %v3561 = vunpack.c.h.b16 %v940
        %v3562 = vunpack.c.l.b16 %v941
        %v3563 = vunpack.c.h.b16 %v941
        %v3564 = vunpack.c.l.b16 %v942
        %v3565 = vunpack.c.h.b16 %v942
        %v3566 = vunpack.c.l.b16 %v943
        %v3567 = vunpack.c.h.b16 %v943
        %v3568 = vunpack.c.l.b16 %v944
        %v3569 = vunpack.c.h.b16 %v944
        %v3570 = vunpack.c.l.b16 %v945
        %v3571 = vunpack.c.h.b16 %v945
        %v3572 = vunpack.c.l.b16 %v946
        %v3573 = vunpack.c.h.b16 %v946
        %v3574 = vunpack.c.l.b16 %v947
        %v3575 = vunpack.c.h.b16 %v947
        %v3576 = vunpack.c.l.b16 %v948
        %v3577 = vunpack.c.h.b16 %v948
        %v3578 = vunpack.c.l.b16 %v949
        %v3579 = vunpack.c.h.b16 %v949
        %v3580 = vunpack.c.l.b16 %v950
        %v3581 = vunpack.c.h.b16 %v950
        %v3582 = vunpack.c.l.b16 %v951
        %v3583 = vunpack.c.h.b16 %v951
        %v3584 = vunpack.c.l.b16 %v952
        %v3585 = vunpack.c.h.b16 %v952
        %v3586 = vunpack.c.l.b16 %v953
        %v3587 = vunpack.c.h.b16 %v953
        %v3588 = vunpack.c.l.b16 %v954
        %v3589 = vunpack.c.h.b16 %v954
        %v3590 = vunpack.c.l.b16 %v955
        %v3591 = vunpack.c.h.b16 %v955
        %v3592 = vunpack.c.l.b16 %v956
        %v3593 = vunpack.c.h.b16 %v956
        %v3594 = vunpack.c.l.b16 %v957
        %v3595 = vunpack.c.h.b16 %v957
        %v3596 = vunpack.c.l.b16 %v958
        %v3597 = vunpack.c.h.b16 %v958
        %v3598 = vunpack.c.l.b16 %v959
        %v3599 = vunpack.c.h.b16 %v959
        %v3600 = vunpack.c.l.b16 %v960
        %v3601 = vunpack.c.h.b16 %v960
        %v3602 = vunpack.c.l.b16 %v961
        %v3603 = vunpack.c.h.b16 %v961
        %v3604 = vunpack.c.l.b16 %v962
        %v3605 = vunpack.c.h.b16 %v962
        %v3606 = vunpack.c.l.b16 %v963
        %v3607 = vunpack.c.h.b16 %v963
        %v3608 = vunpack.c.l.b16 %v964
        %v3609 = vunpack.c.h.b16 %v964
        %v3610 = vunpack.c.l.b16 %v965
        %v3611 = vunpack.c.h.b16 %v965
        %v3612 = vunpack.c.l.b16 %v966
        %v3613 = vunpack.c.h.b16 %v966
        %v3614 = vunpack.c.l.b16 %v967
        %v3615 = vunpack.c.h.b16 %v967
        %v3616 = vunpack.c.l.b16 %v968
        %v3617 = vunpack.c.h.b16 %v968
        %v3618 = vunpack.c.l.b16 %v969
        %v3619 = vunpack.c.h.b16 %v969
        %v3620 = vunpack.c.l.b16 %v970
        %v3621 = vunpack.c.h.b16 %v970
        %v3622 = vunpack.c.l.b16 %v971
        %v3623 = vunpack.c.h.b16 %v971
        %v3624 = vunpack.c.l.b16 %v972
        %v3625 = vunpack.c.h.b16 %v972
        %v3626 = vunpack.c.l.b16 %v973
        %v3627 = vunpack.c.h.b16 %v973
        %v3628 = vunpack.c.l.b16 %v974
        %v3629 = vunpack.c.h.b16 %v974
        %v3630 = vunpack.c.l.b16 %v975
        %v3631 = vunpack.c.h.b16 %v975
        %v3632 = vunpack.c.l.b16 %v976
        %v3633 = vunpack.c.h.b16 %v976
        %v3634 = vunpack.c.l.b16 %v977
        %v3635 = vunpack.c.h.b16 %v977
        %v3636 = vunpack.c.l.b16 %v978
        %v3637 = vunpack.c.h.b16 %v978
        %v3638 = vunpack.c.l.b16 %v979
        %v3639 = vunpack.c.h.b16 %v979
        %v3640 = vunpack.c.l.b16 %v980
        %v3641 = vunpack.c.h.b16 %v980
        %v3642 = vunpack.c.l.b16 %v981
        %v3643 = vunpack.c.h.b16 %v981
        %v3644 = vunpack.c.l.b16 %v982
        %v3645 = vunpack.c.h.b16 %v982
        %v3646 = vunpack.c.l.b16 %v983
        %v3647 = vunpack.c.h.b16 %v983
        %v3648 = vunpack.c.l.b16 %v984
        %v3649 = vunpack.c.h.b16 %v984
        %v3650 = vunpack.c.l.b16 %v985
        %v3651 = vunpack.c.h.b16 %v985
        %v3652 = vunpack.c.l.b16 %v986
        %v3653 = vunpack.c.h.b16 %v986
        %v3654 = vunpack.c.l.b16 %v987
        %v3655 = vunpack.c.h.b16 %v987
        %v3656 = vunpack.c.l.b16 %v988
        %v3657 = vunpack.c.h.b16 %v988
        %v3658 = vunpack.c.l.b16 %v989
        %v3659 = vunpack.c.h.b16 %v989
        %v3660 = vunpack.c.l.b16 %v990
        %v3661 = vunpack.c.h.b16 %v990
        %v3662 = vunpack.c.l.b16 %v991
        %v3663 = vunpack.c.h.b16 %v991
        %v3664 = vunpack.c.l.b16 %v992
        %v3665 = vunpack.c.h.b16 %v992
        %v3666 = vunpack.c.l.b16 %v993
        %v3667 = vunpack.c.h.b16 %v993
        %v3668 = vunpack.c.l.b16 %v994
        %v3669 = vunpack.c.h.b16 %v994
        %v3670 = vunpack.c.l.b16 %v995
        %v3671 = vunpack.c.h.b16 %v995
        %v3672 = vunpack.c.l.b16 %v996
        %v3673 = vunpack.c.h.b16 %v996
        %v3674 = vunpack.c.l.b16 %v997
        %v3675 = vunpack.c.h.b16 %v997
        %v3676 = vunpack.c.l.b16 %v998
        %v3677 = vunpack.c.h.b16 %v998
        %v3678 = vunpack.c.l.b16 %v999
        %v3679 = vunpack.c.h.b16 %v999
        %v3680 = vunpack.c.l.b16 %v1000
        %v3681 = vunpack.c.h.b16 %v1000
        %v3682 = vunpack.c.l.b16 %v1001
        %v3683 = vunpack.c.h.b16 %v1001
        %v3684 = vunpack.c.l.b16 %v1002
        %v3685 = vunpack.c.h.b16 %v1002
        %v3686 = vunpack.c.l.b16 %v1003
        %v3687 = vunpack.c.h.b16 %v1003
        %v3688 = vunpack.c.l.b16 %v1004
        %v3689 = vunpack.c.h.b16 %v1004
        %v3690 = vunpack.c.l.b16 %v1005
        %v3691 = vunpack.c.h.b16 %v1005
        %v3692 = vunpack.c.l.b16 %v1006
        %v3693 = vunpack.c.h.b16 %v1006
        %v3694 = vunpack.c.l.b16 %v1007
        %v3695 = vunpack.c.h.b16 %v1007
        %v3696 = vunpack.c.l.b16 %v1008
        %v3697 = vunpack.c.h.b16 %v1008
        %v3698 = vunpack.c.l.b16 %v1009
        %v3699 = vunpack.c.h.b16 %v1009
        %v3700 = vunpack.c.l.b16 %v1010
        %v3701 = vunpack.c.h.b16 %v1010
        %v3702 = vunpack.c.l.b16 %v1011
        %v3703 = vunpack.c.h.b16 %v1011
        %v3704 = vunpack.c.l.b16 %v1012
        %v3705 = vunpack.c.h.b16 %v1012
        %v3706 = vunpack.c.l.b16 %v1013
        %v3707 = vunpack.c.h.b16 %v1013
        %v3708 = vunpack.c.l.b16 %v1014
        %v3709 = vunpack.c.h.b16 %v1014
        %v3710 = vunpack.c.l.b16 %v1015
        %v3711 = vunpack.c.h.b16 %v1015
        %v3712 = vunpack.c.l.b16 %v1016
        %v3713 = vunpack.c.h.b16 %v1016
        %v3714 = vunpack.c.l.b16 %v1017
        %v3715 = vunpack.c.h.b16 %v1017
        %v3716 = vunpack.c.l.b16 %v1018
        %v3717 = vunpack.c.h.b16 %v1018
        %v3718 = vunpack.c.l.b16 %v1019
        %v3719 = vunpack.c.h.b16 %v1019
        %v3720 = vunpack.c.l.b16 %v1020
        %v3721 = vunpack.c.h.b16 %v1020
        %v3722 = vunpack.c.l.b16 %v1021
        %v3723 = vunpack.c.h.b16 %v1021
        %v3724 = vunpack.c.l.b16 %v1022
        %v3725 = vunpack.c.h.b16 %v1022
        %v3726 = vunpack.c.l.b16 %v1023
        %v3727 = vunpack.c.h.b16 %v1023
        %v3728 = vunpack.c.l.b16 %v1024
        %v3729 = vunpack.c.h.b16 %v1024
        %v3730 = vunpack.c.l.b16 %v1025
        %v3731 = vunpack.c.h.b16 %v1025
        %v3732 = vunpack.c.l.b16 %v1026
        %v3733 = vunpack.c.h.b16 %v1026
        %v3734 = vunpack.c.l.b16 %v1027
        %v3735 = vunpack.c.h.b16 %v1027
        %v3736 = vunpack.c.l.b16 %v1028
        %v3737 = vunpack.c.h.b16 %v1028
        %v3738 = vunpack.c.l.b16 %v1029
        %v3739 = vunpack.c.h.b16 %v1029
        %v3740 = vunpack.c.l.b16 %v1030
        %v3741 = vunpack.c.h.b16 %v1030
        %v3742 = vunpack.c.l.b16 %v1031
        %v3743 = vunpack.c.h.b16 %v1031
        %v3744 = vunpack.c.l.b16 %v1032
        %v3745 = vunpack.c.h.b16 %v1032
        %v3746 = vunpack.c.l.b16 %v1033
        %v3747 = vunpack.c.h.b16 %v1033
        %v3748 = vunpack.c.l.b16 %v1034
        %v3749 = vunpack.c.h.b16 %v1034
        %v3750 = vunpack.c.l.b16 %v1035
        %v3751 = vunpack.c.h.b16 %v1035
        %v3752 = vunpack.c.l.b16 %v1036
        %v3753 = vunpack.c.h.b16 %v1036
        %v3754 = vunpack.c.l.b16 %v1037
        %v3755 = vunpack.c.h.b16 %v1037
        %v3756 = vunpack.c.l.b16 %v1038
        %v3757 = vunpack.c.h.b16 %v1038
        %v3758 = vunpack.c.l.b16 %v1039
        %v3759 = vunpack.c.h.b16 %v1039
        %v3760 = vunpack.c.l.b16 %v1040
        %v3761 = vunpack.c.h.b16 %v1040
        %v3762 = vunpack.c.l.b16 %v1041
        %v3763 = vunpack.c.h.b16 %v1041
        %v3764 = vunpack.c.l.b16 %v1042
        %v3765 = vunpack.c.h.b16 %v1042
        %v3766 = vunpack.c.l.b16 %v1043
        %v3767 = vunpack.c.h.b16 %v1043
        %v3768 = vunpack.c.l.b16 %v1044
        %v3769 = vunpack.c.h.b16 %v1044
        %v3770 = vunpack.c.l.b16 %v1045
        %v3771 = vunpack.c.h.b16 %v1045
        %v3772 = vunpack.c.l.b16 %v1046
        %v3773 = vunpack.c.h.b16 %v1046
        %v3774 = vunpack.c.l.b16 %v1047
        %v3775 = vunpack.c.h.b16 %v1047
        %v3776 = vunpack.c.l.b16 %v1048
        %v3777 = vunpack.c.h.b16 %v1048
        %v3778 = vunpack.c.l.b16 %v1049
        %v3779 = vunpack.c.h.b16 %v1049
        %v3780 = vunpack.c.l.b16 %v1050
        %v3781 = vunpack.c.h.b16 %v1050
        %v3782 = vunpack.c.l.b16 %v1051
        %v3783 = vunpack.c.h.b16 %v1051
        %v3784 = vunpack.c.l.b16 %v1052
        %v3785 = vunpack.c.h.b16 %v1052
        %v3786 = vunpack.c.l.b16 %v1053
        %v3787 = vunpack.c.h.b16 %v1053
        %v3788 = vunpack.c.l.b16 %v1054
        %v3789 = vunpack.c.h.b16 %v1054
        %v3790 = vunpack.c.l.b16 %v1055
        %v3791 = vunpack.c.h.b16 %v1055
        %v3792 = vunpack.c.l.b16 %v1056
        %v3793 = vunpack.c.h.b16 %v1056
        %v3794 = vunpack.c.l.b16 %v1057
        %v3795 = vunpack.c.h.b16 %v1057
        %v3796 = vunpack.c.l.b16 %v1058
        %v3797 = vunpack.c.h.b16 %v1058
        %v3798 = vunpack.c.l.b16 %v1059
        %v3799 = vunpack.c.h.b16 %v1059
        %v3800 = vunpack.c.l.b16 %v1060
        %v3801 = vunpack.c.h.b16 %v1060
        %v3802 = vunpack.c.l.b16 %v1061
        %v3803 = vunpack.c.h.b16 %v1061
        %v3804 = vunpack.c.l.b16 %v1062
        %v3805 = vunpack.c.h.b16 %v1062
        %v3806 = vunpack.c.l.b16 %v1063
        %v3807 = vunpack.c.h.b16 %v1063
        %v3808 = vunpack.c.l.b16 %v1064
        %v3809 = vunpack.c.h.b16 %v1064
        %v3810 = vunpack.c.l.b16 %v1065
        %v3811 = vunpack.c.h.b16 %v1065
        %v3812 = vunpack.c.l.b16 %v1066
        %v3813 = vunpack.c.h.b16 %v1066
        %v3814 = vunpack.c.l.b16 %v1067
        %v3815 = vunpack.c.h.b16 %v1067
        %v3816 = vunpack.c.l.b16 %v1068
        %v3817 = vunpack.c.h.b16 %v1068
        %v3818 = vunpack.c.l.b16 %v1069
        %v3819 = vunpack.c.h.b16 %v1069
        %v3820 = vunpack.c.l.b16 %v1070
        %v3821 = vunpack.c.h.b16 %v1070
        %v3822 = vunpack.c.l.b16 %v1071
        %v3823 = vunpack.c.h.b16 %v1071
        %v3824 = vunpack.c.l.b16 %v1072
        %v3825 = vunpack.c.h.b16 %v1072
        %v3826 = vunpack.c.l.b16 %v1073
        %v3827 = vunpack.c.h.b16 %v1073
        %v3828 = vunpack.c.l.b16 %v1074
        %v3829 = vunpack.c.h.b16 %v1074
        %v3830 = vunpack.c.l.b16 %v1075
        %v3831 = vunpack.c.h.b16 %v1075
        %v3832 = vunpack.c.l.b16 %v1076
        %v3833 = vunpack.c.h.b16 %v1076
        %v3834 = vunpack.c.l.b16 %v1077
        %v3835 = vunpack.c.h.b16 %v1077
        %v3836 = vunpack.c.l.b16 %v1078
        %v3837 = vunpack.c.h.b16 %v1078
        %v3838 = vunpack.c.l.b16 %v1079
        %v3839 = vunpack.c.h.b16 %v1079
        %v3840 = vunpack.c.l.b16 %v1080
        %v3841 = vunpack.c.h.b16 %v1080
        %v3842 = vunpack.c.l.b16 %v1081
        %v3843 = vunpack.c.h.b16 %v1081
        %v3844 = vunpack.c.l.b16 %v1082
        %v3845 = vunpack.c.h.b16 %v1082
        %v3846 = vunpack.c.l.b16 %v1083
        %v3847 = vunpack.c.h.b16 %v1083
        %v3848 = vunpack.c.l.b16 %v1084
        %v3849 = vunpack.c.h.b16 %v1084
        %v3850 = vunpack.c.l.b16 %v1085
        %v3851 = vunpack.c.h.b16 %v1085
        %v3852 = vunpack.c.l.b16 %v1086
        %v3853 = vunpack.c.h.b16 %v1086
        %v3854 = vunpack.c.l.b16 %v1087
        %v3855 = vunpack.c.h.b16 %v1087
        %v3856 = vunpack.c.l.b16 %v1088
        %v3857 = vunpack.c.h.b16 %v1088
        %v3858 = vunpack.c.l.b16 %v1089
        %v3859 = vunpack.c.h.b16 %v1089
        %v3860 = vunpack.c.l.b16 %v1090
        %v3861 = vunpack.c.h.b16 %v1090
        %v3862 = vunpack.c.l.b16 %v1091
        %v3863 = vunpack.c.h.b16 %v1091
        %v3864 = vunpack.c.l.b16 %v1092
        %v3865 = vunpack.c.h.b16 %v1092
        %v3866 = vunpack.c.l.b16 %v1093
        %v3867 = vunpack.c.h.b16 %v1093
        %v3868 = vunpack.c.l.b16 %v1094
        %v3869 = vunpack.c.h.b16 %v1094
        %v3870 = vunpack.c.l.b16 %v1095
        %v3871 = vunpack.c.h.b16 %v1095
        %v3872 = vunpack.c.l.b16 %v1096
        %v3873 = vunpack.c.h.b16 %v1096
        %v3874 = vunpack.c.l.b16 %v1097
        %v3875 = vunpack.c.h.b16 %v1097
        %v3876 = vunpack.c.l.b16 %v1098
        %v3877 = vunpack.c.h.b16 %v1098
        %v3878 = vunpack.c.l.b16 %v1099
        %v3879 = vunpack.c.h.b16 %v1099
        %v3880 = vunpack.c.l.b16 %v1100
        %v3881 = vunpack.c.h.b16 %v1100
        %v3882 = vunpack.c.l.b16 %v1101
        %v3883 = vunpack.c.h.b16 %v1101
        %v3884 = vunpack.c.l.b16 %v1102
        %v3885 = vunpack.c.h.b16 %v1102
        %v3886 = vunpack.c.l.b16 %v1103
        %v3887 = vunpack.c.h.b16 %v1103
        %v3888 = vunpack.c.l.b16 %v1104
        %v3889 = vunpack.c.h.b16 %v1104
        %v3890 = vunpack.c.l.b16 %v1105
        %v3891 = vunpack.c.h.b16 %v1105
        %v3892 = vunpack.c.l.b16 %v1106
        %v3893 = vunpack.c.h.b16 %v1106
        %v3894 = vunpack.c.l.b16 %v1107
        %v3895 = vunpack.c.h.b16 %v1107
        %v3896 = vunpack.c.l.b16 %v1108
        %v3897 = vunpack.c.h.b16 %v1108
        %v3898 = vunpack.c.l.b16 %v1109
        %v3899 = vunpack.c.h.b16 %v1109
        %v3900 = vunpack.c.l.b16 %v1110
        %v3901 = vunpack.c.h.b16 %v1110
        %v3902 = vunpack.c.l.b16 %v1111
        %v3903 = vunpack.c.h.b16 %v1111
        %v3904 = vunpack.c.l.b16 %v1112
        %v3905 = vunpack.c.h.b16 %v1112
        %v3906 = vunpack.c.l.b16 %v1113
        %v3907 = vunpack.c.h.b16 %v1113
        %v3908 = vunpack.c.l.b16 %v1114
        %v3909 = vunpack.c.h.b16 %v1114
        %v3910 = vunpack.c.l.b16 %v1115
        %v3911 = vunpack.c.h.b16 %v1115
        %v3912 = vunpack.c.l.b16 %v1116
        %v3913 = vunpack.c.h.b16 %v1116
        %v3914 = vunpack.c.l.b16 %v1117
        %v3915 = vunpack.c.h.b16 %v1117
        %v3916 = vunpack.c.l.b16 %v1118
        %v3917 = vunpack.c.h.b16 %v1118
        %v3918 = vunpack.c.l.b16 %v1119
        %v3919 = vunpack.c.h.b16 %v1119
        %v3920 = vunpack.c.l.b16 %v1120
        %v3921 = vunpack.c.h.b16 %v1120
        %v3922 = vunpack.c.l.b16 %v1121
        %v3923 = vunpack.c.h.b16 %v1121
        %v3924 = vunpack.c.l.b16 %v1122
        %v3925 = vunpack.c.h.b16 %v1122
        %v3926 = vunpack.c.l.b16 %v1123
        %v3927 = vunpack.c.h.b16 %v1123
        %v3928 = vunpack.c.l.b16 %v1124
        %v3929 = vunpack.c.h.b16 %v1124
        %v3930 = vunpack.c.l.b16 %v1125
        %v3931 = vunpack.c.h.b16 %v1125
        %v3932 = vunpack.c.l.b16 %v1126
        %v3933 = vunpack.c.h.b16 %v1126
        %v3934 = vunpack.c.l.b16 %v1127
        %v3935 = vunpack.c.h.b16 %v1127
        %v3936 = vunpack.c.l.b16 %v1128
        %v3937 = vunpack.c.h.b16 %v1128
        %v3938 = vunpack.c.l.b16 %v1129
        %v3939 = vunpack.c.h.b16 %v1129
        %v3940 = vunpack.c.l.b16 %v1130
        %v3941 = vunpack.c.h.b16 %v1130
        %v3942 = vunpack.c.l.b16 %v1131
        %v3943 = vunpack.c.h.b16 %v1131
        %v3944 = vunpack.c.l.b16 %v1132
        %v3945 = vunpack.c.h.b16 %v1132
        %v3946 = vunpack.c.l.b16 %v1133
        %v3947 = vunpack.c.h.b16 %v1133
        %v3948 = vunpack.c.l.b16 %v1134
        %v3949 = vunpack.c.h.b16 %v1134
        %v3950 = vunpack.c.l.b16 %v1135
        %v3951 = vunpack.c.h.b16 %v1135
        %v3952 = vunpack.c.l.b16 %v1136
        %v3953 = vunpack.c.h.b16 %v1136
        %v3954 = vunpack.c.l.b16 %v1137
        %v3955 = vunpack.c.h.b16 %v1137
        %v3956 = vunpack.c.l.b16 %v1138
        %v3957 = vunpack.c.h.b16 %v1138
        %v3958 = vunpack.c.l.b16 %v1139
        %v3959 = vunpack.c.h.b16 %v1139
        %v3960 = vunpack.c.l.b16 %v1140
        %v3961 = vunpack.c.h.b16 %v1140
        %v3962 = vunpack.c.l.b16 %v1141
        %v3963 = vunpack.c.h.b16 %v1141
        %v3964 = vunpack.c.l.b16 %v1142
        %v3965 = vunpack.c.h.b16 %v1142
        %v3966 = vunpack.c.l.b16 %v1143
        %v3967 = vunpack.c.h.b16 %v1143
        %v3968 = vunpack.c.l.b16 %v1144
        %v3969 = vunpack.c.h.b16 %v1144
        %v3970 = vunpack.c.l.b16 %v1145
        %v3971 = vunpack.c.h.b16 %v1145
        %v3972 = vunpack.c.l.b16 %v1146
        %v3973 = vunpack.c.h.b16 %v1146
        %v3974 = vunpack.c.l.b16 %v1147
        %v3975 = vunpack.c.h.b16 %v1147
        %v3976 = vunpack.c.l.b16 %v1148
        %v3977 = vunpack.c.h.b16 %v1148
        %v3978 = vunpack.c.l.b16 %v1149
        %v3979 = vunpack.c.h.b16 %v1149
        %v3980 = vunpack.c.l.b16 %v1150
        %v3981 = vunpack.c.h.b16 %v1150
        %v3982 = vunpack.c.l.b16 %v1151
        %v3983 = vunpack.c.h.b16 %v1151
        %v3984 = vunpack.c.l.b16 %v1152
        %v3985 = vunpack.c.h.b16 %v1152
        %v3986 = vunpack.c.l.b16 %v1153
        %v3987 = vunpack.c.h.b16 %v1153
        %v3988 = vunpack.c.l.b16 %v1154
        %v3989 = vunpack.c.h.b16 %v1154
        %v3990 = vunpack.c.l.b16 %v1155
        %v3991 = vunpack.c.h.b16 %v1155
        %v3992 = vunpack.c.l.b16 %v1156
        %v3993 = vunpack.c.h.b16 %v1156
        %v3994 = vunpack.c.l.b16 %v1157
        %v3995 = vunpack.c.h.b16 %v1157
        %v3996 = vunpack.c.l.b16 %v1158
        %v3997 = vunpack.c.h.b16 %v1158
        %v3998 = vunpack.c.l.b16 %v1159
        %v3999 = vunpack.c.h.b16 %v1159
        %v4000 = vunpack.c.l.b16 %v1160
        %v4001 = vunpack.c.h.b16 %v1160
        %v4002 = vunpack.c.l.b16 %v1161
        %v4003 = vunpack.c.h.b16 %v1161
        %v4004 = vunpack.c.l.b16 %v1162
        %v4005 = vunpack.c.h.b16 %v1162
        %v4006 = vunpack.c.l.b16 %v1163
        %v4007 = vunpack.c.h.b16 %v1163
        %v4008 = vunpack.c.l.b16 %v1164
        %v4009 = vunpack.c.h.b16 %v1164
        %v4010 = vunpack.c.l.b16 %v1165
        %v4011 = vunpack.c.h.b16 %v1165
        %v4012 = vunpack.c.l.b16 %v1166
        %v4013 = vunpack.c.h.b16 %v1166
        %v4014 = vunpack.c.l.b16 %v1167
        %v4015 = vunpack.c.h.b16 %v1167
        %v4016 = vunpack.c.l.b16 %v1168
        %v4017 = vunpack.c.h.b16 %v1168
        %v4018 = vunpack.c.l.b16 %v1169
        %v4019 = vunpack.c.h.b16 %v1169
        %v4020 = vunpack.c.l.b16 %v1170
        %v4021 = vunpack.c.h.b16 %v1170
        %v4022 = vunpack.c.l.b16 %v1171
        %v4023 = vunpack.c.h.b16 %v1171
        %v4024 = vunpack.c.l.b16 %v1172
        %v4025 = vunpack.c.h.b16 %v1172
        %v4026 = vunpack.c.l.b16 %v1173
        %v4027 = vunpack.c.h.b16 %v1173
        %v4028 = vunpack.c.l.b16 %v1174
        %v4029 = vunpack.c.h.b16 %v1174
        %v4030 = vunpack.c.l.b16 %v1175
        %v4031 = vunpack.c.h.b16 %v1175
        %v4032 = vunpack.c.l.b16 %v1176
        %v4033 = vunpack.c.h.b16 %v1176
        %v4034 = vunpack.c.l.b16 %v1177
        %v4035 = vunpack.c.h.b16 %v1177
        %v4036 = vunpack.c.l.b16 %v1178
        %v4037 = vunpack.c.h.b16 %v1178
        %v4038 = vunpack.c.l.b16 %v1179
        %v4039 = vunpack.c.h.b16 %v1179
        %v4040 = vunpack.c.l.b16 %v1180
        %v4041 = vunpack.c.h.b16 %v1180
        %v4042 = vunpack.c.l.b16 %v1181
        %v4043 = vunpack.c.h.b16 %v1181
        %v4044 = vunpack.c.l.b16 %v1182
        %v4045 = vunpack.c.h.b16 %v1182
        %v4046 = vunpack.c.l.b16 %v1183
        %v4047 = vunpack.c.h.b16 %v1183
        %v4048 = vunpack.c.l.b16 %v1184
        %v4049 = vunpack.c.h.b16 %v1184
        %v4050 = vunpack.c.l.b16 %v1185
        %v4051 = vunpack.c.h.b16 %v1185
        %v4052 = vunpack.c.l.b16 %v1186
        %v4053 = vunpack.c.h.b16 %v1186
        %v4054 = vunpack.c.l.b16 %v1187
        %v4055 = vunpack.c.h.b16 %v1187
        %v4056 = vunpack.c.l.b16 %v1188
        %v4057 = vunpack.c.h.b16 %v1188
        %v4058 = vunpack.c.l.b16 %v1189
        %v4059 = vunpack.c.h.b16 %v1189
        %v4060 = vunpack.c.l.b16 %v1190
        %v4061 = vunpack.c.h.b16 %v1190
        %v4062 = vunpack.c.l.b16 %v1191
        %v4063 = vunpack.c.h.b16 %v1191
        %v4064 = vunpack.c.l.b16 %v1192
        %v4065 = vunpack.c.h.b16 %v1192
        %v4066 = vunpack.c.l.b16 %v1193
        %v4067 = vunpack.c.h.b16 %v1193
        %v4068 = vunpack.c.l.b16 %v1194
        %v4069 = vunpack.c.h.b16 %v1194
        %v4070 = vunpack.c.l.b16 %v1195
        %v4071 = vunpack.c.h.b16 %v1195
        %v4072 = vunpack.c.l.b16 %v1196
        %v4073 = vunpack.c.h.b16 %v1196
        %v4074 = vunpack.c.l.b16 %v1197
        %v4075 = vunpack.c.h.b16 %v1197
        %v4076 = vunpack.c.l.b16 %v1198
        %v4077 = vunpack.c.h.b16 %v1198
        %v4078 = vunpack.c.l.b16 %v1199
        %v4079 = vunpack.c.h.b16 %v1199
        %v4080 = vunpack.c.l.b16 %v1200
        %v4081 = vunpack.c.h.b16 %v1200
        %v4082 = vunpack.c.l.b16 %v1201
        %v4083 = vunpack.c.h.b16 %v1201
        %v4084 = vunpack.c.l.b16 %v1202
        %v4085 = vunpack.c.h.b16 %v1202
        %v4086 = vunpack.c.l.b16 %v1203
        %v4087 = vunpack.c.h.b16 %v1203
        %v4088 = vunpack.c.l.b16 %v1204
        %v4089 = vunpack.c.h.b16 %v1204
        %v4090 = vunpack.c.l.b16 %v1205
        %v4091 = vunpack.c.h.b16 %v1205
        %v4092 = vunpack.c.l.b16 %v1206
        %v4093 = vunpack.c.h.b16 %v1206
        %v4094 = vunpack.c.l.b16 %v1207
        %v4095 = vunpack.c.h.b16 %v1207
        %v4096 = vunpack.c.l.b16 %v1208
        %v4097 = vunpack.c.h.b16 %v1208
        %v4098 = vunpack.c.l.b16 %v1209
        %v4099 = vunpack.c.h.b16 %v1209
        %v4100 = vunpack.c.l.b16 %v1210
        %v4101 = vunpack.c.h.b16 %v1210
        %v4102 = vunpack.c.l.b16 %v1211
        %v4103 = vunpack.c.h.b16 %v1211
        %v4104 = vunpack.c.l.b16 %v1212
        %v4105 = vunpack.c.h.b16 %v1212
        %v4106 = vunpack.c.l.b16 %v1213
        %v4107 = vunpack.c.h.b16 %v1213
        %v4108 = vunpack.c.l.b16 %v1214
        %v4109 = vunpack.c.h.b16 %v1214
        %v4110 = vunpack.c.l.b16 %v1215
        %v4111 = vunpack.c.h.b16 %v1215
        %v4112 = vunpack.c.l.b16 %v1216
        %v4113 = vunpack.c.h.b16 %v1216
        %v4114 = vunpack.c.l.b16 %v1217
        %v4115 = vunpack.c.h.b16 %v1217
        %v4116 = vunpack.c.l.b16 %v1218
        %v4117 = vunpack.c.h.b16 %v1218
        %v4118 = vunpack.c.l.b16 %v1219
        %v4119 = vunpack.c.h.b16 %v1219
        %v4120 = vunpack.c.l.b16 %v1220
        %v4121 = vunpack.c.h.b16 %v1220
        %v4122 = vunpack.c.l.b16 %v1221
        %v4123 = vunpack.c.h.b16 %v1221
        %v4124 = vunpack.c.l.b16 %v1222
        %v4125 = vunpack.c.h.b16 %v1222
        %v4126 = vunpack.c.l.b16 %v1223
        %v4127 = vunpack.c.h.b16 %v1223
        %v4128 = vunpack.c.l.b16 %v1224
        %v4129 = vunpack.c.h.b16 %v1224
        %v4130 = vunpack.c.l.b16 %v1225
        %v4131 = vunpack.c.h.b16 %v1225
        %v4132 = vunpack.c.l.b16 %v1226
        %v4133 = vunpack.c.h.b16 %v1226
        %v4134 = vunpack.c.l.b16 %v1227
        %v4135 = vunpack.c.h.b16 %v1227
        %v4136 = vunpack.c.l.b16 %v1228
        %v4137 = vunpack.c.h.b16 %v1228
        %v4138 = vunpack.c.l.b16 %v1229
        %v4139 = vunpack.c.h.b16 %v1229
        %v4140 = vunpack.c.l.b16 %v1230
        %v4141 = vunpack.c.h.b16 %v1230
        %v4142 = vunpack.c.l.b16 %v1231
        %v4143 = vunpack.c.h.b16 %v1231
        %v4144 = vunpack.c.l.b16 %v1232
        %v4145 = vunpack.c.h.b16 %v1232
        %v4146 = vunpack.c.l.b16 %v1233
        %v4147 = vunpack.c.h.b16 %v1233
        %v4148 = vunpack.c.l.b16 %v1234
        %v4149 = vunpack.c.h.b16 %v1234
        %v4150 = vunpack.c.l.b16 %v1235
        %v4151 = vunpack.c.h.b16 %v1235
        %v4152 = vunpack.c.l.b16 %v1236
        %v4153 = vunpack.c.h.b16 %v1236
        %v4154 = vunpack.c.l.b16 %v1237
        %v4155 = vunpack.c.h.b16 %v1237
        %v4156 = vunpack.c.l.b16 %v1238
        %v4157 = vunpack.c.h.b16 %v1238
        %v4158 = vunpack.c.l.b16 %v1239
        %v4159 = vunpack.c.h.b16 %v1239
        %v4160 = vunpack.c.l.b16 %v1240
        %v4161 = vunpack.c.h.b16 %v1240
        %v4162 = vunpack.c.l.b16 %v1241
        %v4163 = vunpack.c.h.b16 %v1241
        %v4164 = vunpack.c.l.b16 %v1242
        %v4165 = vunpack.c.h.b16 %v1242
        %v4166 = vunpack.c.l.b16 %v1243
        %v4167 = vunpack.c.h.b16 %v1243
        %v4168 = vunpack.c.l.b16 %v1244
        %v4169 = vunpack.c.h.b16 %v1244
        %v4170 = vunpack.c.l.b16 %v1245
        %v4171 = vunpack.c.h.b16 %v1245
        %v4172 = vunpack.c.l.b16 %v1246
        %v4173 = vunpack.c.h.b16 %v1246
        %v4174 = vunpack.c.l.b16 %v1247
        %v4175 = vunpack.c.h.b16 %v1247
        %v4176 = vunpack.c.l.b16 %v1248
        %v4177 = vunpack.c.h.b16 %v1248
        %v4178 = vunpack.c.l.b16 %v1249
        %v4179 = vunpack.c.h.b16 %v1249
        %v4180 = vunpack.c.l.b16 %v1250
        %v4181 = vunpack.c.h.b16 %v1250
        %v4182 = vunpack.c.l.b16 %v1251
        %v4183 = vunpack.c.h.b16 %v1251
        %v4184 = vunpack.c.l.b16 %v1252
        %v4185 = vunpack.c.h.b16 %v1252
        %v4186 = vunpack.c.l.b16 %v1253
        %v4187 = vunpack.c.h.b16 %v1253
        %v4188 = vunpack.c.l.b16 %v1254
        %v4189 = vunpack.c.h.b16 %v1254
        %v4190 = vunpack.c.l.b16 %v1255
        %v4191 = vunpack.c.h.b16 %v1255
        %v4192 = vunpack.c.l.b16 %v1256
        %v4193 = vunpack.c.h.b16 %v1256
        %v4194 = vunpack.c.l.b16 %v1257
        %v4195 = vunpack.c.h.b16 %v1257
        %v4196 = vunpack.c.l.b16 %v1258
        %v4197 = vunpack.c.h.b16 %v1258
        %v4198 = vunpack.c.l.b16 %v1259
        %v4199 = vunpack.c.h.b16 %v1259
        %v4200 = vunpack.c.l.b16 %v1260
        %v4201 = vunpack.c.h.b16 %v1260
        %v4202 = vunpack.c.l.b16 %v1261
        %v4203 = vunpack.c.h.b16 %v1261
        %v4204 = vunpack.c.l.b16 %v1262
        %v4205 = vunpack.c.h.b16 %v1262
        %v4206 = vunpack.c.l.b16 %v1263
        %v4207 = vunpack.c.h.b16 %v1263
        %v4208 = vunpack.c.l.b16 %v1264
        %v4209 = vunpack.c.h.b16 %v1264
        %v4210 = vunpack.c.l.b16 %v1265
        %v4211 = vunpack.c.h.b16 %v1265
        %v4212 = vunpack.c.l.b16 %v1266
        %v4213 = vunpack.c.h.b16 %v1266
        %v4214 = vunpack.c.l.b16 %v1267
        %v4215 = vunpack.c.h.b16 %v1267
        %v4216 = vunpack.c.l.b16 %v1268
        %v4217 = vunpack.c.h.b16 %v1268
        %v4218 = vunpack.c.l.b16 %v1269
        %v4219 = vunpack.c.h.b16 %v1269
        %v4220 = vunpack.c.l.b16 %v1270
        %v4221 = vunpack.c.h.b16 %v1270
        %v4222 = vunpack.c.l.b16 %v1271
        %v4223 = vunpack.c.h.b16 %v1271
        %v4224 = vunpack.c.l.b16 %v1272
        %v4225 = vunpack.c.h.b16 %v1272
        %v4226 = vunpack.c.l.b16 %v1273
        %v4227 = vunpack.c.h.b16 %v1273
        %v4228 = vunpack.c.l.b16 %v1274
        %v4229 = vunpack.c.h.b16 %v1274
        %v4230 = vunpack.c.l.b16 %v1275
        %v4231 = vunpack.c.h.b16 %v1275
        %v4232 = vunpack.c.l.b16 %v1276
        %v4233 = vunpack.c.h.b16 %v1276
        %v4234 = vunpack.c.l.b16 %v1277
        %v4235 = vunpack.c.h.b16 %v1277
        %v4236 = vunpack.c.l.b16 %v1278
        %v4237 = vunpack.c.h.b16 %v1278
        %v4238 = vunpack.c.l.b16 %v1279
        %v4239 = vunpack.c.h.b16 %v1279
        %v4240 = vunpack.c.l.b16 %v1280
        %v4241 = vunpack.c.h.b16 %v1280
        %v4242 = vunpack.c.l.b16 %v1281
        %v4243 = vunpack.c.h.b16 %v1281
        %v4244 = vunpack.c.l.b16 %v1282
        %v4245 = vunpack.c.h.b16 %v1282
        %v4246 = vunpack.c.l.b16 %v1283
        %v4247 = vunpack.c.h.b16 %v1283
        %v4248 = vunpack.c.l.b16 %v1284
        %v4249 = vunpack.c.h.b16 %v1284
        %v4250 = vunpack.c.l.b16 %v1285
        %v4251 = vunpack.c.h.b16 %v1285
        %v4252 = vunpack.c.l.b16 %v1286
        %v4253 = vunpack.c.h.b16 %v1286
        %v4254 = vunpack.c.l.b16 %v1287
        %v4255 = vunpack.c.h.b16 %v1287
        %v4256 = vunpack.c.l.b16 %v1288
        %v4257 = vunpack.c.h.b16 %v1288
        %v4258 = vunpack.c.l.b16 %v1289
        %v4259 = vunpack.c.h.b16 %v1289
        %v4260 = vunpack.c.l.b16 %v1290
        %v4261 = vunpack.c.h.b16 %v1290
        %v4262 = vunpack.c.l.b16 %v1291
        %v4263 = vunpack.c.h.b16 %v1291
        %v4264 = vunpack.c.l.b16 %v1292
        %v4265 = vunpack.c.h.b16 %v1292
        %v4266 = vunpack.c.l.b16 %v1293
        %v4267 = vunpack.c.h.b16 %v1293
        %v4268 = vunpack.c.l.b16 %v1294
        %v4269 = vunpack.c.h.b16 %v1294
        %v4270 = vunpack.c.l.b16 %v1295
        %v4271 = vunpack.c.h.b16 %v1295
        %v4272 = vunpack.c.l.b16 %v1296
        %v4273 = vunpack.c.h.b16 %v1296
        %v4274 = vunpack.c.l.b16 %v1297
        %v4275 = vunpack.c.h.b16 %v1297
        %v4276 = vunpack.c.l.b16 %v1298
        %v4277 = vunpack.c.h.b16 %v1298
        %v4278 = vunpack.c.l.b16 %v1299
        %v4279 = vunpack.c.h.b16 %v1299
        %v4280 = vunpack.c.l.b16 %v1300
        %v4281 = vunpack.c.h.b16 %v1300
        %v4282 = vunpack.c.l.b16 %v1301
        %v4283 = vunpack.c.h.b16 %v1301
        %v4284 = vunpack.c.l.b16 %v1302
        %v4285 = vunpack.c.h.b16 %v1302
        %v4286 = vunpack.c.l.b16 %v1303
        %v4287 = vunpack.c.h.b16 %v1303
        %v4288 = vunpack.c.l.b16 %v1304
        %v4289 = vunpack.c.h.b16 %v1304
        %v4290 = vunpack.c.l.b16 %v1305
        %v4291 = vunpack.c.h.b16 %v1305
        %v4292 = vunpack.c.l.b16 %v1306
        %v4293 = vunpack.c.h.b16 %v1306
        %v4294 = vunpack.c.l.b16 %v1307
        %v4295 = vunpack.c.h.b16 %v1307
        %v4296 = vunpack.c.l.b16 %v1308
        %v4297 = vunpack.c.h.b16 %v1308
        %v4298 = vunpack.c.l.b16 %v1309
        %v4299 = vunpack.c.h.b16 %v1309
        %v4300 = vunpack.c.l.b16 %v1310
        %v4301 = vunpack.c.h.b16 %v1310
        %v4302 = vunpack.c.l.b16 %v1311
        %v4303 = vunpack.c.h.b16 %v1311
        %v4304 = vunpack.c.l.b16 %v1312
        %v4305 = vunpack.c.h.b16 %v1312
        %v4306 = vunpack.c.l.b16 %v1313
        %v4307 = vunpack.c.h.b16 %v1313
        %v4308 = vunpack.c.l.b16 %v1314
        %v4309 = vunpack.c.h.b16 %v1314
        %v4310 = vunpack.c.l.b16 %v1315
        %v4311 = vunpack.c.h.b16 %v1315
        %v4312 = vunpack.c.l.b16 %v1316
        %v4313 = vunpack.c.h.b16 %v1316
        %v4314 = vunpack.c.l.b16 %v1317
        %v4315 = vunpack.c.h.b16 %v1317
        %v4316 = vunpack.c.l.b16 %v1318
        %v4317 = vunpack.c.h.b16 %v1318
        %v4318 = vunpack.c.l.b16 %v1319
        %v4319 = vunpack.c.h.b16 %v1319
        %v4320 = vunpack.c.l.b16 %v1320
        %v4321 = vunpack.c.h.b16 %v1320
        %v4322 = vunpack.c.l.b16 %v1321
        %v4323 = vunpack.c.h.b16 %v1321
        %v4324 = vunpack.c.l.b16 %v1322
        %v4325 = vunpack.c.h.b16 %v1322
        %v4326 = vunpack.c.l.b16 %v1323
        %v4327 = vunpack.c.h.b16 %v1323
        %v4328 = vunpack.c.l.b16 %v1324
        %v4329 = vunpack.c.h.b16 %v1324
        %v4330 = vunpack.c.l.b16 %v1325
        %v4331 = vunpack.c.h.b16 %v1325
        %v4332 = vunpack.c.l.b16 %v1326
        %v4333 = vunpack.c.h.b16 %v1326
        %v4334 = vunpack.c.l.b16 %v1327
        %v4335 = vunpack.c.h.b16 %v1327
        %v4336 = vunpack.c.l.b16 %v1328
        %v4337 = vunpack.c.h.b16 %v1328
        %v4338 = vunpack.c.l.b16 %v1329
        %v4339 = vunpack.c.h.b16 %v1329
        %v4340 = vunpack.c.l.b16 %v1330
        %v4341 = vunpack.c.h.b16 %v1330
        %v4342 = vunpack.c.l.b16 %v1331
        %v4343 = vunpack.c.h.b16 %v1331
        %v4344 = vunpack.c.l.b16 %v1332
        %v4345 = vunpack.c.h.b16 %v1332
        %v4346 = vunpack.c.l.b16 %v1333
        %v4347 = vunpack.c.h.b16 %v1333
        %v4348 = vunpack.c.l.b16 %v1334
        %v4349 = vunpack.c.h.b16 %v1334
        %v4350 = vunpack.c.l.b16 %v1335
        %v4351 = vunpack.c.h.b16 %v1335
        %v4352 = vunpack.c.l.b16 %v1336
        %v4353 = vunpack.c.h.b16 %v1336
        %v4354 = vunpack.c.l.b16 %v1337
        %v4355 = vunpack.c.h.b16 %v1337
        %v4356 = vunpack.c.l.b16 %v1338
        %v4357 = vunpack.c.h.b16 %v1338
        %v4358 = vunpack.c.l.b16 %v1339
        %v4359 = vunpack.c.h.b16 %v1339
        %v4360 = vunpack.c.l.b16 %v1340
        %v4361 = vunpack.c.h.b16 %v1340
        %v4362 = vunpack.c.l.b16 %v1341
        %v4363 = vunpack.c.h.b16 %v1341
        %v4364 = vunpack.c.l.b16 %v1342
        %v4365 = vunpack.c.h.b16 %v1342
        %v4366 = vunpack.c.l.b16 %v1343
        %v4367 = vunpack.c.h.b16 %v1343
        %v4368 = vunpack.c.l.b16 %v1344
        %v4369 = vunpack.c.h.b16 %v1344
        %v4370 = vunpack.c.l.b16 %v1345
        %v4371 = vunpack.c.h.b16 %v1345
        %v4372 = vunpack.c.l.b16 %v1346
        %v4373 = vunpack.c.h.b16 %v1346
        %v4374 = vunpack.c.l.b16 %v1347
        %v4375 = vunpack.c.h.b16 %v1347
        %v4376 = vunpack.c.l.b16 %v1348
        %v4377 = vunpack.c.h.b16 %v1348
        %v4378 = vunpack.c.l.b16 %v1349
        %v4379 = vunpack.c.h.b16 %v1349
        %v4380 = vunpack.c.l.b16 %v1350
        %v4381 = vunpack.c.h.b16 %v1350
        %v4382 = vunpack.c.l.b16 %v1351
        %v4383 = vunpack.c.h.b16 %v1351
        %v4384 = vunpack.c.l.b16 %v1352
        %v4385 = vunpack.c.h.b16 %v1352
        %v4386 = vunpack.c.l.b16 %v1353
        %v4387 = vunpack.c.h.b16 %v1353
        %v4388 = vunpack.c.l.b16 %v1354
        %v4389 = vunpack.c.h.b16 %v1354
        %v4390 = vunpack.c.l.b16 %v1355
        %v4391 = vunpack.c.h.b16 %v1355
        %v4392 = vunpack.c.l.b16 %v1356
        %v4393 = vunpack.c.h.b16 %v1356
        %v4394 = vunpack.c.l.b16 %v1357
        %v4395 = vunpack.c.h.b16 %v1357
        %v4396 = vunpack.c.l.b16 %v1358
        %v4397 = vunpack.c.h.b16 %v1358
        %v4398 = vunpack.c.l.b16 %v1359
        %v4399 = vunpack.c.h.b16 %v1359
        %v4400 = vunpack.c.l.b16 %v1360
        %v4401 = vunpack.c.h.b16 %v1360
        %v4402 = vunpack.c.l.b16 %v1361
        %v4403 = vunpack.c.h.b16 %v1361
        %v4404 = vunpack.c.l.b16 %v1362
        %v4405 = vunpack.c.h.b16 %v1362
        %v4406 = vunpack.c.l.b16 %v1363
        %v4407 = vunpack.c.h.b16 %v1363
        %v4408 = vunpack.c.l.b16 %v1364
        %v4409 = vunpack.c.h.b16 %v1364
        %v4410 = vunpack.c.l.b16 %v1365
        %v4411 = vunpack.c.h.b16 %v1365
        %v4412 = vunpack.c.l.b16 %v1366
        %v4413 = vunpack.c.h.b16 %v1366
        %v4414 = vunpack.c.l.b16 %v1367
        %v4415 = vunpack.c.h.b16 %v1367
        %v4416 = vunpack.c.l.b16 %v1368
        %v4417 = vunpack.c.h.b16 %v1368
        %v4418 = vunpack.c.l.b16 %v1369
        %v4419 = vunpack.c.h.b16 %v1369
        %v4420 = vunpack.c.l.b16 %v1370
        %v4421 = vunpack.c.h.b16 %v1370
        %v4422 = vunpack.c.l.b16 %v1371
        %v4423 = vunpack.c.h.b16 %v1371
        %v4424 = vunpack.c.l.b16 %v1372
        %v4425 = vunpack.c.h.b16 %v1372
        %v4426 = vunpack.c.l.b16 %v1373
        %v4427 = vunpack.c.h.b16 %v1373
        %v4428 = vunpack.c.l.b16 %v1374
        %v4429 = vunpack.c.h.b16 %v1374
        %v4430 = vunpack.c.l.b16 %v1375
        %v4431 = vunpack.c.h.b16 %v1375
        %v4432 = vunpack.c.l.b16 %v1376
        %v4433 = vunpack.c.h.b16 %v1376
        %v4434 = vunpack.c.l.b16 %v1377
        %v4435 = vunpack.c.h.b16 %v1377
        %v4436 = vunpack.c.l.b16 %v1378
        %v4437 = vunpack.c.h.b16 %v1378
        %v4438 = vunpack.c.l.b16 %v1379
        %v4439 = vunpack.c.h.b16 %v1379
        %v4440 = vunpack.c.l.b16 %v1380
        %v4441 = vunpack.c.h.b16 %v1380
        %v4442 = vunpack.c.l.b16 %v1381
        %v4443 = vunpack.c.h.b16 %v1381
        %v4444 = vunpack.c.l.b16 %v1382
        %v4445 = vunpack.c.h.b16 %v1382
        %v4446 = vunpack.c.l.b16 %v1383
        %v4447 = vunpack.c.h.b16 %v1383
        %v4448 = vunpack.c.l.b16 %v1384
        %v4449 = vunpack.c.h.b16 %v1384
        %v4450 = vunpack.c.l.b16 %v1385
        %v4451 = vunpack.c.h.b16 %v1385
        %v4452 = vunpack.c.l.b16 %v1386
        %v4453 = vunpack.c.h.b16 %v1386
        %v4454 = vunpack.c.l.b16 %v1387
        %v4455 = vunpack.c.h.b16 %v1387
        %v4456 = vunpack.c.l.b16 %v1388
        %v4457 = vunpack.c.h.b16 %v1388
        %v4458 = vunpack.c.l.b16 %v1389
        %v4459 = vunpack.c.h.b16 %v1389
        %v4460 = vunpack.c.l.b16 %v1390
        %v4461 = vunpack.c.h.b16 %v1390
        %v4462 = vunpack.c.l.b16 %v1391
        %v4463 = vunpack.c.h.b16 %v1391
        %v4464 = vunpack.c.l.b16 %v1392
        %v4465 = vunpack.c.h.b16 %v1392
        %v4466 = vunpack.c.l.b16 %v1393
        %v4467 = vunpack.c.h.b16 %v1393
        %v4468 = vunpack.c.l.b16 %v1394
        %v4469 = vunpack.c.h.b16 %v1394
        %v4470 = vunpack.c.l.b16 %v1395
        %v4471 = vunpack.c.h.b16 %v1395
        %v4472 = vunpack.c.l.b16 %v1396
        %v4473 = vunpack.c.h.b16 %v1396
        %v4474 = vunpack.c.l.b16 %v1397
        %v4475 = vunpack.c.h.b16 %v1397
        %v4476 = vunpack.c.l.b16 %v1398
        %v4477 = vunpack.c.h.b16 %v1398
        %v4478 = vunpack.c.l.b16 %v1399
        %v4479 = vunpack.c.h.b16 %v1399
        %v4480 = vunpack.c.l.b16 %v1400
        %v4481 = vunpack.c.h.b16 %v1400
        %v4482 = vunpack.c.l.b16 %v1401
        %v4483 = vunpack.c.h.b16 %v1401
        %v4484 = vunpack.c.l.b16 %v1402
        %v4485 = vunpack.c.h.b16 %v1402
        %v4486 = vunpack.c.l.b16 %v1403
        %v4487 = vunpack.c.h.b16 %v1403
        %v4488 = vunpack.c.l.b16 %v1404
        %v4489 = vunpack.c.h.b16 %v1404
        %v4490 = vunpack.c.l.b16 %v1405
        %v4491 = vunpack.c.h.b16 %v1405
        %v4492 = vunpack.c.l.b16 %v1406
        %v4493 = vunpack.c.h.b16 %v1406
        %v4494 = vunpack.c.l.b16 %v1407
        %v4495 = vunpack.c.h.b16 %v1407
        %v4496 = vunpack.c.l.b16 %v1408
        %v4497 = vunpack.c.h.b16 %v1408
        %v4498 = vunpack.c.l.b16 %v1409
        %v4499 = vunpack.c.h.b16 %v1409
        %v4500 = vunpack.c.l.b16 %v1410
        %v4501 = vunpack.c.h.b16 %v1410
        %v4502 = vunpack.c.l.b16 %v1411
        %v4503 = vunpack.c.h.b16 %v1411
        %v4504 = vunpack.c.l.b16 %v1412
        %v4505 = vunpack.c.h.b16 %v1412
        %v4506 = vunpack.c.l.b16 %v1413
        %v4507 = vunpack.c.h.b16 %v1413
        %v4508 = vunpack.c.l.b16 %v1414
        %v4509 = vunpack.c.h.b16 %v1414
        %v4510 = vunpack.c.l.b16 %v1415
        %v4511 = vunpack.c.h.b16 %v1415
        %v4512 = vunpack.c.l.b16 %v1416
        %v4513 = vunpack.c.h.b16 %v1416
        %v4514 = vunpack.c.l.b16 %v1417
        %v4515 = vunpack.c.h.b16 %v1417
        %v4516 = vunpack.c.l.b16 %v1418
        %v4517 = vunpack.c.h.b16 %v1418
        %v4518 = vunpack.c.l.b16 %v1419
        %v4519 = vunpack.c.h.b16 %v1419
        %v4520 = vunpack.c.l.b16 %v1420
        %v4521 = vunpack.c.h.b16 %v1420
        %v4522 = vunpack.c.l.b16 %v1421
        %v4523 = vunpack.c.h.b16 %v1421
        %v4524 = vunpack.c.l.b16 %v1422
        %v4525 = vunpack.c.h.b16 %v1422
        %v4526 = vunpack.c.l.b16 %v1423
        %v4527 = vunpack.c.h.b16 %v1423
        %v4528 = vunpack.c.l.b16 %v1424
        %v4529 = vunpack.c.h.b16 %v1424
        %v4530 = vunpack.c.l.b16 %v1425
        %v4531 = vunpack.c.h.b16 %v1425
        %v4532 = vunpack.c.l.b16 %v1426
        %v4533 = vunpack.c.h.b16 %v1426
        %v4534 = vunpack.c.l.b16 %v1427
        %v4535 = vunpack.c.h.b16 %v1427
        %v4536 = vunpack.c.l.b16 %v1428
        %v4537 = vunpack.c.h.b16 %v1428
        %v4538 = vunpack.c.l.b16 %v1429
        %v4539 = vunpack.c.h.b16 %v1429
        %v4540 = vunpack.c.l.b16 %v1430
        %v4541 = vunpack.c.h.b16 %v1430
        %v4542 = vunpack.c.l.b16 %v1431
        %v4543 = vunpack.c.h.b16 %v1431
        %v4544 = vunpack.c.l.b16 %v1432
        %v4545 = vunpack.c.h.b16 %v1432
        %v4546 = vunpack.c.l.b16 %v1433
        %v4547 = vunpack.c.h.b16 %v1433
        %v4548 = vunpack.c.l.b16 %v1434
        %v4549 = vunpack.c.h.b16 %v1434
        %v4550 = vunpack.c.l.b16 %v1435
        %v4551 = vunpack.c.h.b16 %v1435
        %v4552 = vunpack.c.l.b16 %v1436
        %v4553 = vunpack.c.h.b16 %v1436
        %v4554 = vunpack.c.l.b16 %v1437
        %v4555 = vunpack.c.h.b16 %v1437
        %v4556 = vunpack.c.l.b16 %v1438
        %v4557 = vunpack.c.h.b16 %v1438
        %v4558 = vunpack.c.l.b16 %v1439
        %v4559 = vunpack.c.h.b16 %v1439
        %v4560 = vunpack.c.l.b16 %v1440
        %v4561 = vunpack.c.h.b16 %v1440
        %v4562 = vunpack.c.l.b16 %v1441
        %v4563 = vunpack.c.h.b16 %v1441
        %v4564 = vunpack.c.l.b16 %v1442
        %v4565 = vunpack.c.h.b16 %v1442
        %v4566 = vunpack.c.l.b16 %v1443
        %v4567 = vunpack.c.h.b16 %v1443
        %v4568 = vunpack.c.l.b16 %v1444
        %v4569 = vunpack.c.h.b16 %v1444
        %v4570 = vunpack.c.l.b16 %v1445
        %v4571 = vunpack.c.h.b16 %v1445
        %v4572 = vunpack.c.l.b16 %v1446
        %v4573 = vunpack.c.h.b16 %v1446
        %v4574 = vunpack.c.l.b16 %v1447
        %v4575 = vunpack.c.h.b16 %v1447
        %v4576 = vunpack.c.l.b16 %v1448
        %v4577 = vunpack.c.h.b16 %v1448
        %v4578 = vunpack.c.l.b16 %v1449
        %v4579 = vunpack.c.h.b16 %v1449
        %v4580 = vunpack.c.l.b16 %v1450
        %v4581 = vunpack.c.h.b16 %v1450
        %v4582 = vunpack.c.l.b16 %v1451
        %v4583 = vunpack.c.h.b16 %v1451
        %v4584 = vunpack.c.l.b16 %v1452
        %v4585 = vunpack.c.h.b16 %v1452
        %v4586 = vunpack.c.l.b16 %v1453
        %v4587 = vunpack.c.h.b16 %v1453
        %v4588 = vunpack.c.l.b16 %v1454
        %v4589 = vunpack.c.h.b16 %v1454
        %v4590 = vunpack.c.l.b16 %v1455
        %v4591 = vunpack.c.h.b16 %v1455
        %v4592 = vunpack.c.l.b16 %v1456
        %v4593 = vunpack.c.h.b16 %v1456
        %v4594 = vunpack.c.l.b16 %v1457
        %v4595 = vunpack.c.h.b16 %v1457
        %v4596 = vunpack.c.l.b16 %v1458
        %v4597 = vunpack.c.h.b16 %v1458
        %v4598 = vunpack.c.l.b16 %v1459
        %v4599 = vunpack.c.h.b16 %v1459
        %v4600 = vunpack.c.l.b16 %v1460
        %v4601 = vunpack.c.h.b16 %v1460
        %v4602 = vunpack.c.l.b16 %v1461
        %v4603 = vunpack.c.h.b16 %v1461
        %v4604 = vunpack.c.l.b16 %v1462
        %v4605 = vunpack.c.h.b16 %v1462
        %v4606 = vunpack.c.l.b16 %v1463
        %v4607 = vunpack.c.h.b16 %v1463
        %v4608 = vunpack.c.l.b16 %v1464
        %v4609 = vunpack.c.h.b16 %v1464
        %v4610 = vunpack.c.l.b16 %v1465
        %v4611 = vunpack.c.h.b16 %v1465
        %v4612 = vunpack.c.l.b16 %v1466
        %v4613 = vunpack.c.h.b16 %v1466
        %v4614 = vunpack.c.l.b16 %v1467
        %v4615 = vunpack.c.h.b16 %v1467
        %v4616 = vunpack.c.l.b16 %v1468
        %v4617 = vunpack.c.h.b16 %v1468
        %v4618 = vunpack.c.l.b16 %v1469
        %v4619 = vunpack.c.h.b16 %v1469
        %v4620 = vunpack.c.l.b16 %v1470
        %v4621 = vunpack.c.h.b16 %v1470
        %v4622 = vunpack.c.l.b16 %v1471
        %v4623 = vunpack.c.h.b16 %v1471
        %v4624 = vunpack.c.l.b16 %v1472
        %v4625 = vunpack.c.h.b16 %v1472
        %v4626 = vunpack.c.l.b16 %v1473
        %v4627 = vunpack.c.h.b16 %v1473
        %v4628 = vunpack.c.l.b16 %v1474
        %v4629 = vunpack.c.h.b16 %v1474
        %v4630 = vunpack.c.l.b16 %v1475
        %v4631 = vunpack.c.h.b16 %v1475
        %v4632 = vunpack.c.l.b16 %v1476
        %v4633 = vunpack.c.h.b16 %v1476
        %v4634 = vunpack.c.l.b16 %v1477
        %v4635 = vunpack.c.h.b16 %v1477
        %v4636 = vunpack.c.l.b16 %v1478
        %v4637 = vunpack.c.h.b16 %v1478
        %v4638 = vunpack.c.l.b16 %v1479
        %v4639 = vunpack.c.h.b16 %v1479
        %v4640 = vunpack.c.l.b16 %v1480
        %v4641 = vunpack.c.h.b16 %v1480
        %v4642 = vunpack.c.l.b16 %v1481
        %v4643 = vunpack.c.h.b16 %v1481
        %v4644 = vunpack.c.l.b16 %v1482
        %v4645 = vunpack.c.h.b16 %v1482
        %v4646 = vunpack.c.l.b16 %v1483
        %v4647 = vunpack.c.h.b16 %v1483
        %v4648 = vunpack.c.l.b16 %v1484
        %v4649 = vunpack.c.h.b16 %v1484
        %v4650 = vunpack.c.l.b16 %v1485
        %v4651 = vunpack.c.h.b16 %v1485
        %v4652 = vunpack.c.l.b16 %v1486
        %v4653 = vunpack.c.h.b16 %v1486
        %v4654 = vunpack.c.l.b16 %v1487
        %v4655 = vunpack.c.h.b16 %v1487
        %v4656 = vunpack.c.l.b16 %v1488
        %v4657 = vunpack.c.h.b16 %v1488
        %v4658 = vunpack.c.l.b16 %v1489
        %v4659 = vunpack.c.h.b16 %v1489
        %v4660 = vpack.c.b16 %v2620, %v2612
        %v4661 = vpack.c.b16 %v2621, %v2613
        %v4662 = vpack.c.b16 %v2622, %v2614
        %v4663 = vpack.c.b16 %v2623, %v2615
        %v4664 = vpack.c.b16 %v2624, %v2616
        %v4665 = vpack.c.b16 %v2625, %v2617
        %v4666 = vpack.c.b16 %v2626, %v2618
        %v4667 = vpack.c.b16 %v2627, %v2619
        %v4668 = vpack.c.b16 %v2636, %v2628
        %v4669 = vpack.c.b16 %v2637, %v2629
        %v4670 = vpack.c.b16 %v2638, %v2630
        %v4671 = vpack.c.b16 %v2639, %v2631
        %v4672 = vpack.c.b16 %v2640, %v2632
        %v4673 = vpack.c.b16 %v2641, %v2633
        %v4674 = vpack.c.b16 %v2642, %v2634
        %v4675 = vpack.c.b16 %v2643, %v2635
        %v4676 = vpack.c.b16 %v2652, %v2644
        %v4677 = vpack.c.b16 %v2653, %v2645
        %v4678 = vpack.c.b16 %v2654, %v2646
        %v4679 = vpack.c.b16 %v2655, %v2647
        %v4680 = vpack.c.b16 %v2656, %v2648
        %v4681 = vpack.c.b16 %v2657, %v2649
        %v4682 = vpack.c.b16 %v2658, %v2650
        %v4683 = vpack.c.b16 %v2659, %v2651
        %v4684 = vpack.c.b16 %v2668, %v2660
        %v4685 = vpack.c.b16 %v2669, %v2661
        %v4686 = vpack.c.b16 %v2670, %v2662
        %v4687 = vpack.c.b16 %v2671, %v2663
        %v4688 = vpack.c.b16 %v2672, %v2664
        %v4689 = vpack.c.b16 %v2673, %v2665
        %v4690 = vpack.c.b16 %v2674, %v2666
        %v4691 = vpack.c.b16 %v2675, %v2667
        %v4692 = vpack.c.b16 %v2684, %v2676
        %v4693 = vpack.c.b16 %v2685, %v2677
        %v4694 = vpack.c.b16 %v2686, %v2678
        %v4695 = vpack.c.b16 %v2687, %v2679
        %v4696 = vpack.c.b16 %v2688, %v2680
        %v4697 = vpack.c.b16 %v2689, %v2681
        %v4698 = vpack.c.b16 %v2690, %v2682
        %v4699 = vpack.c.b16 %v2691, %v2683
        %v4700 = vpack.c.b16 %v2700, %v2692
        %v4701 = vpack.c.b16 %v2701, %v2693
        %v4702 = vpack.c.b16 %v2702, %v2694
        %v4703 = vpack.c.b16 %v2703, %v2695
        %v4704 = vpack.c.b16 %v2704, %v2696
        %v4705 = vpack.c.b16 %v2705, %v2697
        %v4706 = vpack.c.b16 %v2706, %v2698
        %v4707 = vpack.c.b16 %v2707, %v2699
        %v4708 = vpack.c.b16 %v2716, %v2708
        %v4709 = vpack.c.b16 %v2717, %v2709
        %v4710 = vpack.c.b16 %v2718, %v2710
        %v4711 = vpack.c.b16 %v2719, %v2711
        %v4712 = vpack.c.b16 %v2720, %v2712
        %v4713 = vpack.c.b16 %v2721, %v2713
        %v4714 = vpack.c.b16 %v2722, %v2714
        %v4715 = vpack.c.b16 %v2723, %v2715
        %v4716 = vpack.c.b16 %v2732, %v2724
        %v4717 = vpack.c.b16 %v2733, %v2725
        %v4718 = vpack.c.b16 %v2734, %v2726
        %v4719 = vpack.c.b16 %v2735, %v2727
        %v4720 = vpack.c.b16 %v2736, %v2728
        %v4721 = vpack.c.b16 %v2737, %v2729
        %v4722 = vpack.c.b16 %v2738, %v2730
        %v4723 = vpack.c.b16 %v2739, %v2731
        %v4724 = vpack.c.b16 %v2748, %v2740
        %v4725 = vpack.c.b16 %v2749, %v2741
        %v4726 = vpack.c.b16 %v2750, %v2742
        %v4727 = vpack.c.b16 %v2751, %v2743
        %v4728 = vpack.c.b16 %v2752, %v2744
        %v4729 = vpack.c.b16 %v2753, %v2745
        %v4730 = vpack.c.b16 %v2754, %v2746
        %v4731 = vpack.c.b16 %v2755, %v2747
        %v4732 = vpack.c.b16 %v2764, %v2756
        %v4733 = vpack.c.b16 %v2765, %v2757
        %v4734 = vpack.c.b16 %v2766, %v2758
        %v4735 = vpack.c.b16 %v2767, %v2759
        %v4736 = vpack.c.b16 %v2768, %v2760
        %v4737 = vpack.c.b16 %v2769, %v2761
        %v4738 = vpack.c.b16 %v2770, %v2762
        %v4739 = vpack.c.b16 %v2771, %v2763
        %v4740 = vpack.c.b16 %v2780, %v2772
        %v4741 = vpack.c.b16 %v2781, %v2773
        %v4742 = vpack.c.b16 %v2782, %v2774
        %v4743 = vpack.c.b16 %v2783, %v2775
        %v4744 = vpack.c.b16 %v2784, %v2776
        %v4745 = vpack.c.b16 %v2785, %v2777
        %v4746 = vpack.c.b16 %v2786, %v2778
        %v4747 = vpack.c.b16 %v2787, %v2779
        %v4748 = vpack.c.b16 %v2796, %v2788
        %v4749 = vpack.c.b16 %v2797, %v2789
        %v4750 = vpack.c.b16 %v2798, %v2790
        %v4751 = vpack.c.b16 %v2799, %v2791
        %v4752 = vpack.c.b16 %v2800, %v2792
        %v4753 = vpack.c.b16 %v2801, %v2793
        %v4754 = vpack.c.b16 %v2802, %v2794
        %v4755 = vpack.c.b16 %v2803, %v2795
        %v4756 = vpack.c.b16 %v2812, %v2804
        %v4757 = vpack.c.b16 %v2813, %v2805
        %v4758 = vpack.c.b16 %v2814, %v2806
        %v4759 = vpack.c.b16 %v2815, %v2807
        %v4760 = vpack.c.b16 %v2816, %v2808
        %v4761 = vpack.c.b16 %v2817, %v2809
        %v4762 = vpack.c.b16 %v2818, %v2810
        %v4763 = vpack.c.b16 %v2819, %v2811
        %v4764 = vpack.c.b16 %v2828, %v2820
        %v4765 = vpack.c.b16 %v2829, %v2821
        %v4766 = vpack.c.b16 %v2830, %v2822
        %v4767 = vpack.c.b16 %v2831, %v2823
        %v4768 = vpack.c.b16 %v2832, %v2824
        %v4769 = vpack.c.b16 %v2833, %v2825
        %v4770 = vpack.c.b16 %v2834, %v2826
        %v4771 = vpack.c.b16 %v2835, %v2827
        %v4772 = vpack.c.b16 %v2844, %v2836
        %v4773 = vpack.c.b16 %v2845, %v2837
        %v4774 = vpack.c.b16 %v2846, %v2838
        %v4775 = vpack.c.b16 %v2847, %v2839
        %v4776 = vpack.c.b16 %v2848, %v2840
        %v4777 = vpack.c.b16 %v2849, %v2841
        %v4778 = vpack.c.b16 %v2850, %v2842
        %v4779 = vpack.c.b16 %v2851, %v2843
        %v4780 = vpack.c.b16 %v2860, %v2852
        %v4781 = vpack.c.b16 %v2861, %v2853
        %v4782 = vpack.c.b16 %v2862, %v2854
        %v4783 = vpack.c.b16 %v2863, %v2855
        %v4784 = vpack.c.b16 %v2864, %v2856
        %v4785 = vpack.c.b16 %v2865, %v2857
        %v4786 = vpack.c.b16 %v2866, %v2858
        %v4787 = vpack.c.b16 %v2867, %v2859
        %v4788 = vpack.c.b16 %v2876, %v2868
        %v4789 = vpack.c.b16 %v2877, %v2869
        %v4790 = vpack.c.b16 %v2878, %v2870
        %v4791 = vpack.c.b16 %v2879, %v2871
        %v4792 = vpack.c.b16 %v2880, %v2872
        %v4793 = vpack.c.b16 %v2881, %v2873
        %v4794 = vpack.c.b16 %v2882, %v2874
        %v4795 = vpack.c.b16 %v2883, %v2875
        %v4796 = vpack.c.b16 %v2892, %v2884
        %v4797 = vpack.c.b16 %v2893, %v2885
        %v4798 = vpack.c.b16 %v2894, %v2886
        %v4799 = vpack.c.b16 %v2895, %v2887
        %v4800 = vpack.c.b16 %v2896, %v2888
        %v4801 = vpack.c.b16 %v2897, %v2889
        %v4802 = vpack.c.b16 %v2898, %v2890
        %v4803 = vpack.c.b16 %v2899, %v2891
        %v4804 = vpack.c.b16 %v2908, %v2900
        %v4805 = vpack.c.b16 %v2909, %v2901
        %v4806 = vpack.c.b16 %v2910, %v2902
        %v4807 = vpack.c.b16 %v2911, %v2903
        %v4808 = vpack.c.b16 %v2912, %v2904
        %v4809 = vpack.c.b16 %v2913, %v2905
        %v4810 = vpack.c.b16 %v2914, %v2906
        %v4811 = vpack.c.b16 %v2915, %v2907
        %v4812 = vpack.c.b16 %v2924, %v2916
        %v4813 = vpack.c.b16 %v2925, %v2917
        %v4814 = vpack.c.b16 %v2926, %v2918
        %v4815 = vpack.c.b16 %v2927, %v2919
        %v4816 = vpack.c.b16 %v2928, %v2920
        %v4817 = vpack.c.b16 %v2929, %v2921
        %v4818 = vpack.c.b16 %v2930, %v2922
        %v4819 = vpack.c.b16 %v2931, %v2923
        %v4820 = vpack.c.b16 %v2940, %v2932
        %v4821 = vpack.c.b16 %v2941, %v2933
        %v4822 = vpack.c.b16 %v2942, %v2934
        %v4823 = vpack.c.b16 %v2943, %v2935
        %v4824 = vpack.c.b16 %v2944, %v2936
        %v4825 = vpack.c.b16 %v2945, %v2937
        %v4826 = vpack.c.b16 %v2946, %v2938
        %v4827 = vpack.c.b16 %v2947, %v2939
        %v4828 = vpack.c.b16 %v2956, %v2948
        %v4829 = vpack.c.b16 %v2957, %v2949
        %v4830 = vpack.c.b16 %v2958, %v2950
        %v4831 = vpack.c.b16 %v2959, %v2951
        %v4832 = vpack.c.b16 %v2960, %v2952
        %v4833 = vpack.c.b16 %v2961, %v2953
        %v4834 = vpack.c.b16 %v2962, %v2954
        %v4835 = vpack.c.b16 %v2963, %v2955
        %v4836 = vpack.c.b16 %v2972, %v2964
        %v4837 = vpack.c.b16 %v2973, %v2965
        %v4838 = vpack.c.b16 %v2974, %v2966
        %v4839 = vpack.c.b16 %v2975, %v2967
        %v4840 = vpack.c.b16 %v2976, %v2968
        %v4841 = vpack.c.b16 %v2977, %v2969
        %v4842 = vpack.c.b16 %v2978, %v2970
        %v4843 = vpack.c.b16 %v2979, %v2971
        %v4844 = vpack.c.b16 %v2988, %v2980
        %v4845 = vpack.c.b16 %v2989, %v2981
        %v4846 = vpack.c.b16 %v2990, %v2982
        %v4847 = vpack.c.b16 %v2991, %v2983
        %v4848 = vpack.c.b16 %v2992, %v2984
        %v4849 = vpack.c.b16 %v2993, %v2985
        %v4850 = vpack.c.b16 %v2994, %v2986
        %v4851 = vpack.c.b16 %v2995, %v2987
        %v4852 = vpack.c.b16 %v3004, %v2996
        %v4853 = vpack.c.b16 %v3005, %v2997
        %v4854 = vpack.c.b16 %v3006, %v2998
        %v4855 = vpack.c.b16 %v3007, %v2999
        %v4856 = vpack.c.b16 %v3008, %v3000
        %v4857 = vpack.c.b16 %v3009, %v3001
        %v4858 = vpack.c.b16 %v3010, %v3002
        %v4859 = vpack.c.b16 %v3011, %v3003
        %v4860 = vpack.c.b16 %v3020, %v3012
        %v4861 = vpack.c.b16 %v3021, %v3013
        %v4862 = vpack.c.b16 %v3022, %v3014
        %v4863 = vpack.c.b16 %v3023, %v3015
        %v4864 = vpack.c.b16 %v3024, %v3016
        %v4865 = vpack.c.b16 %v3025, %v3017
        %v4866 = vpack.c.b16 %v3026, %v3018
        %v4867 = vpack.c.b16 %v3027, %v3019
        %v4868 = vpack.c.b16 %v3036, %v3028
        %v4869 = vpack.c.b16 %v3037, %v3029
        %v4870 = vpack.c.b16 %v3038, %v3030
        %v4871 = vpack.c.b16 %v3039, %v3031
        %v4872 = vpack.c.b16 %v3040, %v3032
        %v4873 = vpack.c.b16 %v3041, %v3033
        %v4874 = vpack.c.b16 %v3042, %v3034
        %v4875 = vpack.c.b16 %v3043, %v3035
        %v4876 = vpack.c.b16 %v3052, %v3044
        %v4877 = vpack.c.b16 %v3053, %v3045
        %v4878 = vpack.c.b16 %v3054, %v3046
        %v4879 = vpack.c.b16 %v3055, %v3047
        %v4880 = vpack.c.b16 %v3056, %v3048
        %v4881 = vpack.c.b16 %v3057, %v3049
        %v4882 = vpack.c.b16 %v3058, %v3050
        %v4883 = vpack.c.b16 %v3059, %v3051
        %v4884 = vpack.c.b16 %v3068, %v3060
        %v4885 = vpack.c.b16 %v3069, %v3061
        %v4886 = vpack.c.b16 %v3070, %v3062
        %v4887 = vpack.c.b16 %v3071, %v3063
        %v4888 = vpack.c.b16 %v3072, %v3064
        %v4889 = vpack.c.b16 %v3073, %v3065
        %v4890 = vpack.c.b16 %v3074, %v3066
        %v4891 = vpack.c.b16 %v3075, %v3067
        %v4892 = vpack.c.b16 %v3084, %v3076
        %v4893 = vpack.c.b16 %v3085, %v3077
        %v4894 = vpack.c.b16 %v3086, %v3078
        %v4895 = vpack.c.b16 %v3087, %v3079
        %v4896 = vpack.c.b16 %v3088, %v3080
        %v4897 = vpack.c.b16 %v3089, %v3081
        %v4898 = vpack.c.b16 %v3090, %v3082
        %v4899 = vpack.c.b16 %v3091, %v3083
        %v4900 = vpack.c.b16 %v3100, %v3092
        %v4901 = vpack.c.b16 %v3101, %v3093
        %v4902 = vpack.c.b16 %v3102, %v3094
        %v4903 = vpack.c.b16 %v3103, %v3095
        %v4904 = vpack.c.b16 %v3104, %v3096
        %v4905 = vpack.c.b16 %v3105, %v3097
        %v4906 = vpack.c.b16 %v3106, %v3098
        %v4907 = vpack.c.b16 %v3107, %v3099
        %v4908 = vpack.c.b16 %v3116, %v3108
        %v4909 = vpack.c.b16 %v3117, %v3109
        %v4910 = vpack.c.b16 %v3118, %v3110
        %v4911 = vpack.c.b16 %v3119, %v3111
        %v4912 = vpack.c.b16 %v3120, %v3112
        %v4913 = vpack.c.b16 %v3121, %v3113
        %v4914 = vpack.c.b16 %v3122, %v3114
        %v4915 = vpack.c.b16 %v3123, %v3115
        %v4916 = vpack.c.b16 %v3132, %v3124
        %v4917 = vpack.c.b16 %v3133, %v3125
        %v4918 = vpack.c.b16 %v3134, %v3126
        %v4919 = vpack.c.b16 %v3135, %v3127
        %v4920 = vpack.c.b16 %v3136, %v3128
        %v4921 = vpack.c.b16 %v3137, %v3129
        %v4922 = vpack.c.b16 %v3138, %v3130
        %v4923 = vpack.c.b16 %v3139, %v3131
        %v4924 = vpack.c.b16 %v3148, %v3140
        %v4925 = vpack.c.b16 %v3149, %v3141
        %v4926 = vpack.c.b16 %v3150, %v3142
        %v4927 = vpack.c.b16 %v3151, %v3143
        %v4928 = vpack.c.b16 %v3152, %v3144
        %v4929 = vpack.c.b16 %v3153, %v3145
        %v4930 = vpack.c.b16 %v3154, %v3146
        %v4931 = vpack.c.b16 %v3155, %v3147
        %v4932 = vpack.c.b16 %v3164, %v3156
        %v4933 = vpack.c.b16 %v3165, %v3157
        %v4934 = vpack.c.b16 %v3166, %v3158
        %v4935 = vpack.c.b16 %v3167, %v3159
        %v4936 = vpack.c.b16 %v3168, %v3160
        %v4937 = vpack.c.b16 %v3169, %v3161
        %v4938 = vpack.c.b16 %v3170, %v3162
        %v4939 = vpack.c.b16 %v3171, %v3163
        %v4940 = vpack.c.b16 %v3180, %v3172
        %v4941 = vpack.c.b16 %v3181, %v3173
        %v4942 = vpack.c.b16 %v3182, %v3174
        %v4943 = vpack.c.b16 %v3183, %v3175
        %v4944 = vpack.c.b16 %v3184, %v3176
        %v4945 = vpack.c.b16 %v3185, %v3177
        %v4946 = vpack.c.b16 %v3186, %v3178
        %v4947 = vpack.c.b16 %v3187, %v3179
        %v4948 = vpack.c.b16 %v3196, %v3188
        %v4949 = vpack.c.b16 %v3197, %v3189
        %v4950 = vpack.c.b16 %v3198, %v3190
        %v4951 = vpack.c.b16 %v3199, %v3191
        %v4952 = vpack.c.b16 %v3200, %v3192
        %v4953 = vpack.c.b16 %v3201, %v3193
        %v4954 = vpack.c.b16 %v3202, %v3194
        %v4955 = vpack.c.b16 %v3203, %v3195
        %v4956 = vpack.c.b16 %v3212, %v3204
        %v4957 = vpack.c.b16 %v3213, %v3205
        %v4958 = vpack.c.b16 %v3214, %v3206
        %v4959 = vpack.c.b16 %v3215, %v3207
        %v4960 = vpack.c.b16 %v3216, %v3208
        %v4961 = vpack.c.b16 %v3217, %v3209
        %v4962 = vpack.c.b16 %v3218, %v3210
        %v4963 = vpack.c.b16 %v3219, %v3211
        %v4964 = vpack.c.b16 %v3228, %v3220
        %v4965 = vpack.c.b16 %v3229, %v3221
        %v4966 = vpack.c.b16 %v3230, %v3222
        %v4967 = vpack.c.b16 %v3231, %v3223
        %v4968 = vpack.c.b16 %v3232, %v3224
        %v4969 = vpack.c.b16 %v3233, %v3225
        %v4970 = vpack.c.b16 %v3234, %v3226
        %v4971 = vpack.c.b16 %v3235, %v3227
        %v4972 = vpack.c.b16 %v3244, %v3236
        %v4973 = vpack.c.b16 %v3245, %v3237
        %v4974 = vpack.c.b16 %v3246, %v3238
        %v4975 = vpack.c.b16 %v3247, %v3239
        %v4976 = vpack.c.b16 %v3248, %v3240
        %v4977 = vpack.c.b16 %v3249, %v3241
        %v4978 = vpack.c.b16 %v3250, %v3242
        %v4979 = vpack.c.b16 %v3251, %v3243
        %v4980 = vpack.c.b16 %v3260, %v3252
        %v4981 = vpack.c.b16 %v3261, %v3253
        %v4982 = vpack.c.b16 %v3262, %v3254
        %v4983 = vpack.c.b16 %v3263, %v3255
        %v4984 = vpack.c.b16 %v3264, %v3256
        %v4985 = vpack.c.b16 %v3265, %v3257
        %v4986 = vpack.c.b16 %v3266, %v3258
        %v4987 = vpack.c.b16 %v3267, %v3259
        %v4988 = vpack.c.b16 %v3276, %v3268
        %v4989 = vpack.c.b16 %v3277, %v3269
        %v4990 = vpack.c.b16 %v3278, %v3270
        %v4991 = vpack.c.b16 %v3279, %v3271
        %v4992 = vpack.c.b16 %v3280, %v3272
        %v4993 = vpack.c.b16 %v3281, %v3273
        %v4994 = vpack.c.b16 %v3282, %v3274
        %v4995 = vpack.c.b16 %v3283, %v3275
        %v4996 = vpack.c.b16 %v3292, %v3284
        %v4997 = vpack.c.b16 %v3293, %v3285
        %v4998 = vpack.c.b16 %v3294, %v3286
        %v4999 = vpack.c.b16 %v3295, %v3287
        %v5000 = vpack.c.b16 %v3296, %v3288
        %v5001 = vpack.c.b16 %v3297, %v3289
        %v5002 = vpack.c.b16 %v3298, %v3290
        %v5003 = vpack.c.b16 %v3299, %v3291
        %v5004 = vpack.c.b16 %v3308, %v3300
        %v5005 = vpack.c.b16 %v3309, %v3301
        %v5006 = vpack.c.b16 %v3310, %v3302
        %v5007 = vpack.c.b16 %v3311, %v3303
        %v5008 = vpack.c.b16 %v3312, %v3304
        %v5009 = vpack.c.b16 %v3313, %v3305
        %v5010 = vpack.c.b16 %v3314, %v3306
        %v5011 = vpack.c.b16 %v3315, %v3307
        %v5012 = vpack.c.b16 %v3324, %v3316
        %v5013 = vpack.c.b16 %v3325, %v3317
        %v5014 = vpack.c.b16 %v3326, %v3318
        %v5015 = vpack.c.b16 %v3327, %v3319
        %v5016 = vpack.c.b16 %v3328, %v3320
        %v5017 = vpack.c.b16 %v3329, %v3321
        %v5018 = vpack.c.b16 %v3330, %v3322
        %v5019 = vpack.c.b16 %v3331, %v3323
        %v5020 = vpack.c.b16 %v3340, %v3332
        %v5021 = vpack.c.b16 %v3341, %v3333
        %v5022 = vpack.c.b16 %v3342, %v3334
        %v5023 = vpack.c.b16 %v3343, %v3335
        %v5024 = vpack.c.b16 %v3344, %v3336
        %v5025 = vpack.c.b16 %v3345, %v3337
        %v5026 = vpack.c.b16 %v3346, %v3338
        %v5027 = vpack.c.b16 %v3347, %v3339
        %v5028 = vpack.c.b16 %v3356, %v3348
        %v5029 = vpack.c.b16 %v3357, %v3349
        %v5030 = vpack.c.b16 %v3358, %v3350
        %v5031 = vpack.c.b16 %v3359, %v3351
        %v5032 = vpack.c.b16 %v3360, %v3352
        %v5033 = vpack.c.b16 %v3361, %v3353
        %v5034 = vpack.c.b16 %v3362, %v3354
        %v5035 = vpack.c.b16 %v3363, %v3355
        %v5036 = vpack.c.b16 %v3372, %v3364
        %v5037 = vpack.c.b16 %v3373, %v3365
        %v5038 = vpack.c.b16 %v3374, %v3366
        %v5039 = vpack.c.b16 %v3375, %v3367
        %v5040 = vpack.c.b16 %v3376, %v3368
        %v5041 = vpack.c.b16 %v3377, %v3369
        %v5042 = vpack.c.b16 %v3378, %v3370
        %v5043 = vpack.c.b16 %v3379, %v3371
        %v5044 = vpack.c.b16 %v3388, %v3380
        %v5045 = vpack.c.b16 %v3389, %v3381
        %v5046 = vpack.c.b16 %v3390, %v3382
        %v5047 = vpack.c.b16 %v3391, %v3383
        %v5048 = vpack.c.b16 %v3392, %v3384
        %v5049 = vpack.c.b16 %v3393, %v3385
        %v5050 = vpack.c.b16 %v3394, %v3386
        %v5051 = vpack.c.b16 %v3395, %v3387
        %v5052 = vpack.c.b16 %v3404, %v3396
        %v5053 = vpack.c.b16 %v3405, %v3397
        %v5054 = vpack.c.b16 %v3406, %v3398
        %v5055 = vpack.c.b16 %v3407, %v3399
        %v5056 = vpack.c.b16 %v3408, %v3400
        %v5057 = vpack.c.b16 %v3409, %v3401
        %v5058 = vpack.c.b16 %v3410, %v3402
        %v5059 = vpack.c.b16 %v3411, %v3403
        %v5060 = vpack.c.b16 %v3420, %v3412
        %v5061 = vpack.c.b16 %v3421, %v3413
        %v5062 = vpack.c.b16 %v3422, %v3414
        %v5063 = vpack.c.b16 %v3423, %v3415
        %v5064 = vpack.c.b16 %v3424, %v3416
        %v5065 = vpack.c.b16 %v3425, %v3417
        %v5066 = vpack.c.b16 %v3426, %v3418
        %v5067 = vpack.c.b16 %v3427, %v3419
        %v5068 = vpack.c.b16 %v3436, %v3428
        %v5069 = vpack.c.b16 %v3437, %v3429
        %v5070 = vpack.c.b16 %v3438, %v3430
        %v5071 = vpack.c.b16 %v3439, %v3431
        %v5072 = vpack.c.b16 %v3440, %v3432
        %v5073 = vpack.c.b16 %v3441, %v3433
        %v5074 = vpack.c.b16 %v3442, %v3434
        %v5075 = vpack.c.b16 %v3443, %v3435
        %v5076 = vpack.c.b16 %v3452, %v3444
        %v5077 = vpack.c.b16 %v3453, %v3445
        %v5078 = vpack.c.b16 %v3454, %v3446
        %v5079 = vpack.c.b16 %v3455, %v3447
        %v5080 = vpack.c.b16 %v3456, %v3448
        %v5081 = vpack.c.b16 %v3457, %v3449
        %v5082 = vpack.c.b16 %v3458, %v3450
        %v5083 = vpack.c.b16 %v3459, %v3451
        %v5084 = vpack.c.b16 %v3468, %v3460
        %v5085 = vpack.c.b16 %v3469, %v3461
        %v5086 = vpack.c.b16 %v3470, %v3462
        %v5087 = vpack.c.b16 %v3471, %v3463
        %v5088 = vpack.c.b16 %v3472, %v3464
        %v5089 = vpack.c.b16 %v3473, %v3465
        %v5090 = vpack.c.b16 %v3474, %v3466
        %v5091 = vpack.c.b16 %v3475, %v3467
        %v5092 = vpack.c.b16 %v3484, %v3476
        %v5093 = vpack.c.b16 %v3485, %v3477
        %v5094 = vpack.c.b16 %v3486, %v3478
        %v5095 = vpack.c.b16 %v3487, %v3479
        %v5096 = vpack.c.b16 %v3488, %v3480
        %v5097 = vpack.c.b16 %v3489, %v3481
        %v5098 = vpack.c.b16 %v3490, %v3482
        %v5099 = vpack.c.b16 %v3491, %v3483
        %v5100 = vpack.c.b16 %v3500, %v3492
        %v5101 = vpack.c.b16 %v3501, %v3493
        %v5102 = vpack.c.b16 %v3502, %v3494
        %v5103 = vpack.c.b16 %v3503, %v3495
        %v5104 = vpack.c.b16 %v3504, %v3496
        %v5105 = vpack.c.b16 %v3505, %v3497
        %v5106 = vpack.c.b16 %v3506, %v3498
        %v5107 = vpack.c.b16 %v3507, %v3499
        %v5108 = vpack.c.b16 %v3516, %v3508
        %v5109 = vpack.c.b16 %v3517, %v3509
        %v5110 = vpack.c.b16 %v3518, %v3510
        %v5111 = vpack.c.b16 %v3519, %v3511
        %v5112 = vpack.c.b16 %v3520, %v3512
        %v5113 = vpack.c.b16 %v3521, %v3513
        %v5114 = vpack.c.b16 %v3522, %v3514
        %v5115 = vpack.c.b16 %v3523, %v3515
        %v5116 = vpack.c.b16 %v3532, %v3524
        %v5117 = vpack.c.b16 %v3533, %v3525
        %v5118 = vpack.c.b16 %v3534, %v3526
        %v5119 = vpack.c.b16 %v3535, %v3527
        %v5120 = vpack.c.b16 %v3536, %v3528
        %v5121 = vpack.c.b16 %v3537, %v3529
        %v5122 = vpack.c.b16 %v3538, %v3530
        %v5123 = vpack.c.b16 %v3539, %v3531
        %v5124 = vpack.c.b16 %v3548, %v3540
        %v5125 = vpack.c.b16 %v3549, %v3541
        %v5126 = vpack.c.b16 %v3550, %v3542
        %v5127 = vpack.c.b16 %v3551, %v3543
        %v5128 = vpack.c.b16 %v3552, %v3544
        %v5129 = vpack.c.b16 %v3553, %v3545
        %v5130 = vpack.c.b16 %v3554, %v3546
        %v5131 = vpack.c.b16 %v3555, %v3547
        %v5132 = vpack.c.b16 %v3564, %v3556
        %v5133 = vpack.c.b16 %v3565, %v3557
        %v5134 = vpack.c.b16 %v3566, %v3558
        %v5135 = vpack.c.b16 %v3567, %v3559
        %v5136 = vpack.c.b16 %v3568, %v3560
        %v5137 = vpack.c.b16 %v3569, %v3561
        %v5138 = vpack.c.b16 %v3570, %v3562
        %v5139 = vpack.c.b16 %v3571, %v3563
        %v5140 = vpack.c.b16 %v3580, %v3572
        %v5141 = vpack.c.b16 %v3581, %v3573
        %v5142 = vpack.c.b16 %v3582, %v3574
        %v5143 = vpack.c.b16 %v3583, %v3575
        %v5144 = vpack.c.b16 %v3584, %v3576
        %v5145 = vpack.c.b16 %v3585, %v3577
        %v5146 = vpack.c.b16 %v3586, %v3578
        %v5147 = vpack.c.b16 %v3587, %v3579
        %v5148 = vpack.c.b16 %v3596, %v3588
        %v5149 = vpack.c.b16 %v3597, %v3589
        %v5150 = vpack.c.b16 %v3598, %v3590
        %v5151 = vpack.c.b16 %v3599, %v3591
        %v5152 = vpack.c.b16 %v3600, %v3592
        %v5153 = vpack.c.b16 %v3601, %v3593
        %v5154 = vpack.c.b16 %v3602, %v3594
        %v5155 = vpack.c.b16 %v3603, %v3595
        %v5156 = vpack.c.b16 %v3612, %v3604
        %v5157 = vpack.c.b16 %v3613, %v3605
        %v5158 = vpack.c.b16 %v3614, %v3606
        %v5159 = vpack.c.b16 %v3615, %v3607
        %v5160 = vpack.c.b16 %v3616, %v3608
        %v5161 = vpack.c.b16 %v3617, %v3609
        %v5162 = vpack.c.b16 %v3618, %v3610
        %v5163 = vpack.c.b16 %v3619, %v3611
        %v5164 = vpack.c.b16 %v3628, %v3620
        %v5165 = vpack.c.b16 %v3629, %v3621
        %v5166 = vpack.c.b16 %v3630, %v3622
        %v5167 = vpack.c.b16 %v3631, %v3623
        %v5168 = vpack.c.b16 %v3632, %v3624
        %v5169 = vpack.c.b16 %v3633, %v3625
        %v5170 = vpack.c.b16 %v3634, %v3626
        %v5171 = vpack.c.b16 %v3635, %v3627
        %v5172 = vpack.c.b16 %v3644, %v3636
        %v5173 = vpack.c.b16 %v3645, %v3637
        %v5174 = vpack.c.b16 %v3646, %v3638
        %v5175 = vpack.c.b16 %v3647, %v3639
        %v5176 = vpack.c.b16 %v3648, %v3640
        %v5177 = vpack.c.b16 %v3649, %v3641
        %v5178 = vpack.c.b16 %v3650, %v3642
        %v5179 = vpack.c.b16 %v3651, %v3643
        %v5180 = vpack.c.b16 %v3660, %v3652
        %v5181 = vpack.c.b16 %v3661, %v3653
        %v5182 = vpack.c.b16 %v3662, %v3654
        %v5183 = vpack.c.b16 %v3663, %v3655
        %v5184 = vpack.c.b16 %v3664, %v3656
        %v5185 = vpack.c.b16 %v3665, %v3657
        %v5186 = vpack.c.b16 %v3666, %v3658
        %v5187 = vpack.c.b16 %v3667, %v3659
        %v5188 = vpack.c.b16 %v3676, %v3668
        %v5189 = vpack.c.b16 %v3677, %v3669
        %v5190 = vpack.c.b16 %v3678, %v3670
        %v5191 = vpack.c.b16 %v3679, %v3671
        %v5192 = vpack.c.b16 %v3680, %v3672
        %v5193 = vpack.c.b16 %v3681, %v3673
        %v5194 = vpack.c.b16 %v3682, %v3674
        %v5195 = vpack.c.b16 %v3683, %v3675
        %v5196 = vpack.c.b16 %v3692, %v3684
        %v5197 = vpack.c.b16 %v3693, %v3685
        %v5198 = vpack.c.b16 %v3694, %v3686
        %v5199 = vpack.c.b16 %v3695, %v3687
        %v5200 = vpack.c.b16 %v3696, %v3688
        %v5201 = vpack.c.b16 %v3697, %v3689
        %v5202 = vpack.c.b16 %v3698, %v3690
        %v5203 = vpack.c.b16 %v3699, %v3691
        %v5204 = vpack.c.b16 %v3708, %v3700
        %v5205 = vpack.c.b16 %v3709, %v3701
        %v5206 = vpack.c.b16 %v3710, %v3702
        %v5207 = vpack.c.b16 %v3711, %v3703
        %v5208 = vpack.c.b16 %v3712, %v3704
        %v5209 = vpack.c.b16 %v3713, %v3705
        %v5210 = vpack.c.b16 %v3714, %v3706
        %v5211 = vpack.c.b16 %v3715, %v3707
        %v5212 = vpack.c.b16 %v3724, %v3716
        %v5213 = vpack.c.b16 %v3725, %v3717
        %v5214 = vpack.c.b16 %v3726, %v3718
        %v5215 = vpack.c.b16 %v3727, %v3719
        %v5216 = vpack.c.b16 %v3728, %v3720
        %v5217 = vpack.c.b16 %v3729, %v3721
        %v5218 = vpack.c.b16 %v3730, %v3722
        %v5219 = vpack.c.b16 %v3731, %v3723
        %v5220 = vpack.c.b16 %v3740, %v3732
        %v5221 = vpack.c.b16 %v3741, %v3733
        %v5222 = vpack.c.b16 %v3742, %v3734
        %v5223 = vpack.c.b16 %v3743, %v3735
        %v5224 = vpack.c.b16 %v3744, %v3736
        %v5225 = vpack.c.b16 %v3745, %v3737
        %v5226 = vpack.c.b16 %v3746, %v3738
        %v5227 = vpack.c.b16 %v3747, %v3739
        %v5228 = vpack.c.b16 %v3756, %v3748
        %v5229 = vpack.c.b16 %v3757, %v3749
        %v5230 = vpack.c.b16 %v3758, %v3750
        %v5231 = vpack.c.b16 %v3759, %v3751
        %v5232 = vpack.c.b16 %v3760, %v3752
        %v5233 = vpack.c.b16 %v3761, %v3753
        %v5234 = vpack.c.b16 %v3762, %v3754
        %v5235 = vpack.c.b16 %v3763, %v3755
        %v5236 = vpack.c.b16 %v3772, %v3764
        %v5237 = vpack.c.b16 %v3773, %v3765
        %v5238 = vpack.c.b16 %v3774, %v3766
        %v5239 = vpack.c.b16 %v3775, %v3767
        %v5240 = vpack.c.b16 %v3776, %v3768
        %v5241 = vpack.c.b16 %v3777, %v3769
        %v5242 = vpack.c.b16 %v3778, %v3770
        %v5243 = vpack.c.b16 %v3779, %v3771
        %v5244 = vpack.c.b16 %v3788, %v3780
        %v5245 = vpack.c.b16 %v3789, %v3781
        %v5246 = vpack.c.b16 %v3790, %v3782
        %v5247 = vpack.c.b16 %v3791, %v3783
        %v5248 = vpack.c.b16 %v3792, %v3784
        %v5249 = vpack.c.b16 %v3793, %v3785
        %v5250 = vpack.c.b16 %v3794, %v3786
        %v5251 = vpack.c.b16 %v3795, %v3787
        %v5252 = vpack.c.b16 %v3804, %v3796
        %v5253 = vpack.c.b16 %v3805, %v3797
        %v5254 = vpack.c.b16 %v3806, %v3798
        %v5255 = vpack.c.b16 %v3807, %v3799
        %v5256 = vpack.c.b16 %v3808, %v3800
        %v5257 = vpack.c.b16 %v3809, %v3801
        %v5258 = vpack.c.b16 %v3810, %v3802
        %v5259 = vpack.c.b16 %v3811, %v3803
        %v5260 = vpack.c.b16 %v3820, %v3812
        %v5261 = vpack.c.b16 %v3821, %v3813
        %v5262 = vpack.c.b16 %v3822, %v3814
        %v5263 = vpack.c.b16 %v3823, %v3815
        %v5264 = vpack.c.b16 %v3824, %v3816
        %v5265 = vpack.c.b16 %v3825, %v3817
        %v5266 = vpack.c.b16 %v3826, %v3818
        %v5267 = vpack.c.b16 %v3827, %v3819
        %v5268 = vpack.c.b16 %v3836, %v3828
        %v5269 = vpack.c.b16 %v3837, %v3829
        %v5270 = vpack.c.b16 %v3838, %v3830
        %v5271 = vpack.c.b16 %v3839, %v3831
        %v5272 = vpack.c.b16 %v3840, %v3832
        %v5273 = vpack.c.b16 %v3841, %v3833
        %v5274 = vpack.c.b16 %v3842, %v3834
        %v5275 = vpack.c.b16 %v3843, %v3835
        %v5276 = vpack.c.b16 %v3852, %v3844
        %v5277 = vpack.c.b16 %v3853, %v3845
        %v5278 = vpack.c.b16 %v3854, %v3846
        %v5279 = vpack.c.b16 %v3855, %v3847
        %v5280 = vpack.c.b16 %v3856, %v3848
        %v5281 = vpack.c.b16 %v3857, %v3849
        %v5282 = vpack.c.b16 %v3858, %v3850
        %v5283 = vpack.c.b16 %v3859, %v3851
        %v5284 = vpack.c.b16 %v3868, %v3860
        %v5285 = vpack.c.b16 %v3869, %v3861
        %v5286 = vpack.c.b16 %v3870, %v3862
        %v5287 = vpack.c.b16 %v3871, %v3863
        %v5288 = vpack.c.b16 %v3872, %v3864
        %v5289 = vpack.c.b16 %v3873, %v3865
        %v5290 = vpack.c.b16 %v3874, %v3866
        %v5291 = vpack.c.b16 %v3875, %v3867
        %v5292 = vpack.c.b16 %v3884, %v3876
        %v5293 = vpack.c.b16 %v3885, %v3877
        %v5294 = vpack.c.b16 %v3886, %v3878
        %v5295 = vpack.c.b16 %v3887, %v3879
        %v5296 = vpack.c.b16 %v3888, %v3880
        %v5297 = vpack.c.b16 %v3889, %v3881
        %v5298 = vpack.c.b16 %v3890, %v3882
        %v5299 = vpack.c.b16 %v3891, %v3883
        %v5300 = vpack.c.b16 %v3900, %v3892
        %v5301 = vpack.c.b16 %v3901, %v3893
        %v5302 = vpack.c.b16 %v3902, %v3894
        %v5303 = vpack.c.b16 %v3903, %v3895
        %v5304 = vpack.c.b16 %v3904, %v3896
        %v5305 = vpack.c.b16 %v3905, %v3897
        %v5306 = vpack.c.b16 %v3906, %v3898
        %v5307 = vpack.c.b16 %v3907, %v3899
        %v5308 = vpack.c.b16 %v3916, %v3908
        %v5309 = vpack.c.b16 %v3917, %v3909
        %v5310 = vpack.c.b16 %v3918, %v3910
        %v5311 = vpack.c.b16 %v3919, %v3911
        %v5312 = vpack.c.b16 %v3920, %v3912
        %v5313 = vpack.c.b16 %v3921, %v3913
        %v5314 = vpack.c.b16 %v3922, %v3914
        %v5315 = vpack.c.b16 %v3923, %v3915
        %v5316 = vpack.c.b16 %v3932, %v3924
        %v5317 = vpack.c.b16 %v3933, %v3925
        %v5318 = vpack.c.b16 %v3934, %v3926
        %v5319 = vpack.c.b16 %v3935, %v3927
        %v5320 = vpack.c.b16 %v3936, %v3928
        %v5321 = vpack.c.b16 %v3937, %v3929
        %v5322 = vpack.c.b16 %v3938, %v3930
        %v5323 = vpack.c.b16 %v3939, %v3931
        %v5324 = vpack.c.b16 %v3948, %v3940
        %v5325 = vpack.c.b16 %v3949, %v3941
        %v5326 = vpack.c.b16 %v3950, %v3942
        %v5327 = vpack.c.b16 %v3951, %v3943
        %v5328 = vpack.c.b16 %v3952, %v3944
        %v5329 = vpack.c.b16 %v3953, %v3945
        %v5330 = vpack.c.b16 %v3954, %v3946
        %v5331 = vpack.c.b16 %v3955, %v3947
        %v5332 = vpack.c.b16 %v3964, %v3956
        %v5333 = vpack.c.b16 %v3965, %v3957
        %v5334 = vpack.c.b16 %v3966, %v3958
        %v5335 = vpack.c.b16 %v3967, %v3959
        %v5336 = vpack.c.b16 %v3968, %v3960
        %v5337 = vpack.c.b16 %v3969, %v3961
        %v5338 = vpack.c.b16 %v3970, %v3962
        %v5339 = vpack.c.b16 %v3971, %v3963
        %v5340 = vpack.c.b16 %v3980, %v3972
        %v5341 = vpack.c.b16 %v3981, %v3973
        %v5342 = vpack.c.b16 %v3982, %v3974
        %v5343 = vpack.c.b16 %v3983, %v3975
        %v5344 = vpack.c.b16 %v3984, %v3976
        %v5345 = vpack.c.b16 %v3985, %v3977
        %v5346 = vpack.c.b16 %v3986, %v3978
        %v5347 = vpack.c.b16 %v3987, %v3979
        %v5348 = vpack.c.b16 %v3996, %v3988
        %v5349 = vpack.c.b16 %v3997, %v3989
        %v5350 = vpack.c.b16 %v3998, %v3990
        %v5351 = vpack.c.b16 %v3999, %v3991
        %v5352 = vpack.c.b16 %v4000, %v3992
        %v5353 = vpack.c.b16 %v4001, %v3993
        %v5354 = vpack.c.b16 %v4002, %v3994
        %v5355 = vpack.c.b16 %v4003, %v3995
        %v5356 = vpack.c.b16 %v4012, %v4004
        %v5357 = vpack.c.b16 %v4013, %v4005
        %v5358 = vpack.c.b16 %v4014, %v4006
        %v5359 = vpack.c.b16 %v4015, %v4007
        %v5360 = vpack.c.b16 %v4016, %v4008
        %v5361 = vpack.c.b16 %v4017, %v4009
        %v5362 = vpack.c.b16 %v4018, %v4010
        %v5363 = vpack.c.b16 %v4019, %v4011
        %v5364 = vpack.c.b16 %v4028, %v4020
        %v5365 = vpack.c.b16 %v4029, %v4021
        %v5366 = vpack.c.b16 %v4030, %v4022
        %v5367 = vpack.c.b16 %v4031, %v4023
        %v5368 = vpack.c.b16 %v4032, %v4024
        %v5369 = vpack.c.b16 %v4033, %v4025
        %v5370 = vpack.c.b16 %v4034, %v4026
        %v5371 = vpack.c.b16 %v4035, %v4027
        %v5372 = vpack.c.b16 %v4044, %v4036
        %v5373 = vpack.c.b16 %v4045, %v4037
        %v5374 = vpack.c.b16 %v4046, %v4038
        %v5375 = vpack.c.b16 %v4047, %v4039
        %v5376 = vpack.c.b16 %v4048, %v4040
        %v5377 = vpack.c.b16 %v4049, %v4041
        %v5378 = vpack.c.b16 %v4050, %v4042
        %v5379 = vpack.c.b16 %v4051, %v4043
        %v5380 = vpack.c.b16 %v4060, %v4052
        %v5381 = vpack.c.b16 %v4061, %v4053
        %v5382 = vpack.c.b16 %v4062, %v4054
        %v5383 = vpack.c.b16 %v4063, %v4055
        %v5384 = vpack.c.b16 %v4064, %v4056
        %v5385 = vpack.c.b16 %v4065, %v4057
        %v5386 = vpack.c.b16 %v4066, %v4058
        %v5387 = vpack.c.b16 %v4067, %v4059
        %v5388 = vpack.c.b16 %v4076, %v4068
        %v5389 = vpack.c.b16 %v4077, %v4069
        %v5390 = vpack.c.b16 %v4078, %v4070
        %v5391 = vpack.c.b16 %v4079, %v4071
        %v5392 = vpack.c.b16 %v4080, %v4072
        %v5393 = vpack.c.b16 %v4081, %v4073
        %v5394 = vpack.c.b16 %v4082, %v4074
        %v5395 = vpack.c.b16 %v4083, %v4075
        %v5396 = vpack.c.b16 %v4092, %v4084
        %v5397 = vpack.c.b16 %v4093, %v4085
        %v5398 = vpack.c.b16 %v4094, %v4086
        %v5399 = vpack.c.b16 %v4095, %v4087
        %v5400 = vpack.c.b16 %v4096, %v4088
        %v5401 = vpack.c.b16 %v4097, %v4089
        %v5402 = vpack.c.b16 %v4098, %v4090
        %v5403 = vpack.c.b16 %v4099, %v4091
        %v5404 = vpack.c.b16 %v4108, %v4100
        %v5405 = vpack.c.b16 %v4109, %v4101
        %v5406 = vpack.c.b16 %v4110, %v4102
        %v5407 = vpack.c.b16 %v4111, %v4103
        %v5408 = vpack.c.b16 %v4112, %v4104
        %v5409 = vpack.c.b16 %v4113, %v4105
        %v5410 = vpack.c.b16 %v4114, %v4106
        %v5411 = vpack.c.b16 %v4115, %v4107
        %v5412 = vpack.c.b16 %v4124, %v4116
        %v5413 = vpack.c.b16 %v4125, %v4117
        %v5414 = vpack.c.b16 %v4126, %v4118
        %v5415 = vpack.c.b16 %v4127, %v4119
        %v5416 = vpack.c.b16 %v4128, %v4120
        %v5417 = vpack.c.b16 %v4129, %v4121
        %v5418 = vpack.c.b16 %v4130, %v4122
        %v5419 = vpack.c.b16 %v4131, %v4123
        %v5420 = vpack.c.b16 %v4140, %v4132
        %v5421 = vpack.c.b16 %v4141, %v4133
        %v5422 = vpack.c.b16 %v4142, %v4134
        %v5423 = vpack.c.b16 %v4143, %v4135
        %v5424 = vpack.c.b16 %v4144, %v4136
        %v5425 = vpack.c.b16 %v4145, %v4137
        %v5426 = vpack.c.b16 %v4146, %v4138
        %v5427 = vpack.c.b16 %v4147, %v4139
        %v5428 = vpack.c.b16 %v4156, %v4148
        %v5429 = vpack.c.b16 %v4157, %v4149
        %v5430 = vpack.c.b16 %v4158, %v4150
        %v5431 = vpack.c.b16 %v4159, %v4151
        %v5432 = vpack.c.b16 %v4160, %v4152
        %v5433 = vpack.c.b16 %v4161, %v4153
        %v5434 = vpack.c.b16 %v4162, %v4154
        %v5435 = vpack.c.b16 %v4163, %v4155
        %v5436 = vpack.c.b16 %v4172, %v4164
        %v5437 = vpack.c.b16 %v4173, %v4165
        %v5438 = vpack.c.b16 %v4174, %v4166
        %v5439 = vpack.c.b16 %v4175, %v4167
        %v5440 = vpack.c.b16 %v4176, %v4168
        %v5441 = vpack.c.b16 %v4177, %v4169
        %v5442 = vpack.c.b16 %v4178, %v4170
        %v5443 = vpack.c.b16 %v4179, %v4171
        %v5444 = vpack.c.b16 %v4188, %v4180
        %v5445 = vpack.c.b16 %v4189, %v4181
        %v5446 = vpack.c.b16 %v4190, %v4182
        %v5447 = vpack.c.b16 %v4191, %v4183
        %v5448 = vpack.c.b16 %v4192, %v4184
        %v5449 = vpack.c.b16 %v4193, %v4185
        %v5450 = vpack.c.b16 %v4194, %v4186
        %v5451 = vpack.c.b16 %v4195, %v4187
        %v5452 = vpack.c.b16 %v4204, %v4196
        %v5453 = vpack.c.b16 %v4205, %v4197
        %v5454 = vpack.c.b16 %v4206, %v4198
        %v5455 = vpack.c.b16 %v4207, %v4199
        %v5456 = vpack.c.b16 %v4208, %v4200
        %v5457 = vpack.c.b16 %v4209, %v4201
        %v5458 = vpack.c.b16 %v4210, %v4202
        %v5459 = vpack.c.b16 %v4211, %v4203
        %v5460 = vpack.c.b16 %v4220, %v4212
        %v5461 = vpack.c.b16 %v4221, %v4213
        %v5462 = vpack.c.b16 %v4222, %v4214
        %v5463 = vpack.c.b16 %v4223, %v4215
        %v5464 = vpack.c.b16 %v4224, %v4216
        %v5465 = vpack.c.b16 %v4225, %v4217
        %v5466 = vpack.c.b16 %v4226, %v4218
        %v5467 = vpack.c.b16 %v4227, %v4219
        %v5468 = vpack.c.b16 %v4236, %v4228
        %v5469 = vpack.c.b16 %v4237, %v4229
        %v5470 = vpack.c.b16 %v4238, %v4230
        %v5471 = vpack.c.b16 %v4239, %v4231
        %v5472 = vpack.c.b16 %v4240, %v4232
        %v5473 = vpack.c.b16 %v4241, %v4233
        %v5474 = vpack.c.b16 %v4242, %v4234
        %v5475 = vpack.c.b16 %v4243, %v4235
        %v5476 = vpack.c.b16 %v4252, %v4244
        %v5477 = vpack.c.b16 %v4253, %v4245
        %v5478 = vpack.c.b16 %v4254, %v4246
        %v5479 = vpack.c.b16 %v4255, %v4247
        %v5480 = vpack.c.b16 %v4256, %v4248
        %v5481 = vpack.c.b16 %v4257, %v4249
        %v5482 = vpack.c.b16 %v4258, %v4250
        %v5483 = vpack.c.b16 %v4259, %v4251
        %v5484 = vpack.c.b16 %v4268, %v4260
        %v5485 = vpack.c.b16 %v4269, %v4261
        %v5486 = vpack.c.b16 %v4270, %v4262
        %v5487 = vpack.c.b16 %v4271, %v4263
        %v5488 = vpack.c.b16 %v4272, %v4264
        %v5489 = vpack.c.b16 %v4273, %v4265
        %v5490 = vpack.c.b16 %v4274, %v4266
        %v5491 = vpack.c.b16 %v4275, %v4267
        %v5492 = vpack.c.b16 %v4284, %v4276
        %v5493 = vpack.c.b16 %v4285, %v4277
        %v5494 = vpack.c.b16 %v4286, %v4278
        %v5495 = vpack.c.b16 %v4287, %v4279
        %v5496 = vpack.c.b16 %v4288, %v4280
        %v5497 = vpack.c.b16 %v4289, %v4281
        %v5498 = vpack.c.b16 %v4290, %v4282
        %v5499 = vpack.c.b16 %v4291, %v4283
        %v5500 = vpack.c.b16 %v4300, %v4292
        %v5501 = vpack.c.b16 %v4301, %v4293
        %v5502 = vpack.c.b16 %v4302, %v4294
        %v5503 = vpack.c.b16 %v4303, %v4295
        %v5504 = vpack.c.b16 %v4304, %v4296
        %v5505 = vpack.c.b16 %v4305, %v4297
        %v5506 = vpack.c.b16 %v4306, %v4298
        %v5507 = vpack.c.b16 %v4307, %v4299
        %v5508 = vpack.c.b16 %v4316, %v4308
        %v5509 = vpack.c.b16 %v4317, %v4309
        %v5510 = vpack.c.b16 %v4318, %v4310
        %v5511 = vpack.c.b16 %v4319, %v4311
        %v5512 = vpack.c.b16 %v4320, %v4312
        %v5513 = vpack.c.b16 %v4321, %v4313
        %v5514 = vpack.c.b16 %v4322, %v4314
        %v5515 = vpack.c.b16 %v4323, %v4315
        %v5516 = vpack.c.b16 %v4332, %v4324
        %v5517 = vpack.c.b16 %v4333, %v4325
        %v5518 = vpack.c.b16 %v4334, %v4326
        %v5519 = vpack.c.b16 %v4335, %v4327
        %v5520 = vpack.c.b16 %v4336, %v4328
        %v5521 = vpack.c.b16 %v4337, %v4329
        %v5522 = vpack.c.b16 %v4338, %v4330
        %v5523 = vpack.c.b16 %v4339, %v4331
        %v5524 = vpack.c.b16 %v4348, %v4340
        %v5525 = vpack.c.b16 %v4349, %v4341
        %v5526 = vpack.c.b16 %v4350, %v4342
        %v5527 = vpack.c.b16 %v4351, %v4343
        %v5528 = vpack.c.b16 %v4352, %v4344
        %v5529 = vpack.c.b16 %v4353, %v4345
        %v5530 = vpack.c.b16 %v4354, %v4346
        %v5531 = vpack.c.b16 %v4355, %v4347
        %v5532 = vpack.c.b16 %v4364, %v4356
        %v5533 = vpack.c.b16 %v4365, %v4357
        %v5534 = vpack.c.b16 %v4366, %v4358
        %v5535 = vpack.c.b16 %v4367, %v4359
        %v5536 = vpack.c.b16 %v4368, %v4360
        %v5537 = vpack.c.b16 %v4369, %v4361
        %v5538 = vpack.c.b16 %v4370, %v4362
        %v5539 = vpack.c.b16 %v4371, %v4363
        %v5540 = vpack.c.b16 %v4380, %v4372
        %v5541 = vpack.c.b16 %v4381, %v4373
        %v5542 = vpack.c.b16 %v4382, %v4374
        %v5543 = vpack.c.b16 %v4383, %v4375
        %v5544 = vpack.c.b16 %v4384, %v4376
        %v5545 = vpack.c.b16 %v4385, %v4377
        %v5546 = vpack.c.b16 %v4386, %v4378
        %v5547 = vpack.c.b16 %v4387, %v4379
        %v5548 = vpack.c.b16 %v4396, %v4388
        %v5549 = vpack.c.b16 %v4397, %v4389
        %v5550 = vpack.c.b16 %v4398, %v4390
        %v5551 = vpack.c.b16 %v4399, %v4391
        %v5552 = vpack.c.b16 %v4400, %v4392
        %v5553 = vpack.c.b16 %v4401, %v4393
        %v5554 = vpack.c.b16 %v4402, %v4394
        %v5555 = vpack.c.b16 %v4403, %v4395
        %v5556 = vpack.c.b16 %v4412, %v4404
        %v5557 = vpack.c.b16 %v4413, %v4405
        %v5558 = vpack.c.b16 %v4414, %v4406
        %v5559 = vpack.c.b16 %v4415, %v4407
        %v5560 = vpack.c.b16 %v4416, %v4408
        %v5561 = vpack.c.b16 %v4417, %v4409
        %v5562 = vpack.c.b16 %v4418, %v4410
        %v5563 = vpack.c.b16 %v4419, %v4411
        %v5564 = vpack.c.b16 %v4428, %v4420
        %v5565 = vpack.c.b16 %v4429, %v4421
        %v5566 = vpack.c.b16 %v4430, %v4422
        %v5567 = vpack.c.b16 %v4431, %v4423
        %v5568 = vpack.c.b16 %v4432, %v4424
        %v5569 = vpack.c.b16 %v4433, %v4425
        %v5570 = vpack.c.b16 %v4434, %v4426
        %v5571 = vpack.c.b16 %v4435, %v4427
        %v5572 = vpack.c.b16 %v4444, %v4436
        %v5573 = vpack.c.b16 %v4445, %v4437
        %v5574 = vpack.c.b16 %v4446, %v4438
        %v5575 = vpack.c.b16 %v4447, %v4439
        %v5576 = vpack.c.b16 %v4448, %v4440
        %v5577 = vpack.c.b16 %v4449, %v4441
        %v5578 = vpack.c.b16 %v4450, %v4442
        %v5579 = vpack.c.b16 %v4451, %v4443
        %v5580 = vpack.c.b16 %v4460, %v4452
        %v5581 = vpack.c.b16 %v4461, %v4453
        %v5582 = vpack.c.b16 %v4462, %v4454
        %v5583 = vpack.c.b16 %v4463, %v4455
        %v5584 = vpack.c.b16 %v4464, %v4456
        %v5585 = vpack.c.b16 %v4465, %v4457
        %v5586 = vpack.c.b16 %v4466, %v4458
        %v5587 = vpack.c.b16 %v4467, %v4459
        %v5588 = vpack.c.b16 %v4476, %v4468
        %v5589 = vpack.c.b16 %v4477, %v4469
        %v5590 = vpack.c.b16 %v4478, %v4470
        %v5591 = vpack.c.b16 %v4479, %v4471
        %v5592 = vpack.c.b16 %v4480, %v4472
        %v5593 = vpack.c.b16 %v4481, %v4473
        %v5594 = vpack.c.b16 %v4482, %v4474
        %v5595 = vpack.c.b16 %v4483, %v4475
        %v5596 = vpack.c.b16 %v4492, %v4484
        %v5597 = vpack.c.b16 %v4493, %v4485
        %v5598 = vpack.c.b16 %v4494, %v4486
        %v5599 = vpack.c.b16 %v4495, %v4487
        %v5600 = vpack.c.b16 %v4496, %v4488
        %v5601 = vpack.c.b16 %v4497, %v4489
        %v5602 = vpack.c.b16 %v4498, %v4490
        %v5603 = vpack.c.b16 %v4499, %v4491
        %v5604 = vpack.c.b16 %v4508, %v4500
        %v5605 = vpack.c.b16 %v4509, %v4501
        %v5606 = vpack.c.b16 %v4510, %v4502
        %v5607 = vpack.c.b16 %v4511, %v4503
        %v5608 = vpack.c.b16 %v4512, %v4504
        %v5609 = vpack.c.b16 %v4513, %v4505
        %v5610 = vpack.c.b16 %v4514, %v4506
        %v5611 = vpack.c.b16 %v4515, %v4507
        %v5612 = vpack.c.b16 %v4524, %v4516
        %v5613 = vpack.c.b16 %v4525, %v4517
        %v5614 = vpack.c.b16 %v4526, %v4518
        %v5615 = vpack.c.b16 %v4527, %v4519
        %v5616 = vpack.c.b16 %v4528, %v4520
        %v5617 = vpack.c.b16 %v4529, %v4521
        %v5618 = vpack.c.b16 %v4530, %v4522
        %v5619 = vpack.c.b16 %v4531, %v4523
        %v5620 = vpack.c.b16 %v4540, %v4532
        %v5621 = vpack.c.b16 %v4541, %v4533
        %v5622 = vpack.c.b16 %v4542, %v4534
        %v5623 = vpack.c.b16 %v4543, %v4535
        %v5624 = vpack.c.b16 %v4544, %v4536
        %v5625 = vpack.c.b16 %v4545, %v4537
        %v5626 = vpack.c.b16 %v4546, %v4538
        %v5627 = vpack.c.b16 %v4547, %v4539
        %v5628 = vpack.c.b16 %v4556, %v4548
        %v5629 = vpack.c.b16 %v4557, %v4549
        %v5630 = vpack.c.b16 %v4558, %v4550
        %v5631 = vpack.c.b16 %v4559, %v4551
        %v5632 = vpack.c.b16 %v4560, %v4552
        %v5633 = vpack.c.b16 %v4561, %v4553
        %v5634 = vpack.c.b16 %v4562, %v4554
        %v5635 = vpack.c.b16 %v4563, %v4555
        %v5636 = vpack.c.b16 %v4572, %v4564
        %v5637 = vpack.c.b16 %v4573, %v4565
        %v5638 = vpack.c.b16 %v4574, %v4566
        %v5639 = vpack.c.b16 %v4575, %v4567
        %v5640 = vpack.c.b16 %v4576, %v4568
        %v5641 = vpack.c.b16 %v4577, %v4569
        %v5642 = vpack.c.b16 %v4578, %v4570
        %v5643 = vpack.c.b16 %v4579, %v4571
        %v5644 = vpack.c.b16 %v4588, %v4580
        %v5645 = vpack.c.b16 %v4589, %v4581
        %v5646 = vpack.c.b16 %v4590, %v4582
        %v5647 = vpack.c.b16 %v4591, %v4583
        %v5648 = vpack.c.b16 %v4592, %v4584
        %v5649 = vpack.c.b16 %v4593, %v4585
        %v5650 = vpack.c.b16 %v4594, %v4586
        %v5651 = vpack.c.b16 %v4595, %v4587
        %v5652 = vpack.c.b16 %v4604, %v4596
        %v5653 = vpack.c.b16 %v4605, %v4597
        %v5654 = vpack.c.b16 %v4606, %v4598
        %v5655 = vpack.c.b16 %v4607, %v4599
        %v5656 = vpack.c.b16 %v4608, %v4600
        %v5657 = vpack.c.b16 %v4609, %v4601
        %v5658 = vpack.c.b16 %v4610, %v4602
        %v5659 = vpack.c.b16 %v4611, %v4603
        %v5660 = vpack.c.b16 %v4620, %v4612
        %v5661 = vpack.c.b16 %v4621, %v4613
        %v5662 = vpack.c.b16 %v4622, %v4614
        %v5663 = vpack.c.b16 %v4623, %v4615
        %v5664 = vpack.c.b16 %v4624, %v4616
        %v5665 = vpack.c.b16 %v4625, %v4617
        %v5666 = vpack.c.b16 %v4626, %v4618
        %v5667 = vpack.c.b16 %v4627, %v4619
        %v5668 = vpack.c.b16 %v4636, %v4628
        %v5669 = vpack.c.b16 %v4637, %v4629
        %v5670 = vpack.c.b16 %v4638, %v4630
        %v5671 = vpack.c.b16 %v4639, %v4631
        %v5672 = vpack.c.b16 %v4640, %v4632
        %v5673 = vpack.c.b16 %v4641, %v4633
        %v5674 = vpack.c.b16 %v4642, %v4634
        %v5675 = vpack.c.b16 %v4643, %v4635
        %v5676 = vpack.c.b16 %v4652, %v4644
        %v5677 = vpack.c.b16 %v4653, %v4645
        %v5678 = vpack.c.b16 %v4654, %v4646
        %v5679 = vpack.c.b16 %v4655, %v4647
        %v5680 = vpack.c.b16 %v4656, %v4648
        %v5681 = vpack.c.b16 %v4657, %v4649
        %v5682 = vpack.c.b16 %v4658, %v4650
        %v5683 = vpack.c.b16 %v4659, %v4651
        %6708 = vmatprep.subr.bf16.mxu0 %v4661
        %6709 = vmatpush1.bf16.msra.mxu0 %v4660
        %6710 = vmatprep.subr.bf16.mxu0 %v4669
        %6711 = vmatpush1.bf16.msra.mxu0 %v4668
        %6712 = vmatprep.subr.bf16.mxu0 %v4677
        %6713 = vmatpush1.bf16.msra.mxu0 %v4676
        %6714 = vmatprep.subr.bf16.mxu0 %v4685
        %6715 = vmatpush1.bf16.msra.mxu0 %v4684
        %6716 = vmatprep.subr.bf16.mxu0 %v4693
        %6717 = vmatpush1.bf16.msra.mxu0 %v4692
        %6718 = vmatprep.subr.bf16.mxu0 %v4701
        %6719 = vmatpush1.bf16.msra.mxu0 %v4700
        %6720 = vmatprep.subr.bf16.mxu0 %v4709
        %6721 = vmatpush1.bf16.msra.mxu0 %v4708
        %6722 = vmatprep.subr.bf16.mxu0 %v4717
        %6723 = vmatpush1.bf16.msra.mxu0 %v4716
        %6724 = vmatprep.subr.bf16.mxu0 %v4725
        %6725 = vmatpush1.bf16.msra.mxu0 %v4724
        %6726 = vmatprep.subr.bf16.mxu0 %v4733
        %6727 = vmatpush1.bf16.msra.mxu0 %v4732
        %6728 = vmatprep.subr.bf16.mxu0 %v4741
        %6729 = vmatpush1.bf16.msra.mxu0 %v4740
        %6730 = vmatprep.subr.bf16.mxu0 %v4749
        %6731 = vmatpush1.bf16.msra.mxu0 %v4748
        %6732 = vmatprep.subr.bf16.mxu0 %v4757
        %6733 = vmatpush1.bf16.msra.mxu0 %v4756
        %6734 = vmatprep.subr.bf16.mxu0 %v4765
        %6735 = vmatpush1.bf16.msra.mxu0 %v4764
        %6736 = vmatprep.subr.bf16.mxu0 %v4773
        %6737 = vmatpush1.bf16.msra.mxu0 %v4772
        %6738 = vmatprep.subr.bf16.mxu0 %v4781
        %6739 = vmatpush1.bf16.msra.mxu0 %v4780
        %6740 = vmatprep.mubr.bf16.mxu0 %v1557
        %6741 = vmatmul.mubr.bf16.gmra.mrb[0].mxu0 %v1556
        %v6742 = vpop.f32.mrb[0].mxu0
        %v6743 = vadd.f32 %v1495, %v6742
        %v6744 = vpop.f32.mrb[0].mxu0
        %v6745 = vadd.f32 %v1499, %v6744
        %v6746 = vpop.f32.mrb[0].mxu0
        %v6747 = vpop.f32.mrb[0].mxu0
        %6748 = vdwg.mxu0
        %6749 = vmatprep.subr.bf16.mxu0 %v4789
        %6750 = vmatpush1.bf16.msra.mxu0 %v4788
        %6751 = vmatprep.subr.bf16.mxu0 %v4797
        %6752 = vmatpush1.bf16.msra.mxu0 %v4796
        %6753 = vmatprep.subr.bf16.mxu0 %v4805
        %6754 = vmatpush1.bf16.msra.mxu0 %v4804
        %6755 = vmatprep.subr.bf16.mxu0 %v4813
        %6756 = vmatpush1.bf16.msra.mxu0 %v4812
        %6757 = vmatprep.subr.bf16.mxu0 %v4821
        %6758 = vmatpush1.bf16.msra.mxu0 %v4820
        %6759 = vmatprep.subr.bf16.mxu0 %v4829
        %6760 = vmatpush1.bf16.msra.mxu0 %v4828
        %6761 = vmatprep.subr.bf16.mxu0 %v4837
        %6762 = vmatpush1.bf16.msra.mxu0 %v4836
        %6763 = vmatprep.subr.bf16.mxu0 %v4845
        %6764 = vmatpush1.bf16.msra.mxu0 %v4844
        %6765 = vmatprep.subr.bf16.mxu0 %v4853
        %6766 = vmatpush1.bf16.msra.mxu0 %v4852
        %6767 = vmatprep.subr.bf16.mxu0 %v4861
        %6768 = vmatpush1.bf16.msra.mxu0 %v4860
        %6769 = vmatprep.subr.bf16.mxu0 %v4869
        %6770 = vmatpush1.bf16.msra.mxu0 %v4868
        %6771 = vmatprep.subr.bf16.mxu0 %v4877
        %6772 = vmatpush1.bf16.msra.mxu0 %v4876
        %6773 = vmatprep.subr.bf16.mxu0 %v4885
        %6774 = vmatpush1.bf16.msra.mxu0 %v4884
        %6775 = vmatprep.subr.bf16.mxu0 %v4893
        %6776 = vmatpush1.bf16.msra.mxu0 %v4892
        %6777 = vmatprep.subr.bf16.mxu0 %v4901
        %6778 = vmatpush1.bf16.msra.mxu0 %v4900
        %6779 = vmatprep.subr.bf16.mxu0 %v4909
        %6780 = vmatpush1.bf16.msra.mxu0 %v4908
        %6781 = vmatprep.mubr.bf16.mxu0 %v1559
        %6782 = vmatmul.mubr.bf16.gmra.mrb[0].mxu0 %v1558
        %v6783 = vpop.f32.mrb[0].mxu0
        %v6784 = vadd.f32 %v6743, %v6783
        %v6785 = vpop.f32.mrb[0].mxu0
        %v6786 = vadd.f32 %v6745, %v6785
        %v6787 = vpop.f32.mrb[0].mxu0
        %v6788 = vpop.f32.mrb[0].mxu0
        %6789 = vdwg.mxu0
        %6790 = vmatprep.subr.bf16.mxu0 %v4917
        %6791 = vmatpush1.bf16.msra.mxu0 %v4916
        %6792 = vmatprep.subr.bf16.mxu0 %v4925
        %6793 = vmatpush1.bf16.msra.mxu0 %v4924
        %6794 = vmatprep.subr.bf16.mxu0 %v4933
        %6795 = vmatpush1.bf16.msra.mxu0 %v4932
        %6796 = vmatprep.subr.bf16.mxu0 %v4941
        %6797 = vmatpush1.bf16.msra.mxu0 %v4940
        %6798 = vmatprep.subr.bf16.mxu0 %v4949
        %6799 = vmatpush1.bf16.msra.mxu0 %v4948
        %6800 = vmatprep.subr.bf16.mxu0 %v4957
        %6801 = vmatpush1.bf16.msra.mxu0 %v4956
        %6802 = vmatprep.subr.bf16.mxu0 %v4965
        %6803 = vmatpush1.bf16.msra.mxu0 %v4964
        %6804 = vmatprep.subr.bf16.mxu0 %v4973
        %6805 = vmatpush1.bf16.msra.mxu0 %v4972
        %6806 = vmatprep.subr.bf16.mxu0 %v4981
        %6807 = vmatpush1.bf16.msra.mxu0 %v4980
        %6808 = vmatprep.subr.bf16.mxu0 %v4989
        %6809 = vmatpush1.bf16.msra.mxu0 %v4988
        %6810 = vmatprep.subr.bf16.mxu0 %v4997
        %6811 = vmatpush1.bf16.msra.mxu0 %v4996
        %6812 = vmatprep.subr.bf16.mxu0 %v5005
        %6813 = vmatpush1.bf16.msra.mxu0 %v5004
        %6814 = vmatprep.subr.bf16.mxu0 %v5013
        %6815 = vmatpush1.bf16.msra.mxu0 %v5012
        %6816 = vmatprep.subr.bf16.mxu0 %v5021
        %6817 = vmatpush1.bf16.msra.mxu0 %v5020
        %6818 = vmatprep.subr.bf16.mxu0 %v5029
        %6819 = vmatpush1.bf16.msra.mxu0 %v5028
        %6820 = vmatprep.subr.bf16.mxu0 %v5037
        %6821 = vmatpush1.bf16.msra.mxu0 %v5036
        %6822 = vmatprep.mubr.bf16.mxu0 %v1561
        %6823 = vmatmul.mubr.bf16.gmra.mrb[0].mxu0 %v1560
        %v6824 = vpop.f32.mrb[0].mxu0
        %v6825 = vadd.f32 %v6784, %v6824
        %v6826 = vpop.f32.mrb[0].mxu0
        %v6827 = vadd.f32 %v6786, %v6826
        %v6828 = vpop.f32.mrb[0].mxu0
        %v6829 = vpop.f32.mrb[0].mxu0
        %6830 = vdwg.mxu0
        %6831 = vmatprep.subr.bf16.mxu0 %v5045
        %6832 = vmatpush1.bf16.msra.mxu0 %v5044
        %6833 = vmatprep.subr.bf16.mxu0 %v5053
        %6834 = vmatpush1.bf16.msra.mxu0 %v5052
        %6835 = vmatprep.subr.bf16.mxu0 %v5061
        %6836 = vmatpush1.bf16.msra.mxu0 %v5060
        %6837 = vmatprep.subr.bf16.mxu0 %v5069
        %6838 = vmatpush1.bf16.msra.mxu0 %v5068
        %6839 = vmatprep.subr.bf16.mxu0 %v5077
        %6840 = vmatpush1.bf16.msra.mxu0 %v5076
        %6841 = vmatprep.subr.bf16.mxu0 %v5085
        %6842 = vmatpush1.bf16.msra.mxu0 %v5084
        %6843 = vmatprep.subr.bf16.mxu0 %v5093
        %6844 = vmatpush1.bf16.msra.mxu0 %v5092
        %6845 = vmatprep.subr.bf16.mxu0 %v5101
        %6846 = vmatpush1.bf16.msra.mxu0 %v5100
        %6847 = vmatprep.subr.bf16.mxu0 %v5109
        %6848 = vmatpush1.bf16.msra.mxu0 %v5108
        %6849 = vmatprep.subr.bf16.mxu0 %v5117
        %6850 = vmatpush1.bf16.msra.mxu0 %v5116
        %6851 = vmatprep.subr.bf16.mxu0 %v5125
        %6852 = vmatpush1.bf16.msra.mxu0 %v5124
        %6853 = vmatprep.subr.bf16.mxu0 %v5133
        %6854 = vmatpush1.bf16.msra.mxu0 %v5132
        %6855 = vmatprep.subr.bf16.mxu0 %v5141
        %6856 = vmatpush1.bf16.msra.mxu0 %v5140
        %6857 = vmatprep.subr.bf16.mxu0 %v5149
        %6858 = vmatpush1.bf16.msra.mxu0 %v5148
        %6859 = vmatprep.subr.bf16.mxu0 %v5157
        %6860 = vmatpush1.bf16.msra.mxu0 %v5156
        %6861 = vmatprep.subr.bf16.mxu0 %v5165
        %6862 = vmatpush1.bf16.msra.mxu0 %v5164
        %6863 = vmatprep.mubr.bf16.mxu0 %v1563
        %6864 = vmatmul.mubr.bf16.gmra.mrb[0].mxu0 %v1562
        %v6865 = vpop.f32.mrb[0].mxu0
        %v6866 = vadd.f32 %v6825, %v6865
        %v6867 = vpop.f32.mrb[0].mxu0
        %v6868 = vadd.f32 %v6827, %v6867
        %v6869 = vpop.f32.mrb[0].mxu0
        %v6870 = vpop.f32.mrb[0].mxu0
        %6871 = vdwg.mxu0
        %6872 = vmatprep.subr.bf16.mxu0 %v5173
        %6873 = vmatpush1.bf16.msra.mxu0 %v5172
        %6874 = vmatprep.subr.bf16.mxu0 %v5181
        %6875 = vmatpush1.bf16.msra.mxu0 %v5180
        %6876 = vmatprep.subr.bf16.mxu0 %v5189
        %6877 = vmatpush1.bf16.msra.mxu0 %v5188
        %6878 = vmatprep.subr.bf16.mxu0 %v5197
        %6879 = vmatpush1.bf16.msra.mxu0 %v5196
        %6880 = vmatprep.subr.bf16.mxu0 %v5205
        %6881 = vmatpush1.bf16.msra.mxu0 %v5204
        %6882 = vmatprep.subr.bf16.mxu0 %v5213
        %6883 = vmatpush1.bf16.msra.mxu0 %v5212
        %6884 = vmatprep.subr.bf16.mxu0 %v5221
        %6885 = vmatpush1.bf16.msra.mxu0 %v5220
        %6886 = vmatprep.subr.bf16.mxu0 %v5229
        %6887 = vmatpush1.bf16.msra.mxu0 %v5228
        %6888 = vmatprep.subr.bf16.mxu0 %v5237
        %6889 = vmatpush1.bf16.msra.mxu0 %v5236
        %6890 = vmatprep.subr.bf16.mxu0 %v5245
        %6891 = vmatpush1.bf16.msra.mxu0 %v5244
        %6892 = vmatprep.subr.bf16.mxu0 %v5253
        %6893 = vmatpush1.bf16.msra.mxu0 %v5252
        %6894 = vmatprep.subr.bf16.mxu0 %v5261
        %6895 = vmatpush1.bf16.msra.mxu0 %v5260
        %6896 = vmatprep.subr.bf16.mxu0 %v5269
        %6897 = vmatpush1.bf16.msra.mxu0 %v5268
        %6898 = vmatprep.subr.bf16.mxu0 %v5277
        %6899 = vmatpush1.bf16.msra.mxu0 %v5276
        %6900 = vmatprep.subr.bf16.mxu0 %v5285
        %6901 = vmatpush1.bf16.msra.mxu0 %v5284
        %6902 = vmatprep.subr.bf16.mxu0 %v5293
        %6903 = vmatpush1.bf16.msra.mxu0 %v5292
        %6904 = vmatprep.mubr.bf16.mxu0 %v1565
        %6905 = vmatmul.mubr.bf16.gmra.mrb[0].mxu0 %v1564
        %v6906 = vpop.f32.mrb[0].mxu0
        %v6907 = vadd.f32 %v6866, %v6906
        %v6908 = vpop.f32.mrb[0].mxu0
        %v6909 = vadd.f32 %v6868, %v6908
        %v6910 = vpop.f32.mrb[0].mxu0
        %v6911 = vpop.f32.mrb[0].mxu0
        %6912 = vdwg.mxu0
        %6913 = vmatprep.subr.bf16.mxu0 %v5301
        %6914 = vmatpush1.bf16.msra.mxu0 %v5300
        %6915 = vmatprep.subr.bf16.mxu0 %v5309
        %6916 = vmatpush1.bf16.msra.mxu0 %v5308
        %6917 = vmatprep.subr.bf16.mxu0 %v5317
        %6918 = vmatpush1.bf16.msra.mxu0 %v5316
        %6919 = vmatprep.subr.bf16.mxu0 %v5325
        %6920 = vmatpush1.bf16.msra.mxu0 %v5324
        %6921 = vmatprep.subr.bf16.mxu0 %v5333
        %6922 = vmatpush1.bf16.msra.mxu0 %v5332
        %6923 = vmatprep.subr.bf16.mxu0 %v5341
        %6924 = vmatpush1.bf16.msra.mxu0 %v5340
        %6925 = vmatprep.subr.bf16.mxu0 %v5349
        %6926 = vmatpush1.bf16.msra.mxu0 %v5348
        %6927 = vmatprep.subr.bf16.mxu0 %v5357
        %6928 = vmatpush1.bf16.msra.mxu0 %v5356
        %6929 = vmatprep.subr.bf16.mxu0 %v5365
        %6930 = vmatpush1.bf16.msra.mxu0 %v5364
        %6931 = vmatprep.subr.bf16.mxu0 %v5373
        %6932 = vmatpush1.bf16.msra.mxu0 %v5372
        %6933 = vmatprep.subr.bf16.mxu0 %v5381
        %6934 = vmatpush1.bf16.msra.mxu0 %v5380
        %6935 = vmatprep.subr.bf16.mxu0 %v5389
        %6936 = vmatpush1.bf16.msra.mxu0 %v5388
        %6937 = vmatprep.subr.bf16.mxu0 %v5397
        %6938 = vmatpush1.bf16.msra.mxu0 %v5396
        %6939 = vmatprep.subr.bf16.mxu0 %v5405
        %6940 = vmatpush1.bf16.msra.mxu0 %v5404
        %6941 = vmatprep.subr.bf16.mxu0 %v5413
        %6942 = vmatpush1.bf16.msra.mxu0 %v5412
        %6943 = vmatprep.subr.bf16.mxu0 %v5421
        %6944 = vmatpush1.bf16.msra.mxu0 %v5420
        %6945 = vmatprep.mubr.bf16.mxu0 %v1567
        %6946 = vmatmul.mubr.bf16.gmra.mrb[0].mxu0 %v1566
        %v6947 = vpop.f32.mrb[0].mxu0
        %v6948 = vadd.f32 %v6907, %v6947
        %v6949 = vpop.f32.mrb[0].mxu0
        %v6950 = vadd.f32 %v6909, %v6949
        %v6951 = vpop.f32.mrb[0].mxu0
        %v6952 = vpop.f32.mrb[0].mxu0
        %6953 = vdwg.mxu0
        %6954 = vmatprep.subr.bf16.mxu0 %v5429
        %6955 = vmatpush1.bf16.msra.mxu0 %v5428
        %6956 = vmatprep.subr.bf16.mxu0 %v5437
        %6957 = vmatpush1.bf16.msra.mxu0 %v5436
        %6958 = vmatprep.subr.bf16.mxu0 %v5445
        %6959 = vmatpush1.bf16.msra.mxu0 %v5444
        %6960 = vmatprep.subr.bf16.mxu0 %v5453
        %6961 = vmatpush1.bf16.msra.mxu0 %v5452
        %6962 = vmatprep.subr.bf16.mxu0 %v5461
        %6963 = vmatpush1.bf16.msra.mxu0 %v5460
        %6964 = vmatprep.subr.bf16.mxu0 %v5469
        %6965 = vmatpush1.bf16.msra.mxu0 %v5468
        %6966 = vmatprep.subr.bf16.mxu0 %v5477
        %6967 = vmatpush1.bf16.msra.mxu0 %v5476
        %6968 = vmatprep.subr.bf16.mxu0 %v5485
        %6969 = vmatpush1.bf16.msra.mxu0 %v5484
        %6970 = vmatprep.subr.bf16.mxu0 %v5493
        %6971 = vmatpush1.bf16.msra.mxu0 %v5492
        %6972 = vmatprep.subr.bf16.mxu0 %v5501
        %6973 = vmatpush1.bf16.msra.mxu0 %v5500
        %6974 = vmatprep.subr.bf16.mxu0 %v5509
        %6975 = vmatpush1.bf16.msra.mxu0 %v5508
        %6976 = vmatprep.subr.bf16.mxu0 %v5517
        %6977 = vmatpush1.bf16.msra.mxu0 %v5516
        %6978 = vmatprep.subr.bf16.mxu0 %v5525
        %6979 = vmatpush1.bf16.msra.mxu0 %v5524
        %6980 = vmatprep.subr.bf16.mxu0 %v5533
        %6981 = vmatpush1.bf16.msra.mxu0 %v5532
        %6982 = vmatprep.subr.bf16.mxu0 %v5541
        %6983 = vmatpush1.bf16.msra.mxu0 %v5540
        %6984 = vmatprep.subr.bf16.mxu0 %v5549
        %6985 = vmatpush1.bf16.msra.mxu0 %v5548
        %6986 = vmatprep.mubr.bf16.mxu0 %v1569
        %6987 = vmatmul.mubr.bf16.gmra.mrb[0].mxu0 %v1568
        %v6988 = vpop.f32.mrb[0].mxu0
        %v6989 = vadd.f32 %v6948, %v6988
        %v6990 = vpop.f32.mrb[0].mxu0
        %v6991 = vadd.f32 %v6950, %v6990
        %v6992 = vpop.f32.mrb[0].mxu0
        %v6993 = vpop.f32.mrb[0].mxu0
        %6994 = vdwg.mxu0
        %6995 = vmatprep.subr.bf16.mxu0 %v5557
        %6996 = vmatpush1.bf16.msra.mxu0 %v5556
        %6997 = vmatprep.subr.bf16.mxu0 %v5565
        %6998 = vmatpush1.bf16.msra.mxu0 %v5564
        %6999 = vmatprep.subr.bf16.mxu0 %v5573
        %7000 = vmatpush1.bf16.msra.mxu0 %v5572
        %7001 = vmatprep.subr.bf16.mxu0 %v5581
        %7002 = vmatpush1.bf16.msra.mxu0 %v5580
        %7003 = vmatprep.subr.bf16.mxu0 %v5589
        %7004 = vmatpush1.bf16.msra.mxu0 %v5588
        %7005 = vmatprep.subr.bf16.mxu0 %v5597
        %7006 = vmatpush1.bf16.msra.mxu0 %v5596
        %7007 = vmatprep.subr.bf16.mxu0 %v5605
        %7008 = vmatpush1.bf16.msra.mxu0 %v5604
        %7009 = vmatprep.subr.bf16.mxu0 %v5613
        %7010 = vmatpush1.bf16.msra.mxu0 %v5612
        %7011 = vmatprep.subr.bf16.mxu0 %v5621
        %7012 = vmatpush1.bf16.msra.mxu0 %v5620
        %7013 = vmatprep.subr.bf16.mxu0 %v5629
        %7014 = vmatpush1.bf16.msra.mxu0 %v5628
        %7015 = vmatprep.subr.bf16.mxu0 %v5637
        %7016 = vmatpush1.bf16.msra.mxu0 %v5636
        %7017 = vmatprep.subr.bf16.mxu0 %v5645
        %7018 = vmatpush1.bf16.msra.mxu0 %v5644
        %7019 = vmatprep.subr.bf16.mxu0 %v5653
        %7020 = vmatpush1.bf16.msra.mxu0 %v5652
        %7021 = vmatprep.subr.bf16.mxu0 %v5661
        %7022 = vmatpush1.bf16.msra.mxu0 %v5660
        %7023 = vmatprep.subr.bf16.mxu0 %v5669
        %7024 = vmatpush1.bf16.msra.mxu0 %v5668
        %7025 = vmatprep.subr.bf16.mxu0 %v5677
        %7026 = vmatpush1.bf16.msra.mxu0 %v5676
        %7027 = vmatprep.mubr.bf16.mxu0 %v1571
        %7028 = vmatmul.mubr.bf16.gmra.mrb[0].mxu0 %v1570
        %v7029 = vpop.f32.mrb[0].mxu0
        %v7030 = vadd.f32 %v6989, %v7029
        %v7031 = vpop.f32.mrb[0].mxu0
        %v7032 = vadd.f32 %v6991, %v7031
        %v7033 = vpop.f32.mrb[0].mxu0
        %v7034 = vpop.f32.mrb[0].mxu0
        %7035 = vdwg.mxu0
        %7036 = vmatprep.subr.bf16.mxu0 %v4663
        %7037 = vmatpush1.bf16.msra.mxu0 %v4662
        %7038 = vmatprep.subr.bf16.mxu0 %v4671
        %7039 = vmatpush1.bf16.msra.mxu0 %v4670
        %7040 = vmatprep.subr.bf16.mxu0 %v4679
        %7041 = vmatpush1.bf16.msra.mxu0 %v4678
        %7042 = vmatprep.subr.bf16.mxu0 %v4687
        %7043 = vmatpush1.bf16.msra.mxu0 %v4686
        %7044 = vmatprep.subr.bf16.mxu0 %v4695
        %7045 = vmatpush1.bf16.msra.mxu0 %v4694
        %7046 = vmatprep.subr.bf16.mxu0 %v4703
        %7047 = vmatpush1.bf16.msra.mxu0 %v4702
        %7048 = vmatprep.subr.bf16.mxu0 %v4711
        %7049 = vmatpush1.bf16.msra.mxu0 %v4710
        %7050 = vmatprep.subr.bf16.mxu0 %v4719
        %7051 = vmatpush1.bf16.msra.mxu0 %v4718
        %7052 = vmatprep.subr.bf16.mxu0 %v4727
        %7053 = vmatpush1.bf16.msra.mxu0 %v4726
        %7054 = vmatprep.subr.bf16.mxu0 %v4735
        %7055 = vmatpush1.bf16.msra.mxu0 %v4734
        %7056 = vmatprep.subr.bf16.mxu0 %v4743
        %7057 = vmatpush1.bf16.msra.mxu0 %v4742
        %7058 = vmatprep.subr.bf16.mxu0 %v4751
        %7059 = vmatpush1.bf16.msra.mxu0 %v4750
        %7060 = vmatprep.subr.bf16.mxu0 %v4759
        %7061 = vmatpush1.bf16.msra.mxu0 %v4758
        %7062 = vmatprep.subr.bf16.mxu0 %v4767
        %7063 = vmatpush1.bf16.msra.mxu0 %v4766
        %7064 = vmatprep.subr.bf16.mxu0 %v4775
        %7065 = vmatpush1.bf16.msra.mxu0 %v4774
        %7066 = vmatprep.subr.bf16.mxu0 %v4783
        %7067 = vmatpush1.bf16.msra.mxu0 %v4782
        %7068 = vmatprep.mubr.bf16.mxu0 %v1557
        %7069 = vmatmul.mubr.bf16.gmra.mrb[0].mxu0 %v1556
        %v7070 = vpop.f32.mrb[0].mxu0
        %v7071 = vadd.f32 %v1503, %v7070
        %v7072 = vpop.f32.mrb[0].mxu0
        %v7073 = vadd.f32 %v1507, %v7072
        %v7074 = vpop.f32.mrb[0].mxu0
        %v7075 = vpop.f32.mrb[0].mxu0
        %7076 = vdwg.mxu0
        %7077 = vmatprep.subr.bf16.mxu0 %v4791
        %7078 = vmatpush1.bf16.msra.mxu0 %v4790
        %7079 = vmatprep.subr.bf16.mxu0 %v4799
        %7080 = vmatpush1.bf16.msra.mxu0 %v4798
        %7081 = vmatprep.subr.bf16.mxu0 %v4807
        %7082 = vmatpush1.bf16.msra.mxu0 %v4806
        %7083 = vmatprep.subr.bf16.mxu0 %v4815
        %7084 = vmatpush1.bf16.msra.mxu0 %v4814
        %7085 = vmatprep.subr.bf16.mxu0 %v4823
        %7086 = vmatpush1.bf16.msra.mxu0 %v4822
        %7087 = vmatprep.subr.bf16.mxu0 %v4831
        %7088 = vmatpush1.bf16.msra.mxu0 %v4830
        %7089 = vmatprep.subr.bf16.mxu0 %v4839
        %7090 = vmatpush1.bf16.msra.mxu0 %v4838
        %7091 = vmatprep.subr.bf16.mxu0 %v4847
        %7092 = vmatpush1.bf16.msra.mxu0 %v4846
        %7093 = vmatprep.subr.bf16.mxu0 %v4855
        %7094 = vmatpush1.bf16.msra.mxu0 %v4854
        %7095 = vmatprep.subr.bf16.mxu0 %v4863
        %7096 = vmatpush1.bf16.msra.mxu0 %v4862
        %7097 = vmatprep.subr.bf16.mxu0 %v4871
        %7098 = vmatpush1.bf16.msra.mxu0 %v4870
        %7099 = vmatprep.subr.bf16.mxu0 %v4879
        %7100 = vmatpush1.bf16.msra.mxu0 %v4878
        %7101 = vmatprep.subr.bf16.mxu0 %v4887
        %7102 = vmatpush1.bf16.msra.mxu0 %v4886
        %7103 = vmatprep.subr.bf16.mxu0 %v4895
        %7104 = vmatpush1.bf16.msra.mxu0 %v4894
        %7105 = vmatprep.subr.bf16.mxu0 %v4903
        %7106 = vmatpush1.bf16.msra.mxu0 %v4902
        %7107 = vmatprep.subr.bf16.mxu0 %v4911
        %7108 = vmatpush1.bf16.msra.mxu0 %v4910
        %7109 = vmatprep.mubr.bf16.mxu0 %v1559
        %7110 = vmatmul.mubr.bf16.gmra.mrb[0].mxu0 %v1558
        %v7111 = vpop.f32.mrb[0].mxu0
        %v7112 = vadd.f32 %v7071, %v7111
        %v7113 = vpop.f32.mrb[0].mxu0
        %v7114 = vadd.f32 %v7073, %v7113
        %v7115 = vpop.f32.mrb[0].mxu0
        %v7116 = vpop.f32.mrb[0].mxu0
        %7117 = vdwg.mxu0
        %7118 = vmatprep.subr.bf16.mxu0 %v4919
        %7119 = vmatpush1.bf16.msra.mxu0 %v4918
        %7120 = vmatprep.subr.bf16.mxu0 %v4927
        %7121 = vmatpush1.bf16.msra.mxu0 %v4926
        %7122 = vmatprep.subr.bf16.mxu0 %v4935
        %7123 = vmatpush1.bf16.msra.mxu0 %v4934
        %7124 = vmatprep.subr.bf16.mxu0 %v4943
        %7125 = vmatpush1.bf16.msra.mxu0 %v4942
        %7126 = vmatprep.subr.bf16.mxu0 %v4951
        %7127 = vmatpush1.bf16.msra.mxu0 %v4950
        %7128 = vmatprep.subr.bf16.mxu0 %v4959
        %7129 = vmatpush1.bf16.msra.mxu0 %v4958
        %7130 = vmatprep.subr.bf16.mxu0 %v4967
        %7131 = vmatpush1.bf16.msra.mxu0 %v4966
        %7132 = vmatprep.subr.bf16.mxu0 %v4975
        %7133 = vmatpush1.bf16.msra.mxu0 %v4974
        %7134 = vmatprep.subr.bf16.mxu0 %v4983
        %7135 = vmatpush1.bf16.msra.mxu0 %v4982
        %7136 = vmatprep.subr.bf16.mxu0 %v4991
        %7137 = vmatpush1.bf16.msra.mxu0 %v4990
        %7138 = vmatprep.subr.bf16.mxu0 %v4999
        %7139 = vmatpush1.bf16.msra.mxu0 %v4998
        %7140 = vmatprep.subr.bf16.mxu0 %v5007
        %7141 = vmatpush1.bf16.msra.mxu0 %v5006
        %7142 = vmatprep.subr.bf16.mxu0 %v5015
        %7143 = vmatpush1.bf16.msra.mxu0 %v5014
        %7144 = vmatprep.subr.bf16.mxu0 %v5023
        %7145 = vmatpush1.bf16.msra.mxu0 %v5022
        %7146 = vmatprep.subr.bf16.mxu0 %v5031
        %7147 = vmatpush1.bf16.msra.mxu0 %v5030
        %7148 = vmatprep.subr.bf16.mxu0 %v5039
        %7149 = vmatpush1.bf16.msra.mxu0 %v5038
        %7150 = vmatprep.mubr.bf16.mxu0 %v1561
        %7151 = vmatmul.mubr.bf16.gmra.mrb[0].mxu0 %v1560
        %v7152 = vpop.f32.mrb[0].mxu0
        %v7153 = vadd.f32 %v7112, %v7152
        %v7154 = vpop.f32.mrb[0].mxu0
        %v7155 = vadd.f32 %v7114, %v7154
        %v7156 = vpop.f32.mrb[0].mxu0
        %v7157 = vpop.f32.mrb[0].mxu0
        %7158 = vdwg.mxu0
        %7159 = vmatprep.subr.bf16.mxu0 %v5047
        %7160 = vmatpush1.bf16.msra.mxu0 %v5046
        %7161 = vmatprep.subr.bf16.mxu0 %v5055
        %7162 = vmatpush1.bf16.msra.mxu0 %v5054
        %7163 = vmatprep.subr.bf16.mxu0 %v5063
        %7164 = vmatpush1.bf16.msra.mxu0 %v5062
        %7165 = vmatprep.subr.bf16.mxu0 %v5071
        %7166 = vmatpush1.bf16.msra.mxu0 %v5070
        %7167 = vmatprep.subr.bf16.mxu0 %v5079
        %7168 = vmatpush1.bf16.msra.mxu0 %v5078
        %7169 = vmatprep.subr.bf16.mxu0 %v5087
        %7170 = vmatpush1.bf16.msra.mxu0 %v5086
        %7171 = vmatprep.subr.bf16.mxu0 %v5095
        %7172 = vmatpush1.bf16.msra.mxu0 %v5094
        %7173 = vmatprep.subr.bf16.mxu0 %v5103
        %7174 = vmatpush1.bf16.msra.mxu0 %v5102
        %7175 = vmatprep.subr.bf16.mxu0 %v5111
        %7176 = vmatpush1.bf16.msra.mxu0 %v5110
        %7177 = vmatprep.subr.bf16.mxu0 %v5119
        %7178 = vmatpush1.bf16.msra.mxu0 %v5118
        %7179 = vmatprep.subr.bf16.mxu0 %v5127
        %7180 = vmatpush1.bf16.msra.mxu0 %v5126
        %7181 = vmatprep.subr.bf16.mxu0 %v5135
        %7182 = vmatpush1.bf16.msra.mxu0 %v5134
        %7183 = vmatprep.subr.bf16.mxu0 %v5143
        %7184 = vmatpush1.bf16.msra.mxu0 %v5142
        %7185 = vmatprep.subr.bf16.mxu0 %v5151
        %7186 = vmatpush1.bf16.msra.mxu0 %v5150
        %7187 = vmatprep.subr.bf16.mxu0 %v5159
        %7188 = vmatpush1.bf16.msra.mxu0 %v5158
        %7189 = vmatprep.subr.bf16.mxu0 %v5167
        %7190 = vmatpush1.bf16.msra.mxu0 %v5166
        %7191 = vmatprep.mubr.bf16.mxu0 %v1563
        %7192 = vmatmul.mubr.bf16.gmra.mrb[0].mxu0 %v1562
        %v7193 = vpop.f32.mrb[0].mxu0
        %v7194 = vadd.f32 %v7153, %v7193
        %v7195 = vpop.f32.mrb[0].mxu0
        %v7196 = vadd.f32 %v7155, %v7195
        %v7197 = vpop.f32.mrb[0].mxu0
        %v7198 = vpop.f32.mrb[0].mxu0
        %7199 = vdwg.mxu0
        %7200 = vmatprep.subr.bf16.mxu0 %v5175
        %7201 = vmatpush1.bf16.msra.mxu0 %v5174
        %7202 = vmatprep.subr.bf16.mxu0 %v5183
        %7203 = vmatpush1.bf16.msra.mxu0 %v5182
        %7204 = vmatprep.subr.bf16.mxu0 %v5191
        %7205 = vmatpush1.bf16.msra.mxu0 %v5190
        %7206 = vmatprep.subr.bf16.mxu0 %v5199
        %7207 = vmatpush1.bf16.msra.mxu0 %v5198
        %7208 = vmatprep.subr.bf16.mxu0 %v5207
        %7209 = vmatpush1.bf16.msra.mxu0 %v5206
        %7210 = vmatprep.subr.bf16.mxu0 %v5215
        %7211 = vmatpush1.bf16.msra.mxu0 %v5214
        %7212 = vmatprep.subr.bf16.mxu0 %v5223
        %7213 = vmatpush1.bf16.msra.mxu0 %v5222
        %7214 = vmatprep.subr.bf16.mxu0 %v5231
        %7215 = vmatpush1.bf16.msra.mxu0 %v5230
        %7216 = vmatprep.subr.bf16.mxu0 %v5239
        %7217 = vmatpush1.bf16.msra.mxu0 %v5238
        %7218 = vmatprep.subr.bf16.mxu0 %v5247
        %7219 = vmatpush1.bf16.msra.mxu0 %v5246
        %7220 = vmatprep.subr.bf16.mxu0 %v5255
        %7221 = vmatpush1.bf16.msra.mxu0 %v5254
        %7222 = vmatprep.subr.bf16.mxu0 %v5263
        %7223 = vmatpush1.bf16.msra.mxu0 %v5262
        %7224 = vmatprep.subr.bf16.mxu0 %v5271
        %7225 = vmatpush1.bf16.msra.mxu0 %v5270
        %7226 = vmatprep.subr.bf16.mxu0 %v5279
        %7227 = vmatpush1.bf16.msra.mxu0 %v5278
        %7228 = vmatprep.subr.bf16.mxu0 %v5287
        %7229 = vmatpush1.bf16.msra.mxu0 %v5286
        %7230 = vmatprep.subr.bf16.mxu0 %v5295
        %7231 = vmatpush1.bf16.msra.mxu0 %v5294
        %7232 = vmatprep.mubr.bf16.mxu0 %v1565
        %7233 = vmatmul.mubr.bf16.gmra.mrb[0].mxu0 %v1564
        %v7234 = vpop.f32.mrb[0].mxu0
        %v7235 = vadd.f32 %v7194, %v7234
        %v7236 = vpop.f32.mrb[0].mxu0
        %v7237 = vadd.f32 %v7196, %v7236
        %v7238 = vpop.f32.mrb[0].mxu0
        %v7239 = vpop.f32.mrb[0].mxu0
        %7240 = vdwg.mxu0
        %7241 = vmatprep.subr.bf16.mxu0 %v5303
        %7242 = vmatpush1.bf16.msra.mxu0 %v5302
        %7243 = vmatprep.subr.bf16.mxu0 %v5311
        %7244 = vmatpush1.bf16.msra.mxu0 %v5310
        %7245 = vmatprep.subr.bf16.mxu0 %v5319
        %7246 = vmatpush1.bf16.msra.mxu0 %v5318
        %7247 = vmatprep.subr.bf16.mxu0 %v5327
        %7248 = vmatpush1.bf16.msra.mxu0 %v5326
        %7249 = vmatprep.subr.bf16.mxu0 %v5335
        %7250 = vmatpush1.bf16.msra.mxu0 %v5334
        %7251 = vmatprep.subr.bf16.mxu0 %v5343
        %7252 = vmatpush1.bf16.msra.mxu0 %v5342
        %7253 = vmatprep.subr.bf16.mxu0 %v5351
        %7254 = vmatpush1.bf16.msra.mxu0 %v5350
        %7255 = vmatprep.subr.bf16.mxu0 %v5359
        %7256 = vmatpush1.bf16.msra.mxu0 %v5358
        %7257 = vmatprep.subr.bf16.mxu0 %v5367
        %7258 = vmatpush1.bf16.msra.mxu0 %v5366
        %7259 = vmatprep.subr.bf16.mxu0 %v5375
        %7260 = vmatpush1.bf16.msra.mxu0 %v5374
        %7261 = vmatprep.subr.bf16.mxu0 %v5383
        %7262 = vmatpush1.bf16.msra.mxu0 %v5382
        %7263 = vmatprep.subr.bf16.mxu0 %v5391
        %7264 = vmatpush1.bf16.msra.mxu0 %v5390
        %7265 = vmatprep.subr.bf16.mxu0 %v5399
        %7266 = vmatpush1.bf16.msra.mxu0 %v5398
        %7267 = vmatprep.subr.bf16.mxu0 %v5407
        %7268 = vmatpush1.bf16.msra.mxu0 %v5406
        %7269 = vmatprep.subr.bf16.mxu0 %v5415
        %7270 = vmatpush1.bf16.msra.mxu0 %v5414
        %7271 = vmatprep.subr.bf16.mxu0 %v5423
        %7272 = vmatpush1.bf16.msra.mxu0 %v5422
        %7273 = vmatprep.mubr.bf16.mxu0 %v1567
        %7274 = vmatmul.mubr.bf16.gmra.mrb[0].mxu0 %v1566
        %v7275 = vpop.f32.mrb[0].mxu0
        %v7276 = vadd.f32 %v7235, %v7275
        %v7277 = vpop.f32.mrb[0].mxu0
        %v7278 = vadd.f32 %v7237, %v7277
        %v7279 = vpop.f32.mrb[0].mxu0
        %v7280 = vpop.f32.mrb[0].mxu0
        %7281 = vdwg.mxu0
        %7282 = vmatprep.subr.bf16.mxu0 %v5431
        %7283 = vmatpush1.bf16.msra.mxu0 %v5430
        %7284 = vmatprep.subr.bf16.mxu0 %v5439
        %7285 = vmatpush1.bf16.msra.mxu0 %v5438
        %7286 = vmatprep.subr.bf16.mxu0 %v5447
        %7287 = vmatpush1.bf16.msra.mxu0 %v5446
        %7288 = vmatprep.subr.bf16.mxu0 %v5455
        %7289 = vmatpush1.bf16.msra.mxu0 %v5454
        %7290 = vmatprep.subr.bf16.mxu0 %v5463
        %7291 = vmatpush1.bf16.msra.mxu0 %v5462
        %7292 = vmatprep.subr.bf16.mxu0 %v5471
        %7293 = vmatpush1.bf16.msra.mxu0 %v5470
        %7294 = vmatprep.subr.bf16.mxu0 %v5479
        %7295 = vmatpush1.bf16.msra.mxu0 %v5478
        %7296 = vmatprep.subr.bf16.mxu0 %v5487
        %7297 = vmatpush1.bf16.msra.mxu0 %v5486
        %7298 = vmatprep.subr.bf16.mxu0 %v5495
        %7299 = vmatpush1.bf16.msra.mxu0 %v5494
        %7300 = vmatprep.subr.bf16.mxu0 %v5503
        %7301 = vmatpush1.bf16.msra.mxu0 %v5502
        %7302 = vmatprep.subr.bf16.mxu0 %v5511
        %7303 = vmatpush1.bf16.msra.mxu0 %v5510
        %7304 = vmatprep.subr.bf16.mxu0 %v5519
        %7305 = vmatpush1.bf16.msra.mxu0 %v5518
        %7306 = vmatprep.subr.bf16.mxu0 %v5527
        %7307 = vmatpush1.bf16.msra.mxu0 %v5526
        %7308 = vmatprep.subr.bf16.mxu0 %v5535
        %7309 = vmatpush1.bf16.msra.mxu0 %v5534
        %7310 = vmatprep.subr.bf16.mxu0 %v5543
        %7311 = vmatpush1.bf16.msra.mxu0 %v5542
        %7312 = vmatprep.subr.bf16.mxu0 %v5551
        %7313 = vmatpush1.bf16.msra.mxu0 %v5550
        %7314 = vmatprep.mubr.bf16.mxu0 %v1569
        %7315 = vmatmul.mubr.bf16.gmra.mrb[0].mxu0 %v1568
        %v7316 = vpop.f32.mrb[0].mxu0
        %v7317 = vadd.f32 %v7276, %v7316
        %v7318 = vpop.f32.mrb[0].mxu0
        %v7319 = vadd.f32 %v7278, %v7318
        %v7320 = vpop.f32.mrb[0].mxu0
        %v7321 = vpop.f32.mrb[0].mxu0
        %7322 = vdwg.mxu0
        %7323 = vmatprep.subr.bf16.mxu0 %v5559
        %7324 = vmatpush1.bf16.msra.mxu0 %v5558
        %7325 = vmatprep.subr.bf16.mxu0 %v5567
        %7326 = vmatpush1.bf16.msra.mxu0 %v5566
        %7327 = vmatprep.subr.bf16.mxu0 %v5575
        %7328 = vmatpush1.bf16.msra.mxu0 %v5574
        %7329 = vmatprep.subr.bf16.mxu0 %v5583
        %7330 = vmatpush1.bf16.msra.mxu0 %v5582
        %7331 = vmatprep.subr.bf16.mxu0 %v5591
        %7332 = vmatpush1.bf16.msra.mxu0 %v5590
        %7333 = vmatprep.subr.bf16.mxu0 %v5599
        %7334 = vmatpush1.bf16.msra.mxu0 %v5598
        %7335 = vmatprep.subr.bf16.mxu0 %v5607
        %7336 = vmatpush1.bf16.msra.mxu0 %v5606
        %7337 = vmatprep.subr.bf16.mxu0 %v5615
        %7338 = vmatpush1.bf16.msra.mxu0 %v5614
        %7339 = vmatprep.subr.bf16.mxu0 %v5623
        %7340 = vmatpush1.bf16.msra.mxu0 %v5622
        %7341 = vmatprep.subr.bf16.mxu0 %v5631
        %7342 = vmatpush1.bf16.msra.mxu0 %v5630
        %7343 = vmatprep.subr.bf16.mxu0 %v5639
        %7344 = vmatpush1.bf16.msra.mxu0 %v5638
        %7345 = vmatprep.subr.bf16.mxu0 %v5647
        %7346 = vmatpush1.bf16.msra.mxu0 %v5646
        %7347 = vmatprep.subr.bf16.mxu0 %v5655
        %7348 = vmatpush1.bf16.msra.mxu0 %v5654
        %7349 = vmatprep.subr.bf16.mxu0 %v5663
        %7350 = vmatpush1.bf16.msra.mxu0 %v5662
        %7351 = vmatprep.subr.bf16.mxu0 %v5671
        %7352 = vmatpush1.bf16.msra.mxu0 %v5670
        %7353 = vmatprep.subr.bf16.mxu0 %v5679
        %7354 = vmatpush1.bf16.msra.mxu0 %v5678
        %7355 = vmatprep.mubr.bf16.mxu0 %v1571
        %7356 = vmatmul.mubr.bf16.gmra.mrb[0].mxu0 %v1570
        %v7357 = vpop.f32.mrb[0].mxu0
        %v7358 = vadd.f32 %v7317, %v7357
        %v7359 = vpop.f32.mrb[0].mxu0
        %v7360 = vadd.f32 %v7319, %v7359
        %v7361 = vpop.f32.mrb[0].mxu0
        %v7362 = vpop.f32.mrb[0].mxu0
        %7363 = vdwg.mxu0
        %7364 = vmatprep.subr.bf16.mxu0 %v4665
        %7365 = vmatpush1.bf16.msra.mxu0 %v4664
        %7366 = vmatprep.subr.bf16.mxu0 %v4673
        %7367 = vmatpush1.bf16.msra.mxu0 %v4672
        %7368 = vmatprep.subr.bf16.mxu0 %v4681
        %7369 = vmatpush1.bf16.msra.mxu0 %v4680
        %7370 = vmatprep.subr.bf16.mxu0 %v4689
        %7371 = vmatpush1.bf16.msra.mxu0 %v4688
        %7372 = vmatprep.subr.bf16.mxu0 %v4697
        %7373 = vmatpush1.bf16.msra.mxu0 %v4696
        %7374 = vmatprep.subr.bf16.mxu0 %v4705
        %7375 = vmatpush1.bf16.msra.mxu0 %v4704
        %7376 = vmatprep.subr.bf16.mxu0 %v4713
        %7377 = vmatpush1.bf16.msra.mxu0 %v4712
        %7378 = vmatprep.subr.bf16.mxu0 %v4721
        %7379 = vmatpush1.bf16.msra.mxu0 %v4720
        %7380 = vmatprep.subr.bf16.mxu0 %v4729
        %7381 = vmatpush1.bf16.msra.mxu0 %v4728
        %7382 = vmatprep.subr.bf16.mxu0 %v4737
        %7383 = vmatpush1.bf16.msra.mxu0 %v4736
        %7384 = vmatprep.subr.bf16.mxu0 %v4745
        %7385 = vmatpush1.bf16.msra.mxu0 %v4744
        %7386 = vmatprep.subr.bf16.mxu0 %v4753
        %7387 = vmatpush1.bf16.msra.mxu0 %v4752
        %7388 = vmatprep.subr.bf16.mxu0 %v4761
        %7389 = vmatpush1.bf16.msra.mxu0 %v4760
        %7390 = vmatprep.subr.bf16.mxu0 %v4769
        %7391 = vmatpush1.bf16.msra.mxu0 %v4768
        %7392 = vmatprep.subr.bf16.mxu0 %v4777
        %7393 = vmatpush1.bf16.msra.mxu0 %v4776
        %7394 = vmatprep.subr.bf16.mxu0 %v4785
        %7395 = vmatpush1.bf16.msra.mxu0 %v4784
        %7396 = vmatprep.mubr.bf16.mxu0 %v1557
        %7397 = vmatmul.mubr.bf16.gmra.mrb[0].mxu0 %v1556
        %v7398 = vpop.f32.mrb[0].mxu0
        %v7399 = vadd.f32 %v1511, %v7398
        %v7400 = vpop.f32.mrb[0].mxu0
        %v7401 = vadd.f32 %v1515, %v7400
        %v7402 = vpop.f32.mrb[0].mxu0
        %v7403 = vpop.f32.mrb[0].mxu0
        %7404 = vdwg.mxu0
        %7405 = vmatprep.subr.bf16.mxu0 %v4793
        %7406 = vmatpush1.bf16.msra.mxu0 %v4792
        %7407 = vmatprep.subr.bf16.mxu0 %v4801
        %7408 = vmatpush1.bf16.msra.mxu0 %v4800
        %7409 = vmatprep.subr.bf16.mxu0 %v4809
        %7410 = vmatpush1.bf16.msra.mxu0 %v4808
        %7411 = vmatprep.subr.bf16.mxu0 %v4817
        %7412 = vmatpush1.bf16.msra.mxu0 %v4816
        %7413 = vmatprep.subr.bf16.mxu0 %v4825
        %7414 = vmatpush1.bf16.msra.mxu0 %v4824
        %7415 = vmatprep.subr.bf16.mxu0 %v4833
        %7416 = vmatpush1.bf16.msra.mxu0 %v4832
        %7417 = vmatprep.subr.bf16.mxu0 %v4841
        %7418 = vmatpush1.bf16.msra.mxu0 %v4840
        %7419 = vmatprep.subr.bf16.mxu0 %v4849
        %7420 = vmatpush1.bf16.msra.mxu0 %v4848
        %7421 = vmatprep.subr.bf16.mxu0 %v4857
        %7422 = vmatpush1.bf16.msra.mxu0 %v4856
        %7423 = vmatprep.subr.bf16.mxu0 %v4865
        %7424 = vmatpush1.bf16.msra.mxu0 %v4864
        %7425 = vmatprep.subr.bf16.mxu0 %v4873
        %7426 = vmatpush1.bf16.msra.mxu0 %v4872
        %7427 = vmatprep.subr.bf16.mxu0 %v4881
        %7428 = vmatpush1.bf16.msra.mxu0 %v4880
        %7429 = vmatprep.subr.bf16.mxu0 %v4889
        %7430 = vmatpush1.bf16.msra.mxu0 %v4888
        %7431 = vmatprep.subr.bf16.mxu0 %v4897
        %7432 = vmatpush1.bf16.msra.mxu0 %v4896
        %7433 = vmatprep.subr.bf16.mxu0 %v4905
        %7434 = vmatpush1.bf16.msra.mxu0 %v4904
        %7435 = vmatprep.subr.bf16.mxu0 %v4913
        %7436 = vmatpush1.bf16.msra.mxu0 %v4912
        %7437 = vmatprep.mubr.bf16.mxu0 %v1559
        %7438 = vmatmul.mubr.bf16.gmra.mrb[0].mxu0 %v1558
        %v7439 = vpop.f32.mrb[0].mxu0
        %v7440 = vadd.f32 %v7399, %v7439
        %v7441 = vpop.f32.mrb[0].mxu0
        %v7442 = vadd.f32 %v7401, %v7441
        %v7443 = vpop.f32.mrb[0].mxu0
        %v7444 = vpop.f32.mrb[0].mxu0
        %7445 = vdwg.mxu0
        %7446 = vmatprep.subr.bf16.mxu0 %v4921
        %7447 = vmatpush1.bf16.msra.mxu0 %v4920
        %7448 = vmatprep.subr.bf16.mxu0 %v4929
        %7449 = vmatpush1.bf16.msra.mxu0 %v4928
        %7450 = vmatprep.subr.bf16.mxu0 %v4937
        %7451 = vmatpush1.bf16.msra.mxu0 %v4936
        %7452 = vmatprep.subr.bf16.mxu0 %v4945
        %7453 = vmatpush1.bf16.msra.mxu0 %v4944
        %7454 = vmatprep.subr.bf16.mxu0 %v4953
        %7455 = vmatpush1.bf16.msra.mxu0 %v4952
        %7456 = vmatprep.subr.bf16.mxu0 %v4961
        %7457 = vmatpush1.bf16.msra.mxu0 %v4960
        %7458 = vmatprep.subr.bf16.mxu0 %v4969
        %7459 = vmatpush1.bf16.msra.mxu0 %v4968
        %7460 = vmatprep.subr.bf16.mxu0 %v4977
        %7461 = vmatpush1.bf16.msra.mxu0 %v4976
        %7462 = vmatprep.subr.bf16.mxu0 %v4985
        %7463 = vmatpush1.bf16.msra.mxu0 %v4984
        %7464 = vmatprep.subr.bf16.mxu0 %v4993
        %7465 = vmatpush1.bf16.msra.mxu0 %v4992
        %7466 = vmatprep.subr.bf16.mxu0 %v5001
        %7467 = vmatpush1.bf16.msra.mxu0 %v5000
        %7468 = vmatprep.subr.bf16.mxu0 %v5009
        %7469 = vmatpush1.bf16.msra.mxu0 %v5008
        %7470 = vmatprep.subr.bf16.mxu0 %v5017
        %7471 = vmatpush1.bf16.msra.mxu0 %v5016
        %7472 = vmatprep.subr.bf16.mxu0 %v5025
        %7473 = vmatpush1.bf16.msra.mxu0 %v5024
        %7474 = vmatprep.subr.bf16.mxu0 %v5033
        %7475 = vmatpush1.bf16.msra.mxu0 %v5032
        %7476 = vmatprep.subr.bf16.mxu0 %v5041
        %7477 = vmatpush1.bf16.msra.mxu0 %v5040
        %7478 = vmatprep.mubr.bf16.mxu0 %v1561
        %7479 = vmatmul.mubr.bf16.gmra.mrb[0].mxu0 %v1560
        %v7480 = vpop.f32.mrb[0].mxu0
        %v7481 = vadd.f32 %v7440, %v7480
        %v7482 = vpop.f32.mrb[0].mxu0
        %v7483 = vadd.f32 %v7442, %v7482
        %v7484 = vpop.f32.mrb[0].mxu0
        %v7485 = vpop.f32.mrb[0].mxu0
        %7486 = vdwg.mxu0
        %7487 = vmatprep.subr.bf16.mxu0 %v5049
        %7488 = vmatpush1.bf16.msra.mxu0 %v5048
        %7489 = vmatprep.subr.bf16.mxu0 %v5057
        %7490 = vmatpush1.bf16.msra.mxu0 %v5056
        %7491 = vmatprep.subr.bf16.mxu0 %v5065
        %7492 = vmatpush1.bf16.msra.mxu0 %v5064
        %7493 = vmatprep.subr.bf16.mxu0 %v5073
        %7494 = vmatpush1.bf16.msra.mxu0 %v5072
        %7495 = vmatprep.subr.bf16.mxu0 %v5081
        %7496 = vmatpush1.bf16.msra.mxu0 %v5080
        %7497 = vmatprep.subr.bf16.mxu0 %v5089
        %7498 = vmatpush1.bf16.msra.mxu0 %v5088
        %7499 = vmatprep.subr.bf16.mxu0 %v5097
        %7500 = vmatpush1.bf16.msra.mxu0 %v5096
        %7501 = vmatprep.subr.bf16.mxu0 %v5105
        %7502 = vmatpush1.bf16.msra.mxu0 %v5104
        %7503 = vmatprep.subr.bf16.mxu0 %v5113
        %7504 = vmatpush1.bf16.msra.mxu0 %v5112
        %7505 = vmatprep.subr.bf16.mxu0 %v5121
        %7506 = vmatpush1.bf16.msra.mxu0 %v5120
        %7507 = vmatprep.subr.bf16.mxu0 %v5129
        %7508 = vmatpush1.bf16.msra.mxu0 %v5128
        %7509 = vmatprep.subr.bf16.mxu0 %v5137
        %7510 = vmatpush1.bf16.msra.mxu0 %v5136
        %7511 = vmatprep.subr.bf16.mxu0 %v5145
        %7512 = vmatpush1.bf16.msra.mxu0 %v5144
        %7513 = vmatprep.subr.bf16.mxu0 %v5153
        %7514 = vmatpush1.bf16.msra.mxu0 %v5152
        %7515 = vmatprep.subr.bf16.mxu0 %v5161
        %7516 = vmatpush1.bf16.msra.mxu0 %v5160
        %7517 = vmatprep.subr.bf16.mxu0 %v5169
        %7518 = vmatpush1.bf16.msra.mxu0 %v5168
        %7519 = vmatprep.mubr.bf16.mxu0 %v1563
        %7520 = vmatmul.mubr.bf16.gmra.mrb[0].mxu0 %v1562
        %v7521 = vpop.f32.mrb[0].mxu0
        %v7522 = vadd.f32 %v7481, %v7521
        %v7523 = vpop.f32.mrb[0].mxu0
        %v7524 = vadd.f32 %v7483, %v7523
        %v7525 = vpop.f32.mrb[0].mxu0
        %v7526 = vpop.f32.mrb[0].mxu0
        %7527 = vdwg.mxu0
        %7528 = vmatprep.subr.bf16.mxu0 %v5177
        %7529 = vmatpush1.bf16.msra.mxu0 %v5176
        %7530 = vmatprep.subr.bf16.mxu0 %v5185
        %7531 = vmatpush1.bf16.msra.mxu0 %v5184
        %7532 = vmatprep.subr.bf16.mxu0 %v5193
        %7533 = vmatpush1.bf16.msra.mxu0 %v5192
        %7534 = vmatprep.subr.bf16.mxu0 %v5201
        %7535 = vmatpush1.bf16.msra.mxu0 %v5200
        %7536 = vmatprep.subr.bf16.mxu0 %v5209
        %7537 = vmatpush1.bf16.msra.mxu0 %v5208
        %7538 = vmatprep.subr.bf16.mxu0 %v5217
        %7539 = vmatpush1.bf16.msra.mxu0 %v5216
        %7540 = vmatprep.subr.bf16.mxu0 %v5225
        %7541 = vmatpush1.bf16.msra.mxu0 %v5224
        %7542 = vmatprep.subr.bf16.mxu0 %v5233
        %7543 = vmatpush1.bf16.msra.mxu0 %v5232
        %7544 = vmatprep.subr.bf16.mxu0 %v5241
        %7545 = vmatpush1.bf16.msra.mxu0 %v5240
        %7546 = vmatprep.subr.bf16.mxu0 %v5249
        %7547 = vmatpush1.bf16.msra.mxu0 %v5248
        %7548 = vmatprep.subr.bf16.mxu0 %v5257
        %7549 = vmatpush1.bf16.msra.mxu0 %v5256
        %7550 = vmatprep.subr.bf16.mxu0 %v5265
        %7551 = vmatpush1.bf16.msra.mxu0 %v5264
        %7552 = vmatprep.subr.bf16.mxu0 %v5273
        %7553 = vmatpush1.bf16.msra.mxu0 %v5272
        %7554 = vmatprep.subr.bf16.mxu0 %v5281
        %7555 = vmatpush1.bf16.msra.mxu0 %v5280
        %7556 = vmatprep.subr.bf16.mxu0 %v5289
        %7557 = vmatpush1.bf16.msra.mxu0 %v5288
        %7558 = vmatprep.subr.bf16.mxu0 %v5297
        %7559 = vmatpush1.bf16.msra.mxu0 %v5296
        %7560 = vmatprep.mubr.bf16.mxu0 %v1565
        %7561 = vmatmul.mubr.bf16.gmra.mrb[0].mxu0 %v1564
        %v7562 = vpop.f32.mrb[0].mxu0
        %v7563 = vadd.f32 %v7522, %v7562
        %v7564 = vpop.f32.mrb[0].mxu0
        %v7565 = vadd.f32 %v7524, %v7564
        %v7566 = vpop.f32.mrb[0].mxu0
        %v7567 = vpop.f32.mrb[0].mxu0
        %7568 = vdwg.mxu0
        %7569 = vmatprep.subr.bf16.mxu0 %v5305
        %7570 = vmatpush1.bf16.msra.mxu0 %v5304
        %7571 = vmatprep.subr.bf16.mxu0 %v5313
        %7572 = vmatpush1.bf16.msra.mxu0 %v5312
        %7573 = vmatprep.subr.bf16.mxu0 %v5321
        %7574 = vmatpush1.bf16.msra.mxu0 %v5320
        %7575 = vmatprep.subr.bf16.mxu0 %v5329
        %7576 = vmatpush1.bf16.msra.mxu0 %v5328
        %7577 = vmatprep.subr.bf16.mxu0 %v5337
        %7578 = vmatpush1.bf16.msra.mxu0 %v5336
        %7579 = vmatprep.subr.bf16.mxu0 %v5345
        %7580 = vmatpush1.bf16.msra.mxu0 %v5344
        %7581 = vmatprep.subr.bf16.mxu0 %v5353
        %7582 = vmatpush1.bf16.msra.mxu0 %v5352
        %7583 = vmatprep.subr.bf16.mxu0 %v5361
        %7584 = vmatpush1.bf16.msra.mxu0 %v5360
        %7585 = vmatprep.subr.bf16.mxu0 %v5369
        %7586 = vmatpush1.bf16.msra.mxu0 %v5368
        %7587 = vmatprep.subr.bf16.mxu0 %v5377
        %7588 = vmatpush1.bf16.msra.mxu0 %v5376
        %7589 = vmatprep.subr.bf16.mxu0 %v5385
        %7590 = vmatpush1.bf16.msra.mxu0 %v5384
        %7591 = vmatprep.subr.bf16.mxu0 %v5393
        %7592 = vmatpush1.bf16.msra.mxu0 %v5392
        %7593 = vmatprep.subr.bf16.mxu0 %v5401
        %7594 = vmatpush1.bf16.msra.mxu0 %v5400
        %7595 = vmatprep.subr.bf16.mxu0 %v5409
        %7596 = vmatpush1.bf16.msra.mxu0 %v5408
        %7597 = vmatprep.subr.bf16.mxu0 %v5417
        %7598 = vmatpush1.bf16.msra.mxu0 %v5416
        %7599 = vmatprep.subr.bf16.mxu0 %v5425
        %7600 = vmatpush1.bf16.msra.mxu0 %v5424
        %7601 = vmatprep.mubr.bf16.mxu0 %v1567
        %7602 = vmatmul.mubr.bf16.gmra.mrb[0].mxu0 %v1566
        %v7603 = vpop.f32.mrb[0].mxu0
        %v7604 = vadd.f32 %v7563, %v7603
        %v7605 = vpop.f32.mrb[0].mxu0
        %v7606 = vadd.f32 %v7565, %v7605
        %v7607 = vpop.f32.mrb[0].mxu0
        %v7608 = vpop.f32.mrb[0].mxu0
        %7609 = vdwg.mxu0
        %7610 = vmatprep.subr.bf16.mxu0 %v5433
        %7611 = vmatpush1.bf16.msra.mxu0 %v5432
        %7612 = vmatprep.subr.bf16.mxu0 %v5441
        %7613 = vmatpush1.bf16.msra.mxu0 %v5440
        %7614 = vmatprep.subr.bf16.mxu0 %v5449
        %7615 = vmatpush1.bf16.msra.mxu0 %v5448
        %7616 = vmatprep.subr.bf16.mxu0 %v5457
        %7617 = vmatpush1.bf16.msra.mxu0 %v5456
        %7618 = vmatprep.subr.bf16.mxu0 %v5465
        %7619 = vmatpush1.bf16.msra.mxu0 %v5464
        %7620 = vmatprep.subr.bf16.mxu0 %v5473
        %7621 = vmatpush1.bf16.msra.mxu0 %v5472
        %7622 = vmatprep.subr.bf16.mxu0 %v5481
        %7623 = vmatpush1.bf16.msra.mxu0 %v5480
        %7624 = vmatprep.subr.bf16.mxu0 %v5489
        %7625 = vmatpush1.bf16.msra.mxu0 %v5488
        %7626 = vmatprep.subr.bf16.mxu0 %v5497
        %7627 = vmatpush1.bf16.msra.mxu0 %v5496
        %7628 = vmatprep.subr.bf16.mxu0 %v5505
        %7629 = vmatpush1.bf16.msra.mxu0 %v5504
        %7630 = vmatprep.subr.bf16.mxu0 %v5513
        %7631 = vmatpush1.bf16.msra.mxu0 %v5512
        %7632 = vmatprep.subr.bf16.mxu0 %v5521
        %7633 = vmatpush1.bf16.msra.mxu0 %v5520
        %7634 = vmatprep.subr.bf16.mxu0 %v5529
        %7635 = vmatpush1.bf16.msra.mxu0 %v5528
        %7636 = vmatprep.subr.bf16.mxu0 %v5537
        %7637 = vmatpush1.bf16.msra.mxu0 %v5536
        %7638 = vmatprep.subr.bf16.mxu0 %v5545
        %7639 = vmatpush1.bf16.msra.mxu0 %v5544
        %7640 = vmatprep.subr.bf16.mxu0 %v5553
        %7641 = vmatpush1.bf16.msra.mxu0 %v5552
        %7642 = vmatprep.mubr.bf16.mxu0 %v1569
        %7643 = vmatmul.mubr.bf16.gmra.mrb[0].mxu0 %v1568
        %v7644 = vpop.f32.mrb[0].mxu0
        %v7645 = vadd.f32 %v7604, %v7644
        %v7646 = vpop.f32.mrb[0].mxu0
        %v7647 = vadd.f32 %v7606, %v7646
        %v7648 = vpop.f32.mrb[0].mxu0
        %v7649 = vpop.f32.mrb[0].mxu0
        %7650 = vdwg.mxu0
        %7651 = vmatprep.subr.bf16.mxu0 %v5561
        %7652 = vmatpush1.bf16.msra.mxu0 %v5560
        %7653 = vmatprep.subr.bf16.mxu0 %v5569
        %7654 = vmatpush1.bf16.msra.mxu0 %v5568
        %7655 = vmatprep.subr.bf16.mxu0 %v5577
        %7656 = vmatpush1.bf16.msra.mxu0 %v5576
        %7657 = vmatprep.subr.bf16.mxu0 %v5585
        %7658 = vmatpush1.bf16.msra.mxu0 %v5584
        %7659 = vmatprep.subr.bf16.mxu0 %v5593
        %7660 = vmatpush1.bf16.msra.mxu0 %v5592
        %7661 = vmatprep.subr.bf16.mxu0 %v5601
        %7662 = vmatpush1.bf16.msra.mxu0 %v5600
        %7663 = vmatprep.subr.bf16.mxu0 %v5609
        %7664 = vmatpush1.bf16.msra.mxu0 %v5608
        %7665 = vmatprep.subr.bf16.mxu0 %v5617
        %7666 = vmatpush1.bf16.msra.mxu0 %v5616
        %7667 = vmatprep.subr.bf16.mxu0 %v5625
        %7668 = vmatpush1.bf16.msra.mxu0 %v5624
        %7669 = vmatprep.subr.bf16.mxu0 %v5633
        %7670 = vmatpush1.bf16.msra.mxu0 %v5632
        %7671 = vmatprep.subr.bf16.mxu0 %v5641
        %7672 = vmatpush1.bf16.msra.mxu0 %v5640
        %7673 = vmatprep.subr.bf16.mxu0 %v5649
        %7674 = vmatpush1.bf16.msra.mxu0 %v5648
        %7675 = vmatprep.subr.bf16.mxu0 %v5657
        %7676 = vmatpush1.bf16.msra.mxu0 %v5656
        %7677 = vmatprep.subr.bf16.mxu0 %v5665
        %7678 = vmatpush1.bf16.msra.mxu0 %v5664
        %7679 = vmatprep.subr.bf16.mxu0 %v5673
        %7680 = vmatpush1.bf16.msra.mxu0 %v5672
        %7681 = vmatprep.subr.bf16.mxu0 %v5681
        %7682 = vmatpush1.bf16.msra.mxu0 %v5680
        %7683 = vmatprep.mubr.bf16.mxu0 %v1571
        %7684 = vmatmul.mubr.bf16.gmra.mrb[0].mxu0 %v1570
        %v7685 = vpop.f32.mrb[0].mxu0
        %v7686 = vadd.f32 %v7645, %v7685
        %v7687 = vpop.f32.mrb[0].mxu0
        %v7688 = vadd.f32 %v7647, %v7687
        %v7689 = vpop.f32.mrb[0].mxu0
        %v7690 = vpop.f32.mrb[0].mxu0
        %7691 = vdwg.mxu0
        %7692 = vmatprep.subr.bf16.mxu0 %v4667
        %7693 = vmatpush1.bf16.msra.mxu0 %v4666
        %7694 = vmatprep.subr.bf16.mxu0 %v4675
        %7695 = vmatpush1.bf16.msra.mxu0 %v4674
        %7696 = vmatprep.subr.bf16.mxu0 %v4683
        %7697 = vmatpush1.bf16.msra.mxu0 %v4682
        %7698 = vmatprep.subr.bf16.mxu0 %v4691
        %7699 = vmatpush1.bf16.msra.mxu0 %v4690
        %7700 = vmatprep.subr.bf16.mxu0 %v4699
        %7701 = vmatpush1.bf16.msra.mxu0 %v4698
        %7702 = vmatprep.subr.bf16.mxu0 %v4707
        %7703 = vmatpush1.bf16.msra.mxu0 %v4706
        %7704 = vmatprep.subr.bf16.mxu0 %v4715
        %7705 = vmatpush1.bf16.msra.mxu0 %v4714
        %7706 = vmatprep.subr.bf16.mxu0 %v4723
        %7707 = vmatpush1.bf16.msra.mxu0 %v4722
        %7708 = vmatprep.subr.bf16.mxu0 %v4731
        %7709 = vmatpush1.bf16.msra.mxu0 %v4730
        %7710 = vmatprep.subr.bf16.mxu0 %v4739
        %7711 = vmatpush1.bf16.msra.mxu0 %v4738
        %7712 = vmatprep.subr.bf16.mxu0 %v4747
        %7713 = vmatpush1.bf16.msra.mxu0 %v4746
        %7714 = vmatprep.subr.bf16.mxu0 %v4755
        %7715 = vmatpush1.bf16.msra.mxu0 %v4754
        %7716 = vmatprep.subr.bf16.mxu0 %v4763
        %7717 = vmatpush1.bf16.msra.mxu0 %v4762
        %7718 = vmatprep.subr.bf16.mxu0 %v4771
        %7719 = vmatpush1.bf16.msra.mxu0 %v4770
        %7720 = vmatprep.subr.bf16.mxu0 %v4779
        %7721 = vmatpush1.bf16.msra.mxu0 %v4778
        %7722 = vmatprep.subr.bf16.mxu0 %v4787
        %7723 = vmatpush1.bf16.msra.mxu0 %v4786
        %7724 = vmatprep.mubr.bf16.mxu0 %v1557
        %7725 = vmatmul.mubr.bf16.gmra.mrb[0].mxu0 %v1556
        %v7726 = vpop.f32.mrb[0].mxu0
        %v7727 = vadd.f32 %v1519, %v7726
        %v7728 = vpop.f32.mrb[0].mxu0
        %v7729 = vadd.f32 %v1523, %v7728
        %v7730 = vpop.f32.mrb[0].mxu0
        %v7731 = vpop.f32.mrb[0].mxu0
        %7732 = vdwg.mxu0
        %7733 = vmatprep.subr.bf16.mxu0 %v4795
        %7734 = vmatpush1.bf16.msra.mxu0 %v4794
        %7735 = vmatprep.subr.bf16.mxu0 %v4803
        %7736 = vmatpush1.bf16.msra.mxu0 %v4802
        %7737 = vmatprep.subr.bf16.mxu0 %v4811
        %7738 = vmatpush1.bf16.msra.mxu0 %v4810
        %7739 = vmatprep.subr.bf16.mxu0 %v4819
        %7740 = vmatpush1.bf16.msra.mxu0 %v4818
        %7741 = vmatprep.subr.bf16.mxu0 %v4827
        %7742 = vmatpush1.bf16.msra.mxu0 %v4826
        %7743 = vmatprep.subr.bf16.mxu0 %v4835
        %7744 = vmatpush1.bf16.msra.mxu0 %v4834
        %7745 = vmatprep.subr.bf16.mxu0 %v4843
        %7746 = vmatpush1.bf16.msra.mxu0 %v4842
        %7747 = vmatprep.subr.bf16.mxu0 %v4851
        %7748 = vmatpush1.bf16.msra.mxu0 %v4850
        %7749 = vmatprep.subr.bf16.mxu0 %v4859
        %7750 = vmatpush1.bf16.msra.mxu0 %v4858
        %7751 = vmatprep.subr.bf16.mxu0 %v4867
        %7752 = vmatpush1.bf16.msra.mxu0 %v4866
        %7753 = vmatprep.subr.bf16.mxu0 %v4875
        %7754 = vmatpush1.bf16.msra.mxu0 %v4874
        %7755 = vmatprep.subr.bf16.mxu0 %v4883
        %7756 = vmatpush1.bf16.msra.mxu0 %v4882
        %7757 = vmatprep.subr.bf16.mxu0 %v4891
        %7758 = vmatpush1.bf16.msra.mxu0 %v4890
        %7759 = vmatprep.subr.bf16.mxu0 %v4899
        %7760 = vmatpush1.bf16.msra.mxu0 %v4898
        %7761 = vmatprep.subr.bf16.mxu0 %v4907
        %7762 = vmatpush1.bf16.msra.mxu0 %v4906
        %7763 = vmatprep.subr.bf16.mxu0 %v4915
        %7764 = vmatpush1.bf16.msra.mxu0 %v4914
        %7765 = vmatprep.mubr.bf16.mxu0 %v1559
        %7766 = vmatmul.mubr.bf16.gmra.mrb[0].mxu0 %v1558
        %v7767 = vpop.f32.mrb[0].mxu0
        %v7768 = vadd.f32 %v7727, %v7767
        %v7769 = vpop.f32.mrb[0].mxu0
        %v7770 = vadd.f32 %v7729, %v7769
        %v7771 = vpop.f32.mrb[0].mxu0
        %v7772 = vpop.f32.mrb[0].mxu0
        %7773 = vdwg.mxu0
        %7774 = vmatprep.subr.bf16.mxu0 %v4923
        %7775 = vmatpush1.bf16.msra.mxu0 %v4922
        %7776 = vmatprep.subr.bf16.mxu0 %v4931
        %7777 = vmatpush1.bf16.msra.mxu0 %v4930
        %7778 = vmatprep.subr.bf16.mxu0 %v4939
        %7779 = vmatpush1.bf16.msra.mxu0 %v4938
        %7780 = vmatprep.subr.bf16.mxu0 %v4947
        %7781 = vmatpush1.bf16.msra.mxu0 %v4946
        %7782 = vmatprep.subr.bf16.mxu0 %v4955
        %7783 = vmatpush1.bf16.msra.mxu0 %v4954
        %7784 = vmatprep.subr.bf16.mxu0 %v4963
        %7785 = vmatpush1.bf16.msra.mxu0 %v4962
        %7786 = vmatprep.subr.bf16.mxu0 %v4971
        %7787 = vmatpush1.bf16.msra.mxu0 %v4970
        %7788 = vmatprep.subr.bf16.mxu0 %v4979
        %7789 = vmatpush1.bf16.msra.mxu0 %v4978
        %7790 = vmatprep.subr.bf16.mxu0 %v4987
        %7791 = vmatpush1.bf16.msra.mxu0 %v4986
        %7792 = vmatprep.subr.bf16.mxu0 %v4995
        %7793 = vmatpush1.bf16.msra.mxu0 %v4994
        %7794 = vmatprep.subr.bf16.mxu0 %v5003
        %7795 = vmatpush1.bf16.msra.mxu0 %v5002
        %7796 = vmatprep.subr.bf16.mxu0 %v5011
        %7797 = vmatpush1.bf16.msra.mxu0 %v5010
        %7798 = vmatprep.subr.bf16.mxu0 %v5019
        %7799 = vmatpush1.bf16.msra.mxu0 %v5018
        %7800 = vmatprep.subr.bf16.mxu0 %v5027
        %7801 = vmatpush1.bf16.msra.mxu0 %v5026
        %7802 = vmatprep.subr.bf16.mxu0 %v5035
        %7803 = vmatpush1.bf16.msra.mxu0 %v5034
        %7804 = vmatprep.subr.bf16.mxu0 %v5043
        %7805 = vmatpush1.bf16.msra.mxu0 %v5042
        %7806 = vmatprep.mubr.bf16.mxu0 %v1561
        %7807 = vmatmul.mubr.bf16.gmra.mrb[0].mxu0 %v1560
        %v7808 = vpop.f32.mrb[0].mxu0
        %v7809 = vadd.f32 %v7768, %v7808
        %v7810 = vpop.f32.mrb[0].mxu0
        %v7811 = vadd.f32 %v7770, %v7810
        %v7812 = vpop.f32.mrb[0].mxu0
        %v7813 = vpop.f32.mrb[0].mxu0
        %7814 = vdwg.mxu0
        %7815 = vmatprep.subr.bf16.mxu0 %v5051
        %7816 = vmatpush1.bf16.msra.mxu0 %v5050
        %7817 = vmatprep.subr.bf16.mxu0 %v5059
        %7818 = vmatpush1.bf16.msra.mxu0 %v5058
        %7819 = vmatprep.subr.bf16.mxu0 %v5067
        %7820 = vmatpush1.bf16.msra.mxu0 %v5066
        %7821 = vmatprep.subr.bf16.mxu0 %v5075
        %7822 = vmatpush1.bf16.msra.mxu0 %v5074
        %7823 = vmatprep.subr.bf16.mxu0 %v5083
        %7824 = vmatpush1.bf16.msra.mxu0 %v5082
        %7825 = vmatprep.subr.bf16.mxu0 %v5091
        %7826 = vmatpush1.bf16.msra.mxu0 %v5090
        %7827 = vmatprep.subr.bf16.mxu0 %v5099
        %7828 = vmatpush1.bf16.msra.mxu0 %v5098
        %7829 = vmatprep.subr.bf16.mxu0 %v5107
        %7830 = vmatpush1.bf16.msra.mxu0 %v5106
        %7831 = vmatprep.subr.bf16.mxu0 %v5115
        %7832 = vmatpush1.bf16.msra.mxu0 %v5114
        %7833 = vmatprep.subr.bf16.mxu0 %v5123
        %7834 = vmatpush1.bf16.msra.mxu0 %v5122
        %7835 = vmatprep.subr.bf16.mxu0 %v5131
        %7836 = vmatpush1.bf16.msra.mxu0 %v5130
        %7837 = vmatprep.subr.bf16.mxu0 %v5139
        %7838 = vmatpush1.bf16.msra.mxu0 %v5138
        %7839 = vmatprep.subr.bf16.mxu0 %v5147
        %7840 = vmatpush1.bf16.msra.mxu0 %v5146
        %7841 = vmatprep.subr.bf16.mxu0 %v5155
        %7842 = vmatpush1.bf16.msra.mxu0 %v5154
        %7843 = vmatprep.subr.bf16.mxu0 %v5163
        %7844 = vmatpush1.bf16.msra.mxu0 %v5162
        %7845 = vmatprep.subr.bf16.mxu0 %v5171
        %7846 = vmatpush1.bf16.msra.mxu0 %v5170
        %7847 = vmatprep.mubr.bf16.mxu0 %v1563
        %7848 = vmatmul.mubr.bf16.gmra.mrb[0].mxu0 %v1562
        %v7849 = vpop.f32.mrb[0].mxu0
        %v7850 = vadd.f32 %v7809, %v7849
        %v7851 = vpop.f32.mrb[0].mxu0
        %v7852 = vadd.f32 %v7811, %v7851
        %v7853 = vpop.f32.mrb[0].mxu0
        %v7854 = vpop.f32.mrb[0].mxu0
        %7855 = vdwg.mxu0
        %7856 = vmatprep.subr.bf16.mxu0 %v5179
        %7857 = vmatpush1.bf16.msra.mxu0 %v5178
        %7858 = vmatprep.subr.bf16.mxu0 %v5187
        %7859 = vmatpush1.bf16.msra.mxu0 %v5186
        %7860 = vmatprep.subr.bf16.mxu0 %v5195
        %7861 = vmatpush1.bf16.msra.mxu0 %v5194
        %7862 = vmatprep.subr.bf16.mxu0 %v5203
        %7863 = vmatpush1.bf16.msra.mxu0 %v5202
        %7864 = vmatprep.subr.bf16.mxu0 %v5211
        %7865 = vmatpush1.bf16.msra.mxu0 %v5210
        %7866 = vmatprep.subr.bf16.mxu0 %v5219
        %7867 = vmatpush1.bf16.msra.mxu0 %v5218
        %7868 = vmatprep.subr.bf16.mxu0 %v5227
        %7869 = vmatpush1.bf16.msra.mxu0 %v5226
        %7870 = vmatprep.subr.bf16.mxu0 %v5235
        %7871 = vmatpush1.bf16.msra.mxu0 %v5234
        %7872 = vmatprep.subr.bf16.mxu0 %v5243
        %7873 = vmatpush1.bf16.msra.mxu0 %v5242
        %7874 = vmatprep.subr.bf16.mxu0 %v5251
        %7875 = vmatpush1.bf16.msra.mxu0 %v5250
        %7876 = vmatprep.subr.bf16.mxu0 %v5259
        %7877 = vmatpush1.bf16.msra.mxu0 %v5258
        %7878 = vmatprep.subr.bf16.mxu0 %v5267
        %7879 = vmatpush1.bf16.msra.mxu0 %v5266
        %7880 = vmatprep.subr.bf16.mxu0 %v5275
        %7881 = vmatpush1.bf16.msra.mxu0 %v5274
        %7882 = vmatprep.subr.bf16.mxu0 %v5283
        %7883 = vmatpush1.bf16.msra.mxu0 %v5282
        %7884 = vmatprep.subr.bf16.mxu0 %v5291
        %7885 = vmatpush1.bf16.msra.mxu0 %v5290
        %7886 = vmatprep.subr.bf16.mxu0 %v5299
        %7887 = vmatpush1.bf16.msra.mxu0 %v5298
        %7888 = vmatprep.mubr.bf16.mxu0 %v1565
        %7889 = vmatmul.mubr.bf16.gmra.mrb[0].mxu0 %v1564
        %v7890 = vpop.f32.mrb[0].mxu0
        %v7891 = vadd.f32 %v7850, %v7890
        %v7892 = vpop.f32.mrb[0].mxu0
        %v7893 = vadd.f32 %v7852, %v7892
        %v7894 = vpop.f32.mrb[0].mxu0
        %v7895 = vpop.f32.mrb[0].mxu0
        %7896 = vdwg.mxu0
        %7897 = vmatprep.subr.bf16.mxu0 %v5307
        %7898 = vmatpush1.bf16.msra.mxu0 %v5306
        %7899 = vmatprep.subr.bf16.mxu0 %v5315
        %7900 = vmatpush1.bf16.msra.mxu0 %v5314
        %7901 = vmatprep.subr.bf16.mxu0 %v5323
        %7902 = vmatpush1.bf16.msra.mxu0 %v5322
        %7903 = vmatprep.subr.bf16.mxu0 %v5331
        %7904 = vmatpush1.bf16.msra.mxu0 %v5330
        %7905 = vmatprep.subr.bf16.mxu0 %v5339
        %7906 = vmatpush1.bf16.msra.mxu0 %v5338
        %7907 = vmatprep.subr.bf16.mxu0 %v5347
        %7908 = vmatpush1.bf16.msra.mxu0 %v5346
        %7909 = vmatprep.subr.bf16.mxu0 %v5355
        %7910 = vmatpush1.bf16.msra.mxu0 %v5354
        %7911 = vmatprep.subr.bf16.mxu0 %v5363
        %7912 = vmatpush1.bf16.msra.mxu0 %v5362
        %7913 = vmatprep.subr.bf16.mxu0 %v5371
        %7914 = vmatpush1.bf16.msra.mxu0 %v5370
        %7915 = vmatprep.subr.bf16.mxu0 %v5379
        %7916 = vmatpush1.bf16.msra.mxu0 %v5378
        %7917 = vmatprep.subr.bf16.mxu0 %v5387
        %7918 = vmatpush1.bf16.msra.mxu0 %v5386
        %7919 = vmatprep.subr.bf16.mxu0 %v5395
        %7920 = vmatpush1.bf16.msra.mxu0 %v5394
        %7921 = vmatprep.subr.bf16.mxu0 %v5403
        %7922 = vmatpush1.bf16.msra.mxu0 %v5402
        %7923 = vmatprep.subr.bf16.mxu0 %v5411
        %7924 = vmatpush1.bf16.msra.mxu0 %v5410
        %7925 = vmatprep.subr.bf16.mxu0 %v5419
        %7926 = vmatpush1.bf16.msra.mxu0 %v5418
        %7927 = vmatprep.subr.bf16.mxu0 %v5427
        %7928 = vmatpush1.bf16.msra.mxu0 %v5426
        %7929 = vmatprep.mubr.bf16.mxu0 %v1567
        %7930 = vmatmul.mubr.bf16.gmra.mrb[0].mxu0 %v1566
        %v7931 = vpop.f32.mrb[0].mxu0
        %v7932 = vadd.f32 %v7891, %v7931
        %v7933 = vpop.f32.mrb[0].mxu0
        %v7934 = vadd.f32 %v7893, %v7933
        %v7935 = vpop.f32.mrb[0].mxu0
        %v7936 = vpop.f32.mrb[0].mxu0
        %7937 = vdwg.mxu0
        %7938 = vmatprep.subr.bf16.mxu0 %v5435
        %7939 = vmatpush1.bf16.msra.mxu0 %v5434
        %7940 = vmatprep.subr.bf16.mxu0 %v5443
        %7941 = vmatpush1.bf16.msra.mxu0 %v5442
        %7942 = vmatprep.subr.bf16.mxu0 %v5451
        %7943 = vmatpush1.bf16.msra.mxu0 %v5450
        %7944 = vmatprep.subr.bf16.mxu0 %v5459
        %7945 = vmatpush1.bf16.msra.mxu0 %v5458
        %7946 = vmatprep.subr.bf16.mxu0 %v5467
        %7947 = vmatpush1.bf16.msra.mxu0 %v5466
        %7948 = vmatprep.subr.bf16.mxu0 %v5475
        %7949 = vmatpush1.bf16.msra.mxu0 %v5474
        %7950 = vmatprep.subr.bf16.mxu0 %v5483
        %7951 = vmatpush1.bf16.msra.mxu0 %v5482
        %7952 = vmatprep.subr.bf16.mxu0 %v5491
        %7953 = vmatpush1.bf16.msra.mxu0 %v5490
        %7954 = vmatprep.subr.bf16.mxu0 %v5499
        %7955 = vmatpush1.bf16.msra.mxu0 %v5498
        %7956 = vmatprep.subr.bf16.mxu0 %v5507
        %7957 = vmatpush1.bf16.msra.mxu0 %v5506
        %7958 = vmatprep.subr.bf16.mxu0 %v5515
        %7959 = vmatpush1.bf16.msra.mxu0 %v5514
        %7960 = vmatprep.subr.bf16.mxu0 %v5523
        %7961 = vmatpush1.bf16.msra.mxu0 %v5522
        %7962 = vmatprep.subr.bf16.mxu0 %v5531
        %7963 = vmatpush1.bf16.msra.mxu0 %v5530
        %7964 = vmatprep.subr.bf16.mxu0 %v5539
        %7965 = vmatpush1.bf16.msra.mxu0 %v5538
        %7966 = vmatprep.subr.bf16.mxu0 %v5547
        %7967 = vmatpush1.bf16.msra.mxu0 %v5546
        %7968 = vmatprep.subr.bf16.mxu0 %v5555
        %7969 = vmatpush1.bf16.msra.mxu0 %v5554
        %7970 = vmatprep.mubr.bf16.mxu0 %v1569
        %7971 = vmatmul.mubr.bf16.gmra.mrb[0].mxu0 %v1568
        %v7972 = vpop.f32.mrb[0].mxu0
        %v7973 = vadd.f32 %v7932, %v7972
        %v7974 = vpop.f32.mrb[0].mxu0
        %v7975 = vadd.f32 %v7934, %v7974
        %v7976 = vpop.f32.mrb[0].mxu0
        %v7977 = vpop.f32.mrb[0].mxu0
        %7978 = vdwg.mxu0
        %7979 = vmatprep.subr.bf16.mxu0 %v5563
        %7980 = vmatpush1.bf16.msra.mxu0 %v5562
        %7981 = vmatprep.subr.bf16.mxu0 %v5571
        %7982 = vmatpush1.bf16.msra.mxu0 %v5570
        %7983 = vmatprep.subr.bf16.mxu0 %v5579
        %7984 = vmatpush1.bf16.msra.mxu0 %v5578
        %7985 = vmatprep.subr.bf16.mxu0 %v5587
        %7986 = vmatpush1.bf16.msra.mxu0 %v5586
        %7987 = vmatprep.subr.bf16.mxu0 %v5595
        %7988 = vmatpush1.bf16.msra.mxu0 %v5594
        %7989 = vmatprep.subr.bf16.mxu0 %v5603
        %7990 = vmatpush1.bf16.msra.mxu0 %v5602
        %7991 = vmatprep.subr.bf16.mxu0 %v5611
        %7992 = vmatpush1.bf16.msra.mxu0 %v5610
        %7993 = vmatprep.subr.bf16.mxu0 %v5619
        %7994 = vmatpush1.bf16.msra.mxu0 %v5618
        %7995 = vmatprep.subr.bf16.mxu0 %v5627
        %7996 = vmatpush1.bf16.msra.mxu0 %v5626
        %7997 = vmatprep.subr.bf16.mxu0 %v5635
        %7998 = vmatpush1.bf16.msra.mxu0 %v5634
        %7999 = vmatprep.subr.bf16.mxu0 %v5643
        %8000 = vmatpush1.bf16.msra.mxu0 %v5642
        %8001 = vmatprep.subr.bf16.mxu0 %v5651
        %8002 = vmatpush1.bf16.msra.mxu0 %v5650
        %8003 = vmatprep.subr.bf16.mxu0 %v5659
        %8004 = vmatpush1.bf16.msra.mxu0 %v5658
        %8005 = vmatprep.subr.bf16.mxu0 %v5667
        %8006 = vmatpush1.bf16.msra.mxu0 %v5666
        %8007 = vmatprep.subr.bf16.mxu0 %v5675
        %8008 = vmatpush1.bf16.msra.mxu0 %v5674
        %8009 = vmatprep.subr.bf16.mxu0 %v5683
        %8010 = vmatpush1.bf16.msra.mxu0 %v5682
        %8011 = vmatprep.mubr.bf16.mxu0 %v1571
        %8012 = vmatmul.mubr.bf16.gmra.mrb[0].mxu0 %v1570
        %v8013 = vpop.f32.mrb[0].mxu0
        %v8014 = vadd.f32 %v7973, %v8013
        %v8015 = vpop.f32.mrb[0].mxu0
        %v8016 = vadd.f32 %v7975, %v8015
        %v8017 = vpop.f32.mrb[0].mxu0
        %v8018 = vpop.f32.mrb[0].mxu0
        %8019 = vdwg.mxu0
        %v8020 = vmax.f32 %v7030, 0.0
        %v8021 = vmax.f32 %v7032, 0.0
        %v8022 = vmax.f32 %v7358, 0.0
        %v8023 = vmax.f32 %v7360, 0.0
        %v8024 = vmax.f32 %v7686, 0.0
        %v8025 = vmax.f32 %v7688, 0.0
        %v8026 = vmax.f32 %v8014, 0.0
        %v8027 = vmax.f32 %v8016, 0.0
        %v8028 = vpack.c.bf16 %v8020, %v8020
        %v8029 = vpack.c.bf16 %v8021, %v8021
        %v8030 = vpack.c.bf16 %v8022, %v8022
        %v8031 = vpack.c.bf16 %v8023, %v8023
        %v8032 = vpack.c.bf16 %v8024, %v8024
        %v8033 = vpack.c.bf16 %v8025, %v8025
        %v8034 = vpack.c.bf16 %v8026, %v8026
        %v8035 = vpack.c.bf16 %v8027, %v8027
        %v8036 = vld [vmem:[#allocation8] sm:$0xff]
        %v8037 = vld [vmem:[#allocation8 + $0x8] sm:$0xff]
        %v8038 = vld [vmem:[#allocation8 + $0x10] sm:$0xff]
        %v8039 = vld [vmem:[#allocation8 + $0x18] sm:$0xff]
        %v8040 = vld [vmem:[#allocation8 + $0x20] sm:$0xff]
        %v8041 = vld [vmem:[#allocation8 + $0x28] sm:$0xff]
        %v8042 = vld [vmem:[#allocation8 + $0x30] sm:$0xff]
        %v8043 = vld [vmem:[#allocation8 + $0x38] sm:$0xff]
        %v8044 = vld [vmem:[#allocation8 + $0x40] sm:$0xff]
        %v8045 = vld [vmem:[#allocation8 + $0x48] sm:$0xff]
        %v8046 = vld [vmem:[#allocation8 + $0x50] sm:$0xff]
        %v8047 = vld [vmem:[#allocation8 + $0x58] sm:$0xff]
        %v8048 = vld [vmem:[#allocation8 + $0x60] sm:$0xff]
        %v8049 = vld [vmem:[#allocation8 + $0x68] sm:$0xff]
        %v8050 = vld [vmem:[#allocation8 + $0x70] sm:$0xff]
        %v8051 = vld [vmem:[#allocation8 + $0x78] sm:$0xff]
        %v8052 = vld [vmem:[#allocation8 + $0x80] sm:$0xff]
        %v8053 = vld [vmem:[#allocation8 + $0x88] sm:$0xff]
        %v8054 = vld [vmem:[#allocation8 + $0x90] sm:$0xff]
        %v8055 = vld [vmem:[#allocation8 + $0x98] sm:$0xff]
        %v8056 = vld [vmem:[#allocation8 + $0xa0] sm:$0xff]
        %v8057 = vld [vmem:[#allocation8 + $0xa8] sm:$0xff]
        %v8058 = vld [vmem:[#allocation8 + $0xb0] sm:$0xff]
        %v8059 = vld [vmem:[#allocation8 + $0xb8] sm:$0xff]
        %v8060 = vld [vmem:[#allocation8 + $0xc0] sm:$0xff]
        %v8061 = vld [vmem:[#allocation8 + $0xc8] sm:$0xff]
        %v8062 = vld [vmem:[#allocation8 + $0xd0] sm:$0xff]
        %v8063 = vld [vmem:[#allocation8 + $0xd8] sm:$0xff]
        %v8064 = vld [vmem:[#allocation8 + $0xe0] sm:$0xff]
        %v8065 = vld [vmem:[#allocation8 + $0xe8] sm:$0xff]
        %v8066 = vld [vmem:[#allocation8 + $0xf0] sm:$0xff]
        %v8067 = vld [vmem:[#allocation8 + $0xf8] sm:$0xff]
        %v8068 = vld [vmem:[#allocation8 + $0x100] sm:$0xff]
        %v8069 = vld [vmem:[#allocation8 + $0x108] sm:$0xff]
        %v8070 = vld [vmem:[#allocation8 + $0x110] sm:$0xff]
        %v8071 = vld [vmem:[#allocation8 + $0x118] sm:$0xff]
        %v8072 = vld [vmem:[#allocation8 + $0x120] sm:$0xff]
        %v8073 = vld [vmem:[#allocation8 + $0x128] sm:$0xff]
        %v8074 = vld [vmem:[#allocation8 + $0x130] sm:$0xff]
        %v8075 = vld [vmem:[#allocation8 + $0x138] sm:$0xff]
        %v8076 = vld [vmem:[#allocation8 + $0x140] sm:$0xff]
        %v8077 = vld [vmem:[#allocation8 + $0x148] sm:$0xff]
        %v8078 = vld [vmem:[#allocation8 + $0x150] sm:$0xff]
        %v8079 = vld [vmem:[#allocation8 + $0x158] sm:$0xff]
        %v8080 = vld [vmem:[#allocation8 + $0x160] sm:$0xff]
        %v8081 = vld [vmem:[#allocation8 + $0x168] sm:$0xff]
        %v8082 = vld [vmem:[#allocation8 + $0x170] sm:$0xff]
        %v8083 = vld [vmem:[#allocation8 + $0x178] sm:$0xff]
        %v8084 = vld [vmem:[#allocation8 + $0x180] sm:$0xff]
        %v8085 = vld [vmem:[#allocation8 + $0x188] sm:$0xff]
        %v8086 = vld [vmem:[#allocation8 + $0x190] sm:$0xff]
        %v8087 = vld [vmem:[#allocation8 + $0x198] sm:$0xff]
        %v8088 = vld [vmem:[#allocation8 + $0x1a0] sm:$0xff]
        %v8089 = vld [vmem:[#allocation8 + $0x1a8] sm:$0xff]
        %v8090 = vld [vmem:[#allocation8 + $0x1b0] sm:$0xff]
        %v8091 = vld [vmem:[#allocation8 + $0x1b8] sm:$0xff]
        %v8092 = vld [vmem:[#allocation8 + $0x1c0] sm:$0xff]
        %v8093 = vld [vmem:[#allocation8 + $0x1c8] sm:$0xff]
        %v8094 = vld [vmem:[#allocation8 + $0x1d0] sm:$0xff]
        %v8095 = vld [vmem:[#allocation8 + $0x1d8] sm:$0xff]
        %v8096 = vld [vmem:[#allocation8 + $0x1e0] sm:$0xff]
        %v8097 = vld [vmem:[#allocation8 + $0x1e8] sm:$0xff]
        %v8098 = vld [vmem:[#allocation8 + $0x1f0] sm:$0xff]
        %v8099 = vld [vmem:[#allocation8 + $0x1f8] sm:$0xff]
        %v8100 = vld [vmem:[#allocation8 + $0x200] sm:$0xff]
        %v8101 = vld [vmem:[#allocation8 + $0x208] sm:$0xff]
        %v8102 = vld [vmem:[#allocation8 + $0x210] sm:$0xff]
        %v8103 = vld [vmem:[#allocation8 + $0x218] sm:$0xff]
        %v8104 = vld [vmem:[#allocation8 + $0x220] sm:$0xff]
        %v8105 = vld [vmem:[#allocation8 + $0x228] sm:$0xff]
        %v8106 = vld [vmem:[#allocation8 + $0x230] sm:$0xff]
        %v8107 = vld [vmem:[#allocation8 + $0x238] sm:$0xff]
        %v8108 = vld [vmem:[#allocation8 + $0x240] sm:$0xff]
        %v8109 = vld [vmem:[#allocation8 + $0x248] sm:$0xff]
        %v8110 = vld [vmem:[#allocation8 + $0x250] sm:$0xff]
        %v8111 = vld [vmem:[#allocation8 + $0x258] sm:$0xff]
        %v8112 = vld [vmem:[#allocation8 + $0x260] sm:$0xff]
        %v8113 = vld [vmem:[#allocation8 + $0x268] sm:$0xff]
        %v8114 = vld [vmem:[#allocation8 + $0x270] sm:$0xff]
        %v8115 = vld [vmem:[#allocation8 + $0x278] sm:$0xff]
        %v8116 = vld [vmem:[#allocation8 + $0x280] sm:$0xff]
        %v8117 = vld [vmem:[#allocation8 + $0x288] sm:$0xff]
        %v8118 = vld [vmem:[#allocation8 + $0x290] sm:$0xff]
        %v8119 = vld [vmem:[#allocation8 + $0x298] sm:$0xff]
        %v8120 = vld [vmem:[#allocation8 + $0x2a0] sm:$0xff]
        %v8121 = vld [vmem:[#allocation8 + $0x2a8] sm:$0xff]
        %v8122 = vld [vmem:[#allocation8 + $0x2b0] sm:$0xff]
        %v8123 = vld [vmem:[#allocation8 + $0x2b8] sm:$0xff]
        %v8124 = vld [vmem:[#allocation8 + $0x2c0] sm:$0xff]
        %v8125 = vld [vmem:[#allocation8 + $0x2c8] sm:$0xff]
        %v8126 = vld [vmem:[#allocation8 + $0x2d0] sm:$0xff]
        %v8127 = vld [vmem:[#allocation8 + $0x2d8] sm:$0xff]
        %v8128 = vld [vmem:[#allocation8 + $0x2e0] sm:$0xff]
        %v8129 = vld [vmem:[#allocation8 + $0x2e8] sm:$0xff]
        %v8130 = vld [vmem:[#allocation8 + $0x2f0] sm:$0xff]
        %v8131 = vld [vmem:[#allocation8 + $0x2f8] sm:$0xff]
        %v8132 = vld [vmem:[#allocation8 + $0x300] sm:$0xff]
        %v8133 = vld [vmem:[#allocation8 + $0x308] sm:$0xff]
        %v8134 = vld [vmem:[#allocation8 + $0x310] sm:$0xff]
        %v8135 = vld [vmem:[#allocation8 + $0x318] sm:$0xff]
        %v8136 = vld [vmem:[#allocation8 + $0x320] sm:$0xff]
        %v8137 = vld [vmem:[#allocation8 + $0x328] sm:$0xff]
        %v8138 = vld [vmem:[#allocation8 + $0x330] sm:$0xff]
        %v8139 = vld [vmem:[#allocation8 + $0x338] sm:$0xff]
        %v8140 = vld [vmem:[#allocation8 + $0x340] sm:$0xff]
        %v8141 = vld [vmem:[#allocation8 + $0x348] sm:$0xff]
        %v8142 = vld [vmem:[#allocation8 + $0x350] sm:$0xff]
        %v8143 = vld [vmem:[#allocation8 + $0x358] sm:$0xff]
        %v8144 = vld [vmem:[#allocation8 + $0x360] sm:$0xff]
        %v8145 = vld [vmem:[#allocation8 + $0x368] sm:$0xff]
        %v8146 = vld [vmem:[#allocation8 + $0x370] sm:$0xff]
        %v8147 = vld [vmem:[#allocation8 + $0x378] sm:$0xff]
        %v8148 = vld [vmem:[#allocation8 + $0x380] sm:$0xff]
        %v8149 = vld [vmem:[#allocation8 + $0x388] sm:$0xff]
        %v8150 = vld [vmem:[#allocation8 + $0x390] sm:$0xff]
        %v8151 = vld [vmem:[#allocation8 + $0x398] sm:$0xff]
        %v8152 = vld [vmem:[#allocation8 + $0x3a0] sm:$0xff]
        %v8153 = vld [vmem:[#allocation8 + $0x3a8] sm:$0xff]
        %v8154 = vld [vmem:[#allocation8 + $0x3b0] sm:$0xff]
        %v8155 = vld [vmem:[#allocation8 + $0x3b8] sm:$0xff]
        %v8156 = vld [vmem:[#allocation8 + $0x3c0] sm:$0xff]
        %v8157 = vld [vmem:[#allocation8 + $0x3c8] sm:$0xff]
        %v8158 = vld [vmem:[#allocation8 + $0x3d0] sm:$0xff]
        %v8159 = vld [vmem:[#allocation8 + $0x3d8] sm:$0xff]
        %v8160 = vld [vmem:[#allocation8 + $0x3e0] sm:$0xff]
        %v8161 = vld [vmem:[#allocation8 + $0x3e8] sm:$0xff]
        %v8162 = vld [vmem:[#allocation8 + $0x3f0] sm:$0xff]
        %v8163 = vld [vmem:[#allocation8 + $0x3f8] sm:$0xff]
        %v8164 = vld [vmem:[#allocation8 + $0x400] sm:$0xff]
        %v8165 = vld [vmem:[#allocation8 + $0x408] sm:$0xff]
        %v8166 = vld [vmem:[#allocation8 + $0x410] sm:$0xff]
        %v8167 = vld [vmem:[#allocation8 + $0x418] sm:$0xff]
        %v8168 = vld [vmem:[#allocation8 + $0x420] sm:$0xff]
        %v8169 = vld [vmem:[#allocation8 + $0x428] sm:$0xff]
        %v8170 = vld [vmem:[#allocation8 + $0x430] sm:$0xff]
        %v8171 = vld [vmem:[#allocation8 + $0x438] sm:$0xff]
        %v8172 = vld [vmem:[#allocation8 + $0x440] sm:$0xff]
        %v8173 = vld [vmem:[#allocation8 + $0x448] sm:$0xff]
        %v8174 = vld [vmem:[#allocation8 + $0x450] sm:$0xff]
        %v8175 = vld [vmem:[#allocation8 + $0x458] sm:$0xff]
        %v8176 = vld [vmem:[#allocation8 + $0x460] sm:$0xff]
        %v8177 = vld [vmem:[#allocation8 + $0x468] sm:$0xff]
        %v8178 = vld [vmem:[#allocation8 + $0x470] sm:$0xff]
        %v8179 = vld [vmem:[#allocation8 + $0x478] sm:$0xff]
        %v8180 = vld [vmem:[#allocation8 + $0x480] sm:$0xff]
        %v8181 = vld [vmem:[#allocation8 + $0x488] sm:$0xff]
        %v8182 = vld [vmem:[#allocation8 + $0x490] sm:$0xff]
        %v8183 = vld [vmem:[#allocation8 + $0x498] sm:$0xff]
        %v8184 = vld [vmem:[#allocation8 + $0x4a0] sm:$0xff]
        %v8185 = vld [vmem:[#allocation8 + $0x4a8] sm:$0xff]
        %v8186 = vld [vmem:[#allocation8 + $0x4b0] sm:$0xff]
        %v8187 = vld [vmem:[#allocation8 + $0x4b8] sm:$0xff]
        %v8188 = vld [vmem:[#allocation8 + $0x4c0] sm:$0xff]
        %v8189 = vld [vmem:[#allocation8 + $0x4c8] sm:$0xff]
        %v8190 = vld [vmem:[#allocation8 + $0x4d0] sm:$0xff]
        %v8191 = vld [vmem:[#allocation8 + $0x4d8] sm:$0xff]
        %v8192 = vld [vmem:[#allocation8 + $0x4e0] sm:$0xff]
        %v8193 = vld [vmem:[#allocation8 + $0x4e8] sm:$0xff]
        %v8194 = vld [vmem:[#allocation8 + $0x4f0] sm:$0xff]
        %v8195 = vld [vmem:[#allocation8 + $0x4f8] sm:$0xff]
        %v8196 = vld [vmem:[#allocation8 + $0x500] sm:$0xff]
        %v8197 = vld [vmem:[#allocation8 + $0x508] sm:$0xff]
        %v8198 = vld [vmem:[#allocation8 + $0x510] sm:$0xff]
        %v8199 = vld [vmem:[#allocation8 + $0x518] sm:$0xff]
        %v8200 = vld [vmem:[#allocation8 + $0x520] sm:$0xff]
        %v8201 = vld [vmem:[#allocation8 + $0x528] sm:$0xff]
        %v8202 = vld [vmem:[#allocation8 + $0x530] sm:$0xff]
        %v8203 = vld [vmem:[#allocation8 + $0x538] sm:$0xff]
        %v8204 = vld [vmem:[#allocation8 + $0x540] sm:$0xff]
        %v8205 = vld [vmem:[#allocation8 + $0x548] sm:$0xff]
        %v8206 = vld [vmem:[#allocation8 + $0x550] sm:$0xff]
        %v8207 = vld [vmem:[#allocation8 + $0x558] sm:$0xff]
        %v8208 = vld [vmem:[#allocation8 + $0x560] sm:$0xff]
        %v8209 = vld [vmem:[#allocation8 + $0x568] sm:$0xff]
        %v8210 = vld [vmem:[#allocation8 + $0x570] sm:$0xff]
        %v8211 = vld [vmem:[#allocation8 + $0x578] sm:$0xff]
        %v8212 = vld [vmem:[#allocation8 + $0x580] sm:$0xff]
        %v8213 = vld [vmem:[#allocation8 + $0x588] sm:$0xff]
        %v8214 = vld [vmem:[#allocation8 + $0x590] sm:$0xff]
        %v8215 = vld [vmem:[#allocation8 + $0x598] sm:$0xff]
        %v8216 = vld [vmem:[#allocation8 + $0x5a0] sm:$0xff]
        %v8217 = vld [vmem:[#allocation8 + $0x5a8] sm:$0xff]
        %v8218 = vld [vmem:[#allocation8 + $0x5b0] sm:$0xff]
        %v8219 = vld [vmem:[#allocation8 + $0x5b8] sm:$0xff]
        %v8220 = vld [vmem:[#allocation8 + $0x5c0] sm:$0xff]
        %v8221 = vld [vmem:[#allocation8 + $0x5c8] sm:$0xff]
        %v8222 = vld [vmem:[#allocation8 + $0x5d0] sm:$0xff]
        %v8223 = vld [vmem:[#allocation8 + $0x5d8] sm:$0xff]
        %v8224 = vld [vmem:[#allocation8 + $0x5e0] sm:$0xff]
        %v8225 = vld [vmem:[#allocation8 + $0x5e8] sm:$0xff]
        %v8226 = vld [vmem:[#allocation8 + $0x5f0] sm:$0xff]
        %v8227 = vld [vmem:[#allocation8 + $0x5f8] sm:$0xff]
        %v8228 = vld [vmem:[#allocation8 + $0x600] sm:$0xff]
        %v8229 = vld [vmem:[#allocation8 + $0x608] sm:$0xff]
        %v8230 = vld [vmem:[#allocation8 + $0x610] sm:$0xff]
        %v8231 = vld [vmem:[#allocation8 + $0x618] sm:$0xff]
        %v8232 = vld [vmem:[#allocation8 + $0x620] sm:$0xff]
        %v8233 = vld [vmem:[#allocation8 + $0x628] sm:$0xff]
        %v8234 = vld [vmem:[#allocation8 + $0x630] sm:$0xff]
        %v8235 = vld [vmem:[#allocation8 + $0x638] sm:$0xff]
        %v8236 = vld [vmem:[#allocation8 + $0x640] sm:$0xff]
        %v8237 = vld [vmem:[#allocation8 + $0x648] sm:$0xff]
        %v8238 = vld [vmem:[#allocation8 + $0x650] sm:$0xff]
        %v8239 = vld [vmem:[#allocation8 + $0x658] sm:$0xff]
        %v8240 = vld [vmem:[#allocation8 + $0x660] sm:$0xff]
        %v8241 = vld [vmem:[#allocation8 + $0x668] sm:$0xff]
        %v8242 = vld [vmem:[#allocation8 + $0x670] sm:$0xff]
        %v8243 = vld [vmem:[#allocation8 + $0x678] sm:$0xff]
        %v8244 = vld [vmem:[#allocation8 + $0x680] sm:$0xff]
        %v8245 = vld [vmem:[#allocation8 + $0x688] sm:$0xff]
        %v8246 = vld [vmem:[#allocation8 + $0x690] sm:$0xff]
        %v8247 = vld [vmem:[#allocation8 + $0x698] sm:$0xff]
        %v8248 = vld [vmem:[#allocation8 + $0x6a0] sm:$0xff]
        %v8249 = vld [vmem:[#allocation8 + $0x6a8] sm:$0xff]
        %v8250 = vld [vmem:[#allocation8 + $0x6b0] sm:$0xff]
        %v8251 = vld [vmem:[#allocation8 + $0x6b8] sm:$0xff]
        %v8252 = vld [vmem:[#allocation8 + $0x6c0] sm:$0xff]
        %v8253 = vld [vmem:[#allocation8 + $0x6c8] sm:$0xff]
        %v8254 = vld [vmem:[#allocation8 + $0x6d0] sm:$0xff]
        %v8255 = vld [vmem:[#allocation8 + $0x6d8] sm:$0xff]
        %v8256 = vld [vmem:[#allocation8 + $0x6e0] sm:$0xff]
        %v8257 = vld [vmem:[#allocation8 + $0x6e8] sm:$0xff]
        %v8258 = vld [vmem:[#allocation8 + $0x6f0] sm:$0xff]
        %v8259 = vld [vmem:[#allocation8 + $0x6f8] sm:$0xff]
        %v8260 = vld [vmem:[#allocation8 + $0x700] sm:$0xff]
        %v8261 = vld [vmem:[#allocation8 + $0x708] sm:$0xff]
        %v8262 = vld [vmem:[#allocation8 + $0x710] sm:$0xff]
        %v8263 = vld [vmem:[#allocation8 + $0x718] sm:$0xff]
        %v8264 = vld [vmem:[#allocation8 + $0x720] sm:$0xff]
        %v8265 = vld [vmem:[#allocation8 + $0x728] sm:$0xff]
        %v8266 = vld [vmem:[#allocation8 + $0x730] sm:$0xff]
        %v8267 = vld [vmem:[#allocation8 + $0x738] sm:$0xff]
        %v8268 = vld [vmem:[#allocation8 + $0x740] sm:$0xff]
        %v8269 = vld [vmem:[#allocation8 + $0x748] sm:$0xff]
        %v8270 = vld [vmem:[#allocation8 + $0x750] sm:$0xff]
        %v8271 = vld [vmem:[#allocation8 + $0x758] sm:$0xff]
        %v8272 = vld [vmem:[#allocation8 + $0x760] sm:$0xff]
        %v8273 = vld [vmem:[#allocation8 + $0x768] sm:$0xff]
        %v8274 = vld [vmem:[#allocation8 + $0x770] sm:$0xff]
        %v8275 = vld [vmem:[#allocation8 + $0x778] sm:$0xff]
        %v8276 = vld [vmem:[#allocation8 + $0x780] sm:$0xff]
        %v8277 = vld [vmem:[#allocation8 + $0x788] sm:$0xff]
        %v8278 = vld [vmem:[#allocation8 + $0x790] sm:$0xff]
        %v8279 = vld [vmem:[#allocation8 + $0x798] sm:$0xff]
        %v8280 = vld [vmem:[#allocation8 + $0x7a0] sm:$0xff]
        %v8281 = vld [vmem:[#allocation8 + $0x7a8] sm:$0xff]
        %v8282 = vld [vmem:[#allocation8 + $0x7b0] sm:$0xff]
        %v8283 = vld [vmem:[#allocation8 + $0x7b8] sm:$0xff]
        %v8284 = vld [vmem:[#allocation8 + $0x7c0] sm:$0xff]
        %v8285 = vld [vmem:[#allocation8 + $0x7c8] sm:$0xff]
        %v8286 = vld [vmem:[#allocation8 + $0x7d0] sm:$0xff]
        %v8287 = vld [vmem:[#allocation8 + $0x7d8] sm:$0xff]
        %v8288 = vld [vmem:[#allocation8 + $0x7e0] sm:$0xff]
        %v8289 = vld [vmem:[#allocation8 + $0x7e8] sm:$0xff]
        %v8290 = vld [vmem:[#allocation8 + $0x7f0] sm:$0xff]
        %v8291 = vld [vmem:[#allocation8 + $0x7f8] sm:$0xff]
        %v8292 = vld [vmem:[#allocation10] sm:$0xf]
        %v8294 = vlaneseq
        %v8295 = vshrl.u32 %v8294, 7
        %v8296 = vsub.s32 0, %v8295
        %v8297 = vrot.slane %v8292, %v8296
        %v8298 = vlaneseq
        %v8299 = vshrl.u32 %v8298, 7
        %v8300 = vsub.s32 1, %v8299
        %v8301 = vrot.slane %v8292, %v8300
        %v8302 = vlaneseq
        %v8303 = vshrl.u32 %v8302, 7
        %v8304 = vsub.s32 2, %v8303
        %v8305 = vrot.slane %v8292, %v8304
        %v8306 = vlaneseq
        %v8307 = vshrl.u32 %v8306, 7
        %v8308 = vsub.s32 3, %v8307
        %v8309 = vrot.slane %v8292, %v8308
        %v8570 = vunpack.c.l.b16 %v8036
        %v8571 = vunpack.c.h.b16 %v8036
        %v8572 = vunpack.c.l.b16 %v8037
        %v8573 = vunpack.c.h.b16 %v8037
        %v8574 = vunpack.c.l.b16 %v8038
        %v8575 = vunpack.c.h.b16 %v8038
        %v8576 = vunpack.c.l.b16 %v8039
        %v8577 = vunpack.c.h.b16 %v8039
        %v8578 = vunpack.c.l.b16 %v8040
        %v8579 = vunpack.c.h.b16 %v8040
        %v8580 = vunpack.c.l.b16 %v8041
        %v8581 = vunpack.c.h.b16 %v8041
        %v8582 = vunpack.c.l.b16 %v8042
        %v8583 = vunpack.c.h.b16 %v8042
        %v8584 = vunpack.c.l.b16 %v8043
        %v8585 = vunpack.c.h.b16 %v8043
        %v8586 = vunpack.c.l.b16 %v8044
        %v8587 = vunpack.c.h.b16 %v8044
        %v8588 = vunpack.c.l.b16 %v8045
        %v8589 = vunpack.c.h.b16 %v8045
        %v8590 = vunpack.c.l.b16 %v8046
        %v8591 = vunpack.c.h.b16 %v8046
        %v8592 = vunpack.c.l.b16 %v8047
        %v8593 = vunpack.c.h.b16 %v8047
        %v8594 = vunpack.c.l.b16 %v8048
        %v8595 = vunpack.c.h.b16 %v8048
        %v8596 = vunpack.c.l.b16 %v8049
        %v8597 = vunpack.c.h.b16 %v8049
        %v8598 = vunpack.c.l.b16 %v8050
        %v8599 = vunpack.c.h.b16 %v8050
        %v8600 = vunpack.c.l.b16 %v8051
        %v8601 = vunpack.c.h.b16 %v8051
        %v8602 = vunpack.c.l.b16 %v8052
        %v8603 = vunpack.c.h.b16 %v8052
        %v8604 = vunpack.c.l.b16 %v8053
        %v8605 = vunpack.c.h.b16 %v8053
        %v8606 = vunpack.c.l.b16 %v8054
        %v8607 = vunpack.c.h.b16 %v8054
        %v8608 = vunpack.c.l.b16 %v8055
        %v8609 = vunpack.c.h.b16 %v8055
        %v8610 = vunpack.c.l.b16 %v8056
        %v8611 = vunpack.c.h.b16 %v8056
        %v8612 = vunpack.c.l.b16 %v8057
        %v8613 = vunpack.c.h.b16 %v8057
        %v8614 = vunpack.c.l.b16 %v8058
        %v8615 = vunpack.c.h.b16 %v8058
        %v8616 = vunpack.c.l.b16 %v8059
        %v8617 = vunpack.c.h.b16 %v8059
        %v8618 = vunpack.c.l.b16 %v8060
        %v8619 = vunpack.c.h.b16 %v8060
        %v8620 = vunpack.c.l.b16 %v8061
        %v8621 = vunpack.c.h.b16 %v8061
        %v8622 = vunpack.c.l.b16 %v8062
        %v8623 = vunpack.c.h.b16 %v8062
        %v8624 = vunpack.c.l.b16 %v8063
        %v8625 = vunpack.c.h.b16 %v8063
        %v8626 = vunpack.c.l.b16 %v8064
        %v8627 = vunpack.c.h.b16 %v8064
        %v8628 = vunpack.c.l.b16 %v8065
        %v8629 = vunpack.c.h.b16 %v8065
        %v8630 = vunpack.c.l.b16 %v8066
        %v8631 = vunpack.c.h.b16 %v8066
        %v8632 = vunpack.c.l.b16 %v8067
        %v8633 = vunpack.c.h.b16 %v8067
        %v8634 = vunpack.c.l.b16 %v8068
        %v8635 = vunpack.c.h.b16 %v8068
        %v8636 = vunpack.c.l.b16 %v8069
        %v8637 = vunpack.c.h.b16 %v8069
        %v8638 = vunpack.c.l.b16 %v8070
        %v8639 = vunpack.c.h.b16 %v8070
        %v8640 = vunpack.c.l.b16 %v8071
        %v8641 = vunpack.c.h.b16 %v8071
        %v8642 = vunpack.c.l.b16 %v8072
        %v8643 = vunpack.c.h.b16 %v8072
        %v8644 = vunpack.c.l.b16 %v8073
        %v8645 = vunpack.c.h.b16 %v8073
        %v8646 = vunpack.c.l.b16 %v8074
        %v8647 = vunpack.c.h.b16 %v8074
        %v8648 = vunpack.c.l.b16 %v8075
        %v8649 = vunpack.c.h.b16 %v8075
        %v8650 = vunpack.c.l.b16 %v8076
        %v8651 = vunpack.c.h.b16 %v8076
        %v8652 = vunpack.c.l.b16 %v8077
        %v8653 = vunpack.c.h.b16 %v8077
        %v8654 = vunpack.c.l.b16 %v8078
        %v8655 = vunpack.c.h.b16 %v8078
        %v8656 = vunpack.c.l.b16 %v8079
        %v8657 = vunpack.c.h.b16 %v8079
        %v8658 = vunpack.c.l.b16 %v8080
        %v8659 = vunpack.c.h.b16 %v8080
        %v8660 = vunpack.c.l.b16 %v8081
        %v8661 = vunpack.c.h.b16 %v8081
        %v8662 = vunpack.c.l.b16 %v8082
        %v8663 = vunpack.c.h.b16 %v8082
        %v8664 = vunpack.c.l.b16 %v8083
        %v8665 = vunpack.c.h.b16 %v8083
        %v8666 = vunpack.c.l.b16 %v8084
        %v8667 = vunpack.c.h.b16 %v8084
        %v8668 = vunpack.c.l.b16 %v8085
        %v8669 = vunpack.c.h.b16 %v8085
        %v8670 = vunpack.c.l.b16 %v8086
        %v8671 = vunpack.c.h.b16 %v8086
        %v8672 = vunpack.c.l.b16 %v8087
        %v8673 = vunpack.c.h.b16 %v8087
        %v8674 = vunpack.c.l.b16 %v8088
        %v8675 = vunpack.c.h.b16 %v8088
        %v8676 = vunpack.c.l.b16 %v8089
        %v8677 = vunpack.c.h.b16 %v8089
        %v8678 = vunpack.c.l.b16 %v8090
        %v8679 = vunpack.c.h.b16 %v8090
        %v8680 = vunpack.c.l.b16 %v8091
        %v8681 = vunpack.c.h.b16 %v8091
        %v8682 = vunpack.c.l.b16 %v8092
        %v8683 = vunpack.c.h.b16 %v8092
        %v8684 = vunpack.c.l.b16 %v8093
        %v8685 = vunpack.c.h.b16 %v8093
        %v8686 = vunpack.c.l.b16 %v8094
        %v8687 = vunpack.c.h.b16 %v8094
        %v8688 = vunpack.c.l.b16 %v8095
        %v8689 = vunpack.c.h.b16 %v8095
        %v8690 = vunpack.c.l.b16 %v8096
        %v8691 = vunpack.c.h.b16 %v8096
        %v8692 = vunpack.c.l.b16 %v8097
        %v8693 = vunpack.c.h.b16 %v8097
        %v8694 = vunpack.c.l.b16 %v8098
        %v8695 = vunpack.c.h.b16 %v8098
        %v8696 = vunpack.c.l.b16 %v8099
        %v8697 = vunpack.c.h.b16 %v8099
        %v8698 = vunpack.c.l.b16 %v8100
        %v8699 = vunpack.c.h.b16 %v8100
        %v8700 = vunpack.c.l.b16 %v8101
        %v8701 = vunpack.c.h.b16 %v8101
        %v8702 = vunpack.c.l.b16 %v8102
        %v8703 = vunpack.c.h.b16 %v8102
        %v8704 = vunpack.c.l.b16 %v8103
        %v8705 = vunpack.c.h.b16 %v8103
        %v8706 = vunpack.c.l.b16 %v8104
        %v8707 = vunpack.c.h.b16 %v8104
        %v8708 = vunpack.c.l.b16 %v8105
        %v8709 = vunpack.c.h.b16 %v8105
        %v8710 = vunpack.c.l.b16 %v8106
        %v8711 = vunpack.c.h.b16 %v8106
        %v8712 = vunpack.c.l.b16 %v8107
        %v8713 = vunpack.c.h.b16 %v8107
        %v8714 = vunpack.c.l.b16 %v8108
        %v8715 = vunpack.c.h.b16 %v8108
        %v8716 = vunpack.c.l.b16 %v8109
        %v8717 = vunpack.c.h.b16 %v8109
        %v8718 = vunpack.c.l.b16 %v8110
        %v8719 = vunpack.c.h.b16 %v8110
        %v8720 = vunpack.c.l.b16 %v8111
        %v8721 = vunpack.c.h.b16 %v8111
        %v8722 = vunpack.c.l.b16 %v8112
        %v8723 = vunpack.c.h.b16 %v8112
        %v8724 = vunpack.c.l.b16 %v8113
        %v8725 = vunpack.c.h.b16 %v8113
        %v8726 = vunpack.c.l.b16 %v8114
        %v8727 = vunpack.c.h.b16 %v8114
        %v8728 = vunpack.c.l.b16 %v8115
        %v8729 = vunpack.c.h.b16 %v8115
        %v8730 = vunpack.c.l.b16 %v8116
        %v8731 = vunpack.c.h.b16 %v8116
        %v8732 = vunpack.c.l.b16 %v8117
        %v8733 = vunpack.c.h.b16 %v8117
        %v8734 = vunpack.c.l.b16 %v8118
        %v8735 = vunpack.c.h.b16 %v8118
        %v8736 = vunpack.c.l.b16 %v8119
        %v8737 = vunpack.c.h.b16 %v8119
        %v8738 = vunpack.c.l.b16 %v8120
        %v8739 = vunpack.c.h.b16 %v8120
        %v8740 = vunpack.c.l.b16 %v8121
        %v8741 = vunpack.c.h.b16 %v8121
        %v8742 = vunpack.c.l.b16 %v8122
        %v8743 = vunpack.c.h.b16 %v8122
        %v8744 = vunpack.c.l.b16 %v8123
        %v8745 = vunpack.c.h.b16 %v8123
        %v8746 = vunpack.c.l.b16 %v8124
        %v8747 = vunpack.c.h.b16 %v8124
        %v8748 = vunpack.c.l.b16 %v8125
        %v8749 = vunpack.c.h.b16 %v8125
        %v8750 = vunpack.c.l.b16 %v8126
        %v8751 = vunpack.c.h.b16 %v8126
        %v8752 = vunpack.c.l.b16 %v8127
        %v8753 = vunpack.c.h.b16 %v8127
        %v8754 = vunpack.c.l.b16 %v8128
        %v8755 = vunpack.c.h.b16 %v8128
        %v8756 = vunpack.c.l.b16 %v8129
        %v8757 = vunpack.c.h.b16 %v8129
        %v8758 = vunpack.c.l.b16 %v8130
        %v8759 = vunpack.c.h.b16 %v8130
        %v8760 = vunpack.c.l.b16 %v8131
        %v8761 = vunpack.c.h.b16 %v8131
        %v8762 = vunpack.c.l.b16 %v8132
        %v8763 = vunpack.c.h.b16 %v8132
        %v8764 = vunpack.c.l.b16 %v8133
        %v8765 = vunpack.c.h.b16 %v8133
        %v8766 = vunpack.c.l.b16 %v8134
        %v8767 = vunpack.c.h.b16 %v8134
        %v8768 = vunpack.c.l.b16 %v8135
        %v8769 = vunpack.c.h.b16 %v8135
        %v8770 = vunpack.c.l.b16 %v8136
        %v8771 = vunpack.c.h.b16 %v8136
        %v8772 = vunpack.c.l.b16 %v8137
        %v8773 = vunpack.c.h.b16 %v8137
        %v8774 = vunpack.c.l.b16 %v8138
        %v8775 = vunpack.c.h.b16 %v8138
        %v8776 = vunpack.c.l.b16 %v8139
        %v8777 = vunpack.c.h.b16 %v8139
        %v8778 = vunpack.c.l.b16 %v8140
        %v8779 = vunpack.c.h.b16 %v8140
        %v8780 = vunpack.c.l.b16 %v8141
        %v8781 = vunpack.c.h.b16 %v8141
        %v8782 = vunpack.c.l.b16 %v8142
        %v8783 = vunpack.c.h.b16 %v8142
        %v8784 = vunpack.c.l.b16 %v8143
        %v8785 = vunpack.c.h.b16 %v8143
        %v8786 = vunpack.c.l.b16 %v8144
        %v8787 = vunpack.c.h.b16 %v8144
        %v8788 = vunpack.c.l.b16 %v8145
        %v8789 = vunpack.c.h.b16 %v8145
        %v8790 = vunpack.c.l.b16 %v8146
        %v8791 = vunpack.c.h.b16 %v8146
        %v8792 = vunpack.c.l.b16 %v8147
        %v8793 = vunpack.c.h.b16 %v8147
        %v8794 = vunpack.c.l.b16 %v8148
        %v8795 = vunpack.c.h.b16 %v8148
        %v8796 = vunpack.c.l.b16 %v8149
        %v8797 = vunpack.c.h.b16 %v8149
        %v8798 = vunpack.c.l.b16 %v8150
        %v8799 = vunpack.c.h.b16 %v8150
        %v8800 = vunpack.c.l.b16 %v8151
        %v8801 = vunpack.c.h.b16 %v8151
        %v8802 = vunpack.c.l.b16 %v8152
        %v8803 = vunpack.c.h.b16 %v8152
        %v8804 = vunpack.c.l.b16 %v8153
        %v8805 = vunpack.c.h.b16 %v8153
        %v8806 = vunpack.c.l.b16 %v8154
        %v8807 = vunpack.c.h.b16 %v8154
        %v8808 = vunpack.c.l.b16 %v8155
        %v8809 = vunpack.c.h.b16 %v8155
        %v8810 = vunpack.c.l.b16 %v8156
        %v8811 = vunpack.c.h.b16 %v8156
        %v8812 = vunpack.c.l.b16 %v8157
        %v8813 = vunpack.c.h.b16 %v8157
        %v8814 = vunpack.c.l.b16 %v8158
        %v8815 = vunpack.c.h.b16 %v8158
        %v8816 = vunpack.c.l.b16 %v8159
        %v8817 = vunpack.c.h.b16 %v8159
        %v8818 = vunpack.c.l.b16 %v8160
        %v8819 = vunpack.c.h.b16 %v8160
        %v8820 = vunpack.c.l.b16 %v8161
        %v8821 = vunpack.c.h.b16 %v8161
        %v8822 = vunpack.c.l.b16 %v8162
        %v8823 = vunpack.c.h.b16 %v8162
        %v8824 = vunpack.c.l.b16 %v8163
        %v8825 = vunpack.c.h.b16 %v8163
        %v8826 = vunpack.c.l.b16 %v8164
        %v8827 = vunpack.c.h.b16 %v8164
        %v8828 = vunpack.c.l.b16 %v8165
        %v8829 = vunpack.c.h.b16 %v8165
        %v8830 = vunpack.c.l.b16 %v8166
        %v8831 = vunpack.c.h.b16 %v8166
        %v8832 = vunpack.c.l.b16 %v8167
        %v8833 = vunpack.c.h.b16 %v8167
        %v8834 = vunpack.c.l.b16 %v8168
        %v8835 = vunpack.c.h.b16 %v8168
        %v8836 = vunpack.c.l.b16 %v8169
        %v8837 = vunpack.c.h.b16 %v8169
        %v8838 = vunpack.c.l.b16 %v8170
        %v8839 = vunpack.c.h.b16 %v8170
        %v8840 = vunpack.c.l.b16 %v8171
        %v8841 = vunpack.c.h.b16 %v8171
        %v8842 = vunpack.c.l.b16 %v8172
        %v8843 = vunpack.c.h.b16 %v8172
        %v8844 = vunpack.c.l.b16 %v8173
        %v8845 = vunpack.c.h.b16 %v8173
        %v8846 = vunpack.c.l.b16 %v8174
        %v8847 = vunpack.c.h.b16 %v8174
        %v8848 = vunpack.c.l.b16 %v8175
        %v8849 = vunpack.c.h.b16 %v8175
        %v8850 = vunpack.c.l.b16 %v8176
        %v8851 = vunpack.c.h.b16 %v8176
        %v8852 = vunpack.c.l.b16 %v8177
        %v8853 = vunpack.c.h.b16 %v8177
        %v8854 = vunpack.c.l.b16 %v8178
        %v8855 = vunpack.c.h.b16 %v8178
        %v8856 = vunpack.c.l.b16 %v8179
        %v8857 = vunpack.c.h.b16 %v8179
        %v8858 = vunpack.c.l.b16 %v8180
        %v8859 = vunpack.c.h.b16 %v8180
        %v8860 = vunpack.c.l.b16 %v8181
        %v8861 = vunpack.c.h.b16 %v8181
        %v8862 = vunpack.c.l.b16 %v8182
        %v8863 = vunpack.c.h.b16 %v8182
        %v8864 = vunpack.c.l.b16 %v8183
        %v8865 = vunpack.c.h.b16 %v8183
        %v8866 = vunpack.c.l.b16 %v8184
        %v8867 = vunpack.c.h.b16 %v8184
        %v8868 = vunpack.c.l.b16 %v8185
        %v8869 = vunpack.c.h.b16 %v8185
        %v8870 = vunpack.c.l.b16 %v8186
        %v8871 = vunpack.c.h.b16 %v8186
        %v8872 = vunpack.c.l.b16 %v8187
        %v8873 = vunpack.c.h.b16 %v8187
        %v8874 = vunpack.c.l.b16 %v8188
        %v8875 = vunpack.c.h.b16 %v8188
        %v8876 = vunpack.c.l.b16 %v8189
        %v8877 = vunpack.c.h.b16 %v8189
        %v8878 = vunpack.c.l.b16 %v8190
        %v8879 = vunpack.c.h.b16 %v8190
        %v8880 = vunpack.c.l.b16 %v8191
        %v8881 = vunpack.c.h.b16 %v8191
        %v8882 = vunpack.c.l.b16 %v8192
        %v8883 = vunpack.c.h.b16 %v8192
        %v8884 = vunpack.c.l.b16 %v8193
        %v8885 = vunpack.c.h.b16 %v8193
        %v8886 = vunpack.c.l.b16 %v8194
        %v8887 = vunpack.c.h.b16 %v8194
        %v8888 = vunpack.c.l.b16 %v8195
        %v8889 = vunpack.c.h.b16 %v8195
        %v8890 = vunpack.c.l.b16 %v8196
        %v8891 = vunpack.c.h.b16 %v8196
        %v8892 = vunpack.c.l.b16 %v8197
        %v8893 = vunpack.c.h.b16 %v8197
        %v8894 = vunpack.c.l.b16 %v8198
        %v8895 = vunpack.c.h.b16 %v8198
        %v8896 = vunpack.c.l.b16 %v8199
        %v8897 = vunpack.c.h.b16 %v8199
        %v8898 = vunpack.c.l.b16 %v8200
        %v8899 = vunpack.c.h.b16 %v8200
        %v8900 = vunpack.c.l.b16 %v8201
        %v8901 = vunpack.c.h.b16 %v8201
        %v8902 = vunpack.c.l.b16 %v8202
        %v8903 = vunpack.c.h.b16 %v8202
        %v8904 = vunpack.c.l.b16 %v8203
        %v8905 = vunpack.c.h.b16 %v8203
        %v8906 = vunpack.c.l.b16 %v8204
        %v8907 = vunpack.c.h.b16 %v8204
        %v8908 = vunpack.c.l.b16 %v8205
        %v8909 = vunpack.c.h.b16 %v8205
        %v8910 = vunpack.c.l.b16 %v8206
        %v8911 = vunpack.c.h.b16 %v8206
        %v8912 = vunpack.c.l.b16 %v8207
        %v8913 = vunpack.c.h.b16 %v8207
        %v8914 = vunpack.c.l.b16 %v8208
        %v8915 = vunpack.c.h.b16 %v8208
        %v8916 = vunpack.c.l.b16 %v8209
        %v8917 = vunpack.c.h.b16 %v8209
        %v8918 = vunpack.c.l.b16 %v8210
        %v8919 = vunpack.c.h.b16 %v8210
        %v8920 = vunpack.c.l.b16 %v8211
        %v8921 = vunpack.c.h.b16 %v8211
        %v8922 = vunpack.c.l.b16 %v8212
        %v8923 = vunpack.c.h.b16 %v8212
        %v8924 = vunpack.c.l.b16 %v8213
        %v8925 = vunpack.c.h.b16 %v8213
        %v8926 = vunpack.c.l.b16 %v8214
        %v8927 = vunpack.c.h.b16 %v8214
        %v8928 = vunpack.c.l.b16 %v8215
        %v8929 = vunpack.c.h.b16 %v8215
        %v8930 = vunpack.c.l.b16 %v8216
        %v8931 = vunpack.c.h.b16 %v8216
        %v8932 = vunpack.c.l.b16 %v8217
        %v8933 = vunpack.c.h.b16 %v8217
        %v8934 = vunpack.c.l.b16 %v8218
        %v8935 = vunpack.c.h.b16 %v8218
        %v8936 = vunpack.c.l.b16 %v8219
        %v8937 = vunpack.c.h.b16 %v8219
        %v8938 = vunpack.c.l.b16 %v8220
        %v8939 = vunpack.c.h.b16 %v8220
        %v8940 = vunpack.c.l.b16 %v8221
        %v8941 = vunpack.c.h.b16 %v8221
        %v8942 = vunpack.c.l.b16 %v8222
        %v8943 = vunpack.c.h.b16 %v8222
        %v8944 = vunpack.c.l.b16 %v8223
        %v8945 = vunpack.c.h.b16 %v8223
        %v8946 = vunpack.c.l.b16 %v8224
        %v8947 = vunpack.c.h.b16 %v8224
        %v8948 = vunpack.c.l.b16 %v8225
        %v8949 = vunpack.c.h.b16 %v8225
        %v8950 = vunpack.c.l.b16 %v8226
        %v8951 = vunpack.c.h.b16 %v8226
        %v8952 = vunpack.c.l.b16 %v8227
        %v8953 = vunpack.c.h.b16 %v8227
        %v8954 = vunpack.c.l.b16 %v8228
        %v8955 = vunpack.c.h.b16 %v8228
        %v8956 = vunpack.c.l.b16 %v8229
        %v8957 = vunpack.c.h.b16 %v8229
        %v8958 = vunpack.c.l.b16 %v8230
        %v8959 = vunpack.c.h.b16 %v8230
        %v8960 = vunpack.c.l.b16 %v8231
        %v8961 = vunpack.c.h.b16 %v8231
        %v8962 = vunpack.c.l.b16 %v8232
        %v8963 = vunpack.c.h.b16 %v8232
        %v8964 = vunpack.c.l.b16 %v8233
        %v8965 = vunpack.c.h.b16 %v8233
        %v8966 = vunpack.c.l.b16 %v8234
        %v8967 = vunpack.c.h.b16 %v8234
        %v8968 = vunpack.c.l.b16 %v8235
        %v8969 = vunpack.c.h.b16 %v8235
        %v8970 = vunpack.c.l.b16 %v8236
        %v8971 = vunpack.c.h.b16 %v8236
        %v8972 = vunpack.c.l.b16 %v8237
        %v8973 = vunpack.c.h.b16 %v8237
        %v8974 = vunpack.c.l.b16 %v8238
        %v8975 = vunpack.c.h.b16 %v8238
        %v8976 = vunpack.c.l.b16 %v8239
        %v8977 = vunpack.c.h.b16 %v8239
        %v8978 = vunpack.c.l.b16 %v8240
        %v8979 = vunpack.c.h.b16 %v8240
        %v8980 = vunpack.c.l.b16 %v8241
        %v8981 = vunpack.c.h.b16 %v8241
        %v8982 = vunpack.c.l.b16 %v8242
        %v8983 = vunpack.c.h.b16 %v8242
        %v8984 = vunpack.c.l.b16 %v8243
        %v8985 = vunpack.c.h.b16 %v8243
        %v8986 = vunpack.c.l.b16 %v8244
        %v8987 = vunpack.c.h.b16 %v8244
        %v8988 = vunpack.c.l.b16 %v8245
        %v8989 = vunpack.c.h.b16 %v8245
        %v8990 = vunpack.c.l.b16 %v8246
        %v8991 = vunpack.c.h.b16 %v8246
        %v8992 = vunpack.c.l.b16 %v8247
        %v8993 = vunpack.c.h.b16 %v8247
        %v8994 = vunpack.c.l.b16 %v8248
        %v8995 = vunpack.c.h.b16 %v8248
        %v8996 = vunpack.c.l.b16 %v8249
        %v8997 = vunpack.c.h.b16 %v8249
        %v8998 = vunpack.c.l.b16 %v8250
        %v8999 = vunpack.c.h.b16 %v8250
        %v9000 = vunpack.c.l.b16 %v8251
        %v9001 = vunpack.c.h.b16 %v8251
        %v9002 = vunpack.c.l.b16 %v8252
        %v9003 = vunpack.c.h.b16 %v8252
        %v9004 = vunpack.c.l.b16 %v8253
        %v9005 = vunpack.c.h.b16 %v8253
        %v9006 = vunpack.c.l.b16 %v8254
        %v9007 = vunpack.c.h.b16 %v8254
        %v9008 = vunpack.c.l.b16 %v8255
        %v9009 = vunpack.c.h.b16 %v8255
        %v9010 = vunpack.c.l.b16 %v8256
        %v9011 = vunpack.c.h.b16 %v8256
        %v9012 = vunpack.c.l.b16 %v8257
        %v9013 = vunpack.c.h.b16 %v8257
        %v9014 = vunpack.c.l.b16 %v8258
        %v9015 = vunpack.c.h.b16 %v8258
        %v9016 = vunpack.c.l.b16 %v8259
        %v9017 = vunpack.c.h.b16 %v8259
        %v9018 = vunpack.c.l.b16 %v8260
        %v9019 = vunpack.c.h.b16 %v8260
        %v9020 = vunpack.c.l.b16 %v8261
        %v9021 = vunpack.c.h.b16 %v8261
        %v9022 = vunpack.c.l.b16 %v8262
        %v9023 = vunpack.c.h.b16 %v8262
        %v9024 = vunpack.c.l.b16 %v8263
        %v9025 = vunpack.c.h.b16 %v8263
        %v9026 = vunpack.c.l.b16 %v8264
        %v9027 = vunpack.c.h.b16 %v8264
        %v9028 = vunpack.c.l.b16 %v8265
        %v9029 = vunpack.c.h.b16 %v8265
        %v9030 = vunpack.c.l.b16 %v8266
        %v9031 = vunpack.c.h.b16 %v8266
        %v9032 = vunpack.c.l.b16 %v8267
        %v9033 = vunpack.c.h.b16 %v8267
        %v9034 = vunpack.c.l.b16 %v8268
        %v9035 = vunpack.c.h.b16 %v8268
        %v9036 = vunpack.c.l.b16 %v8269
        %v9037 = vunpack.c.h.b16 %v8269
        %v9038 = vunpack.c.l.b16 %v8270
        %v9039 = vunpack.c.h.b16 %v8270
        %v9040 = vunpack.c.l.b16 %v8271
        %v9041 = vunpack.c.h.b16 %v8271
        %v9042 = vunpack.c.l.b16 %v8272
        %v9043 = vunpack.c.h.b16 %v8272
        %v9044 = vunpack.c.l.b16 %v8273
        %v9045 = vunpack.c.h.b16 %v8273
        %v9046 = vunpack.c.l.b16 %v8274
        %v9047 = vunpack.c.h.b16 %v8274
        %v9048 = vunpack.c.l.b16 %v8275
        %v9049 = vunpack.c.h.b16 %v8275
        %v9050 = vunpack.c.l.b16 %v8276
        %v9051 = vunpack.c.h.b16 %v8276
        %v9052 = vunpack.c.l.b16 %v8277
        %v9053 = vunpack.c.h.b16 %v8277
        %v9054 = vunpack.c.l.b16 %v8278
        %v9055 = vunpack.c.h.b16 %v8278
        %v9056 = vunpack.c.l.b16 %v8279
        %v9057 = vunpack.c.h.b16 %v8279
        %v9058 = vunpack.c.l.b16 %v8280
        %v9059 = vunpack.c.h.b16 %v8280
        %v9060 = vunpack.c.l.b16 %v8281
        %v9061 = vunpack.c.h.b16 %v8281
        %v9062 = vunpack.c.l.b16 %v8282
        %v9063 = vunpack.c.h.b16 %v8282
        %v9064 = vunpack.c.l.b16 %v8283
        %v9065 = vunpack.c.h.b16 %v8283
        %v9066 = vunpack.c.l.b16 %v8284
        %v9067 = vunpack.c.h.b16 %v8284
        %v9068 = vunpack.c.l.b16 %v8285
        %v9069 = vunpack.c.h.b16 %v8285
        %v9070 = vunpack.c.l.b16 %v8286
        %v9071 = vunpack.c.h.b16 %v8286
        %v9072 = vunpack.c.l.b16 %v8287
        %v9073 = vunpack.c.h.b16 %v8287
        %v9074 = vunpack.c.l.b16 %v8288
        %v9075 = vunpack.c.h.b16 %v8288
        %v9076 = vunpack.c.l.b16 %v8289
        %v9077 = vunpack.c.h.b16 %v8289
        %v9078 = vunpack.c.l.b16 %v8290
        %v9079 = vunpack.c.h.b16 %v8290
        %v9080 = vunpack.c.l.b16 %v8291
        %v9081 = vunpack.c.h.b16 %v8291
        %v9082 = vpack.c.b16 %v8574, %v8570
        %v9083 = vpack.c.b16 %v8575, %v8571
        %v9084 = vpack.c.b16 %v8576, %v8572
        %v9085 = vpack.c.b16 %v8577, %v8573
        %v9086 = vpack.c.b16 %v8582, %v8578
        %v9087 = vpack.c.b16 %v8583, %v8579
        %v9088 = vpack.c.b16 %v8584, %v8580
        %v9089 = vpack.c.b16 %v8585, %v8581
        %v9090 = vpack.c.b16 %v8590, %v8586
        %v9091 = vpack.c.b16 %v8591, %v8587
        %v9092 = vpack.c.b16 %v8592, %v8588
        %v9093 = vpack.c.b16 %v8593, %v8589
        %v9094 = vpack.c.b16 %v8598, %v8594
        %v9095 = vpack.c.b16 %v8599, %v8595
        %v9096 = vpack.c.b16 %v8600, %v8596
        %v9097 = vpack.c.b16 %v8601, %v8597
        %v9098 = vpack.c.b16 %v8606, %v8602
        %v9099 = vpack.c.b16 %v8607, %v8603
        %v9100 = vpack.c.b16 %v8608, %v8604
        %v9101 = vpack.c.b16 %v8609, %v8605
        %v9102 = vpack.c.b16 %v8614, %v8610
        %v9103 = vpack.c.b16 %v8615, %v8611
        %v9104 = vpack.c.b16 %v8616, %v8612
        %v9105 = vpack.c.b16 %v8617, %v8613
        %v9106 = vpack.c.b16 %v8622, %v8618
        %v9107 = vpack.c.b16 %v8623, %v8619
        %v9108 = vpack.c.b16 %v8624, %v8620
        %v9109 = vpack.c.b16 %v8625, %v8621
        %v9110 = vpack.c.b16 %v8630, %v8626
        %v9111 = vpack.c.b16 %v8631, %v8627
        %v9112 = vpack.c.b16 %v8632, %v8628
        %v9113 = vpack.c.b16 %v8633, %v8629
        %v9114 = vpack.c.b16 %v8638, %v8634
        %v9115 = vpack.c.b16 %v8639, %v8635
        %v9116 = vpack.c.b16 %v8640, %v8636
        %v9117 = vpack.c.b16 %v8641, %v8637
        %v9118 = vpack.c.b16 %v8646, %v8642
        %v9119 = vpack.c.b16 %v8647, %v8643
        %v9120 = vpack.c.b16 %v8648, %v8644
        %v9121 = vpack.c.b16 %v8649, %v8645
        %v9122 = vpack.c.b16 %v8654, %v8650
        %v9123 = vpack.c.b16 %v8655, %v8651
        %v9124 = vpack.c.b16 %v8656, %v8652
        %v9125 = vpack.c.b16 %v8657, %v8653
        %v9126 = vpack.c.b16 %v8662, %v8658
        %v9127 = vpack.c.b16 %v8663, %v8659
        %v9128 = vpack.c.b16 %v8664, %v8660
        %v9129 = vpack.c.b16 %v8665, %v8661
        %v9130 = vpack.c.b16 %v8670, %v8666
        %v9131 = vpack.c.b16 %v8671, %v8667
        %v9132 = vpack.c.b16 %v8672, %v8668
        %v9133 = vpack.c.b16 %v8673, %v8669
        %v9134 = vpack.c.b16 %v8678, %v8674
        %v9135 = vpack.c.b16 %v8679, %v8675
        %v9136 = vpack.c.b16 %v8680, %v8676
        %v9137 = vpack.c.b16 %v8681, %v8677
        %v9138 = vpack.c.b16 %v8686, %v8682
        %v9139 = vpack.c.b16 %v8687, %v8683
        %v9140 = vpack.c.b16 %v8688, %v8684
        %v9141 = vpack.c.b16 %v8689, %v8685
        %v9142 = vpack.c.b16 %v8694, %v8690
        %v9143 = vpack.c.b16 %v8695, %v8691
        %v9144 = vpack.c.b16 %v8696, %v8692
        %v9145 = vpack.c.b16 %v8697, %v8693
        %v9146 = vpack.c.b16 %v8702, %v8698
        %v9147 = vpack.c.b16 %v8703, %v8699
        %v9148 = vpack.c.b16 %v8704, %v8700
        %v9149 = vpack.c.b16 %v8705, %v8701
        %v9150 = vpack.c.b16 %v8710, %v8706
        %v9151 = vpack.c.b16 %v8711, %v8707
        %v9152 = vpack.c.b16 %v8712, %v8708
        %v9153 = vpack.c.b16 %v8713, %v8709
        %v9154 = vpack.c.b16 %v8718, %v8714
        %v9155 = vpack.c.b16 %v8719, %v8715
        %v9156 = vpack.c.b16 %v8720, %v8716
        %v9157 = vpack.c.b16 %v8721, %v8717
        %v9158 = vpack.c.b16 %v8726, %v8722
        %v9159 = vpack.c.b16 %v8727, %v8723
        %v9160 = vpack.c.b16 %v8728, %v8724
        %v9161 = vpack.c.b16 %v8729, %v8725
        %v9162 = vpack.c.b16 %v8734, %v8730
        %v9163 = vpack.c.b16 %v8735, %v8731
        %v9164 = vpack.c.b16 %v8736, %v8732
        %v9165 = vpack.c.b16 %v8737, %v8733
        %v9166 = vpack.c.b16 %v8742, %v8738
        %v9167 = vpack.c.b16 %v8743, %v8739
        %v9168 = vpack.c.b16 %v8744, %v8740
        %v9169 = vpack.c.b16 %v8745, %v8741
        %v9170 = vpack.c.b16 %v8750, %v8746
        %v9171 = vpack.c.b16 %v8751, %v8747
        %v9172 = vpack.c.b16 %v8752, %v8748
        %v9173 = vpack.c.b16 %v8753, %v8749
        %v9174 = vpack.c.b16 %v8758, %v8754
        %v9175 = vpack.c.b16 %v8759, %v8755
        %v9176 = vpack.c.b16 %v8760, %v8756
        %v9177 = vpack.c.b16 %v8761, %v8757
        %v9178 = vpack.c.b16 %v8766, %v8762
        %v9179 = vpack.c.b16 %v8767, %v8763
        %v9180 = vpack.c.b16 %v8768, %v8764
        %v9181 = vpack.c.b16 %v8769, %v8765
        %v9182 = vpack.c.b16 %v8774, %v8770
        %v9183 = vpack.c.b16 %v8775, %v8771
        %v9184 = vpack.c.b16 %v8776, %v8772
        %v9185 = vpack.c.b16 %v8777, %v8773
        %v9186 = vpack.c.b16 %v8782, %v8778
        %v9187 = vpack.c.b16 %v8783, %v8779
        %v9188 = vpack.c.b16 %v8784, %v8780
        %v9189 = vpack.c.b16 %v8785, %v8781
        %v9190 = vpack.c.b16 %v8790, %v8786
        %v9191 = vpack.c.b16 %v8791, %v8787
        %v9192 = vpack.c.b16 %v8792, %v8788
        %v9193 = vpack.c.b16 %v8793, %v8789
        %v9194 = vpack.c.b16 %v8798, %v8794
        %v9195 = vpack.c.b16 %v8799, %v8795
        %v9196 = vpack.c.b16 %v8800, %v8796
        %v9197 = vpack.c.b16 %v8801, %v8797
        %v9198 = vpack.c.b16 %v8806, %v8802
        %v9199 = vpack.c.b16 %v8807, %v8803
        %v9200 = vpack.c.b16 %v8808, %v8804
        %v9201 = vpack.c.b16 %v8809, %v8805
        %v9202 = vpack.c.b16 %v8814, %v8810
        %v9203 = vpack.c.b16 %v8815, %v8811
        %v9204 = vpack.c.b16 %v8816, %v8812
        %v9205 = vpack.c.b16 %v8817, %v8813
        %v9206 = vpack.c.b16 %v8822, %v8818
        %v9207 = vpack.c.b16 %v8823, %v8819
        %v9208 = vpack.c.b16 %v8824, %v8820
        %v9209 = vpack.c.b16 %v8825, %v8821
        %v9210 = vpack.c.b16 %v8830, %v8826
        %v9211 = vpack.c.b16 %v8831, %v8827
        %v9212 = vpack.c.b16 %v8832, %v8828
        %v9213 = vpack.c.b16 %v8833, %v8829
        %v9214 = vpack.c.b16 %v8838, %v8834
        %v9215 = vpack.c.b16 %v8839, %v8835
        %v9216 = vpack.c.b16 %v8840, %v8836
        %v9217 = vpack.c.b16 %v8841, %v8837
        %v9218 = vpack.c.b16 %v8846, %v8842
        %v9219 = vpack.c.b16 %v8847, %v8843
        %v9220 = vpack.c.b16 %v8848, %v8844
        %v9221 = vpack.c.b16 %v8849, %v8845
        %v9222 = vpack.c.b16 %v8854, %v8850
        %v9223 = vpack.c.b16 %v8855, %v8851
        %v9224 = vpack.c.b16 %v8856, %v8852
        %v9225 = vpack.c.b16 %v8857, %v8853
        %v9226 = vpack.c.b16 %v8862, %v8858
        %v9227 = vpack.c.b16 %v8863, %v8859
        %v9228 = vpack.c.b16 %v8864, %v8860
        %v9229 = vpack.c.b16 %v8865, %v8861
        %v9230 = vpack.c.b16 %v8870, %v8866
        %v9231 = vpack.c.b16 %v8871, %v8867
        %v9232 = vpack.c.b16 %v8872, %v8868
        %v9233 = vpack.c.b16 %v8873, %v8869
        %v9234 = vpack.c.b16 %v8878, %v8874
        %v9235 = vpack.c.b16 %v8879, %v8875
        %v9236 = vpack.c.b16 %v8880, %v8876
        %v9237 = vpack.c.b16 %v8881, %v8877
        %v9238 = vpack.c.b16 %v8886, %v8882
        %v9239 = vpack.c.b16 %v8887, %v8883
        %v9240 = vpack.c.b16 %v8888, %v8884
        %v9241 = vpack.c.b16 %v8889, %v8885
        %v9242 = vpack.c.b16 %v8894, %v8890
        %v9243 = vpack.c.b16 %v8895, %v8891
        %v9244 = vpack.c.b16 %v8896, %v8892
        %v9245 = vpack.c.b16 %v8897, %v8893
        %v9246 = vpack.c.b16 %v8902, %v8898
        %v9247 = vpack.c.b16 %v8903, %v8899
        %v9248 = vpack.c.b16 %v8904, %v8900
        %v9249 = vpack.c.b16 %v8905, %v8901
        %v9250 = vpack.c.b16 %v8910, %v8906
        %v9251 = vpack.c.b16 %v8911, %v8907
        %v9252 = vpack.c.b16 %v8912, %v8908
        %v9253 = vpack.c.b16 %v8913, %v8909
        %v9254 = vpack.c.b16 %v8918, %v8914
        %v9255 = vpack.c.b16 %v8919, %v8915
        %v9256 = vpack.c.b16 %v8920, %v8916
        %v9257 = vpack.c.b16 %v8921, %v8917
        %v9258 = vpack.c.b16 %v8926, %v8922
        %v9259 = vpack.c.b16 %v8927, %v8923
        %v9260 = vpack.c.b16 %v8928, %v8924
        %v9261 = vpack.c.b16 %v8929, %v8925
        %v9262 = vpack.c.b16 %v8934, %v8930
        %v9263 = vpack.c.b16 %v8935, %v8931
        %v9264 = vpack.c.b16 %v8936, %v8932
        %v9265 = vpack.c.b16 %v8937, %v8933
        %v9266 = vpack.c.b16 %v8942, %v8938
        %v9267 = vpack.c.b16 %v8943, %v8939
        %v9268 = vpack.c.b16 %v8944, %v8940
        %v9269 = vpack.c.b16 %v8945, %v8941
        %v9270 = vpack.c.b16 %v8950, %v8946
        %v9271 = vpack.c.b16 %v8951, %v8947
        %v9272 = vpack.c.b16 %v8952, %v8948
        %v9273 = vpack.c.b16 %v8953, %v8949
        %v9274 = vpack.c.b16 %v8958, %v8954
        %v9275 = vpack.c.b16 %v8959, %v8955
        %v9276 = vpack.c.b16 %v8960, %v8956
        %v9277 = vpack.c.b16 %v8961, %v8957
        %v9278 = vpack.c.b16 %v8966, %v8962
        %v9279 = vpack.c.b16 %v8967, %v8963
        %v9280 = vpack.c.b16 %v8968, %v8964
        %v9281 = vpack.c.b16 %v8969, %v8965
        %v9282 = vpack.c.b16 %v8974, %v8970
        %v9283 = vpack.c.b16 %v8975, %v8971
        %v9284 = vpack.c.b16 %v8976, %v8972
        %v9285 = vpack.c.b16 %v8977, %v8973
        %v9286 = vpack.c.b16 %v8982, %v8978
        %v9287 = vpack.c.b16 %v8983, %v8979
        %v9288 = vpack.c.b16 %v8984, %v8980
        %v9289 = vpack.c.b16 %v8985, %v8981
        %v9290 = vpack.c.b16 %v8990, %v8986
        %v9291 = vpack.c.b16 %v8991, %v8987
        %v9292 = vpack.c.b16 %v8992, %v8988
        %v9293 = vpack.c.b16 %v8993, %v8989
        %v9294 = vpack.c.b16 %v8998, %v8994
        %v9295 = vpack.c.b16 %v8999, %v8995
        %v9296 = vpack.c.b16 %v9000, %v8996
        %v9297 = vpack.c.b16 %v9001, %v8997
        %v9298 = vpack.c.b16 %v9006, %v9002
        %v9299 = vpack.c.b16 %v9007, %v9003
        %v9300 = vpack.c.b16 %v9008, %v9004
        %v9301 = vpack.c.b16 %v9009, %v9005
        %v9302 = vpack.c.b16 %v9014, %v9010
        %v9303 = vpack.c.b16 %v9015, %v9011
        %v9304 = vpack.c.b16 %v9016, %v9012
        %v9305 = vpack.c.b16 %v9017, %v9013
        %v9306 = vpack.c.b16 %v9022, %v9018
        %v9307 = vpack.c.b16 %v9023, %v9019
        %v9308 = vpack.c.b16 %v9024, %v9020
        %v9309 = vpack.c.b16 %v9025, %v9021
        %v9310 = vpack.c.b16 %v9030, %v9026
        %v9311 = vpack.c.b16 %v9031, %v9027
        %v9312 = vpack.c.b16 %v9032, %v9028
        %v9313 = vpack.c.b16 %v9033, %v9029
        %v9314 = vpack.c.b16 %v9038, %v9034
        %v9315 = vpack.c.b16 %v9039, %v9035
        %v9316 = vpack.c.b16 %v9040, %v9036
        %v9317 = vpack.c.b16 %v9041, %v9037
        %v9318 = vpack.c.b16 %v9046, %v9042
        %v9319 = vpack.c.b16 %v9047, %v9043
        %v9320 = vpack.c.b16 %v9048, %v9044
        %v9321 = vpack.c.b16 %v9049, %v9045
        %v9322 = vpack.c.b16 %v9054, %v9050
        %v9323 = vpack.c.b16 %v9055, %v9051
        %v9324 = vpack.c.b16 %v9056, %v9052
        %v9325 = vpack.c.b16 %v9057, %v9053
        %v9326 = vpack.c.b16 %v9062, %v9058
        %v9327 = vpack.c.b16 %v9063, %v9059
        %v9328 = vpack.c.b16 %v9064, %v9060
        %v9329 = vpack.c.b16 %v9065, %v9061
        %v9330 = vpack.c.b16 %v9070, %v9066
        %v9331 = vpack.c.b16 %v9071, %v9067
        %v9332 = vpack.c.b16 %v9072, %v9068
        %v9333 = vpack.c.b16 %v9073, %v9069
        %v9334 = vpack.c.b16 %v9078, %v9074
        %v9335 = vpack.c.b16 %v9079, %v9075
        %v9336 = vpack.c.b16 %v9080, %v9076
        %v9337 = vpack.c.b16 %v9081, %v9077
        %9594 = vmatprep.subr.bf16.mxu0 %v9083
        %9595 = vmatpush1.bf16.msra.mxu0 %v9082
        %9596 = vmatprep.subr.bf16.mxu0 %v9087
        %9597 = vmatpush1.bf16.msra.mxu0 %v9086
        %9598 = vmatprep.subr.bf16.mxu0 %v9091
        %9599 = vmatpush1.bf16.msra.mxu0 %v9090
        %9600 = vmatprep.subr.bf16.mxu0 %v9095
        %9601 = vmatpush1.bf16.msra.mxu0 %v9094
        %9602 = vmatprep.subr.bf16.mxu0 %v9099
        %9603 = vmatpush1.bf16.msra.mxu0 %v9098
        %9604 = vmatprep.subr.bf16.mxu0 %v9103
        %9605 = vmatpush1.bf16.msra.mxu0 %v9102
        %9606 = vmatprep.subr.bf16.mxu0 %v9107
        %9607 = vmatpush1.bf16.msra.mxu0 %v9106
        %9608 = vmatprep.subr.bf16.mxu0 %v9111
        %9609 = vmatpush1.bf16.msra.mxu0 %v9110
        %9610 = vmatprep.subr.bf16.mxu0 %v9115
        %9611 = vmatpush1.bf16.msra.mxu0 %v9114
        %9612 = vmatprep.subr.bf16.mxu0 %v9119
        %9613 = vmatpush1.bf16.msra.mxu0 %v9118
        %9614 = vmatprep.subr.bf16.mxu0 %v9123
        %9615 = vmatpush1.bf16.msra.mxu0 %v9122
        %9616 = vmatprep.subr.bf16.mxu0 %v9127
        %9617 = vmatpush1.bf16.msra.mxu0 %v9126
        %9618 = vmatprep.subr.bf16.mxu0 %v9131
        %9619 = vmatpush1.bf16.msra.mxu0 %v9130
        %9620 = vmatprep.subr.bf16.mxu0 %v9135
        %9621 = vmatpush1.bf16.msra.mxu0 %v9134
        %9622 = vmatprep.subr.bf16.mxu0 %v9139
        %9623 = vmatpush1.bf16.msra.mxu0 %v9138
        %9624 = vmatprep.subr.bf16.mxu0 %v9143
        %9625 = vmatpush1.bf16.msra.mxu0 %v9142
        %9626 = vmatprep.mubr.bf16.mxu0 %v8029
        %9627 = vmatmul.mubr.bf16.gmra.mrb[0].mxu0 %v8028
        %v9628 = vpop.f32.mrb[0].mxu0
        %v9629 = vadd.f32 %v8297, %v9628
        %v9630 = vpop.f32.mrb[0].mxu0
        %v9631 = vadd.f32 %v8301, %v9630
        %v9632 = vpop.f32.mrb[0].mxu0
        %v9633 = vpop.f32.mrb[0].mxu0
        %9634 = vdwg.mxu0
        %9635 = vmatprep.subr.bf16.mxu0 %v9147
        %9636 = vmatpush1.bf16.msra.mxu0 %v9146
        %9637 = vmatprep.subr.bf16.mxu0 %v9151
        %9638 = vmatpush1.bf16.msra.mxu0 %v9150
        %9639 = vmatprep.subr.bf16.mxu0 %v9155
        %9640 = vmatpush1.bf16.msra.mxu0 %v9154
        %9641 = vmatprep.subr.bf16.mxu0 %v9159
        %9642 = vmatpush1.bf16.msra.mxu0 %v9158
        %9643 = vmatprep.subr.bf16.mxu0 %v9163
        %9644 = vmatpush1.bf16.msra.mxu0 %v9162
        %9645 = vmatprep.subr.bf16.mxu0 %v9167
        %9646 = vmatpush1.bf16.msra.mxu0 %v9166
        %9647 = vmatprep.subr.bf16.mxu0 %v9171
        %9648 = vmatpush1.bf16.msra.mxu0 %v9170
        %9649 = vmatprep.subr.bf16.mxu0 %v9175
        %9650 = vmatpush1.bf16.msra.mxu0 %v9174
        %9651 = vmatprep.subr.bf16.mxu0 %v9179
        %9652 = vmatpush1.bf16.msra.mxu0 %v9178
        %9653 = vmatprep.subr.bf16.mxu0 %v9183
        %9654 = vmatpush1.bf16.msra.mxu0 %v9182
        %9655 = vmatprep.subr.bf16.mxu0 %v9187
        %9656 = vmatpush1.bf16.msra.mxu0 %v9186
        %9657 = vmatprep.subr.bf16.mxu0 %v9191
        %9658 = vmatpush1.bf16.msra.mxu0 %v9190
        %9659 = vmatprep.subr.bf16.mxu0 %v9195
        %9660 = vmatpush1.bf16.msra.mxu0 %v9194
        %9661 = vmatprep.subr.bf16.mxu0 %v9199
        %9662 = vmatpush1.bf16.msra.mxu0 %v9198
        %9663 = vmatprep.subr.bf16.mxu0 %v9203
        %9664 = vmatpush1.bf16.msra.mxu0 %v9202
        %9665 = vmatprep.subr.bf16.mxu0 %v9207
        %9666 = vmatpush1.bf16.msra.mxu0 %v9206
        %9667 = vmatprep.mubr.bf16.mxu0 %v8031
        %9668 = vmatmul.mubr.bf16.gmra.mrb[0].mxu0 %v8030
        %v9669 = vpop.f32.mrb[0].mxu0
        %v9670 = vadd.f32 %v9629, %v9669
        %v9671 = vpop.f32.mrb[0].mxu0
        %v9672 = vadd.f32 %v9631, %v9671
        %v9673 = vpop.f32.mrb[0].mxu0
        %v9674 = vpop.f32.mrb[0].mxu0
        %9675 = vdwg.mxu0
        %9676 = vmatprep.subr.bf16.mxu0 %v9211
        %9677 = vmatpush1.bf16.msra.mxu0 %v9210
        %9678 = vmatprep.subr.bf16.mxu0 %v9215
        %9679 = vmatpush1.bf16.msra.mxu0 %v9214
        %9680 = vmatprep.subr.bf16.mxu0 %v9219
        %9681 = vmatpush1.bf16.msra.mxu0 %v9218
        %9682 = vmatprep.subr.bf16.mxu0 %v9223
        %9683 = vmatpush1.bf16.msra.mxu0 %v9222
        %9684 = vmatprep.subr.bf16.mxu0 %v9227
        %9685 = vmatpush1.bf16.msra.mxu0 %v9226
        %9686 = vmatprep.subr.bf16.mxu0 %v9231
        %9687 = vmatpush1.bf16.msra.mxu0 %v9230
        %9688 = vmatprep.subr.bf16.mxu0 %v9235
        %9689 = vmatpush1.bf16.msra.mxu0 %v9234
        %9690 = vmatprep.subr.bf16.mxu0 %v9239
        %9691 = vmatpush1.bf16.msra.mxu0 %v9238
        %9692 = vmatprep.subr.bf16.mxu0 %v9243
        %9693 = vmatpush1.bf16.msra.mxu0 %v9242
        %9694 = vmatprep.subr.bf16.mxu0 %v9247
        %9695 = vmatpush1.bf16.msra.mxu0 %v9246
        %9696 = vmatprep.subr.bf16.mxu0 %v9251
        %9697 = vmatpush1.bf16.msra.mxu0 %v9250
        %9698 = vmatprep.subr.bf16.mxu0 %v9255
        %9699 = vmatpush1.bf16.msra.mxu0 %v9254
        %9700 = vmatprep.subr.bf16.mxu0 %v9259
        %9701 = vmatpush1.bf16.msra.mxu0 %v9258
        %9702 = vmatprep.subr.bf16.mxu0 %v9263
        %9703 = vmatpush1.bf16.msra.mxu0 %v9262
        %9704 = vmatprep.subr.bf16.mxu0 %v9267
        %9705 = vmatpush1.bf16.msra.mxu0 %v9266
        %9706 = vmatprep.subr.bf16.mxu0 %v9271
        %9707 = vmatpush1.bf16.msra.mxu0 %v9270
        %9708 = vmatprep.mubr.bf16.mxu0 %v8033
        %9709 = vmatmul.mubr.bf16.gmra.mrb[0].mxu0 %v8032
        %v9710 = vpop.f32.mrb[0].mxu0
        %v9711 = vadd.f32 %v9670, %v9710
        %v9712 = vpop.f32.mrb[0].mxu0
        %v9713 = vadd.f32 %v9672, %v9712
        %v9714 = vpop.f32.mrb[0].mxu0
        %v9715 = vpop.f32.mrb[0].mxu0
        %9716 = vdwg.mxu0
        %9717 = vmatprep.subr.bf16.mxu0 %v9275
        %9718 = vmatpush1.bf16.msra.mxu0 %v9274
        %9719 = vmatprep.subr.bf16.mxu0 %v9279
        %9720 = vmatpush1.bf16.msra.mxu0 %v9278
        %9721 = vmatprep.subr.bf16.mxu0 %v9283
        %9722 = vmatpush1.bf16.msra.mxu0 %v9282
        %9723 = vmatprep.subr.bf16.mxu0 %v9287
        %9724 = vmatpush1.bf16.msra.mxu0 %v9286
        %9725 = vmatprep.subr.bf16.mxu0 %v9291
        %9726 = vmatpush1.bf16.msra.mxu0 %v9290
        %9727 = vmatprep.subr.bf16.mxu0 %v9295
        %9728 = vmatpush1.bf16.msra.mxu0 %v9294
        %9729 = vmatprep.subr.bf16.mxu0 %v9299
        %9730 = vmatpush1.bf16.msra.mxu0 %v9298
        %9731 = vmatprep.subr.bf16.mxu0 %v9303
        %9732 = vmatpush1.bf16.msra.mxu0 %v9302
        %9733 = vmatprep.subr.bf16.mxu0 %v9307
        %9734 = vmatpush1.bf16.msra.mxu0 %v9306
        %9735 = vmatprep.subr.bf16.mxu0 %v9311
        %9736 = vmatpush1.bf16.msra.mxu0 %v9310
        %9737 = vmatprep.subr.bf16.mxu0 %v9315
        %9738 = vmatpush1.bf16.msra.mxu0 %v9314
        %9739 = vmatprep.subr.bf16.mxu0 %v9319
        %9740 = vmatpush1.bf16.msra.mxu0 %v9318
        %9741 = vmatprep.subr.bf16.mxu0 %v9323
        %9742 = vmatpush1.bf16.msra.mxu0 %v9322
        %9743 = vmatprep.subr.bf16.mxu0 %v9327
        %9744 = vmatpush1.bf16.msra.mxu0 %v9326
        %9745 = vmatprep.subr.bf16.mxu0 %v9331
        %9746 = vmatpush1.bf16.msra.mxu0 %v9330
        %9747 = vmatprep.subr.bf16.mxu0 %v9335
        %9748 = vmatpush1.bf16.msra.mxu0 %v9334
        %9749 = vmatprep.mubr.bf16.mxu0 %v8035
        %9750 = vmatmul.mubr.bf16.gmra.mrb[0].mxu0 %v8034
        %v9751 = vpop.f32.mrb[0].mxu0
        %v9752 = vadd.f32 %v9711, %v9751
        %v9753 = vpop.f32.mrb[0].mxu0
        %v9754 = vadd.f32 %v9713, %v9753
        %v9755 = vpop.f32.mrb[0].mxu0
        %v9756 = vpop.f32.mrb[0].mxu0
        %9757 = vdwg.mxu0
        %9758 = vmatprep.subr.bf16.mxu0 %v9085
        %9759 = vmatpush1.bf16.msra.mxu0 %v9084
        %9760 = vmatprep.subr.bf16.mxu0 %v9089
        %9761 = vmatpush1.bf16.msra.mxu0 %v9088
        %9762 = vmatprep.subr.bf16.mxu0 %v9093
        %9763 = vmatpush1.bf16.msra.mxu0 %v9092
        %9764 = vmatprep.subr.bf16.mxu0 %v9097
        %9765 = vmatpush1.bf16.msra.mxu0 %v9096
        %9766 = vmatprep.subr.bf16.mxu0 %v9101
        %9767 = vmatpush1.bf16.msra.mxu0 %v9100
        %9768 = vmatprep.subr.bf16.mxu0 %v9105
        %9769 = vmatpush1.bf16.msra.mxu0 %v9104
        %9770 = vmatprep.subr.bf16.mxu0 %v9109
        %9771 = vmatpush1.bf16.msra.mxu0 %v9108
        %9772 = vmatprep.subr.bf16.mxu0 %v9113
        %9773 = vmatpush1.bf16.msra.mxu0 %v9112
        %9774 = vmatprep.subr.bf16.mxu0 %v9117
        %9775 = vmatpush1.bf16.msra.mxu0 %v9116
        %9776 = vmatprep.subr.bf16.mxu0 %v9121
        %9777 = vmatpush1.bf16.msra.mxu0 %v9120
        %9778 = vmatprep.subr.bf16.mxu0 %v9125
        %9779 = vmatpush1.bf16.msra.mxu0 %v9124
        %9780 = vmatprep.subr.bf16.mxu0 %v9129
        %9781 = vmatpush1.bf16.msra.mxu0 %v9128
        %9782 = vmatprep.subr.bf16.mxu0 %v9133
        %9783 = vmatpush1.bf16.msra.mxu0 %v9132
        %9784 = vmatprep.subr.bf16.mxu0 %v9137
        %9785 = vmatpush1.bf16.msra.mxu0 %v9136
        %9786 = vmatprep.subr.bf16.mxu0 %v9141
        %9787 = vmatpush1.bf16.msra.mxu0 %v9140
        %9788 = vmatprep.subr.bf16.mxu0 %v9145
        %9789 = vmatpush1.bf16.msra.mxu0 %v9144
        %9790 = vmatprep.mubr.bf16.mxu0 %v8029
        %9791 = vmatmul.mubr.bf16.gmra.mrb[0].mxu0 %v8028
        %v9792 = vpop.f32.mrb[0].mxu0
        %v9793 = vadd.f32 %v8305, %v9792
        %v9794 = vpop.f32.mrb[0].mxu0
        %v9795 = vadd.f32 %v8309, %v9794
        %v9796 = vpop.f32.mrb[0].mxu0
        %v9797 = vpop.f32.mrb[0].mxu0
        %9798 = vdwg.mxu0
        %9799 = vmatprep.subr.bf16.mxu0 %v9149
        %9800 = vmatpush1.bf16.msra.mxu0 %v9148
        %9801 = vmatprep.subr.bf16.mxu0 %v9153
        %9802 = vmatpush1.bf16.msra.mxu0 %v9152
        %9803 = vmatprep.subr.bf16.mxu0 %v9157
        %9804 = vmatpush1.bf16.msra.mxu0 %v9156
        %9805 = vmatprep.subr.bf16.mxu0 %v9161
        %9806 = vmatpush1.bf16.msra.mxu0 %v9160
        %9807 = vmatprep.subr.bf16.mxu0 %v9165
        %9808 = vmatpush1.bf16.msra.mxu0 %v9164
        %9809 = vmatprep.subr.bf16.mxu0 %v9169
        %9810 = vmatpush1.bf16.msra.mxu0 %v9168
        %9811 = vmatprep.subr.bf16.mxu0 %v9173
        %9812 = vmatpush1.bf16.msra.mxu0 %v9172
        %9813 = vmatprep.subr.bf16.mxu0 %v9177
        %9814 = vmatpush1.bf16.msra.mxu0 %v9176
        %9815 = vmatprep.subr.bf16.mxu0 %v9181
        %9816 = vmatpush1.bf16.msra.mxu0 %v9180
        %9817 = vmatprep.subr.bf16.mxu0 %v9185
        %9818 = vmatpush1.bf16.msra.mxu0 %v9184
        %9819 = vmatprep.subr.bf16.mxu0 %v9189
        %9820 = vmatpush1.bf16.msra.mxu0 %v9188
        %9821 = vmatprep.subr.bf16.mxu0 %v9193
        %9822 = vmatpush1.bf16.msra.mxu0 %v9192
        %9823 = vmatprep.subr.bf16.mxu0 %v9197
        %9824 = vmatpush1.bf16.msra.mxu0 %v9196
        %9825 = vmatprep.subr.bf16.mxu0 %v9201
        %9826 = vmatpush1.bf16.msra.mxu0 %v9200
        %9827 = vmatprep.subr.bf16.mxu0 %v9205
        %9828 = vmatpush1.bf16.msra.mxu0 %v9204
        %9829 = vmatprep.subr.bf16.mxu0 %v9209
        %9830 = vmatpush1.bf16.msra.mxu0 %v9208
        %9831 = vmatprep.mubr.bf16.mxu0 %v8031
        %9832 = vmatmul.mubr.bf16.gmra.mrb[0].mxu0 %v8030
        %v9833 = vpop.f32.mrb[0].mxu0
        %v9834 = vadd.f32 %v9793, %v9833
        %v9835 = vpop.f32.mrb[0].mxu0
        %v9836 = vadd.f32 %v9795, %v9835
        %v9837 = vpop.f32.mrb[0].mxu0
        %v9838 = vpop.f32.mrb[0].mxu0
        %9839 = vdwg.mxu0
        %9840 = vmatprep.subr.bf16.mxu0 %v9213
        %9841 = vmatpush1.bf16.msra.mxu0 %v9212
        %9842 = vmatprep.subr.bf16.mxu0 %v9217
        %9843 = vmatpush1.bf16.msra.mxu0 %v9216
        %9844 = vmatprep.subr.bf16.mxu0 %v9221
        %9845 = vmatpush1.bf16.msra.mxu0 %v9220
        %9846 = vmatprep.subr.bf16.mxu0 %v9225
        %9847 = vmatpush1.bf16.msra.mxu0 %v9224
        %9848 = vmatprep.subr.bf16.mxu0 %v9229
        %9849 = vmatpush1.bf16.msra.mxu0 %v9228
        %9850 = vmatprep.subr.bf16.mxu0 %v9233
        %9851 = vmatpush1.bf16.msra.mxu0 %v9232
        %9852 = vmatprep.subr.bf16.mxu0 %v9237
        %9853 = vmatpush1.bf16.msra.mxu0 %v9236
        %9854 = vmatprep.subr.bf16.mxu0 %v9241
        %9855 = vmatpush1.bf16.msra.mxu0 %v9240
        %9856 = vmatprep.subr.bf16.mxu0 %v9245
        %9857 = vmatpush1.bf16.msra.mxu0 %v9244
        %9858 = vmatprep.subr.bf16.mxu0 %v9249
        %9859 = vmatpush1.bf16.msra.mxu0 %v9248
        %9860 = vmatprep.subr.bf16.mxu0 %v9253
        %9861 = vmatpush1.bf16.msra.mxu0 %v9252
        %9862 = vmatprep.subr.bf16.mxu0 %v9257
        %9863 = vmatpush1.bf16.msra.mxu0 %v9256
        %9864 = vmatprep.subr.bf16.mxu0 %v9261
        %9865 = vmatpush1.bf16.msra.mxu0 %v9260
        %9866 = vmatprep.subr.bf16.mxu0 %v9265
        %9867 = vmatpush1.bf16.msra.mxu0 %v9264
        %9868 = vmatprep.subr.bf16.mxu0 %v9269
        %9869 = vmatpush1.bf16.msra.mxu0 %v9268
        %9870 = vmatprep.subr.bf16.mxu0 %v9273
        %9871 = vmatpush1.bf16.msra.mxu0 %v9272
        %9872 = vmatprep.mubr.bf16.mxu0 %v8033
        %9873 = vmatmul.mubr.bf16.gmra.mrb[0].mxu0 %v8032
        %v9874 = vpop.f32.mrb[0].mxu0
        %v9875 = vadd.f32 %v9834, %v9874
        %v9876 = vpop.f32.mrb[0].mxu0
        %v9877 = vadd.f32 %v9836, %v9876
        %v9878 = vpop.f32.mrb[0].mxu0
        %v9879 = vpop.f32.mrb[0].mxu0
        %9880 = vdwg.mxu0
        %9881 = vmatprep.subr.bf16.mxu0 %v9277
        %9882 = vmatpush1.bf16.msra.mxu0 %v9276
        %9883 = vmatprep.subr.bf16.mxu0 %v9281
        %9884 = vmatpush1.bf16.msra.mxu0 %v9280
        %9885 = vmatprep.subr.bf16.mxu0 %v9285
        %9886 = vmatpush1.bf16.msra.mxu0 %v9284
        %9887 = vmatprep.subr.bf16.mxu0 %v9289
        %9888 = vmatpush1.bf16.msra.mxu0 %v9288
        %9889 = vmatprep.subr.bf16.mxu0 %v9293
        %9890 = vmatpush1.bf16.msra.mxu0 %v9292
        %9891 = vmatprep.subr.bf16.mxu0 %v9297
        %9892 = vmatpush1.bf16.msra.mxu0 %v9296
        %9893 = vmatprep.subr.bf16.mxu0 %v9301
        %9894 = vmatpush1.bf16.msra.mxu0 %v9300
        %9895 = vmatprep.subr.bf16.mxu0 %v9305
        %9896 = vmatpush1.bf16.msra.mxu0 %v9304
        %9897 = vmatprep.subr.bf16.mxu0 %v9309
        %9898 = vmatpush1.bf16.msra.mxu0 %v9308
        %9899 = vmatprep.subr.bf16.mxu0 %v9313
        %9900 = vmatpush1.bf16.msra.mxu0 %v9312
        %9901 = vmatprep.subr.bf16.mxu0 %v9317
        %9902 = vmatpush1.bf16.msra.mxu0 %v9316
        %9903 = vmatprep.subr.bf16.mxu0 %v9321
        %9904 = vmatpush1.bf16.msra.mxu0 %v9320
        %9905 = vmatprep.subr.bf16.mxu0 %v9325
        %9906 = vmatpush1.bf16.msra.mxu0 %v9324
        %9907 = vmatprep.subr.bf16.mxu0 %v9329
        %9908 = vmatpush1.bf16.msra.mxu0 %v9328
        %9909 = vmatprep.subr.bf16.mxu0 %v9333
        %9910 = vmatpush1.bf16.msra.mxu0 %v9332
        %9911 = vmatprep.subr.bf16.mxu0 %v9337
        %9912 = vmatpush1.bf16.msra.mxu0 %v9336
        %9913 = vmatprep.mubr.bf16.mxu0 %v8035
        %9914 = vmatmul.mubr.bf16.gmra.mrb[0].mxu0 %v8034
        %v9915 = vpop.f32.mrb[0].mxu0
        %v9916 = vadd.f32 %v9875, %v9915
        %v9917 = vpop.f32.mrb[0].mxu0
        %v9918 = vadd.f32 %v9877, %v9917
        %v9919 = vpop.f32.mrb[0].mxu0
        %v9920 = vpop.f32.mrb[0].mxu0
        %9921 = vdwg.mxu0
        %v9922 = vmax.f32 %v9752, 0.0
        %v9923 = vmax.f32 %v9754, 0.0
        %v9924 = vmax.f32 %v9916, 0.0
        %v9925 = vmax.f32 %v9918, 0.0
        %v9926 = vpack.c.bf16 %v9922, %v9922
        %v9927 = vpack.c.bf16 %v9923, %v9923
        %v9928 = vpack.c.bf16 %v9924, %v9924
        %v9929 = vpack.c.bf16 %v9925, %v9925
        %v9930 = vld [vmem:[#allocation11] sm:$0xff]
        %v9931 = vld [vmem:[#allocation11 + $0x8] sm:$0xff]
        %v9932 = vld [vmem:[#allocation11 + $0x10] sm:$0xff]
        %v9933 = vld [vmem:[#allocation11 + $0x18] sm:$0xff]
        %v9934 = vld [vmem:[#allocation11 + $0x20] sm:$0xff]
        %v9935 = vld [vmem:[#allocation11 + $0x28] sm:$0xff]
        %v9936 = vld [vmem:[#allocation11 + $0x30] sm:$0xff]
        %v9937 = vld [vmem:[#allocation11 + $0x38] sm:$0xff]
        %v9938 = vld [vmem:[#allocation11 + $0x40] sm:$0xff]
        %v9939 = vld [vmem:[#allocation11 + $0x48] sm:$0xff]
        %v9940 = vld [vmem:[#allocation11 + $0x50] sm:$0xff]
        %v9941 = vld [vmem:[#allocation11 + $0x58] sm:$0xff]
        %v9942 = vld [vmem:[#allocation11 + $0x60] sm:$0xff]
        %v9943 = vld [vmem:[#allocation11 + $0x68] sm:$0xff]
        %v9944 = vld [vmem:[#allocation11 + $0x70] sm:$0xff]
        %v9945 = vld [vmem:[#allocation11 + $0x78] sm:$0xff]
        %v9946 = vld [vmem:[#allocation11 + $0x80] sm:$0xff]
        %v9947 = vld [vmem:[#allocation11 + $0x88] sm:$0xff]
        %v9948 = vld [vmem:[#allocation11 + $0x90] sm:$0xff]
        %v9949 = vld [vmem:[#allocation11 + $0x98] sm:$0xff]
        %v9950 = vld [vmem:[#allocation11 + $0xa0] sm:$0xff]
        %v9951 = vld [vmem:[#allocation11 + $0xa8] sm:$0xff]
        %v9952 = vld [vmem:[#allocation11 + $0xb0] sm:$0xff]
        %v9953 = vld [vmem:[#allocation11 + $0xb8] sm:$0xff]
        %v9954 = vld [vmem:[#allocation11 + $0xc0] sm:$0xff]
        %v9955 = vld [vmem:[#allocation11 + $0xc8] sm:$0xff]
        %v9956 = vld [vmem:[#allocation11 + $0xd0] sm:$0xff]
        %v9957 = vld [vmem:[#allocation11 + $0xd8] sm:$0xff]
        %v9958 = vld [vmem:[#allocation11 + $0xe0] sm:$0xff]
        %v9959 = vld [vmem:[#allocation11 + $0xe8] sm:$0xff]
        %v9960 = vld [vmem:[#allocation11 + $0xf0] sm:$0xff]
        %v9961 = vld [vmem:[#allocation11 + $0xf8] sm:$0xff]
        %v9962 = vld [vmem:[#allocation11 + $0x100] sm:$0xff]
        %v9963 = vld [vmem:[#allocation11 + $0x108] sm:$0xff]
        %v9964 = vld [vmem:[#allocation11 + $0x110] sm:$0xff]
        %v9965 = vld [vmem:[#allocation11 + $0x118] sm:$0xff]
        %v9966 = vld [vmem:[#allocation11 + $0x120] sm:$0xff]
        %v9967 = vld [vmem:[#allocation11 + $0x128] sm:$0xff]
        %v9968 = vld [vmem:[#allocation11 + $0x130] sm:$0xff]
        %v9969 = vld [vmem:[#allocation11 + $0x138] sm:$0xff]
        %v9970 = vld [vmem:[#allocation11 + $0x140] sm:$0xff]
        %v9971 = vld [vmem:[#allocation11 + $0x148] sm:$0xff]
        %v9972 = vld [vmem:[#allocation11 + $0x150] sm:$0xff]
        %v9973 = vld [vmem:[#allocation11 + $0x158] sm:$0xff]
        %v9974 = vld [vmem:[#allocation11 + $0x160] sm:$0xff]
        %v9975 = vld [vmem:[#allocation11 + $0x168] sm:$0xff]
        %v9976 = vld [vmem:[#allocation11 + $0x170] sm:$0xff]
        %v9977 = vld [vmem:[#allocation11 + $0x178] sm:$0xff]
        %v9978 = vld [vmem:[#allocation11 + $0x180] sm:$0xff]
        %v9979 = vld [vmem:[#allocation11 + $0x188] sm:$0xff]
        %v9980 = vld [vmem:[#allocation11 + $0x190] sm:$0xff]
        %v9981 = vld [vmem:[#allocation11 + $0x198] sm:$0xff]
        %v9982 = vld [vmem:[#allocation11 + $0x1a0] sm:$0xff]
        %v9983 = vld [vmem:[#allocation11 + $0x1a8] sm:$0xff]
        %v9984 = vld [vmem:[#allocation11 + $0x1b0] sm:$0xff]
        %v9985 = vld [vmem:[#allocation11 + $0x1b8] sm:$0xff]
        %v9986 = vld [vmem:[#allocation11 + $0x1c0] sm:$0xff]
        %v9987 = vld [vmem:[#allocation11 + $0x1c8] sm:$0xff]
        %v9988 = vld [vmem:[#allocation11 + $0x1d0] sm:$0xff]
        %v9989 = vld [vmem:[#allocation11 + $0x1d8] sm:$0xff]
        %v9990 = vld [vmem:[#allocation11 + $0x1e0] sm:$0xff]
        %v9991 = vld [vmem:[#allocation11 + $0x1e8] sm:$0xff]
        %v9992 = vld [vmem:[#allocation11 + $0x1f0] sm:$0xff]
        %v9993 = vld [vmem:[#allocation11 + $0x1f8] sm:$0xff]
        %v9994 = vld [vmem:[#allocation13] sm:$0x3]
        %v9996 = vlaneseq
        %v9997 = vshrl.u32 %v9996, 7
        %v9998 = vsub.s32 0, %v9997
        %v9999 = vrot.slane %v9994, %v9998
        %v10000 = vlaneseq
        %v10001 = vshrl.u32 %v10000, 7
        %v10002 = vsub.s32 1, %v10001
        %v10003 = vrot.slane %v9994, %v10002
        %v10070 = vunpack.c.l.b16 %v9930
        %v10071 = vunpack.c.h.b16 %v9930
        %v10072 = vunpack.c.l.b16 %v9931
        %v10073 = vunpack.c.h.b16 %v9931
        %v10074 = vunpack.c.l.b16 %v9932
        %v10075 = vunpack.c.h.b16 %v9932
        %v10076 = vunpack.c.l.b16 %v9933
        %v10077 = vunpack.c.h.b16 %v9933
        %v10078 = vunpack.c.l.b16 %v9934
        %v10079 = vunpack.c.h.b16 %v9934
        %v10080 = vunpack.c.l.b16 %v9935
        %v10081 = vunpack.c.h.b16 %v9935
        %v10082 = vunpack.c.l.b16 %v9936
        %v10083 = vunpack.c.h.b16 %v9936
        %v10084 = vunpack.c.l.b16 %v9937
        %v10085 = vunpack.c.h.b16 %v9937
        %v10086 = vunpack.c.l.b16 %v9938
        %v10087 = vunpack.c.h.b16 %v9938
        %v10088 = vunpack.c.l.b16 %v9939
        %v10089 = vunpack.c.h.b16 %v9939
        %v10090 = vunpack.c.l.b16 %v9940
        %v10091 = vunpack.c.h.b16 %v9940
        %v10092 = vunpack.c.l.b16 %v9941
        %v10093 = vunpack.c.h.b16 %v9941
        %v10094 = vunpack.c.l.b16 %v9942
        %v10095 = vunpack.c.h.b16 %v9942
        %v10096 = vunpack.c.l.b16 %v9943
        %v10097 = vunpack.c.h.b16 %v9943
        %v10098 = vunpack.c.l.b16 %v9944
        %v10099 = vunpack.c.h.b16 %v9944
        %v10100 = vunpack.c.l.b16 %v9945
        %v10101 = vunpack.c.h.b16 %v9945
        %v10102 = vunpack.c.l.b16 %v9946
        %v10103 = vunpack.c.h.b16 %v9946
        %v10104 = vunpack.c.l.b16 %v9947
        %v10105 = vunpack.c.h.b16 %v9947
        %v10106 = vunpack.c.l.b16 %v9948
        %v10107 = vunpack.c.h.b16 %v9948
        %v10108 = vunpack.c.l.b16 %v9949
        %v10109 = vunpack.c.h.b16 %v9949
        %v10110 = vunpack.c.l.b16 %v9950
        %v10111 = vunpack.c.h.b16 %v9950
        %v10112 = vunpack.c.l.b16 %v9951
        %v10113 = vunpack.c.h.b16 %v9951
        %v10114 = vunpack.c.l.b16 %v9952
        %v10115 = vunpack.c.h.b16 %v9952
        %v10116 = vunpack.c.l.b16 %v9953
        %v10117 = vunpack.c.h.b16 %v9953
        %v10118 = vunpack.c.l.b16 %v9954
        %v10119 = vunpack.c.h.b16 %v9954
        %v10120 = vunpack.c.l.b16 %v9955
        %v10121 = vunpack.c.h.b16 %v9955
        %v10122 = vunpack.c.l.b16 %v9956
        %v10123 = vunpack.c.h.b16 %v9956
        %v10124 = vunpack.c.l.b16 %v9957
        %v10125 = vunpack.c.h.b16 %v9957
        %v10126 = vunpack.c.l.b16 %v9958
        %v10127 = vunpack.c.h.b16 %v9958
        %v10128 = vunpack.c.l.b16 %v9959
        %v10129 = vunpack.c.h.b16 %v9959
        %v10130 = vunpack.c.l.b16 %v9960
        %v10131 = vunpack.c.h.b16 %v9960
        %v10132 = vunpack.c.l.b16 %v9961
        %v10133 = vunpack.c.h.b16 %v9961
        %v10134 = vunpack.c.l.b16 %v9962
        %v10135 = vunpack.c.h.b16 %v9962
        %v10136 = vunpack.c.l.b16 %v9963
        %v10137 = vunpack.c.h.b16 %v9963
        %v10138 = vunpack.c.l.b16 %v9964
        %v10139 = vunpack.c.h.b16 %v9964
        %v10140 = vunpack.c.l.b16 %v9965
        %v10141 = vunpack.c.h.b16 %v9965
        %v10142 = vunpack.c.l.b16 %v9966
        %v10143 = vunpack.c.h.b16 %v9966
        %v10144 = vunpack.c.l.b16 %v9967
        %v10145 = vunpack.c.h.b16 %v9967
        %v10146 = vunpack.c.l.b16 %v9968
        %v10147 = vunpack.c.h.b16 %v9968
        %v10148 = vunpack.c.l.b16 %v9969
        %v10149 = vunpack.c.h.b16 %v9969
        %v10150 = vunpack.c.l.b16 %v9970
        %v10151 = vunpack.c.h.b16 %v9970
        %v10152 = vunpack.c.l.b16 %v9971
        %v10153 = vunpack.c.h.b16 %v9971
        %v10154 = vunpack.c.l.b16 %v9972
        %v10155 = vunpack.c.h.b16 %v9972
        %v10156 = vunpack.c.l.b16 %v9973
        %v10157 = vunpack.c.h.b16 %v9973
        %v10158 = vunpack.c.l.b16 %v9974
        %v10159 = vunpack.c.h.b16 %v9974
        %v10160 = vunpack.c.l.b16 %v9975
        %v10161 = vunpack.c.h.b16 %v9975
        %v10162 = vunpack.c.l.b16 %v9976
        %v10163 = vunpack.c.h.b16 %v9976
        %v10164 = vunpack.c.l.b16 %v9977
        %v10165 = vunpack.c.h.b16 %v9977
        %v10166 = vunpack.c.l.b16 %v9978
        %v10167 = vunpack.c.h.b16 %v9978
        %v10168 = vunpack.c.l.b16 %v9979
        %v10169 = vunpack.c.h.b16 %v9979
        %v10170 = vunpack.c.l.b16 %v9980
        %v10171 = vunpack.c.h.b16 %v9980
        %v10172 = vunpack.c.l.b16 %v9981
        %v10173 = vunpack.c.h.b16 %v9981
        %v10174 = vunpack.c.l.b16 %v9982
        %v10175 = vunpack.c.h.b16 %v9982
        %v10176 = vunpack.c.l.b16 %v9983
        %v10177 = vunpack.c.h.b16 %v9983
        %v10178 = vunpack.c.l.b16 %v9984
        %v10179 = vunpack.c.h.b16 %v9984
        %v10180 = vunpack.c.l.b16 %v9985
        %v10181 = vunpack.c.h.b16 %v9985
        %v10182 = vunpack.c.l.b16 %v9986
        %v10183 = vunpack.c.h.b16 %v9986
        %v10184 = vunpack.c.l.b16 %v9987
        %v10185 = vunpack.c.h.b16 %v9987
        %v10186 = vunpack.c.l.b16 %v9988
        %v10187 = vunpack.c.h.b16 %v9988
        %v10188 = vunpack.c.l.b16 %v9989
        %v10189 = vunpack.c.h.b16 %v9989
        %v10190 = vunpack.c.l.b16 %v9990
        %v10191 = vunpack.c.h.b16 %v9990
        %v10192 = vunpack.c.l.b16 %v9991
        %v10193 = vunpack.c.h.b16 %v9991
        %v10194 = vunpack.c.l.b16 %v9992
        %v10195 = vunpack.c.h.b16 %v9992
        %v10196 = vunpack.c.l.b16 %v9993
        %v10197 = vunpack.c.h.b16 %v9993
        %v10198 = vpack.c.b16 %v10072, %v10070
        %v10199 = vpack.c.b16 %v10073, %v10071
        %v10200 = vpack.c.b16 %v10076, %v10074
        %v10201 = vpack.c.b16 %v10077, %v10075
        %v10202 = vpack.c.b16 %v10080, %v10078
        %v10203 = vpack.c.b16 %v10081, %v10079
        %v10204 = vpack.c.b16 %v10084, %v10082
        %v10205 = vpack.c.b16 %v10085, %v10083
        %v10206 = vpack.c.b16 %v10088, %v10086
        %v10207 = vpack.c.b16 %v10089, %v10087
        %v10208 = vpack.c.b16 %v10092, %v10090
        %v10209 = vpack.c.b16 %v10093, %v10091
        %v10210 = vpack.c.b16 %v10096, %v10094
        %v10211 = vpack.c.b16 %v10097, %v10095
        %v10212 = vpack.c.b16 %v10100, %v10098
        %v10213 = vpack.c.b16 %v10101, %v10099
        %v10214 = vpack.c.b16 %v10104, %v10102
        %v10215 = vpack.c.b16 %v10105, %v10103
        %v10216 = vpack.c.b16 %v10108, %v10106
        %v10217 = vpack.c.b16 %v10109, %v10107
        %v10218 = vpack.c.b16 %v10112, %v10110
        %v10219 = vpack.c.b16 %v10113, %v10111
        %v10220 = vpack.c.b16 %v10116, %v10114
        %v10221 = vpack.c.b16 %v10117, %v10115
        %v10222 = vpack.c.b16 %v10120, %v10118
        %v10223 = vpack.c.b16 %v10121, %v10119
        %v10224 = vpack.c.b16 %v10124, %v10122
        %v10225 = vpack.c.b16 %v10125, %v10123
        %v10226 = vpack.c.b16 %v10128, %v10126
        %v10227 = vpack.c.b16 %v10129, %v10127
        %v10228 = vpack.c.b16 %v10132, %v10130
        %v10229 = vpack.c.b16 %v10133, %v10131
        %v10230 = vpack.c.b16 %v10136, %v10134
        %v10231 = vpack.c.b16 %v10137, %v10135
        %v10232 = vpack.c.b16 %v10140, %v10138
        %v10233 = vpack.c.b16 %v10141, %v10139
        %v10234 = vpack.c.b16 %v10144, %v10142
        %v10235 = vpack.c.b16 %v10145, %v10143
        %v10236 = vpack.c.b16 %v10148, %v10146
        %v10237 = vpack.c.b16 %v10149, %v10147
        %v10238 = vpack.c.b16 %v10152, %v10150
        %v10239 = vpack.c.b16 %v10153, %v10151
        %v10240 = vpack.c.b16 %v10156, %v10154
        %v10241 = vpack.c.b16 %v10157, %v10155
        %v10242 = vpack.c.b16 %v10160, %v10158
        %v10243 = vpack.c.b16 %v10161, %v10159
        %v10244 = vpack.c.b16 %v10164, %v10162
        %v10245 = vpack.c.b16 %v10165, %v10163
        %v10246 = vpack.c.b16 %v10168, %v10166
        %v10247 = vpack.c.b16 %v10169, %v10167
        %v10248 = vpack.c.b16 %v10172, %v10170
        %v10249 = vpack.c.b16 %v10173, %v10171
        %v10250 = vpack.c.b16 %v10176, %v10174
        %v10251 = vpack.c.b16 %v10177, %v10175
        %v10252 = vpack.c.b16 %v10180, %v10178
        %v10253 = vpack.c.b16 %v10181, %v10179
        %v10254 = vpack.c.b16 %v10184, %v10182
        %v10255 = vpack.c.b16 %v10185, %v10183
        %v10256 = vpack.c.b16 %v10188, %v10186
        %v10257 = vpack.c.b16 %v10189, %v10187
        %v10258 = vpack.c.b16 %v10192, %v10190
        %v10259 = vpack.c.b16 %v10193, %v10191
        %v10260 = vpack.c.b16 %v10196, %v10194
        %v10261 = vpack.c.b16 %v10197, %v10195
        %10326 = vmatprep.subr.bf16.mxu0 %v10199
        %10327 = vmatpush1.bf16.msra.mxu0 %v10198
        %10328 = vmatprep.subr.bf16.mxu0 %v10201
        %10329 = vmatpush1.bf16.msra.mxu0 %v10200
        %10330 = vmatprep.subr.bf16.mxu0 %v10203
        %10331 = vmatpush1.bf16.msra.mxu0 %v10202
        %10332 = vmatprep.subr.bf16.mxu0 %v10205
        %10333 = vmatpush1.bf16.msra.mxu0 %v10204
        %10334 = vmatprep.subr.bf16.mxu0 %v10207
        %10335 = vmatpush1.bf16.msra.mxu0 %v10206
        %10336 = vmatprep.subr.bf16.mxu0 %v10209
        %10337 = vmatpush1.bf16.msra.mxu0 %v10208
        %10338 = vmatprep.subr.bf16.mxu0 %v10211
        %10339 = vmatpush1.bf16.msra.mxu0 %v10210
        %10340 = vmatprep.subr.bf16.mxu0 %v10213
        %10341 = vmatpush1.bf16.msra.mxu0 %v10212
        %10342 = vmatprep.subr.bf16.mxu0 %v10215
        %10343 = vmatpush1.bf16.msra.mxu0 %v10214
        %10344 = vmatprep.subr.bf16.mxu0 %v10217
        %10345 = vmatpush1.bf16.msra.mxu0 %v10216
        %10346 = vmatprep.subr.bf16.mxu0 %v10219
        %10347 = vmatpush1.bf16.msra.mxu0 %v10218
        %10348 = vmatprep.subr.bf16.mxu0 %v10221
        %10349 = vmatpush1.bf16.msra.mxu0 %v10220
        %10350 = vmatprep.subr.bf16.mxu0 %v10223
        %10351 = vmatpush1.bf16.msra.mxu0 %v10222
        %10352 = vmatprep.subr.bf16.mxu0 %v10225
        %10353 = vmatpush1.bf16.msra.mxu0 %v10224
        %10354 = vmatprep.subr.bf16.mxu0 %v10227
        %10355 = vmatpush1.bf16.msra.mxu0 %v10226
        %10356 = vmatprep.subr.bf16.mxu0 %v10229
        %10357 = vmatpush1.bf16.msra.mxu0 %v10228
        %10358 = vmatprep.mubr.bf16.mxu0 %v9927
        %10359 = vmatmul.mubr.bf16.gmra.mrb[0].mxu0 %v9926
        %v10360 = vpop.f32.mrb[0].mxu0
        %v10361 = vadd.f32 %v9999, %v10360
        %v10362 = vpop.f32.mrb[0].mxu0
        %v10363 = vadd.f32 %v10003, %v10362
        %v10364 = vpop.f32.mrb[0].mxu0
        %v10365 = vpop.f32.mrb[0].mxu0
        %10366 = vdwg.mxu0
        %10367 = vmatprep.subr.bf16.mxu0 %v10231
        %10368 = vmatpush1.bf16.msra.mxu0 %v10230
        %10369 = vmatprep.subr.bf16.mxu0 %v10233
        %10370 = vmatpush1.bf16.msra.mxu0 %v10232
        %10371 = vmatprep.subr.bf16.mxu0 %v10235
        %10372 = vmatpush1.bf16.msra.mxu0 %v10234
        %10373 = vmatprep.subr.bf16.mxu0 %v10237
        %10374 = vmatpush1.bf16.msra.mxu0 %v10236
        %10375 = vmatprep.subr.bf16.mxu0 %v10239
        %10376 = vmatpush1.bf16.msra.mxu0 %v10238
        %10377 = vmatprep.subr.bf16.mxu0 %v10241
        %10378 = vmatpush1.bf16.msra.mxu0 %v10240
        %10379 = vmatprep.subr.bf16.mxu0 %v10243
        %10380 = vmatpush1.bf16.msra.mxu0 %v10242
        %10381 = vmatprep.subr.bf16.mxu0 %v10245
        %10382 = vmatpush1.bf16.msra.mxu0 %v10244
        %10383 = vmatprep.subr.bf16.mxu0 %v10247
        %10384 = vmatpush1.bf16.msra.mxu0 %v10246
        %10385 = vmatprep.subr.bf16.mxu0 %v10249
        %10386 = vmatpush1.bf16.msra.mxu0 %v10248
        %10387 = vmatprep.subr.bf16.mxu0 %v10251
        %10388 = vmatpush1.bf16.msra.mxu0 %v10250
        %10389 = vmatprep.subr.bf16.mxu0 %v10253
        %10390 = vmatpush1.bf16.msra.mxu0 %v10252
        %10391 = vmatprep.subr.bf16.mxu0 %v10255
        %10392 = vmatpush1.bf16.msra.mxu0 %v10254
        %10393 = vmatprep.subr.bf16.mxu0 %v10257
        %10394 = vmatpush1.bf16.msra.mxu0 %v10256
        %10395 = vmatprep.subr.bf16.mxu0 %v10259
        %10396 = vmatpush1.bf16.msra.mxu0 %v10258
        %10397 = vmatprep.subr.bf16.mxu0 %v10261
        %10398 = vmatpush1.bf16.msra.mxu0 %v10260
        %10399 = vmatprep.mubr.bf16.mxu0 %v9929
        %10400 = vmatmul.mubr.bf16.gmra.mrb[0].mxu0 %v9928
        %v10401 = vpop.f32.mrb[0].mxu0
        %v10402 = vadd.f32 %v10361, %v10401
        %v10403 = vpop.f32.mrb[0].mxu0
        %v10404 = vadd.f32 %v10363, %v10403
        %v10405 = vpop.f32.mrb[0].mxu0
        %v10406 = vpop.f32.mrb[0].mxu0
        %10407 = vdwg.mxu0
        %v10408 = vmax.f32 %v10402, 0.0
        %v10409 = vmax.f32 %v10404, 0.0
        %v10410 = vpack.c.bf16 %v10408, %v10408
        %v10411 = vpack.c.bf16 %v10409, %v10409
        %v10412 = vld [vmem:[#allocation14] sm:$0xf]
        %v10413 = vld [vmem:[#allocation14 + $0x4] sm:$0xf]
        %v10414 = vld [vmem:[#allocation14 + $0x8] sm:$0xf]
        %v10415 = vld [vmem:[#allocation14 + $0xc] sm:$0xf]
        %v10416 = vld [vmem:[#allocation14 + $0x10] sm:$0xf]
        %v10417 = vld [vmem:[#allocation14 + $0x14] sm:$0xf]
        %v10418 = vld [vmem:[#allocation14 + $0x18] sm:$0xf]
        %v10419 = vld [vmem:[#allocation14 + $0x1c] sm:$0xf]
        %v10420 = vld [vmem:[#allocation14 + $0x20] sm:$0xf]
        %v10421 = vld [vmem:[#allocation14 + $0x24] sm:$0xf]
        %v10422 = vld [vmem:[#allocation14 + $0x28] sm:$0xf]
        %v10423 = vld [vmem:[#allocation14 + $0x2c] sm:$0xf]
        %v10424 = vld [vmem:[#allocation14 + $0x30] sm:$0xf]
        %v10425 = vld [vmem:[#allocation14 + $0x34] sm:$0xf]
        %v10426 = vld [vmem:[#allocation14 + $0x38] sm:$0xf]
        %v10427 = vld [vmem:[#allocation14 + $0x3c] sm:$0xf]
        %v10428 = vld [vmem:[#allocation14 + $0x40] sm:$0xf]
        %v10429 = vld [vmem:[#allocation14 + $0x44] sm:$0xf]
        %v10430 = vld [vmem:[#allocation14 + $0x48] sm:$0xf]
        %v10431 = vld [vmem:[#allocation14 + $0x4c] sm:$0xf]
        %v10432 = vld [vmem:[#allocation14 + $0x50] sm:$0xf]
        %v10433 = vld [vmem:[#allocation14 + $0x54] sm:$0xf]
        %v10434 = vld [vmem:[#allocation14 + $0x58] sm:$0xf]
        %v10435 = vld [vmem:[#allocation14 + $0x5c] sm:$0xf]
        %v10436 = vld [vmem:[#allocation14 + $0x60] sm:$0xf]
        %v10437 = vld [vmem:[#allocation14 + $0x64] sm:$0xf]
        %v10438 = vld [vmem:[#allocation14 + $0x68] sm:$0xf]
        %v10439 = vld [vmem:[#allocation14 + $0x6c] sm:$0xf]
        %v10440 = vld [vmem:[#allocation14 + $0x70] sm:$0xf]
        %v10441 = vld [vmem:[#allocation14 + $0x74] sm:$0xf]
        %v10442 = vld [vmem:[#allocation14 + $0x78] sm:$0xf]
        %v10443 = vld [vmem:[#allocation14 + $0x7c] sm:$0xf]
        %v10444 = vld [vmem:[#allocation16] sm:$0x1]
        %v10446 = vlaneseq
        %v10447 = vshrl.u32 %v10446, 7
        %v10448 = vsub.s32 0, %v10447
        %v10449 = vrot.slane %v10444, %v10448
        %v10483 = vunpack.c.l.b16 %v10412
        %v10484 = vunpack.c.l.b16 %v10413
        %v10485 = vunpack.c.l.b16 %v10414
        %v10486 = vunpack.c.l.b16 %v10415
        %v10487 = vunpack.c.l.b16 %v10416
        %v10488 = vunpack.c.l.b16 %v10417
        %v10489 = vunpack.c.l.b16 %v10418
        %v10490 = vunpack.c.l.b16 %v10419
        %v10491 = vunpack.c.l.b16 %v10420
        %v10492 = vunpack.c.l.b16 %v10421
        %v10493 = vunpack.c.l.b16 %v10422
        %v10494 = vunpack.c.l.b16 %v10423
        %v10495 = vunpack.c.l.b16 %v10424
        %v10496 = vunpack.c.l.b16 %v10425
        %v10497 = vunpack.c.l.b16 %v10426
        %v10498 = vunpack.c.l.b16 %v10427
        %v10499 = vunpack.c.l.b16 %v10428
        %v10500 = vunpack.c.l.b16 %v10429
        %v10501 = vunpack.c.l.b16 %v10430
        %v10502 = vunpack.c.l.b16 %v10431
        %v10503 = vunpack.c.l.b16 %v10432
        %v10504 = vunpack.c.l.b16 %v10433
        %v10505 = vunpack.c.l.b16 %v10434
        %v10506 = vunpack.c.l.b16 %v10435
        %v10507 = vunpack.c.l.b16 %v10436
        %v10508 = vunpack.c.l.b16 %v10437
        %v10509 = vunpack.c.l.b16 %v10438
        %v10510 = vunpack.c.l.b16 %v10439
        %v10511 = vunpack.c.l.b16 %v10440
        %v10512 = vunpack.c.l.b16 %v10441
        %v10513 = vunpack.c.l.b16 %v10442
        %v10514 = vunpack.c.l.b16 %v10443
        %v10515 = vpack.c.b16 %v10484, %v10483
        %v10516 = vpack.c.b16 %v10486, %v10485
        %v10517 = vpack.c.b16 %v10488, %v10487
        %v10518 = vpack.c.b16 %v10490, %v10489
        %v10519 = vpack.c.b16 %v10492, %v10491
        %v10520 = vpack.c.b16 %v10494, %v10493
        %v10521 = vpack.c.b16 %v10496, %v10495
        %v10522 = vpack.c.b16 %v10498, %v10497
        %v10523 = vpack.c.b16 %v10500, %v10499
        %v10524 = vpack.c.b16 %v10502, %v10501
        %v10525 = vpack.c.b16 %v10504, %v10503
        %v10526 = vpack.c.b16 %v10506, %v10505
        %v10527 = vpack.c.b16 %v10508, %v10507
        %v10528 = vpack.c.b16 %v10510, %v10509
        %v10529 = vpack.c.b16 %v10512, %v10511
        %v10530 = vpack.c.b16 %v10514, %v10513
        %10547 = vmatprep.subr.bf16.mxu0 0
        %10548 = vmatpush1.bf16.msra.mxu0 %v10515
        %10549 = vmatprep.subr.bf16.mxu0 0
        %10550 = vmatpush1.bf16.msra.mxu0 %v10516
        %10551 = vmatprep.subr.bf16.mxu0 0
        %10552 = vmatpush1.bf16.msra.mxu0 %v10517
        %10553 = vmatprep.subr.bf16.mxu0 0
        %10554 = vmatpush1.bf16.msra.mxu0 %v10518
        %10555 = vmatprep.subr.bf16.mxu0 0
        %10556 = vmatpush1.bf16.msra.mxu0 %v10519
        %10557 = vmatprep.subr.bf16.mxu0 0
        %10558 = vmatpush1.bf16.msra.mxu0 %v10520
        %10559 = vmatprep.subr.bf16.mxu0 0
        %10560 = vmatpush1.bf16.msra.mxu0 %v10521
        %10561 = vmatprep.subr.bf16.mxu0 0
        %10562 = vmatpush1.bf16.msra.mxu0 %v10522
        %10563 = vmatprep.subr.bf16.mxu0 0
        %10564 = vmatpush1.bf16.msra.mxu0 %v10523
        %10565 = vmatprep.subr.bf16.mxu0 0
        %10566 = vmatpush1.bf16.msra.mxu0 %v10524
        %10567 = vmatprep.subr.bf16.mxu0 0
        %10568 = vmatpush1.bf16.msra.mxu0 %v10525
        %10569 = vmatprep.subr.bf16.mxu0 0
        %10570 = vmatpush1.bf16.msra.mxu0 %v10526
        %10571 = vmatprep.subr.bf16.mxu0 0
        %10572 = vmatpush1.bf16.msra.mxu0 %v10527
        %10573 = vmatprep.subr.bf16.mxu0 0
        %10574 = vmatpush1.bf16.msra.mxu0 %v10528
        %10575 = vmatprep.subr.bf16.mxu0 0
        %10576 = vmatpush1.bf16.msra.mxu0 %v10529
        %10577 = vmatprep.subr.bf16.mxu0 0
        %10578 = vmatpush1.bf16.msra.mxu0 %v10530
        %10579 = vmatprep.mubr.bf16.mxu0 %v10411
        %10580 = vmatmul.mubr.bf16.gmra.mrb[0].mxu0 %v10410
        %v10581 = vpop.f32.mrb[0].mxu0
        %v10582 = vadd.f32 %v10449, %v10581
        %v10583 = vpop.f32.mrb[0].mxu0
        %v10584 = vpop.f32.mrb[0].mxu0
        %v10585 = vpop.f32.mrb[0].mxu0
        %10586 = vdwg.mxu0
        %10587 = vst [vmem:[%s456] sm:$0xff] %v10582
        %s10588 = sand.u32 %s232, 1
        %s10589 = scalar_lea.sflag [#allocation4], %s10588
        %s10590 = sand.u32 %s232, 1
        %s10591 = smul.addr %s10590, 8
        %s10592 = scalar_lea.vmem [#allocation17], %s10591
        // Predicated region
        $region93: #{_forward_padded.1} parent=55 // pred_check
          %p10593 = pneg %p242
        $region94: #{_forward_padded.1} parent=55 // pred_check_branch
          %10595 = sbr.rel (%p10593) target = $region96
        $region95: #{_forward_padded.1} parent=55 // pred_region
          %s10597 = ssub.s32 128, 128
          %10598 = vsyncadd %s10589, %s10597
          %s10599 = smul.addr %s30, 128
          %s10600 = scalar_lea.hbm %s9, %s10599
          %s10602 = sshll.u32 %s10592, 4
          %s10603 = int_to_ptr.vmem [resolvable:$true] %s10602
          %10605 = dma.vmem_to_hbm [thread:$0]  %s10603, 128, %s10600, %s10589
        $region96: #{_forward_padded.1} parent=55 // pred_fallthru
          _
      $region56: #{_forward_padded.1} parent=5 // pred_fallthru
        _
      %p10606 = scmp.le.s32.totalorder 2, %s25
      // Predicated region
      $region97: #{_forward_padded.1} parent=5 // pred_check
        %p10607 = pneg %p10606
      $region98: #{_forward_padded.1} parent=5 // pred_check_branch
        %10609 = sbr.rel (%p10607) target = $region100
      $region99: #{_forward_padded.1} parent=5 // pred_region
        %s10610 = ssub.s32 %s25, 2
        // Predicated region
        $region101: #{_forward_padded.1} parent=99 // pred_check
          %p10611 = pneg %p248
        $region102: #{_forward_padded.1} parent=99 // pred_check_branch
          %10613 = sbr.rel (%p10611) target = $region104
        $region103: #{_forward_padded.1} parent=99 // pred_region
          %s10614 = sand.u32 %s233, 1
          %s10615 = scalar_lea.sflag [#allocation4], %s10614
          %s10616 = sand.u32 %s233, 1
          %s10617 = smul.addr %s10616, 8
          %s10618 = scalar_lea.vmem [#allocation17], %s10617
          %10619 = dma.done %s10615, 128
        $region104: #{_forward_padded.1} parent=99 // pred_fallthru
          _
      $region100: #{_forward_padded.1} parent=5 // pred_fallthru
        _
    $region6: #{_forward_padded.1} parent=1 // loop_footer
      %s29 = sadd.s32 1, %s25
    $region7: #{_forward_padded.1} parent=1 // loop_footer_branch
      %24 = sbr.rel target = $region3
    $region8: #{_forward_padded.1} parent=1 // loop_exit
      _
    %10620 = vsyncpa [#allocation3], 1
    %s10621 = scalar_lea.sflag [#allocation3], 1
    %10622 = vsyncpa %s10621, 1
    %10623 = vsyncpa [#allocation6], 1
    %10624 = vsyncpa [#allocation9], 1
    %10625 = vsyncpa [#allocation12], 1
    %10626 = vsyncpa [#allocation15], 1
    %10627 = vsyncpa [#allocation4], 1
    %s10628 = scalar_lea.sflag [#allocation4], 1
    %10629 = vsyncpa %s10628, 1

</llo_original>
